<compile_context>
chip_gen: v7x
topology: tpu7x:2x2x1
jax: 0.10.0
libtpu: 0.0.40
codegen_flags: <defaults>
</compile_context>

<pallas_src>
import math
import functools

import jax
import jax.numpy as jnp
from jax.experimental import pallas as pl


# ----------------------------------------------------------------------------
# In-kernel helpers
# ----------------------------------------------------------------------------

def _layernorm_val(y, g, b):
    mu = jnp.mean(y, axis=-1, keepdims=True)
    var = jnp.mean((y - mu) * (y - mu), axis=-1, keepdims=True)
    inv = jax.lax.rsqrt(var + 1e-5)
    return (y - mu) * inv * g + b


# ----------------------------------------------------------------------------
# Pallas kernels
# ----------------------------------------------------------------------------

def _mha_block_kernel(xq_ref, posq_ref, xkv_ref, posk_ref, bias_ref,
                      wq_ref, bq_ref, wk_ref, bk_ref, wv_ref, bv_ref,
                      wo_ref, bo_ref, g_ref, beta_ref, o_ref,
                      *, B, H, Lq, Lk):
    """Fused multi-head attention block.

    Computes LayerNorm(xq + MHA(q=xq+posq, k=xkv+posk, v=xkv)) in a single kernel.
    Rows are batch-major: row = b*L + l.  wq/bq already carry the 1/sqrt(hd) scale.
    bias_ref is a (B, Lk) additive key-padding bias (0 or -1e9).
    """
    d = wq_ref.shape[0]
    hd = d // H

    xq_base = xq_ref[...]                           # (B*Lq, d) residual base
    xq = xq_base + posq_ref[...]
    xkv = xkv_ref[...]                              # (B*Lk, d) value input / residual of k
    xk = xkv + posk_ref[...]

    q = jnp.dot(xq, wq_ref[...], preferred_element_type=jnp.float32) + bq_ref[...]
    k = jnp.dot(xk, wk_ref[...], preferred_element_type=jnp.float32) + bk_ref[...]
    v = jnp.dot(xkv, wv_ref[...], preferred_element_type=jnp.float32) + bv_ref[...]

    bias = bias_ref[...]                            # (B, Lk)
    wo = wo_ref[...]                                # (d, d)
    bo_b = jnp.broadcast_to(bo_ref[...], (Lq, d))   # hoisted broadcast of output bias
    g = g_ref[...]
    beta = beta_ref[...]

    for b in range(B):                              # static unroll, B small
        rq = slice(b * Lq, (b + 1) * Lq)
        rk = slice(b * Lk, (b + 1) * Lk)
        bias_b = bias[b:b + 1, :]                   # (1, Lk)
        acc = bo_b                                  # accumulates attn_out @ wo + bo
        for h in range(H):                          # static unroll over heads
            cs = slice(h * hd, (h + 1) * hd)
            qs = q[rq, cs]                          # (Lq, hd)
            ks = k[rk, cs]                          # (Lk, hd)
            vs = v[rk, cs]                          # (Lk, hd)
            # scores: qs @ ks^T  (contract last dims)
            s = jax.lax.dot_general(qs, ks, (((1,), (1,)), ((), ())),
                                    preferred_element_type=jnp.float32)
            s = s + bias_b
            m = jnp.max(s, axis=-1, keepdims=True)
            p = jnp.exp(s - m)
            l = jnp.sum(p, axis=-1, keepdims=True)
            o_h = jnp.dot(p, vs, preferred_element_type=jnp.float32)   # (Lq, hd)
            o_h = o_h * pl.reciprocal(l, approx=True)                  # normalize after PV
            acc = acc + jnp.dot(o_h, wo[cs, :], preferred_element_type=jnp.float32)
        y = xq_base[rq, :] + acc                    # residual add (dropout = identity)
        o_ref[rq, :] = _layernorm_val(y, g, beta)


def _ffn_block_kernel(x_ref, w1_ref, b1_ref, w2_ref, b2_ref, g_ref, beta_ref, o_ref):
    """Fused FFN block: LayerNorm(x + linear2(relu(linear1(x)))).  ff intermediate stays in VMEM."""
    x = x_ref[...]
    h = jnp.dot(x, w1_ref[...], preferred_element_type=jnp.float32) + b1_ref[...]
    h = jnp.maximum(h, 0.0)
    y = x + jnp.dot(h, w2_ref[...], preferred_element_type=jnp.float32) + b2_ref[...]
    o_ref[...] = _layernorm_val(y, g_ref[...], beta_ref[...])


def _layernorm_kernel(x_ref, g_ref, b_ref, o_ref):
    o_ref[...] = _layernorm_val(x_ref[...], g_ref[...], b_ref[...])


# ----------------------------------------------------------------------------
# Pallas wrappers (shapes are tiny -> whole-array blocks, no grid)
# ----------------------------------------------------------------------------

def mha_block(x_base, pos_q, kv_base, pos_k, bias, attn_p, ln_g, ln_b, *, nhead):
    Mq, d = x_base.shape
    B = bias.shape[0]
    Lq = Mq // B
    Lk = kv_base.shape[0] // B
    kernel = functools.partial(_mha_block_kernel, B=B, H=nhead, Lq=Lq, Lk=Lk)
    return pl.pallas_call(
        kernel,
        out_shape=jax.ShapeDtypeStruct((Mq, d), jnp.float32),
    )(x_base, pos_q, kv_base, pos_k, bias,
      attn_p["wq"], attn_p["bq"], attn_p["wk"], attn_p["bk"],
      attn_p["wv"], attn_p["bv"], attn_p["wo"], attn_p["bo"], ln_g, ln_b)


def ffn_block(x, w1, b1, w2, b2, ln_g, ln_b):
    return pl.pallas_call(
        _ffn_block_kernel,
        out_shape=jax.ShapeDtypeStruct(x.shape, jnp.float32),
    )(x, w1, b1, w2, b2, ln_g, ln_b)


def layernorm(x, g, b):
    return pl.pallas_call(
        _layernorm_kernel,
        out_shape=jax.ShapeDtypeStruct(x.shape, jnp.float32),
    )(x, g, b)


# ----------------------------------------------------------------------------
# Encoder / decoder layers (post-norm, normalize_before=False; dropout = identity)
# ----------------------------------------------------------------------------

def encoder_layer(src, pos_f, bias_mem, p, nhead):
    src = mha_block(src, pos_f, src, pos_f, bias_mem,
                    p["self_attn"], p["ln1_g"], p["ln1_b"], nhead=nhead)
    src = ffn_block(src, p["w1"], p["b1"], p["w2"], p["b2"], p["ln2_g"], p["ln2_b"])
    return src


def decoder_layer(tgt, memory, qpos_f, pos_f, bias_mem, bias_self, p, nhead):
    # self-attention (no key padding mask)
    tgt = mha_block(tgt, qpos_f, tgt, qpos_f, bias_self,
                    p["self_attn"], p["ln1_g"], p["ln1_b"], nhead=nhead)
    # cross-attention over encoder memory (memory key padding mask)
    tgt = mha_block(tgt, qpos_f, memory, pos_f, bias_mem,
                    p["cross_attn"], p["ln2_g"], p["ln2_b"], nhead=nhead)
    tgt = ffn_block(tgt, p["w1"], p["b1"], p["w2"], p["b2"], p["ln3_g"], p["ln3_b"])
    return tgt


# ----------------------------------------------------------------------------
# Full Transformer forward (DETR style)
# ----------------------------------------------------------------------------

def transformer_forward(params, src, mask, query_embed, pos_embed, nhead):
    bs, c, h, w = src.shape
    hw = h * w
    nq = query_embed.shape[0]

    # batch-major internal layout: (bs, L, c) flattened to (bs*L, c)
    src_f = src.reshape(bs, c, hw).transpose(0, 2, 1).reshape(bs * hw, c)
    pos_f = pos_embed.reshape(bs, c, hw).transpose(0, 2, 1).reshape(bs * hw, c)
    qpos_f = jnp.broadcast_to(query_embed[None, :, :], (bs, nq, c)).reshape(bs * nq, c)

    # key-padding-mask -> additive bias, built ONCE and reused by all layers
    mask_f = mask.reshape(bs, hw)
    bias_mem = jnp.where(mask_f, -1e9, 0.0).astype(jnp.float32)      # (bs, hw)
    bias_self = jnp.zeros((bs, nq), jnp.float32)                     # decoder self-attn: no mask

    tgt = jnp.zeros((bs * nq, c), jnp.float32)

    # encoder
    memory = src_f
    for lp in params["encoder_layers"]:
        memory = encoder_layer(memory, pos_f, bias_mem, lp, nhead)

    # decoder (return_intermediate=False)
    out = tgt
    for lp in params["decoder_layers"]:
        out = decoder_layer(out, memory, qpos_f, pos_f, bias_mem, bias_self, lp, nhead)
    out = layernorm(out, params["dec_norm_g"], params["dec_norm_b"])

    # hs.transpose(1, 2) of the reference == (1, bs, nq, d); batch-major layout is already that
    hs = out.reshape(bs, nq, c)[None, ...]
    mem_out = memory.reshape(bs, hw, c).transpose(0, 2, 1).reshape(bs, c, h, w)
    return hs, mem_out


# ----------------------------------------------------------------------------
# Deterministic parameter construction (synthetic xavier-uniform init)
# ----------------------------------------------------------------------------

def _xavier(key, shape):
    fan_in, fan_out = shape
    limit = math.sqrt(6.0 / (fan_in + fan_out))
    return jax.random.uniform(key, shape, jnp.float32, -limit, limit)


def _make_mha_params(key, d, nhead):
    keys = jax.random.split(key, 4)
    # fold the 1/sqrt(head_dim) query scale into wq/bq (bias is zero so only wq changes)
    scale = 1.0 / math.sqrt(d // nhead)
    return {
        "wq": _xavier(keys[0], (d, d)) * scale, "bq": jnp.zeros((1, d), jnp.float32),
        "wk": _xavier(keys[1], (d, d)), "bk": jnp.zeros((1, d), jnp.float32),
        "wv": _xavier(keys[2], (d, d)), "bv": jnp.zeros((1, d), jnp.float32),
        "wo": _xavier(keys[3], (d, d)), "bo": jnp.zeros((1, d), jnp.float32),
    }


def _make_encoder_layer_params(key, d, ff, nhead):
    k1, k2, k3 = jax.random.split(key, 3)
    return {
        "self_attn": _make_mha_params(k1, d, nhead),
        "w1": _xavier(k2, (d, ff)), "b1": jnp.zeros((1, ff), jnp.float32),
        "w2": _xavier(k3, (ff, d)), "b2": jnp.zeros((1, d), jnp.float32),
        "ln1_g": jnp.ones((1, d), jnp.float32), "ln1_b": jnp.zeros((1, d), jnp.float32),
        "ln2_g": jnp.ones((1, d), jnp.float32), "ln2_b": jnp.zeros((1, d), jnp.float32),
    }


def _make_decoder_layer_params(key, d, ff, nhead):
    k1, k2, k3, k4 = jax.random.split(key, 4)
    return {
        "self_attn": _make_mha_params(k1, d, nhead),
        "cross_attn": _make_mha_params(k2, d, nhead),
        "w1": _xavier(k3, (d, ff)), "b1": jnp.zeros((1, ff), jnp.float32),
        "w2": _xavier(k4, (ff, d)), "b2": jnp.zeros((1, d), jnp.float32),
        "ln1_g": jnp.ones((1, d), jnp.float32), "ln1_b": jnp.zeros((1, d), jnp.float32),
        "ln2_g": jnp.ones((1, d), jnp.float32), "ln2_b": jnp.zeros((1, d), jnp.float32),
        "ln3_g": jnp.ones((1, d), jnp.float32), "ln3_b": jnp.zeros((1, d), jnp.float32),
    }


def make_transformer_params(key, d, ff, n_enc, n_dec, nhead):
    keys = jax.random.split(key, n_enc + n_dec)
    return {
        "encoder_layers": [
            _make_encoder_layer_params(keys[i], d, ff, nhead) for i in range(n_enc)
        ],
        "decoder_layers": [
            _make_decoder_layer_params(keys[n_enc + i], d, ff, nhead) for i in range(n_dec)
        ],
        "dec_norm_g": jnp.ones((1, d), jnp.float32),
        "dec_norm_b": jnp.zeros((1, d), jnp.float32),
    }


# ----------------------------------------------------------------------------
# Main
# ----------------------------------------------------------------------------

if __name__ == "__main__":
    d_model = 32
    nhead = 4
    num_encoder_layers = 2
    num_decoder_layers = 2
    dim_feedforward = 64
    num_queries = 8
    bs, h, w = 2, 4, 4

    root = jax.random.PRNGKey(0)
    k_params, k_src, k_pos, k_query = jax.random.split(root, 4)

    params = make_transformer_params(
        k_params, d_model, dim_feedforward,
        num_encoder_layers, num_decoder_layers, nhead)

    src = jax.random.normal(k_src, (bs, d_model, h, w), jnp.float32)
    pos_embed = jax.random.normal(k_pos, (bs, d_model, h, w), jnp.float32)
    query_embed = jax.random.normal(k_query, (num_queries, d_model), jnp.float32)

    # key padding mask: a few padded (True) positions, at least one valid per batch
    mask = jnp.zeros((bs, h, w), dtype=bool)
    mask = mask.at[0, -1, -1].set(True).at[1, -1, :].set(True)

    fwd = jax.jit(functools.partial(transformer_forward, nhead=nhead))
    hs, mem = fwd(params, src, mask, query_embed, pos_embed)
    jax.block_until_ready((hs, mem))

    assert hs.shape == (1, bs, num_queries, d_model), hs.shape
    assert mem.shape == (bs, d_model, h, w), mem.shape
    assert bool(jnp.all(jnp.isfinite(hs))) and bool(jnp.all(jnp.isfinite(mem)))

    print("KERNEL_OK")
</pallas_src>

<mosaic_0001>
module attributes {stable_mosaic.version = 11 : i64} {
  func.func @_mha_block_kernel(%arg0: memref<32x32xf32, #tpu.memory_space<vmem>>, %arg1: memref<32x32xf32, #tpu.memory_space<vmem>>, %arg2: memref<32x32xf32, #tpu.memory_space<vmem>>, %arg3: memref<32x32xf32, #tpu.memory_space<vmem>>, %arg4: memref<2x16xf32, #tpu.memory_space<vmem>>, %arg5: memref<32x32xf32, #tpu.memory_space<vmem>>, %arg6: memref<1x32xf32, #tpu.memory_space<vmem>>, %arg7: memref<32x32xf32, #tpu.memory_space<vmem>>, %arg8: memref<1x32xf32, #tpu.memory_space<vmem>>, %arg9: memref<32x32xf32, #tpu.memory_space<vmem>>, %arg10: memref<1x32xf32, #tpu.memory_space<vmem>>, %arg11: memref<32x32xf32, #tpu.memory_space<vmem>>, %arg12: memref<1x32xf32, #tpu.memory_space<vmem>>, %arg13: memref<1x32xf32, #tpu.memory_space<vmem>>, %arg14: memref<1x32xf32, #tpu.memory_space<vmem>>, %arg15: memref<32x32xf32, #tpu.memory_space<vmem>>) attributes {dimension_semantics = [], scalar_prefetch = 0 : i64, scratch_operands = 0 : i64, tpu.core_type = #tpu.core_type<tc>} {
    %c0 = arith.constant 0 : index
    %c0_0 = arith.constant 0 : index
    %0 = vector.load %arg0[%c0, %c0_0] : memref<32x32xf32, #tpu.memory_space<vmem>>, vector<32x32xf32>
    %c0_1 = arith.constant 0 : index
    %c0_2 = arith.constant 0 : index
    %1 = vector.load %arg1[%c0_1, %c0_2] : memref<32x32xf32, #tpu.memory_space<vmem>>, vector<32x32xf32>
    %2 = arith.addf %0, %1 : vector<32x32xf32>
    %c0_3 = arith.constant 0 : index
    %c0_4 = arith.constant 0 : index
    %3 = vector.load %arg2[%c0_3, %c0_4] : memref<32x32xf32, #tpu.memory_space<vmem>>, vector<32x32xf32>
    %c0_5 = arith.constant 0 : index
    %c0_6 = arith.constant 0 : index
    %4 = vector.load %arg3[%c0_5, %c0_6] : memref<32x32xf32, #tpu.memory_space<vmem>>, vector<32x32xf32>
    %5 = arith.addf %3, %4 : vector<32x32xf32>
    %c0_7 = arith.constant 0 : index
    %c0_8 = arith.constant 0 : index
    %6 = vector.load %arg5[%c0_7, %c0_8] : memref<32x32xf32, #tpu.memory_space<vmem>>, vector<32x32xf32>
    %cst = arith.constant dense<0.000000e+00> : vector<32x32xf32>
    %7 = tpu.matmul %2, %6, %cst {dimension_numbers = #tpu.dot_dimension_numbers<[1], [0], [0], [1], [0, 0, 1, 1], [], []>} : vector<32x32xf32>, vector<32x32xf32>, vector<32x32xf32> -> vector<32x32xf32>
    %c0_9 = arith.constant 0 : index
    %c0_10 = arith.constant 0 : index
    %8 = vector.load %arg6[%c0_9, %c0_10] : memref<1x32xf32, #tpu.memory_space<vmem>>, vector<1x32xf32>
    %9 = vector.broadcast %8 : vector<1x32xf32> to vector<32x32xf32>
    %10 = arith.addf %7, %9 : vector<32x32xf32>
    %c0_11 = arith.constant 0 : index
    %c0_12 = arith.constant 0 : index
    %11 = vector.load %arg7[%c0_11, %c0_12] : memref<32x32xf32, #tpu.memory_space<vmem>>, vector<32x32xf32>
    %cst_13 = arith.constant dense<0.000000e+00> : vector<32x32xf32>
    %12 = tpu.matmul %5, %11, %cst_13 {dimension_numbers = #tpu.dot_dimension_numbers<[1], [0], [0], [1], [0, 0, 1, 1], [], []>} : vector<32x32xf32>, vector<32x32xf32>, vector<32x32xf32> -> vector<32x32xf32>
    %c0_14 = arith.constant 0 : index
    %c0_15 = arith.constant 0 : index
    %13 = vector.load %arg8[%c0_14, %c0_15] : memref<1x32xf32, #tpu.memory_space<vmem>>, vector<1x32xf32>
    %14 = vector.broadcast %13 : vector<1x32xf32> to vector<32x32xf32>
    %15 = arith.addf %12, %14 : vector<32x32xf32>
    %c0_16 = arith.constant 0 : index
    %c0_17 = arith.constant 0 : index
    %16 = vector.load %arg9[%c0_16, %c0_17] : memref<32x32xf32, #tpu.memory_space<vmem>>, vector<32x32xf32>
    %cst_18 = arith.constant dense<0.000000e+00> : vector<32x32xf32>
    %17 = tpu.matmul %3, %16, %cst_18 {dimension_numbers = #tpu.dot_dimension_numbers<[1], [0], [0], [1], [0, 0, 1, 1], [], []>} : vector<32x32xf32>, vector<32x32xf32>, vector<32x32xf32> -> vector<32x32xf32>
    %c0_19 = arith.constant 0 : index
    %c0_20 = arith.constant 0 : index
    %18 = vector.load %arg10[%c0_19, %c0_20] : memref<1x32xf32, #tpu.memory_space<vmem>>, vector<1x32xf32>
    %19 = vector.broadcast %18 : vector<1x32xf32> to vector<32x32xf32>
    %20 = arith.addf %17, %19 : vector<32x32xf32>
    %c0_21 = arith.constant 0 : index
    %c0_22 = arith.constant 0 : index
    %21 = vector.load %arg4[%c0_21, %c0_22] : memref<2x16xf32, #tpu.memory_space<vmem>>, vector<2x16xf32>
    %c0_23 = arith.constant 0 : index
    %c0_24 = arith.constant 0 : index
    %22 = vector.load %arg11[%c0_23, %c0_24] : memref<32x32xf32, #tpu.memory_space<vmem>>, vector<32x32xf32>
    %c0_25 = arith.constant 0 : index
    %c0_26 = arith.constant 0 : index
    %23 = vector.load %arg12[%c0_25, %c0_26] : memref<1x32xf32, #tpu.memory_space<vmem>>, vector<1x32xf32>
    %24 = vector.shape_cast %23 : vector<1x32xf32> to vector<1x32xf32>
    %25 = vector.broadcast %24 : vector<1x32xf32> to vector<16x32xf32>
    %c0_27 = arith.constant 0 : index
    %c0_28 = arith.constant 0 : index
    %26 = vector.load %arg13[%c0_27, %c0_28] : memref<1x32xf32, #tpu.memory_space<vmem>>, vector<1x32xf32>
    %c0_29 = arith.constant 0 : index
    %c0_30 = arith.constant 0 : index
    %27 = vector.load %arg14[%c0_29, %c0_30] : memref<1x32xf32, #tpu.memory_space<vmem>>, vector<1x32xf32>
    %28 = vector.extract_strided_slice %21 {offsets = [0, 0], sizes = [1, 16], strides = [1, 1]} : vector<2x16xf32> to vector<1x16xf32>
    %29 = vector.extract_strided_slice %10 {offsets = [0, 0], sizes = [16, 8], strides = [1, 1]} : vector<32x32xf32> to vector<16x8xf32>
    %30 = vector.extract_strided_slice %15 {offsets = [0, 0], sizes = [16, 8], strides = [1, 1]} : vector<32x32xf32> to vector<16x8xf32>
    %31 = vector.extract_strided_slice %20 {offsets = [0, 0], sizes = [16, 8], strides = [1, 1]} : vector<32x32xf32> to vector<16x8xf32>
    %cst_31 = arith.constant dense<0.000000e+00> : vector<16x16xf32>
    %32 = tpu.matmul %29, %30, %cst_31 {dimension_numbers = #tpu.dot_dimension_numbers<[1], [1], [0], [0], [0, 0, 1, 0], [], []>} : vector<16x8xf32>, vector<16x8xf32>, vector<16x16xf32> -> vector<16x16xf32>
    %33 = vector.broadcast %28 : vector<1x16xf32> to vector<16x16xf32>
    %34 = arith.addf %32, %33 : vector<16x16xf32>
    %cst_32 = arith.constant dense<0xFF800000> : vector<16xf32>
    %35 = vector.multi_reduction <maximumf>, %34, %cst_32 [1] : vector<16x16xf32> to vector<16xf32>
    %36 = vector.shape_cast %35 : vector<16xf32> to vector<16x1xf32>
    %37 = vector.broadcast %36 : vector<16x1xf32> to vector<16x16xf32>
    %38 = arith.subf %34, %37 : vector<16x16xf32>
    %39 = math.exp %38 : vector<16x16xf32>
    %cst_33 = arith.constant dense<0.000000e+00> : vector<16xf32>
    %40 = vector.multi_reduction <add>, %39, %cst_33 [1] : vector<16x16xf32> to vector<16xf32>
    %41 = vector.shape_cast %40 : vector<16xf32> to vector<16x1xf32>
    %cst_34 = arith.constant dense<0.000000e+00> : vector<16x8xf32>
    %42 = tpu.matmul %39, %31, %cst_34 {dimension_numbers = #tpu.dot_dimension_numbers<[1], [0], [0], [1], [0, 0, 1, 1], [], []>} : vector<16x16xf32>, vector<16x8xf32>, vector<16x8xf32> -> vector<16x8xf32>
    %43 = tpu.reciprocal %41 {approx = true} : vector<16x1xf32> -> vector<16x1xf32>
    %44 = vector.broadcast %43 : vector<16x1xf32> to vector<16x8xf32>
    %45 = arith.mulf %42, %44 : vector<16x8xf32>
    %46 = vector.extract_strided_slice %22 {offsets = [0, 0], sizes = [8, 32], strides = [1, 1]} : vector<32x32xf32> to vector<8x32xf32>
    %cst_35 = arith.constant dense<0.000000e+00> : vector<16x32xf32>
    %47 = tpu.matmul %45, %46, %cst_35 {dimension_numbers = #tpu.dot_dimension_numbers<[1], [0], [0], [1], [0, 0, 1, 1], [], []>} : vector<16x8xf32>, vector<8x32xf32>, vector<16x32xf32> -> vector<16x32xf32>
    %48 = arith.addf %25, %47 : vector<16x32xf32>
    %49 = vector.extract_strided_slice %10 {offsets = [0, 8], sizes = [16, 8], strides = [1, 1]} : vector<32x32xf32> to vector<16x8xf32>
    %50 = vector.extract_strided_slice %15 {offsets = [0, 8], sizes = [16, 8], strides = [1, 1]} : vector<32x32xf32> to vector<16x8xf32>
    %51 = vector.extract_strided_slice %20 {offsets = [0, 8], sizes = [16, 8], strides = [1, 1]} : vector<32x32xf32> to vector<16x8xf32>
    %cst_36 = arith.constant dense<0.000000e+00> : vector<16x16xf32>
    %52 = tpu.matmul %49, %50, %cst_36 {dimension_numbers = #tpu.dot_dimension_numbers<[1], [1], [0], [0], [0, 0, 1, 0], [], []>} : vector<16x8xf32>, vector<16x8xf32>, vector<16x16xf32> -> vector<16x16xf32>
    %53 = vector.broadcast %28 : vector<1x16xf32> to vector<16x16xf32>
    %54 = arith.addf %52, %53 : vector<16x16xf32>
    %cst_37 = arith.constant dense<0xFF800000> : vector<16xf32>
    %55 = vector.multi_reduction <maximumf>, %54, %cst_37 [1] : vector<16x16xf32> to vector<16xf32>
    %56 = vector.shape_cast %55 : vector<16xf32> to vector<16x1xf32>
    %57 = vector.broadcast %56 : vector<16x1xf32> to vector<16x16xf32>
    %58 = arith.subf %54, %57 : vector<16x16xf32>
    %59 = math.exp %58 : vector<16x16xf32>
    %cst_38 = arith.constant dense<0.000000e+00> : vector<16xf32>
    %60 = vector.multi_reduction <add>, %59, %cst_38 [1] : vector<16x16xf32> to vector<16xf32>
    %61 = vector.shape_cast %60 : vector<16xf32> to vector<16x1xf32>
    %cst_39 = arith.constant dense<0.000000e+00> : vector<16x8xf32>
    %62 = tpu.matmul %59, %51, %cst_39 {dimension_numbers = #tpu.dot_dimension_numbers<[1], [0], [0], [1], [0, 0, 1, 1], [], []>} : vector<16x16xf32>, vector<16x8xf32>, vector<16x8xf32> -> vector<16x8xf32>
    %63 = tpu.reciprocal %61 {approx = true} : vector<16x1xf32> -> vector<16x1xf32>
    %64 = vector.broadcast %63 : vector<16x1xf32> to vector<16x8xf32>
    %65 = arith.mulf %62, %64 : vector<16x8xf32>
    %66 = vector.extract_strided_slice %22 {offsets = [8, 0], sizes = [8, 32], strides = [1, 1]} : vector<32x32xf32> to vector<8x32xf32>
    %cst_40 = arith.constant dense<0.000000e+00> : vector<16x32xf32>
    %67 = tpu.matmul %65, %66, %cst_40 {dimension_numbers = #tpu.dot_dimension_numbers<[1], [0], [0], [1], [0, 0, 1, 1], [], []>} : vector<16x8xf32>, vector<8x32xf32>, vector<16x32xf32> -> vector<16x32xf32>
    %68 = arith.addf %48, %67 : vector<16x32xf32>
    %69 = vector.extract_strided_slice %10 {offsets = [0, 16], sizes = [16, 8], strides = [1, 1]} : vector<32x32xf32> to vector<16x8xf32>
    %70 = vector.extract_strided_slice %15 {offsets = [0, 16], sizes = [16, 8], strides = [1, 1]} : vector<32x32xf32> to vector<16x8xf32>
    %71 = vector.extract_strided_slice %20 {offsets = [0, 16], sizes = [16, 8], strides = [1, 1]} : vector<32x32xf32> to vector<16x8xf32>
    %cst_41 = arith.constant dense<0.000000e+00> : vector<16x16xf32>
    %72 = tpu.matmul %69, %70, %cst_41 {dimension_numbers = #tpu.dot_dimension_numbers<[1], [1], [0], [0], [0, 0, 1, 0], [], []>} : vector<16x8xf32>, vector<16x8xf32>, vector<16x16xf32> -> vector<16x16xf32>
    %73 = vector.broadcast %28 : vector<1x16xf32> to vector<16x16xf32>
    %74 = arith.addf %72, %73 : vector<16x16xf32>
    %cst_42 = arith.constant dense<0xFF800000> : vector<16xf32>
    %75 = vector.multi_reduction <maximumf>, %74, %cst_42 [1] : vector<16x16xf32> to vector<16xf32>
    %76 = vector.shape_cast %75 : vector<16xf32> to vector<16x1xf32>
    %77 = vector.broadcast %76 : vector<16x1xf32> to vector<16x16xf32>
    %78 = arith.subf %74, %77 : vector<16x16xf32>
    %79 = math.exp %78 : vector<16x16xf32>
    %cst_43 = arith.constant dense<0.000000e+00> : vector<16xf32>
    %80 = vector.multi_reduction <add>, %79, %cst_43 [1] : vector<16x16xf32> to vector<16xf32>
    %81 = vector.shape_cast %80 : vector<16xf32> to vector<16x1xf32>
    %cst_44 = arith.constant dense<0.000000e+00> : vector<16x8xf32>
    %82 = tpu.matmul %79, %71, %cst_44 {dimension_numbers = #tpu.dot_dimension_numbers<[1], [0], [0], [1], [0, 0, 1, 1], [], []>} : vector<16x16xf32>, vector<16x8xf32>, vector<16x8xf32> -> vector<16x8xf32>
    %83 = tpu.reciprocal %81 {approx = true} : vector<16x1xf32> -> vector<16x1xf32>
    %84 = vector.broadcast %83 : vector<16x1xf32> to vector<16x8xf32>
    %85 = arith.mulf %82, %84 : vector<16x8xf32>
    %86 = vector.extract_strided_slice %22 {offsets = [16, 0], sizes = [8, 32], strides = [1, 1]} : vector<32x32xf32> to vector<8x32xf32>
    %cst_45 = arith.constant dense<0.000000e+00> : vector<16x32xf32>
    %87 = tpu.matmul %85, %86, %cst_45 {dimension_numbers = #tpu.dot_dimension_numbers<[1], [0], [0], [1], [0, 0, 1, 1], [], []>} : vector<16x8xf32>, vector<8x32xf32>, vector<16x32xf32> -> vector<16x32xf32>
    %88 = arith.addf %68, %87 : vector<16x32xf32>
    %89 = vector.extract_strided_slice %10 {offsets = [0, 24], sizes = [16, 8], strides = [1, 1]} : vector<32x32xf32> to vector<16x8xf32>
    %90 = vector.extract_strided_slice %15 {offsets = [0, 24], sizes = [16, 8], strides = [1, 1]} : vector<32x32xf32> to vector<16x8xf32>
    %91 = vector.extract_strided_slice %20 {offsets = [0, 24], sizes = [16, 8], strides = [1, 1]} : vector<32x32xf32> to vector<16x8xf32>
    %cst_46 = arith.constant dense<0.000000e+00> : vector<16x16xf32>
    %92 = tpu.matmul %89, %90, %cst_46 {dimension_numbers = #tpu.dot_dimension_numbers<[1], [1], [0], [0], [0, 0, 1, 0], [], []>} : vector<16x8xf32>, vector<16x8xf32>, vector<16x16xf32> -> vector<16x16xf32>
    %93 = vector.broadcast %28 : vector<1x16xf32> to vector<16x16xf32>
    %94 = arith.addf %92, %93 : vector<16x16xf32>
    %cst_47 = arith.constant dense<0xFF800000> : vector<16xf32>
    %95 = vector.multi_reduction <maximumf>, %94, %cst_47 [1] : vector<16x16xf32> to vector<16xf32>
    %96 = vector.shape_cast %95 : vector<16xf32> to vector<16x1xf32>
    %97 = vector.broadcast %96 : vector<16x1xf32> to vector<16x16xf32>
    %98 = arith.subf %94, %97 : vector<16x16xf32>
    %99 = math.exp %98 : vector<16x16xf32>
    %cst_48 = arith.constant dense<0.000000e+00> : vector<16xf32>
    %100 = vector.multi_reduction <add>, %99, %cst_48 [1] : vector<16x16xf32> to vector<16xf32>
    %101 = vector.shape_cast %100 : vector<16xf32> to vector<16x1xf32>
    %cst_49 = arith.constant dense<0.000000e+00> : vector<16x8xf32>
    %102 = tpu.matmul %99, %91, %cst_49 {dimension_numbers = #tpu.dot_dimension_numbers<[1], [0], [0], [1], [0, 0, 1, 1], [], []>} : vector<16x16xf32>, vector<16x8xf32>, vector<16x8xf32> -> vector<16x8xf32>
    %103 = tpu.reciprocal %101 {approx = true} : vector<16x1xf32> -> vector<16x1xf32>
    %104 = vector.broadcast %103 : vector<16x1xf32> to vector<16x8xf32>
    %105 = arith.mulf %102, %104 : vector<16x8xf32>
    %106 = vector.extract_strided_slice %22 {offsets = [24, 0], sizes = [8, 32], strides = [1, 1]} : vector<32x32xf32> to vector<8x32xf32>
    %cst_50 = arith.constant dense<0.000000e+00> : vector<16x32xf32>
    %107 = tpu.matmul %105, %106, %cst_50 {dimension_numbers = #tpu.dot_dimension_numbers<[1], [0], [0], [1], [0, 0, 1, 1], [], []>} : vector<16x8xf32>, vector<8x32xf32>, vector<16x32xf32> -> vector<16x32xf32>
    %108 = arith.addf %88, %107 : vector<16x32xf32>
    %109 = vector.extract_strided_slice %0 {offsets = [0, 0], sizes = [16, 32], strides = [1, 1]} : vector<32x32xf32> to vector<16x32xf32>
    %110 = arith.addf %109, %108 : vector<16x32xf32>
    %cst_51 = arith.constant dense<0.000000e+00> : vector<16xf32>
    %111 = vector.multi_reduction <add>, %110, %cst_51 [1] : vector<16x32xf32> to vector<16xf32>
    %112 = vector.shape_cast %111 : vector<16xf32> to vector<16x1xf32>
    %cst_52 = arith.constant 3.200000e+01 : f32
    %113 = vector.broadcast %cst_52 : f32 to vector<16x1xf32>
    %114 = arith.divf %112, %113 : vector<16x1xf32>
    %115 = vector.broadcast %114 : vector<16x1xf32> to vector<16x32xf32>
    %116 = arith.subf %110, %115 : vector<16x32xf32>
    %117 = vector.broadcast %114 : vector<16x1xf32> to vector<16x32xf32>
    %118 = arith.subf %110, %117 : vector<16x32xf32>
    %119 = arith.mulf %116, %118 : vector<16x32xf32>
    %cst_53 = arith.constant dense<0.000000e+00> : vector<16xf32>
    %120 = vector.multi_reduction <add>, %119, %cst_53 [1] : vector<16x32xf32> to vector<16xf32>
    %121 = vector.shape_cast %120 : vector<16xf32> to vector<16x1xf32>
    %cst_54 = arith.constant 3.200000e+01 : f32
    %122 = vector.broadcast %cst_54 : f32 to vector<16x1xf32>
    %123 = arith.divf %121, %122 : vector<16x1xf32>
    %cst_55 = arith.constant 9.99999974E-6 : f32
    %124 = vector.broadcast %cst_55 : f32 to vector<16x1xf32>
    %125 = arith.addf %123, %124 : vector<16x1xf32>
    %126 = math.rsqrt %125 : vector<16x1xf32>
    %127 = vector.broadcast %114 : vector<16x1xf32> to vector<16x32xf32>
    %128 = arith.subf %110, %127 : vector<16x32xf32>
    %129 = vector.broadcast %126 : vector<16x1xf32> to vector<16x32xf32>
    %130 = arith.mulf %128, %129 : vector<16x32xf32>
    %131 = vector.broadcast %26 : vector<1x32xf32> to vector<16x32xf32>
    %132 = arith.mulf %130, %131 : vector<16x32xf32>
    %133 = vector.broadcast %27 : vector<1x32xf32> to vector<16x32xf32>
    %134 = arith.addf %132, %133 : vector<16x32xf32>
    %c0_56 = arith.constant 0 : index
    %c0_57 = arith.constant 0 : index
    %135 = vector.load %arg15[%c0_56, %c0_57] : memref<32x32xf32, #tpu.memory_space<vmem>>, vector<16x32xf32>
    tpu.vector_store %arg15[%c0_56, %c0_57], %134 {strides = array<i32>} : memref<32x32xf32, #tpu.memory_space<vmem>>, vector<16x32xf32>,
    %136 = vector.extract_strided_slice %21 {offsets = [1, 0], sizes = [1, 16], strides = [1, 1]} : vector<2x16xf32> to vector<1x16xf32>
    %137 = vector.extract_strided_slice %10 {offsets = [16, 0], sizes = [16, 8], strides = [1, 1]} : vector<32x32xf32> to vector<16x8xf32>
    %138 = vector.extract_strided_slice %15 {offsets = [16, 0], sizes = [16, 8], strides = [1, 1]} : vector<32x32xf32> to vector<16x8xf32>
    %139 = vector.extract_strided_slice %20 {offsets = [16, 0], sizes = [16, 8], strides = [1, 1]} : vector<32x32xf32> to vector<16x8xf32>
    %cst_58 = arith.constant dense<0.000000e+00> : vector<16x16xf32>
    %140 = tpu.matmul %137, %138, %cst_58 {dimension_numbers = #tpu.dot_dimension_numbers<[1], [1], [0], [0], [0, 0, 1, 0], [], []>} : vector<16x8xf32>, vector<16x8xf32>, vector<16x16xf32> -> vector<16x16xf32>
    %141 = vector.broadcast %136 : vector<1x16xf32> to vector<16x16xf32>
    %142 = arith.addf %140, %141 : vector<16x16xf32>
    %cst_59 = arith.constant dense<0xFF800000> : vector<16xf32>
    %143 = vector.multi_reduction <maximumf>, %142, %cst_59 [1] : vector<16x16xf32> to vector<16xf32>
    %144 = vector.shape_cast %143 : vector<16xf32> to vector<16x1xf32>
    %145 = vector.broadcast %144 : vector<16x1xf32> to vector<16x16xf32>
    %146 = arith.subf %142, %145 : vector<16x16xf32>
    %147 = math.exp %146 : vector<16x16xf32>
    %cst_60 = arith.constant dense<0.000000e+00> : vector<16xf32>
    %148 = vector.multi_reduction <add>, %147, %cst_60 [1] : vector<16x16xf32> to vector<16xf32>
    %149 = vector.shape_cast %148 : vector<16xf32> to vector<16x1xf32>
    %cst_61 = arith.constant dense<0.000000e+00> : vector<16x8xf32>
    %150 = tpu.matmul %147, %139, %cst_61 {dimension_numbers = #tpu.dot_dimension_numbers<[1], [0], [0], [1], [0, 0, 1, 1], [], []>} : vector<16x16xf32>, vector<16x8xf32>, vector<16x8xf32> -> vector<16x8xf32>
    %151 = tpu.reciprocal %149 {approx = true} : vector<16x1xf32> -> vector<16x1xf32>
    %152 = vector.broadcast %151 : vector<16x1xf32> to vector<16x8xf32>
    %153 = arith.mulf %150, %152 : vector<16x8xf32>
    %154 = vector.extract_strided_slice %22 {offsets = [0, 0], sizes = [8, 32], strides = [1, 1]} : vector<32x32xf32> to vector<8x32xf32>
    %cst_62 = arith.constant dense<0.000000e+00> : vector<16x32xf32>
    %155 = tpu.matmul %153, %154, %cst_62 {dimension_numbers = #tpu.dot_dimension_numbers<[1], [0], [0], [1], [0, 0, 1, 1], [], []>} : vector<16x8xf32>, vector<8x32xf32>, vector<16x32xf32> -> vector<16x32xf32>
    %156 = arith.addf %25, %155 : vector<16x32xf32>
    %157 = vector.extract_strided_slice %10 {offsets = [16, 8], sizes = [16, 8], strides = [1, 1]} : vector<32x32xf32> to vector<16x8xf32>
    %158 = vector.extract_strided_slice %15 {offsets = [16, 8], sizes = [16, 8], strides = [1, 1]} : vector<32x32xf32> to vector<16x8xf32>
    %159 = vector.extract_strided_slice %20 {offsets = [16, 8], sizes = [16, 8], strides = [1, 1]} : vector<32x32xf32> to vector<16x8xf32>
    %cst_63 = arith.constant dense<0.000000e+00> : vector<16x16xf32>
    %160 = tpu.matmul %157, %158, %cst_63 {dimension_numbers = #tpu.dot_dimension_numbers<[1], [1], [0], [0], [0, 0, 1, 0], [], []>} : vector<16x8xf32>, vector<16x8xf32>, vector<16x16xf32> -> vector<16x16xf32>
    %161 = vector.broadcast %136 : vector<1x16xf32> to vector<16x16xf32>
    %162 = arith.addf %160, %161 : vector<16x16xf32>
    %cst_64 = arith.constant dense<0xFF800000> : vector<16xf32>
    %163 = vector.multi_reduction <maximumf>, %162, %cst_64 [1] : vector<16x16xf32> to vector<16xf32>
    %164 = vector.shape_cast %163 : vector<16xf32> to vector<16x1xf32>
    %165 = vector.broadcast %164 : vector<16x1xf32> to vector<16x16xf32>
    %166 = arith.subf %162, %165 : vector<16x16xf32>
    %167 = math.exp %166 : vector<16x16xf32>
    %cst_65 = arith.constant dense<0.000000e+00> : vector<16xf32>
    %168 = vector.multi_reduction <add>, %167, %cst_65 [1] : vector<16x16xf32> to vector<16xf32>
    %169 = vector.shape_cast %168 : vector<16xf32> to vector<16x1xf32>
    %cst_66 = arith.constant dense<0.000000e+00> : vector<16x8xf32>
    %170 = tpu.matmul %167, %159, %cst_66 {dimension_numbers = #tpu.dot_dimension_numbers<[1], [0], [0], [1], [0, 0, 1, 1], [], []>} : vector<16x16xf32>, vector<16x8xf32>, vector<16x8xf32> -> vector<16x8xf32>
    %171 = tpu.reciprocal %169 {approx = true} : vector<16x1xf32> -> vector<16x1xf32>
    %172 = vector.broadcast %171 : vector<16x1xf32> to vector<16x8xf32>
    %173 = arith.mulf %170, %172 : vector<16x8xf32>
    %174 = vector.extract_strided_slice %22 {offsets = [8, 0], sizes = [8, 32], strides = [1, 1]} : vector<32x32xf32> to vector<8x32xf32>
    %cst_67 = arith.constant dense<0.000000e+00> : vector<16x32xf32>
    %175 = tpu.matmul %173, %174, %cst_67 {dimension_numbers = #tpu.dot_dimension_numbers<[1], [0], [0], [1], [0, 0, 1, 1], [], []>} : vector<16x8xf32>, vector<8x32xf32>, vector<16x32xf32> -> vector<16x32xf32>
    %176 = arith.addf %156, %175 : vector<16x32xf32>
    %177 = vector.extract_strided_slice %10 {offsets = [16, 16], sizes = [16, 8], strides = [1, 1]} : vector<32x32xf32> to vector<16x8xf32>
    %178 = vector.extract_strided_slice %15 {offsets = [16, 16], sizes = [16, 8], strides = [1, 1]} : vector<32x32xf32> to vector<16x8xf32>
    %179 = vector.extract_strided_slice %20 {offsets = [16, 16], sizes = [16, 8], strides = [1, 1]} : vector<32x32xf32> to vector<16x8xf32>
    %cst_68 = arith.constant dense<0.000000e+00> : vector<16x16xf32>
    %180 = tpu.matmul %177, %178, %cst_68 {dimension_numbers = #tpu.dot_dimension_numbers<[1], [1], [0], [0], [0, 0, 1, 0], [], []>} : vector<16x8xf32>, vector<16x8xf32>, vector<16x16xf32> -> vector<16x16xf32>
    %181 = vector.broadcast %136 : vector<1x16xf32> to vector<16x16xf32>
    %182 = arith.addf %180, %181 : vector<16x16xf32>
    %cst_69 = arith.constant dense<0xFF800000> : vector<16xf32>
    %183 = vector.multi_reduction <maximumf>, %182, %cst_69 [1] : vector<16x16xf32> to vector<16xf32>
    %184 = vector.shape_cast %183 : vector<16xf32> to vector<16x1xf32>
    %185 = vector.broadcast %184 : vector<16x1xf32> to vector<16x16xf32>
    %186 = arith.subf %182, %185 : vector<16x16xf32>
    %187 = math.exp %186 : vector<16x16xf32>
    %cst_70 = arith.constant dense<0.000000e+00> : vector<16xf32>
    %188 = vector.multi_reduction <add>, %187, %cst_70 [1] : vector<16x16xf32> to vector<16xf32>
    %189 = vector.shape_cast %188 : vector<16xf32> to vector<16x1xf32>
    %cst_71 = arith.constant dense<0.000000e+00> : vector<16x8xf32>
    %190 = tpu.matmul %187, %179, %cst_71 {dimension_numbers = #tpu.dot_dimension_numbers<[1], [0], [0], [1], [0, 0, 1, 1], [], []>} : vector<16x16xf32>, vector<16x8xf32>, vector<16x8xf32> -> vector<16x8xf32>
    %191 = tpu.reciprocal %189 {approx = true} : vector<16x1xf32> -> vector<16x1xf32>
    %192 = vector.broadcast %191 : vector<16x1xf32> to vector<16x8xf32>
    %193 = arith.mulf %190, %192 : vector<16x8xf32>
    %194 = vector.extract_strided_slice %22 {offsets = [16, 0], sizes = [8, 32], strides = [1, 1]} : vector<32x32xf32> to vector<8x32xf32>
    %cst_72 = arith.constant dense<0.000000e+00> : vector<16x32xf32>
    %195 = tpu.matmul %193, %194, %cst_72 {dimension_numbers = #tpu.dot_dimension_numbers<[1], [0], [0], [1], [0, 0, 1, 1], [], []>} : vector<16x8xf32>, vector<8x32xf32>, vector<16x32xf32> -> vector<16x32xf32>
    %196 = arith.addf %176, %195 : vector<16x32xf32>
    %197 = vector.extract_strided_slice %10 {offsets = [16, 24], sizes = [16, 8], strides = [1, 1]} : vector<32x32xf32> to vector<16x8xf32>
    %198 = vector.extract_strided_slice %15 {offsets = [16, 24], sizes = [16, 8], strides = [1, 1]} : vector<32x32xf32> to vector<16x8xf32>
    %199 = vector.extract_strided_slice %20 {offsets = [16, 24], sizes = [16, 8], strides = [1, 1]} : vector<32x32xf32> to vector<16x8xf32>
    %cst_73 = arith.constant dense<0.000000e+00> : vector<16x16xf32>
    %200 = tpu.matmul %197, %198, %cst_73 {dimension_numbers = #tpu.dot_dimension_numbers<[1], [1], [0], [0], [0, 0, 1, 0], [], []>} : vector<16x8xf32>, vector<16x8xf32>, vector<16x16xf32> -> vector<16x16xf32>
    %201 = vector.broadcast %136 : vector<1x16xf32> to vector<16x16xf32>
    %202 = arith.addf %200, %201 : vector<16x16xf32>
    %cst_74 = arith.constant dense<0xFF800000> : vector<16xf32>
    %203 = vector.multi_reduction <maximumf>, %202, %cst_74 [1] : vector<16x16xf32> to vector<16xf32>
    %204 = vector.shape_cast %203 : vector<16xf32> to vector<16x1xf32>
    %205 = vector.broadcast %204 : vector<16x1xf32> to vector<16x16xf32>
    %206 = arith.subf %202, %205 : vector<16x16xf32>
    %207 = math.exp %206 : vector<16x16xf32>
    %cst_75 = arith.constant dense<0.000000e+00> : vector<16xf32>
    %208 = vector.multi_reduction <add>, %207, %cst_75 [1] : vector<16x16xf32> to vector<16xf32>
    %209 = vector.shape_cast %208 : vector<16xf32> to vector<16x1xf32>
    %cst_76 = arith.constant dense<0.000000e+00> : vector<16x8xf32>
    %210 = tpu.matmul %207, %199, %cst_76 {dimension_numbers = #tpu.dot_dimension_numbers<[1], [0], [0], [1], [0, 0, 1, 1], [], []>} : vector<16x16xf32>, vector<16x8xf32>, vector<16x8xf32> -> vector<16x8xf32>
    %211 = tpu.reciprocal %209 {approx = true} : vector<16x1xf32> -> vector<16x1xf32>
    %212 = vector.broadcast %211 : vector<16x1xf32> to vector<16x8xf32>
    %213 = arith.mulf %210, %212 : vector<16x8xf32>
    %214 = vector.extract_strided_slice %22 {offsets = [24, 0], sizes = [8, 32], strides = [1, 1]} : vector<32x32xf32> to vector<8x32xf32>
    %cst_77 = arith.constant dense<0.000000e+00> : vector<16x32xf32>
    %215 = tpu.matmul %213, %214, %cst_77 {dimension_numbers = #tpu.dot_dimension_numbers<[1], [0], [0], [1], [0, 0, 1, 1], [], []>} : vector<16x8xf32>, vector<8x32xf32>, vector<16x32xf32> -> vector<16x32xf32>
    %216 = arith.addf %196, %215 : vector<16x32xf32>
    %217 = vector.extract_strided_slice %0 {offsets = [16, 0], sizes = [16, 32], strides = [1, 1]} : vector<32x32xf32> to vector<16x32xf32>
    %218 = arith.addf %217, %216 : vector<16x32xf32>
    %cst_78 = arith.constant dense<0.000000e+00> : vector<16xf32>
    %219 = vector.multi_reduction <add>, %218, %cst_78 [1] : vector<16x32xf32> to vector<16xf32>
    %220 = vector.shape_cast %219 : vector<16xf32> to vector<16x1xf32>
    %cst_79 = arith.constant 3.200000e+01 : f32
    %221 = vector.broadcast %cst_79 : f32 to vector<16x1xf32>
    %222 = arith.divf %220, %221 : vector<16x1xf32>
    %223 = vector.broadcast %222 : vector<16x1xf32> to vector<16x32xf32>
    %224 = arith.subf %218, %223 : vector<16x32xf32>
    %225 = vector.broadcast %222 : vector<16x1xf32> to vector<16x32xf32>
    %226 = arith.subf %218, %225 : vector<16x32xf32>
    %227 = arith.mulf %224, %226 : vector<16x32xf32>
    %cst_80 = arith.constant dense<0.000000e+00> : vector<16xf32>
    %228 = vector.multi_reduction <add>, %227, %cst_80 [1] : vector<16x32xf32> to vector<16xf32>
    %229 = vector.shape_cast %228 : vector<16xf32> to vector<16x1xf32>
    %cst_81 = arith.constant 3.200000e+01 : f32
    %230 = vector.broadcast %cst_81 : f32 to vector<16x1xf32>
    %231 = arith.divf %229, %230 : vector<16x1xf32>
    %cst_82 = arith.constant 9.99999974E-6 : f32
    %232 = vector.broadcast %cst_82 : f32 to vector<16x1xf32>
    %233 = arith.addf %231, %232 : vector<16x1xf32>
    %234 = math.rsqrt %233 : vector<16x1xf32>
    %235 = vector.broadcast %222 : vector<16x1xf32> to vector<16x32xf32>
    %236 = arith.subf %218, %235 : vector<16x32xf32>
    %237 = vector.broadcast %234 : vector<16x1xf32> to vector<16x32xf32>
    %238 = arith.mulf %236, %237 : vector<16x32xf32>
    %239 = vector.broadcast %26 : vector<1x32xf32> to vector<16x32xf32>
    %240 = arith.mulf %238, %239 : vector<16x32xf32>
    %241 = vector.broadcast %27 : vector<1x32xf32> to vector<16x32xf32>
    %242 = arith.addf %240, %241 : vector<16x32xf32>
    %c16 = arith.constant 16 : index
    %c0_83 = arith.constant 0 : index
    %243 = vector.load %arg15[%c16, %c0_83] : memref<32x32xf32, #tpu.memory_space<vmem>>, vector<16x32xf32>
    tpu.vector_store %arg15[%c16, %c0_83], %242 {strides = array<i32>} : memref<32x32xf32, #tpu.memory_space<vmem>>, vector<16x32xf32>,
    return
  }
}

module attributes {stable_mosaic.version = 11 : i64} {
  func.func @_ffn_block_kernel(%arg0: memref<32x32xf32, #tpu.memory_space<vmem>>, %arg1: memref<32x64xf32, #tpu.memory_space<vmem>>, %arg2: memref<1x64xf32, #tpu.memory_space<vmem>>, %arg3: memref<64x32xf32, #tpu.memory_space<vmem>>, %arg4: memref<1x32xf32, #tpu.memory_space<vmem>>, %arg5: memref<1x32xf32, #tpu.memory_space<vmem>>, %arg6: memref<1x32xf32, #tpu.memory_space<vmem>>, %arg7: memref<32x32xf32, #tpu.memory_space<vmem>>) attributes {dimension_semantics = [], scalar_prefetch = 0 : i64, scratch_operands = 0 : i64, tpu.core_type = #tpu.core_type<tc>} {
    %c0 = arith.constant 0 : index
    %c0_0 = arith.constant 0 : index
    %0 = vector.load %arg0[%c0, %c0_0] : memref<32x32xf32, #tpu.memory_space<vmem>>, vector<32x32xf32>
    %c0_1 = arith.constant 0 : index
    %c0_2 = arith.constant 0 : index
    %1 = vector.load %arg1[%c0_1, %c0_2] : memref<32x64xf32, #tpu.memory_space<vmem>>, vector<32x64xf32>
    %cst = arith.constant dense<0.000000e+00> : vector<32x64xf32>
    %2 = tpu.matmul %0, %1, %cst {dimension_numbers = #tpu.dot_dimension_numbers<[1], [0], [0], [1], [0, 0, 1, 1], [], []>} : vector<32x32xf32>, vector<32x64xf32>, vector<32x64xf32> -> vector<32x64xf32>
    %c0_3 = arith.constant 0 : index
    %c0_4 = arith.constant 0 : index
    %3 = vector.load %arg2[%c0_3, %c0_4] : memref<1x64xf32, #tpu.memory_space<vmem>>, vector<1x64xf32>
    %4 = vector.broadcast %3 : vector<1x64xf32> to vector<32x64xf32>
    %5 = arith.addf %2, %4 : vector<32x64xf32>
    %cst_5 = arith.constant 0.000000e+00 : f32
    %6 = vector.broadcast %cst_5 : f32 to vector<32x64xf32>
    %7 = arith.maximumf %5, %6 : vector<32x64xf32>
    %c0_6 = arith.constant 0 : index
    %c0_7 = arith.constant 0 : index
    %8 = vector.load %arg3[%c0_6, %c0_7] : memref<64x32xf32, #tpu.memory_space<vmem>>, vector<64x32xf32>
    %cst_8 = arith.constant dense<0.000000e+00> : vector<32x32xf32>
    %9 = tpu.matmul %7, %8, %cst_8 {dimension_numbers = #tpu.dot_dimension_numbers<[1], [0], [0], [1], [0, 0, 1, 1], [], []>} : vector<32x64xf32>, vector<64x32xf32>, vector<32x32xf32> -> vector<32x32xf32>
    %10 = arith.addf %0, %9 : vector<32x32xf32>
    %c0_9 = arith.constant 0 : index
    %c0_10 = arith.constant 0 : index
    %11 = vector.load %arg4[%c0_9, %c0_10] : memref<1x32xf32, #tpu.memory_space<vmem>>, vector<1x32xf32>
    %12 = vector.broadcast %11 : vector<1x32xf32> to vector<32x32xf32>
    %13 = arith.addf %10, %12 : vector<32x32xf32>
    %c0_11 = arith.constant 0 : index
    %c0_12 = arith.constant 0 : index
    %14 = vector.load %arg5[%c0_11, %c0_12] : memref<1x32xf32, #tpu.memory_space<vmem>>, vector<1x32xf32>
    %c0_13 = arith.constant 0 : index
    %c0_14 = arith.constant 0 : index
    %15 = vector.load %arg6[%c0_13, %c0_14] : memref<1x32xf32, #tpu.memory_space<vmem>>, vector<1x32xf32>
    %cst_15 = arith.constant dense<0.000000e+00> : vector<32xf32>
    %16 = vector.multi_reduction <add>, %13, %cst_15 [1] : vector<32x32xf32> to vector<32xf32>
    %17 = vector.shape_cast %16 : vector<32xf32> to vector<32x1xf32>
    %cst_16 = arith.constant 3.200000e+01 : f32
    %18 = vector.broadcast %cst_16 : f32 to vector<32x1xf32>
    %19 = arith.divf %17, %18 : vector<32x1xf32>
    %20 = vector.broadcast %19 : vector<32x1xf32> to vector<32x32xf32>
    %21 = arith.subf %13, %20 : vector<32x32xf32>
    %22 = vector.broadcast %19 : vector<32x1xf32> to vector<32x32xf32>
    %23 = arith.subf %13, %22 : vector<32x32xf32>
    %24 = arith.mulf %21, %23 : vector<32x32xf32>
    %cst_17 = arith.constant dense<0.000000e+00> : vector<32xf32>
    %25 = vector.multi_reduction <add>, %24, %cst_17 [1] : vector<32x32xf32> to vector<32xf32>
    %26 = vector.shape_cast %25 : vector<32xf32> to vector<32x1xf32>
    %cst_18 = arith.constant 3.200000e+01 : f32
    %27 = vector.broadcast %cst_18 : f32 to vector<32x1xf32>
    %28 = arith.divf %26, %27 : vector<32x1xf32>
    %cst_19 = arith.constant 9.99999974E-6 : f32
    %29 = vector.broadcast %cst_19 : f32 to vector<32x1xf32>
    %30 = arith.addf %28, %29 : vector<32x1xf32>
    %31 = math.rsqrt %30 : vector<32x1xf32>
    %32 = vector.broadcast %19 : vector<32x1xf32> to vector<32x32xf32>
    %33 = arith.subf %13, %32 : vector<32x32xf32>
    %34 = vector.broadcast %31 : vector<32x1xf32> to vector<32x32xf32>
    %35 = arith.mulf %33, %34 : vector<32x32xf32>
    %36 = vector.broadcast %14 : vector<1x32xf32> to vector<32x32xf32>
    %37 = arith.mulf %35, %36 : vector<32x32xf32>
    %38 = vector.broadcast %15 : vector<1x32xf32> to vector<32x32xf32>
    %39 = arith.addf %37, %38 : vector<32x32xf32>
    %c0_20 = arith.constant 0 : index
    %c0_21 = arith.constant 0 : index
    %40 = vector.load %arg7[%c0_20, %c0_21] : memref<32x32xf32, #tpu.memory_space<vmem>>, vector<32x32xf32>
    tpu.vector_store %arg7[%c0_20, %c0_21], %39 {strides = array<i32>} : memref<32x32xf32, #tpu.memory_space<vmem>>, vector<32x32xf32>,
    return
  }
}

module attributes {stable_mosaic.version = 11 : i64} {
  func.func @_mha_block_kernel(%arg0: memref<16x32xf32, #tpu.memory_space<vmem>>, %arg1: memref<16x32xf32, #tpu.memory_space<vmem>>, %arg2: memref<32x32xf32, #tpu.memory_space<vmem>>, %arg3: memref<32x32xf32, #tpu.memory_space<vmem>>, %arg4: memref<2x16xf32, #tpu.memory_space<vmem>>, %arg5: memref<32x32xf32, #tpu.memory_space<vmem>>, %arg6: memref<1x32xf32, #tpu.memory_space<vmem>>, %arg7: memref<32x32xf32, #tpu.memory_space<vmem>>, %arg8: memref<1x32xf32, #tpu.memory_space<vmem>>, %arg9: memref<32x32xf32, #tpu.memory_space<vmem>>, %arg10: memref<1x32xf32, #tpu.memory_space<vmem>>, %arg11: memref<32x32xf32, #tpu.memory_space<vmem>>, %arg12: memref<1x32xf32, #tpu.memory_space<vmem>>, %arg13: memref<1x32xf32, #tpu.memory_space<vmem>>, %arg14: memref<1x32xf32, #tpu.memory_space<vmem>>, %arg15: memref<16x32xf32, #tpu.memory_space<vmem>>) attributes {dimension_semantics = [], scalar_prefetch = 0 : i64, scratch_operands = 0 : i64, tpu.core_type = #tpu.core_type<tc>} {
    %c0 = arith.constant 0 : index
    %c0_0 = arith.constant 0 : index
    %0 = vector.load %arg0[%c0, %c0_0] : memref<16x32xf32, #tpu.memory_space<vmem>>, vector<16x32xf32>
    %c0_1 = arith.constant 0 : index
    %c0_2 = arith.constant 0 : index
    %1 = vector.load %arg1[%c0_1, %c0_2] : memref<16x32xf32, #tpu.memory_space<vmem>>, vector<16x32xf32>
    %2 = arith.addf %0, %1 : vector<16x32xf32>
    %c0_3 = arith.constant 0 : index
    %c0_4 = arith.constant 0 : index
    %3 = vector.load %arg2[%c0_3, %c0_4] : memref<32x32xf32, #tpu.memory_space<vmem>>, vector<32x32xf32>
    %c0_5 = arith.constant 0 : index
    %c0_6 = arith.constant 0 : index
    %4 = vector.load %arg3[%c0_5, %c0_6] : memref<32x32xf32, #tpu.memory_space<vmem>>, vector<32x32xf32>
    %5 = arith.addf %3, %4 : vector<32x32xf32>
    %c0_7 = arith.constant 0 : index
    %c0_8 = arith.constant 0 : index
    %6 = vector.load %arg5[%c0_7, %c0_8] : memref<32x32xf32, #tpu.memory_space<vmem>>, vector<32x32xf32>
    %cst = arith.constant dense<0.000000e+00> : vector<16x32xf32>
    %7 = tpu.matmul %2, %6, %cst {dimension_numbers = #tpu.dot_dimension_numbers<[1], [0], [0], [1], [0, 0, 1, 1], [], []>} : vector<16x32xf32>, vector<32x32xf32>, vector<16x32xf32> -> vector<16x32xf32>
    %c0_9 = arith.constant 0 : index
    %c0_10 = arith.constant 0 : index
    %8 = vector.load %arg6[%c0_9, %c0_10] : memref<1x32xf32, #tpu.memory_space<vmem>>, vector<1x32xf32>
    %9 = vector.broadcast %8 : vector<1x32xf32> to vector<16x32xf32>
    %10 = arith.addf %7, %9 : vector<16x32xf32>
    %c0_11 = arith.constant 0 : index
    %c0_12 = arith.constant 0 : index
    %11 = vector.load %arg7[%c0_11, %c0_12] : memref<32x32xf32, #tpu.memory_space<vmem>>, vector<32x32xf32>
    %cst_13 = arith.constant dense<0.000000e+00> : vector<32x32xf32>
    %12 = tpu.matmul %5, %11, %cst_13 {dimension_numbers = #tpu.dot_dimension_numbers<[1], [0], [0], [1], [0, 0, 1, 1], [], []>} : vector<32x32xf32>, vector<32x32xf32>, vector<32x32xf32> -> vector<32x32xf32>
    %c0_14 = arith.constant 0 : index
    %c0_15 = arith.constant 0 : index
    %13 = vector.load %arg8[%c0_14, %c0_15] : memref<1x32xf32, #tpu.memory_space<vmem>>, vector<1x32xf32>
    %14 = vector.broadcast %13 : vector<1x32xf32> to vector<32x32xf32>
    %15 = arith.addf %12, %14 : vector<32x32xf32>
    %c0_16 = arith.constant 0 : index
    %c0_17 = arith.constant 0 : index
    %16 = vector.load %arg9[%c0_16, %c0_17] : memref<32x32xf32, #tpu.memory_space<vmem>>, vector<32x32xf32>
    %cst_18 = arith.constant dense<0.000000e+00> : vector<32x32xf32>
    %17 = tpu.matmul %3, %16, %cst_18 {dimension_numbers = #tpu.dot_dimension_numbers<[1], [0], [0], [1], [0, 0, 1, 1], [], []>} : vector<32x32xf32>, vector<32x32xf32>, vector<32x32xf32> -> vector<32x32xf32>
    %c0_19 = arith.constant 0 : index
    %c0_20 = arith.constant 0 : index
    %18 = vector.load %arg10[%c0_19, %c0_20] : memref<1x32xf32, #tpu.memory_space<vmem>>, vector<1x32xf32>
    %19 = vector.broadcast %18 : vector<1x32xf32> to vector<32x32xf32>
    %20 = arith.addf %17, %19 : vector<32x32xf32>
    %c0_21 = arith.constant 0 : index
    %c0_22 = arith.constant 0 : index
    %21 = vector.load %arg4[%c0_21, %c0_22] : memref<2x16xf32, #tpu.memory_space<vmem>>, vector<2x16xf32>
    %c0_23 = arith.constant 0 : index
    %c0_24 = arith.constant 0 : index
    %22 = vector.load %arg11[%c0_23, %c0_24] : memref<32x32xf32, #tpu.memory_space<vmem>>, vector<32x32xf32>
    %c0_25 = arith.constant 0 : index
    %c0_26 = arith.constant 0 : index
    %23 = vector.load %arg12[%c0_25, %c0_26] : memref<1x32xf32, #tpu.memory_space<vmem>>, vector<1x32xf32>
    %24 = vector.shape_cast %23 : vector<1x32xf32> to vector<1x32xf32>
    %25 = vector.broadcast %24 : vector<1x32xf32> to vector<8x32xf32>
    %c0_27 = arith.constant 0 : index
    %c0_28 = arith.constant 0 : index
    %26 = vector.load %arg13[%c0_27, %c0_28] : memref<1x32xf32, #tpu.memory_space<vmem>>, vector<1x32xf32>
    %c0_29 = arith.constant 0 : index
    %c0_30 = arith.constant 0 : index
    %27 = vector.load %arg14[%c0_29, %c0_30] : memref<1x32xf32, #tpu.memory_space<vmem>>, vector<1x32xf32>
    %28 = vector.extract_strided_slice %21 {offsets = [0, 0], sizes = [1, 16], strides = [1, 1]} : vector<2x16xf32> to vector<1x16xf32>
    %29 = vector.extract_strided_slice %10 {offsets = [0, 0], sizes = [8, 8], strides = [1, 1]} : vector<16x32xf32> to vector<8x8xf32>
    %30 = vector.extract_strided_slice %15 {offsets = [0, 0], sizes = [16, 8], strides = [1, 1]} : vector<32x32xf32> to vector<16x8xf32>
    %31 = vector.extract_strided_slice %20 {offsets = [0, 0], sizes = [16, 8], strides = [1, 1]} : vector<32x32xf32> to vector<16x8xf32>
    %cst_31 = arith.constant dense<0.000000e+00> : vector<8x16xf32>
    %32 = tpu.matmul %29, %30, %cst_31 {dimension_numbers = #tpu.dot_dimension_numbers<[1], [1], [0], [0], [0, 0, 1, 0], [], []>} : vector<8x8xf32>, vector<16x8xf32>, vector<8x16xf32> -> vector<8x16xf32>
    %33 = vector.broadcast %28 : vector<1x16xf32> to vector<8x16xf32>
    %34 = arith.addf %32, %33 : vector<8x16xf32>
    %cst_32 = arith.constant dense<0xFF800000> : vector<8xf32>
    %35 = vector.multi_reduction <maximumf>, %34, %cst_32 [1] : vector<8x16xf32> to vector<8xf32>
    %36 = vector.shape_cast %35 : vector<8xf32> to vector<8x1xf32>
    %37 = vector.broadcast %36 : vector<8x1xf32> to vector<8x16xf32>
    %38 = arith.subf %34, %37 : vector<8x16xf32>
    %39 = math.exp %38 : vector<8x16xf32>
    %cst_33 = arith.constant dense<0.000000e+00> : vector<8xf32>
    %40 = vector.multi_reduction <add>, %39, %cst_33 [1] : vector<8x16xf32> to vector<8xf32>
    %41 = vector.shape_cast %40 : vector<8xf32> to vector<8x1xf32>
    %cst_34 = arith.constant dense<0.000000e+00> : vector<8x8xf32>
    %42 = tpu.matmul %39, %31, %cst_34 {dimension_numbers = #tpu.dot_dimension_numbers<[1], [0], [0], [1], [0, 0, 1, 1], [], []>} : vector<8x16xf32>, vector<16x8xf32>, vector<8x8xf32> -> vector<8x8xf32>
    %43 = tpu.reciprocal %41 {approx = true} : vector<8x1xf32> -> vector<8x1xf32>
    %44 = vector.broadcast %43 : vector<8x1xf32> to vector<8x8xf32>
    %45 = arith.mulf %42, %44 : vector<8x8xf32>
    %46 = vector.extract_strided_slice %22 {offsets = [0, 0], sizes = [8, 32], strides = [1, 1]} : vector<32x32xf32> to vector<8x32xf32>
    %cst_35 = arith.constant dense<0.000000e+00> : vector<8x32xf32>
    %47 = tpu.matmul %45, %46, %cst_35 {dimension_numbers = #tpu.dot_dimension_numbers<[1], [0], [0], [1], [0, 0, 1, 1], [], []>} : vector<8x8xf32>, vector<8x32xf32>, vector<8x32xf32> -> vector<8x32xf32>
    %48 = arith.addf %25, %47 : vector<8x32xf32>
    %49 = vector.extract_strided_slice %10 {offsets = [0, 8], sizes = [8, 8], strides = [1, 1]} : vector<16x32xf32> to vector<8x8xf32>
    %50 = vector.extract_strided_slice %15 {offsets = [0, 8], sizes = [16, 8], strides = [1, 1]} : vector<32x32xf32> to vector<16x8xf32>
    %51 = vector.extract_strided_slice %20 {offsets = [0, 8], sizes = [16, 8], strides = [1, 1]} : vector<32x32xf32> to vector<16x8xf32>
    %cst_36 = arith.constant dense<0.000000e+00> : vector<8x16xf32>
    %52 = tpu.matmul %49, %50, %cst_36 {dimension_numbers = #tpu.dot_dimension_numbers<[1], [1], [0], [0], [0, 0, 1, 0], [], []>} : vector<8x8xf32>, vector<16x8xf32>, vector<8x16xf32> -> vector<8x16xf32>
    %53 = vector.broadcast %28 : vector<1x16xf32> to vector<8x16xf32>
    %54 = arith.addf %52, %53 : vector<8x16xf32>
    %cst_37 = arith.constant dense<0xFF800000> : vector<8xf32>
    %55 = vector.multi_reduction <maximumf>, %54, %cst_37 [1] : vector<8x16xf32> to vector<8xf32>
    %56 = vector.shape_cast %55 : vector<8xf32> to vector<8x1xf32>
    %57 = vector.broadcast %56 : vector<8x1xf32> to vector<8x16xf32>
    %58 = arith.subf %54, %57 : vector<8x16xf32>
    %59 = math.exp %58 : vector<8x16xf32>
    %cst_38 = arith.constant dense<0.000000e+00> : vector<8xf32>
    %60 = vector.multi_reduction <add>, %59, %cst_38 [1] : vector<8x16xf32> to vector<8xf32>
    %61 = vector.shape_cast %60 : vector<8xf32> to vector<8x1xf32>
    %cst_39 = arith.constant dense<0.000000e+00> : vector<8x8xf32>
    %62 = tpu.matmul %59, %51, %cst_39 {dimension_numbers = #tpu.dot_dimension_numbers<[1], [0], [0], [1], [0, 0, 1, 1], [], []>} : vector<8x16xf32>, vector<16x8xf32>, vector<8x8xf32> -> vector<8x8xf32>
    %63 = tpu.reciprocal %61 {approx = true} : vector<8x1xf32> -> vector<8x1xf32>
    %64 = vector.broadcast %63 : vector<8x1xf32> to vector<8x8xf32>
    %65 = arith.mulf %62, %64 : vector<8x8xf32>
    %66 = vector.extract_strided_slice %22 {offsets = [8, 0], sizes = [8, 32], strides = [1, 1]} : vector<32x32xf32> to vector<8x32xf32>
    %cst_40 = arith.constant dense<0.000000e+00> : vector<8x32xf32>
    %67 = tpu.matmul %65, %66, %cst_40 {dimension_numbers = #tpu.dot_dimension_numbers<[1], [0], [0], [1], [0, 0, 1, 1], [], []>} : vector<8x8xf32>, vector<8x32xf32>, vector<8x32xf32> -> vector<8x32xf32>
    %68 = arith.addf %48, %67 : vector<8x32xf32>
    %69 = vector.extract_strided_slice %10 {offsets = [0, 16], sizes = [8, 8], strides = [1, 1]} : vector<16x32xf32> to vector<8x8xf32>
    %70 = vector.extract_strided_slice %15 {offsets = [0, 16], sizes = [16, 8], strides = [1, 1]} : vector<32x32xf32> to vector<16x8xf32>
    %71 = vector.extract_strided_slice %20 {offsets = [0, 16], sizes = [16, 8], strides = [1, 1]} : vector<32x32xf32> to vector<16x8xf32>
    %cst_41 = arith.constant dense<0.000000e+00> : vector<8x16xf32>
    %72 = tpu.matmul %69, %70, %cst_41 {dimension_numbers = #tpu.dot_dimension_numbers<[1], [1], [0], [0], [0, 0, 1, 0], [], []>} : vector<8x8xf32>, vector<16x8xf32>, vector<8x16xf32> -> vector<8x16xf32>
    %73 = vector.broadcast %28 : vector<1x16xf32> to vector<8x16xf32>
    %74 = arith.addf %72, %73 : vector<8x16xf32>
    %cst_42 = arith.constant dense<0xFF800000> : vector<8xf32>
    %75 = vector.multi_reduction <maximumf>, %74, %cst_42 [1] : vector<8x16xf32> to vector<8xf32>
    %76 = vector.shape_cast %75 : vector<8xf32> to vector<8x1xf32>
    %77 = vector.broadcast %76 : vector<8x1xf32> to vector<8x16xf32>
    %78 = arith.subf %74, %77 : vector<8x16xf32>
    %79 = math.exp %78 : vector<8x16xf32>
    %cst_43 = arith.constant dense<0.000000e+00> : vector<8xf32>
    %80 = vector.multi_reduction <add>, %79, %cst_43 [1] : vector<8x16xf32> to vector<8xf32>
    %81 = vector.shape_cast %80 : vector<8xf32> to vector<8x1xf32>
    %cst_44 = arith.constant dense<0.000000e+00> : vector<8x8xf32>
    %82 = tpu.matmul %79, %71, %cst_44 {dimension_numbers = #tpu.dot_dimension_numbers<[1], [0], [0], [1], [0, 0, 1, 1], [], []>} : vector<8x16xf32>, vector<16x8xf32>, vector<8x8xf32> -> vector<8x8xf32>
    %83 = tpu.reciprocal %81 {approx = true} : vector<8x1xf32> -> vector<8x1xf32>
    %84 = vector.broadcast %83 : vector<8x1xf32> to vector<8x8xf32>
    %85 = arith.mulf %82, %84 : vector<8x8xf32>
    %86 = vector.extract_strided_slice %22 {offsets = [16, 0], sizes = [8, 32], strides = [1, 1]} : vector<32x32xf32> to vector<8x32xf32>
    %cst_45 = arith.constant dense<0.000000e+00> : vector<8x32xf32>
    %87 = tpu.matmul %85, %86, %cst_45 {dimension_numbers = #tpu.dot_dimension_numbers<[1], [0], [0], [1], [0, 0, 1, 1], [], []>} : vector<8x8xf32>, vector<8x32xf32>, vector<8x32xf32> -> vector<8x32xf32>
    %88 = arith.addf %68, %87 : vector<8x32xf32>
    %89 = vector.extract_strided_slice %10 {offsets = [0, 24], sizes = [8, 8], strides = [1, 1]} : vector<16x32xf32> to vector<8x8xf32>
    %90 = vector.extract_strided_slice %15 {offsets = [0, 24], sizes = [16, 8], strides = [1, 1]} : vector<32x32xf32> to vector<16x8xf32>
    %91 = vector.extract_strided_slice %20 {offsets = [0, 24], sizes = [16, 8], strides = [1, 1]} : vector<32x32xf32> to vector<16x8xf32>
    %cst_46 = arith.constant dense<0.000000e+00> : vector<8x16xf32>
    %92 = tpu.matmul %89, %90, %cst_46 {dimension_numbers = #tpu.dot_dimension_numbers<[1], [1], [0], [0], [0, 0, 1, 0], [], []>} : vector<8x8xf32>, vector<16x8xf32>, vector<8x16xf32> -> vector<8x16xf32>
    %93 = vector.broadcast %28 : vector<1x16xf32> to vector<8x16xf32>
    %94 = arith.addf %92, %93 : vector<8x16xf32>
    %cst_47 = arith.constant dense<0xFF800000> : vector<8xf32>
    %95 = vector.multi_reduction <maximumf>, %94, %cst_47 [1] : vector<8x16xf32> to vector<8xf32>
    %96 = vector.shape_cast %95 : vector<8xf32> to vector<8x1xf32>
    %97 = vector.broadcast %96 : vector<8x1xf32> to vector<8x16xf32>
    %98 = arith.subf %94, %97 : vector<8x16xf32>
    %99 = math.exp %98 : vector<8x16xf32>
    %cst_48 = arith.constant dense<0.000000e+00> : vector<8xf32>
    %100 = vector.multi_reduction <add>, %99, %cst_48 [1] : vector<8x16xf32> to vector<8xf32>
    %101 = vector.shape_cast %100 : vector<8xf32> to vector<8x1xf32>
    %cst_49 = arith.constant dense<0.000000e+00> : vector<8x8xf32>
    %102 = tpu.matmul %99, %91, %cst_49 {dimension_numbers = #tpu.dot_dimension_numbers<[1], [0], [0], [1], [0, 0, 1, 1], [], []>} : vector<8x16xf32>, vector<16x8xf32>, vector<8x8xf32> -> vector<8x8xf32>
    %103 = tpu.reciprocal %101 {approx = true} : vector<8x1xf32> -> vector<8x1xf32>
    %104 = vector.broadcast %103 : vector<8x1xf32> to vector<8x8xf32>
    %105 = arith.mulf %102, %104 : vector<8x8xf32>
    %106 = vector.extract_strided_slice %22 {offsets = [24, 0], sizes = [8, 32], strides = [1, 1]} : vector<32x32xf32> to vector<8x32xf32>
    %cst_50 = arith.constant dense<0.000000e+00> : vector<8x32xf32>
    %107 = tpu.matmul %105, %106, %cst_50 {dimension_numbers = #tpu.dot_dimension_numbers<[1], [0], [0], [1], [0, 0, 1, 1], [], []>} : vector<8x8xf32>, vector<8x32xf32>, vector<8x32xf32> -> vector<8x32xf32>
    %108 = arith.addf %88, %107 : vector<8x32xf32>
    %109 = vector.extract_strided_slice %0 {offsets = [0, 0], sizes = [8, 32], strides = [1, 1]} : vector<16x32xf32> to vector<8x32xf32>
    %110 = arith.addf %109, %108 : vector<8x32xf32>
    %cst_51 = arith.constant dense<0.000000e+00> : vector<8xf32>
    %111 = vector.multi_reduction <add>, %110, %cst_51 [1] : vector<8x32xf32> to vector<8xf32>
    %112 = vector.shape_cast %111 : vector<8xf32> to vector<8x1xf32>
    %cst_52 = arith.constant 3.200000e+01 : f32
    %113 = vector.broadcast %cst_52 : f32 to vector<8x1xf32>
    %114 = arith.divf %112, %113 : vector<8x1xf32>
    %115 = vector.broadcast %114 : vector<8x1xf32> to vector<8x32xf32>
    %116 = arith.subf %110, %115 : vector<8x32xf32>
    %117 = vector.broadcast %114 : vector<8x1xf32> to vector<8x32xf32>
    %118 = arith.subf %110, %117 : vector<8x32xf32>
    %119 = arith.mulf %116, %118 : vector<8x32xf32>
    %cst_53 = arith.constant dense<0.000000e+00> : vector<8xf32>
    %120 = vector.multi_reduction <add>, %119, %cst_53 [1] : vector<8x32xf32> to vector<8xf32>
    %121 = vector.shape_cast %120 : vector<8xf32> to vector<8x1xf32>
    %cst_54 = arith.constant 3.200000e+01 : f32
    %122 = vector.broadcast %cst_54 : f32 to vector<8x1xf32>
    %123 = arith.divf %121, %122 : vector<8x1xf32>
    %cst_55 = arith.constant 9.99999974E-6 : f32
    %124 = vector.broadcast %cst_55 : f32 to vector<8x1xf32>
    %125 = arith.addf %123, %124 : vector<8x1xf32>
    %126 = math.rsqrt %125 : vector<8x1xf32>
    %127 = vector.broadcast %114 : vector<8x1xf32> to vector<8x32xf32>
    %128 = arith.subf %110, %127 : vector<8x32xf32>
    %129 = vector.broadcast %126 : vector<8x1xf32> to vector<8x32xf32>
    %130 = arith.mulf %128, %129 : vector<8x32xf32>
    %131 = vector.broadcast %26 : vector<1x32xf32> to vector<8x32xf32>
    %132 = arith.mulf %130, %131 : vector<8x32xf32>
    %133 = vector.broadcast %27 : vector<1x32xf32> to vector<8x32xf32>
    %134 = arith.addf %132, %133 : vector<8x32xf32>
    %c0_56 = arith.constant 0 : index
    %c0_57 = arith.constant 0 : index
    %135 = vector.load %arg15[%c0_56, %c0_57] : memref<16x32xf32, #tpu.memory_space<vmem>>, vector<8x32xf32>
    tpu.vector_store %arg15[%c0_56, %c0_57], %134 {strides = array<i32>} : memref<16x32xf32, #tpu.memory_space<vmem>>, vector<8x32xf32>,
    %136 = vector.extract_strided_slice %21 {offsets = [1, 0], sizes = [1, 16], strides = [1, 1]} : vector<2x16xf32> to vector<1x16xf32>
    %137 = vector.extract_strided_slice %10 {offsets = [8, 0], sizes = [8, 8], strides = [1, 1]} : vector<16x32xf32> to vector<8x8xf32>
    %138 = vector.extract_strided_slice %15 {offsets = [16, 0], sizes = [16, 8], strides = [1, 1]} : vector<32x32xf32> to vector<16x8xf32>
    %139 = vector.extract_strided_slice %20 {offsets = [16, 0], sizes = [16, 8], strides = [1, 1]} : vector<32x32xf32> to vector<16x8xf32>
    %cst_58 = arith.constant dense<0.000000e+00> : vector<8x16xf32>
    %140 = tpu.matmul %137, %138, %cst_58 {dimension_numbers = #tpu.dot_dimension_numbers<[1], [1], [0], [0], [0, 0, 1, 0], [], []>} : vector<8x8xf32>, vector<16x8xf32>, vector<8x16xf32> -> vector<8x16xf32>
    %141 = vector.broadcast %136 : vector<1x16xf32> to vector<8x16xf32>
    %142 = arith.addf %140, %141 : vector<8x16xf32>
    %cst_59 = arith.constant dense<0xFF800000> : vector<8xf32>
    %143 = vector.multi_reduction <maximumf>, %142, %cst_59 [1] : vector<8x16xf32> to vector<8xf32>
    %144 = vector.shape_cast %143 : vector<8xf32> to vector<8x1xf32>
    %145 = vector.broadcast %144 : vector<8x1xf32> to vector<8x16xf32>
    %146 = arith.subf %142, %145 : vector<8x16xf32>
    %147 = math.exp %146 : vector<8x16xf32>
    %cst_60 = arith.constant dense<0.000000e+00> : vector<8xf32>
    %148 = vector.multi_reduction <add>, %147, %cst_60 [1] : vector<8x16xf32> to vector<8xf32>
    %149 = vector.shape_cast %148 : vector<8xf32> to vector<8x1xf32>
    %cst_61 = arith.constant dense<0.000000e+00> : vector<8x8xf32>
    %150 = tpu.matmul %147, %139, %cst_61 {dimension_numbers = #tpu.dot_dimension_numbers<[1], [0], [0], [1], [0, 0, 1, 1], [], []>} : vector<8x16xf32>, vector<16x8xf32>, vector<8x8xf32> -> vector<8x8xf32>
    %151 = tpu.reciprocal %149 {approx = true} : vector<8x1xf32> -> vector<8x1xf32>
    %152 = vector.broadcast %151 : vector<8x1xf32> to vector<8x8xf32>
    %153 = arith.mulf %150, %152 : vector<8x8xf32>
    %154 = vector.extract_strided_slice %22 {offsets = [0, 0], sizes = [8, 32], strides = [1, 1]} : vector<32x32xf32> to vector<8x32xf32>
    %cst_62 = arith.constant dense<0.000000e+00> : vector<8x32xf32>
    %155 = tpu.matmul %153, %154, %cst_62 {dimension_numbers = #tpu.dot_dimension_numbers<[1], [0], [0], [1], [0, 0, 1, 1], [], []>} : vector<8x8xf32>, vector<8x32xf32>, vector<8x32xf32> -> vector<8x32xf32>
    %156 = arith.addf %25, %155 : vector<8x32xf32>
    %157 = vector.extract_strided_slice %10 {offsets = [8, 8], sizes = [8, 8], strides = [1, 1]} : vector<16x32xf32> to vector<8x8xf32>
    %158 = vector.extract_strided_slice %15 {offsets = [16, 8], sizes = [16, 8], strides = [1, 1]} : vector<32x32xf32> to vector<16x8xf32>
    %159 = vector.extract_strided_slice %20 {offsets = [16, 8], sizes = [16, 8], strides = [1, 1]} : vector<32x32xf32> to vector<16x8xf32>
    %cst_63 = arith.constant dense<0.000000e+00> : vector<8x16xf32>
    %160 = tpu.matmul %157, %158, %cst_63 {dimension_numbers = #tpu.dot_dimension_numbers<[1], [1], [0], [0], [0, 0, 1, 0], [], []>} : vector<8x8xf32>, vector<16x8xf32>, vector<8x16xf32> -> vector<8x16xf32>
    %161 = vector.broadcast %136 : vector<1x16xf32> to vector<8x16xf32>
    %162 = arith.addf %160, %161 : vector<8x16xf32>
    %cst_64 = arith.constant dense<0xFF800000> : vector<8xf32>
    %163 = vector.multi_reduction <maximumf>, %162, %cst_64 [1] : vector<8x16xf32> to vector<8xf32>
    %164 = vector.shape_cast %163 : vector<8xf32> to vector<8x1xf32>
    %165 = vector.broadcast %164 : vector<8x1xf32> to vector<8x16xf32>
    %166 = arith.subf %162, %165 : vector<8x16xf32>
    %167 = math.exp %166 : vector<8x16xf32>
    %cst_65 = arith.constant dense<0.000000e+00> : vector<8xf32>
    %168 = vector.multi_reduction <add>, %167, %cst_65 [1] : vector<8x16xf32> to vector<8xf32>
    %169 = vector.shape_cast %168 : vector<8xf32> to vector<8x1xf32>
    %cst_66 = arith.constant dense<0.000000e+00> : vector<8x8xf32>
    %170 = tpu.matmul %167, %159, %cst_66 {dimension_numbers = #tpu.dot_dimension_numbers<[1], [0], [0], [1], [0, 0, 1, 1], [], []>} : vector<8x16xf32>, vector<16x8xf32>, vector<8x8xf32> -> vector<8x8xf32>
    %171 = tpu.reciprocal %169 {approx = true} : vector<8x1xf32> -> vector<8x1xf32>
    %172 = vector.broadcast %171 : vector<8x1xf32> to vector<8x8xf32>
    %173 = arith.mulf %170, %172 : vector<8x8xf32>
    %174 = vector.extract_strided_slice %22 {offsets = [8, 0], sizes = [8, 32], strides = [1, 1]} : vector<32x32xf32> to vector<8x32xf32>
    %cst_67 = arith.constant dense<0.000000e+00> : vector<8x32xf32>
    %175 = tpu.matmul %173, %174, %cst_67 {dimension_numbers = #tpu.dot_dimension_numbers<[1], [0], [0], [1], [0, 0, 1, 1], [], []>} : vector<8x8xf32>, vector<8x32xf32>, vector<8x32xf32> -> vector<8x32xf32>
    %176 = arith.addf %156, %175 : vector<8x32xf32>
    %177 = vector.extract_strided_slice %10 {offsets = [8, 16], sizes = [8, 8], strides = [1, 1]} : vector<16x32xf32> to vector<8x8xf32>
    %178 = vector.extract_strided_slice %15 {offsets = [16, 16], sizes = [16, 8], strides = [1, 1]} : vector<32x32xf32> to vector<16x8xf32>
    %179 = vector.extract_strided_slice %20 {offsets = [16, 16], sizes = [16, 8], strides = [1, 1]} : vector<32x32xf32> to vector<16x8xf32>
    %cst_68 = arith.constant dense<0.000000e+00> : vector<8x16xf32>
    %180 = tpu.matmul %177, %178, %cst_68 {dimension_numbers = #tpu.dot_dimension_numbers<[1], [1], [0], [0], [0, 0, 1, 0], [], []>} : vector<8x8xf32>, vector<16x8xf32>, vector<8x16xf32> -> vector<8x16xf32>
    %181 = vector.broadcast %136 : vector<1x16xf32> to vector<8x16xf32>
    %182 = arith.addf %180, %181 : vector<8x16xf32>
    %cst_69 = arith.constant dense<0xFF800000> : vector<8xf32>
    %183 = vector.multi_reduction <maximumf>, %182, %cst_69 [1] : vector<8x16xf32> to vector<8xf32>
    %184 = vector.shape_cast %183 : vector<8xf32> to vector<8x1xf32>
    %185 = vector.broadcast %184 : vector<8x1xf32> to vector<8x16xf32>
    %186 = arith.subf %182, %185 : vector<8x16xf32>
    %187 = math.exp %186 : vector<8x16xf32>
    %cst_70 = arith.constant dense<0.000000e+00> : vector<8xf32>
    %188 = vector.multi_reduction <add>, %187, %cst_70 [1] : vector<8x16xf32> to vector<8xf32>
    %189 = vector.shape_cast %188 : vector<8xf32> to vector<8x1xf32>
    %cst_71 = arith.constant dense<0.000000e+00> : vector<8x8xf32>
    %190 = tpu.matmul %187, %179, %cst_71 {dimension_numbers = #tpu.dot_dimension_numbers<[1], [0], [0], [1], [0, 0, 1, 1], [], []>} : vector<8x16xf32>, vector<16x8xf32>, vector<8x8xf32> -> vector<8x8xf32>
    %191 = tpu.reciprocal %189 {approx = true} : vector<8x1xf32> -> vector<8x1xf32>
    %192 = vector.broadcast %191 : vector<8x1xf32> to vector<8x8xf32>
    %193 = arith.mulf %190, %192 : vector<8x8xf32>
    %194 = vector.extract_strided_slice %22 {offsets = [16, 0], sizes = [8, 32], strides = [1, 1]} : vector<32x32xf32> to vector<8x32xf32>
    %cst_72 = arith.constant dense<0.000000e+00> : vector<8x32xf32>
    %195 = tpu.matmul %193, %194, %cst_72 {dimension_numbers = #tpu.dot_dimension_numbers<[1], [0], [0], [1], [0, 0, 1, 1], [], []>} : vector<8x8xf32>, vector<8x32xf32>, vector<8x32xf32> -> vector<8x32xf32>
    %196 = arith.addf %176, %195 : vector<8x32xf32>
    %197 = vector.extract_strided_slice %10 {offsets = [8, 24], sizes = [8, 8], strides = [1, 1]} : vector<16x32xf32> to vector<8x8xf32>
    %198 = vector.extract_strided_slice %15 {offsets = [16, 24], sizes = [16, 8], strides = [1, 1]} : vector<32x32xf32> to vector<16x8xf32>
    %199 = vector.extract_strided_slice %20 {offsets = [16, 24], sizes = [16, 8], strides = [1, 1]} : vector<32x32xf32> to vector<16x8xf32>
    %cst_73 = arith.constant dense<0.000000e+00> : vector<8x16xf32>
    %200 = tpu.matmul %197, %198, %cst_73 {dimension_numbers = #tpu.dot_dimension_numbers<[1], [1], [0], [0], [0, 0, 1, 0], [], []>} : vector<8x8xf32>, vector<16x8xf32>, vector<8x16xf32> -> vector<8x16xf32>
    %201 = vector.broadcast %136 : vector<1x16xf32> to vector<8x16xf32>
    %202 = arith.addf %200, %201 : vector<8x16xf32>
    %cst_74 = arith.constant dense<0xFF800000> : vector<8xf32>
    %203 = vector.multi_reduction <maximumf>, %202, %cst_74 [1] : vector<8x16xf32> to vector<8xf32>
    %204 = vector.shape_cast %203 : vector<8xf32> to vector<8x1xf32>
    %205 = vector.broadcast %204 : vector<8x1xf32> to vector<8x16xf32>
    %206 = arith.subf %202, %205 : vector<8x16xf32>
    %207 = math.exp %206 : vector<8x16xf32>
    %cst_75 = arith.constant dense<0.000000e+00> : vector<8xf32>
    %208 = vector.multi_reduction <add>, %207, %cst_75 [1] : vector<8x16xf32> to vector<8xf32>
    %209 = vector.shape_cast %208 : vector<8xf32> to vector<8x1xf32>
    %cst_76 = arith.constant dense<0.000000e+00> : vector<8x8xf32>
    %210 = tpu.matmul %207, %199, %cst_76 {dimension_numbers = #tpu.dot_dimension_numbers<[1], [0], [0], [1], [0, 0, 1, 1], [], []>} : vector<8x16xf32>, vector<16x8xf32>, vector<8x8xf32> -> vector<8x8xf32>
    %211 = tpu.reciprocal %209 {approx = true} : vector<8x1xf32> -> vector<8x1xf32>
    %212 = vector.broadcast %211 : vector<8x1xf32> to vector<8x8xf32>
    %213 = arith.mulf %210, %212 : vector<8x8xf32>
    %214 = vector.extract_strided_slice %22 {offsets = [24, 0], sizes = [8, 32], strides = [1, 1]} : vector<32x32xf32> to vector<8x32xf32>
    %cst_77 = arith.constant dense<0.000000e+00> : vector<8x32xf32>
    %215 = tpu.matmul %213, %214, %cst_77 {dimension_numbers = #tpu.dot_dimension_numbers<[1], [0], [0], [1], [0, 0, 1, 1], [], []>} : vector<8x8xf32>, vector<8x32xf32>, vector<8x32xf32> -> vector<8x32xf32>
    %216 = arith.addf %196, %215 : vector<8x32xf32>
    %217 = vector.extract_strided_slice %0 {offsets = [8, 0], sizes = [8, 32], strides = [1, 1]} : vector<16x32xf32> to vector<8x32xf32>
    %218 = arith.addf %217, %216 : vector<8x32xf32>
    %cst_78 = arith.constant dense<0.000000e+00> : vector<8xf32>
    %219 = vector.multi_reduction <add>, %218, %cst_78 [1] : vector<8x32xf32> to vector<8xf32>
    %220 = vector.shape_cast %219 : vector<8xf32> to vector<8x1xf32>
    %cst_79 = arith.constant 3.200000e+01 : f32
    %221 = vector.broadcast %cst_79 : f32 to vector<8x1xf32>
    %222 = arith.divf %220, %221 : vector<8x1xf32>
    %223 = vector.broadcast %222 : vector<8x1xf32> to vector<8x32xf32>
    %224 = arith.subf %218, %223 : vector<8x32xf32>
    %225 = vector.broadcast %222 : vector<8x1xf32> to vector<8x32xf32>
    %226 = arith.subf %218, %225 : vector<8x32xf32>
    %227 = arith.mulf %224, %226 : vector<8x32xf32>
    %cst_80 = arith.constant dense<0.000000e+00> : vector<8xf32>
    %228 = vector.multi_reduction <add>, %227, %cst_80 [1] : vector<8x32xf32> to vector<8xf32>
    %229 = vector.shape_cast %228 : vector<8xf32> to vector<8x1xf32>
    %cst_81 = arith.constant 3.200000e+01 : f32
    %230 = vector.broadcast %cst_81 : f32 to vector<8x1xf32>
    %231 = arith.divf %229, %230 : vector<8x1xf32>
    %cst_82 = arith.constant 9.99999974E-6 : f32
    %232 = vector.broadcast %cst_82 : f32 to vector<8x1xf32>
    %233 = arith.addf %231, %232 : vector<8x1xf32>
    %234 = math.rsqrt %233 : vector<8x1xf32>
    %235 = vector.broadcast %222 : vector<8x1xf32> to vector<8x32xf32>
    %236 = arith.subf %218, %235 : vector<8x32xf32>
    %237 = vector.broadcast %234 : vector<8x1xf32> to vector<8x32xf32>
    %238 = arith.mulf %236, %237 : vector<8x32xf32>
    %239 = vector.broadcast %26 : vector<1x32xf32> to vector<8x32xf32>
    %240 = arith.mulf %238, %239 : vector<8x32xf32>
    %241 = vector.broadcast %27 : vector<1x32xf32> to vector<8x32xf32>
    %242 = arith.addf %240, %241 : vector<8x32xf32>
    %c8 = arith.constant 8 : index
    %c0_83 = arith.constant 0 : index
    %243 = vector.load %arg15[%c8, %c0_83] : memref<16x32xf32, #tpu.memory_space<vmem>>, vector<8x32xf32>
    tpu.vector_store %arg15[%c8, %c0_83], %242 {strides = array<i32>} : memref<16x32xf32, #tpu.memory_space<vmem>>, vector<8x32xf32>,
    return
  }
}

module attributes {stable_mosaic.version = 11 : i64} {
  func.func @_mha_block_kernel(%arg0: memref<16x32xf32, #tpu.memory_space<vmem>>, %arg1: memref<16x32xf32, #tpu.memory_space<vmem>>, %arg2: memref<16x32xf32, #tpu.memory_space<vmem>>, %arg3: memref<16x32xf32, #tpu.memory_space<vmem>>, %arg4: memref<2x8xf32, #tpu.memory_space<vmem>>, %arg5: memref<32x32xf32, #tpu.memory_space<vmem>>, %arg6: memref<1x32xf32, #tpu.memory_space<vmem>>, %arg7: memref<32x32xf32, #tpu.memory_space<vmem>>, %arg8: memref<1x32xf32, #tpu.memory_space<vmem>>, %arg9: memref<32x32xf32, #tpu.memory_space<vmem>>, %arg10: memref<1x32xf32, #tpu.memory_space<vmem>>, %arg11: memref<32x32xf32, #tpu.memory_space<vmem>>, %arg12: memref<1x32xf32, #tpu.memory_space<vmem>>, %arg13: memref<1x32xf32, #tpu.memory_space<vmem>>, %arg14: memref<1x32xf32, #tpu.memory_space<vmem>>, %arg15: memref<16x32xf32, #tpu.memory_space<vmem>>) attributes {dimension_semantics = [], scalar_prefetch = 0 : i64, scratch_operands = 0 : i64, tpu.core_type = #tpu.core_type<tc>} {
    %c0 = arith.constant 0 : index
    %c0_0 = arith.constant 0 : index
    %0 = vector.load %arg0[%c0, %c0_0] : memref<16x32xf32, #tpu.memory_space<vmem>>, vector<16x32xf32>
    %c0_1 = arith.constant 0 : index
    %c0_2 = arith.constant 0 : index
    %1 = vector.load %arg1[%c0_1, %c0_2] : memref<16x32xf32, #tpu.memory_space<vmem>>, vector<16x32xf32>
    %2 = arith.addf %0, %1 : vector<16x32xf32>
    %c0_3 = arith.constant 0 : index
    %c0_4 = arith.constant 0 : index
    %3 = vector.load %arg2[%c0_3, %c0_4] : memref<16x32xf32, #tpu.memory_space<vmem>>, vector<16x32xf32>
    %c0_5 = arith.constant 0 : index
    %c0_6 = arith.constant 0 : index
    %4 = vector.load %arg3[%c0_5, %c0_6] : memref<16x32xf32, #tpu.memory_space<vmem>>, vector<16x32xf32>
    %5 = arith.addf %3, %4 : vector<16x32xf32>
    %c0_7 = arith.constant 0 : index
    %c0_8 = arith.constant 0 : index
    %6 = vector.load %arg5[%c0_7, %c0_8] : memref<32x32xf32, #tpu.memory_space<vmem>>, vector<32x32xf32>
    %cst = arith.constant dense<0.000000e+00> : vector<16x32xf32>
    %7 = tpu.matmul %2, %6, %cst {dimension_numbers = #tpu.dot_dimension_numbers<[1], [0], [0], [1], [0, 0, 1, 1], [], []>} : vector<16x32xf32>, vector<32x32xf32>, vector<16x32xf32> -> vector<16x32xf32>
    %c0_9 = arith.constant 0 : index
    %c0_10 = arith.constant 0 : index
    %8 = vector.load %arg6[%c0_9, %c0_10] : memref<1x32xf32, #tpu.memory_space<vmem>>, vector<1x32xf32>
    %9 = vector.broadcast %8 : vector<1x32xf32> to vector<16x32xf32>
    %10 = arith.addf %7, %9 : vector<16x32xf32>
    %c0_11 = arith.constant 0 : index
    %c0_12 = arith.constant 0 : index
    %11 = vector.load %arg7[%c0_11, %c0_12] : memref<32x32xf32, #tpu.memory_space<vmem>>, vector<32x32xf32>
    %cst_13 = arith.constant dense<0.000000e+00> : vector<16x32xf32>
    %12 = tpu.matmul %5, %11, %cst_13 {dimension_numbers = #tpu.dot_dimension_numbers<[1], [0], [0], [1], [0, 0, 1, 1], [], []>} : vector<16x32xf32>, vector<32x32xf32>, vector<16x32xf32> -> vector<16x32xf32>
    %c0_14 = arith.constant 0 : index
    %c0_15 = arith.constant 0 : index
    %13 = vector.load %arg8[%c0_14, %c0_15] : memref<1x32xf32, #tpu.memory_space<vmem>>, vector<1x32xf32>
    %14 = vector.broadcast %13 : vector<1x32xf32> to vector<16x32xf32>
    %15 = arith.addf %12, %14 : vector<16x32xf32>
    %c0_16 = arith.constant 0 : index
    %c0_17 = arith.constant 0 : index
    %16 = vector.load %arg9[%c0_16, %c0_17] : memref<32x32xf32, #tpu.memory_space<vmem>>, vector<32x32xf32>
    %cst_18 = arith.constant dense<0.000000e+00> : vector<16x32xf32>
    %17 = tpu.matmul %3, %16, %cst_18 {dimension_numbers = #tpu.dot_dimension_numbers<[1], [0], [0], [1], [0, 0, 1, 1], [], []>} : vector<16x32xf32>, vector<32x32xf32>, vector<16x32xf32> -> vector<16x32xf32>
    %c0_19 = arith.constant 0 : index
    %c0_20 = arith.constant 0 : index
    %18 = vector.load %arg10[%c0_19, %c0_20] : memref<1x32xf32, #tpu.memory_space<vmem>>, vector<1x32xf32>
    %19 = vector.broadcast %18 : vector<1x32xf32> to vector<16x32xf32>
    %20 = arith.addf %17, %19 : vector<16x32xf32>
    %c0_21 = arith.constant 0 : index
    %c0_22 = arith.constant 0 : index
    %21 = vector.load %arg4[%c0_21, %c0_22] : memref<2x8xf32, #tpu.memory_space<vmem>>, vector<2x8xf32>
    %c0_23 = arith.constant 0 : index
    %c0_24 = arith.constant 0 : index
    %22 = vector.load %arg11[%c0_23, %c0_24] : memref<32x32xf32, #tpu.memory_space<vmem>>, vector<32x32xf32>
    %c0_25 = arith.constant 0 : index
    %c0_26 = arith.constant 0 : index
    %23 = vector.load %arg12[%c0_25, %c0_26] : memref<1x32xf32, #tpu.memory_space<vmem>>, vector<1x32xf32>
    %24 = vector.shape_cast %23 : vector<1x32xf32> to vector<1x32xf32>
    %25 = vector.broadcast %24 : vector<1x32xf32> to vector<8x32xf32>
    %c0_27 = arith.constant 0 : index
    %c0_28 = arith.constant 0 : index
    %26 = vector.load %arg13[%c0_27, %c0_28] : memref<1x32xf32, #tpu.memory_space<vmem>>, vector<1x32xf32>
    %c0_29 = arith.constant 0 : index
    %c0_30 = arith.constant 0 : index
    %27 = vector.load %arg14[%c0_29, %c0_30] : memref<1x32xf32, #tpu.memory_space<vmem>>, vector<1x32xf32>
    %28 = vector.extract_strided_slice %21 {offsets = [0, 0], sizes = [1, 8], strides = [1, 1]} : vector<2x8xf32> to vector<1x8xf32>
    %29 = vector.extract_strided_slice %10 {offsets = [0, 0], sizes = [8, 8], strides = [1, 1]} : vector<16x32xf32> to vector<8x8xf32>
    %30 = vector.extract_strided_slice %15 {offsets = [0, 0], sizes = [8, 8], strides = [1, 1]} : vector<16x32xf32> to vector<8x8xf32>
    %31 = vector.extract_strided_slice %20 {offsets = [0, 0], sizes = [8, 8], strides = [1, 1]} : vector<16x32xf32> to vector<8x8xf32>
    %cst_31 = arith.constant dense<0.000000e+00> : vector<8x8xf32>
    %32 = tpu.matmul %29, %30, %cst_31 {dimension_numbers = #tpu.dot_dimension_numbers<[1], [1], [0], [0], [0, 0, 1, 0], [], []>} : vector<8x8xf32>, vector<8x8xf32>, vector<8x8xf32> -> vector<8x8xf32>
    %33 = vector.broadcast %28 : vector<1x8xf32> to vector<8x8xf32>
    %34 = arith.addf %32, %33 : vector<8x8xf32>
    %cst_32 = arith.constant dense<0xFF800000> : vector<8xf32>
    %35 = vector.multi_reduction <maximumf>, %34, %cst_32 [1] : vector<8x8xf32> to vector<8xf32>
    %36 = vector.shape_cast %35 : vector<8xf32> to vector<8x1xf32>
    %37 = vector.broadcast %36 : vector<8x1xf32> to vector<8x8xf32>
    %38 = arith.subf %34, %37 : vector<8x8xf32>
    %39 = math.exp %38 : vector<8x8xf32>
    %cst_33 = arith.constant dense<0.000000e+00> : vector<8xf32>
    %40 = vector.multi_reduction <add>, %39, %cst_33 [1] : vector<8x8xf32> to vector<8xf32>
    %41 = vector.shape_cast %40 : vector<8xf32> to vector<8x1xf32>
    %cst_34 = arith.constant dense<0.000000e+00> : vector<8x8xf32>
    %42 = tpu.matmul %39, %31, %cst_34 {dimension_numbers = #tpu.dot_dimension_numbers<[1], [0], [0], [1], [0, 0, 1, 1], [], []>} : vector<8x8xf32>, vector<8x8xf32>, vector<8x8xf32> -> vector<8x8xf32>
    %43 = tpu.reciprocal %41 {approx = true} : vector<8x1xf32> -> vector<8x1xf32>
    %44 = vector.broadcast %43 : vector<8x1xf32> to vector<8x8xf32>
    %45 = arith.mulf %42, %44 : vector<8x8xf32>
    %46 = vector.extract_strided_slice %22 {offsets = [0, 0], sizes = [8, 32], strides = [1, 1]} : vector<32x32xf32> to vector<8x32xf32>
    %cst_35 = arith.constant dense<0.000000e+00> : vector<8x32xf32>
    %47 = tpu.matmul %45, %46, %cst_35 {dimension_numbers = #tpu.dot_dimension_numbers<[1], [0], [0], [1], [0, 0, 1, 1], [], []>} : vector<8x8xf32>, vector<8x32xf32>, vector<8x32xf32> -> vector<8x32xf32>
    %48 = arith.addf %25, %47 : vector<8x32xf32>
    %49 = vector.extract_strided_slice %10 {offsets = [0, 8], sizes = [8, 8], strides = [1, 1]} : vector<16x32xf32> to vector<8x8xf32>
    %50 = vector.extract_strided_slice %15 {offsets = [0, 8], sizes = [8, 8], strides = [1, 1]} : vector<16x32xf32> to vector<8x8xf32>
    %51 = vector.extract_strided_slice %20 {offsets = [0, 8], sizes = [8, 8], strides = [1, 1]} : vector<16x32xf32> to vector<8x8xf32>
    %cst_36 = arith.constant dense<0.000000e+00> : vector<8x8xf32>
    %52 = tpu.matmul %49, %50, %cst_36 {dimension_numbers = #tpu.dot_dimension_numbers<[1], [1], [0], [0], [0, 0, 1, 0], [], []>} : vector<8x8xf32>, vector<8x8xf32>, vector<8x8xf32> -> vector<8x8xf32>
    %53 = vector.broadcast %28 : vector<1x8xf32> to vector<8x8xf32>
    %54 = arith.addf %52, %53 : vector<8x8xf32>
    %cst_37 = arith.constant dense<0xFF800000> : vector<8xf32>
    %55 = vector.multi_reduction <maximumf>, %54, %cst_37 [1] : vector<8x8xf32> to vector<8xf32>
    %56 = vector.shape_cast %55 : vector<8xf32> to vector<8x1xf32>
    %57 = vector.broadcast %56 : vector<8x1xf32> to vector<8x8xf32>
    %58 = arith.subf %54, %57 : vector<8x8xf32>
    %59 = math.exp %58 : vector<8x8xf32>
    %cst_38 = arith.constant dense<0.000000e+00> : vector<8xf32>
    %60 = vector.multi_reduction <add>, %59, %cst_38 [1] : vector<8x8xf32> to vector<8xf32>
    %61 = vector.shape_cast %60 : vector<8xf32> to vector<8x1xf32>
    %cst_39 = arith.constant dense<0.000000e+00> : vector<8x8xf32>
    %62 = tpu.matmul %59, %51, %cst_39 {dimension_numbers = #tpu.dot_dimension_numbers<[1], [0], [0], [1], [0, 0, 1, 1], [], []>} : vector<8x8xf32>, vector<8x8xf32>, vector<8x8xf32> -> vector<8x8xf32>
    %63 = tpu.reciprocal %61 {approx = true} : vector<8x1xf32> -> vector<8x1xf32>
    %64 = vector.broadcast %63 : vector<8x1xf32> to vector<8x8xf32>
    %65 = arith.mulf %62, %64 : vector<8x8xf32>
    %66 = vector.extract_strided_slice %22 {offsets = [8, 0], sizes = [8, 32], strides = [1, 1]} : vector<32x32xf32> to vector<8x32xf32>
    %cst_40 = arith.constant dense<0.000000e+00> : vector<8x32xf32>
    %67 = tpu.matmul %65, %66, %cst_40 {dimension_numbers = #tpu.dot_dimension_numbers<[1], [0], [0], [1], [0, 0, 1, 1], [], []>} : vector<8x8xf32>, vector<8x32xf32>, vector<8x32xf32> -> vector<8x32xf32>
    %68 = arith.addf %48, %67 : vector<8x32xf32>
    %69 = vector.extract_strided_slice %10 {offsets = [0, 16], sizes = [8, 8], strides = [1, 1]} : vector<16x32xf32> to vector<8x8xf32>
    %70 = vector.extract_strided_slice %15 {offsets = [0, 16], sizes = [8, 8], strides = [1, 1]} : vector<16x32xf32> to vector<8x8xf32>
    %71 = vector.extract_strided_slice %20 {offsets = [0, 16], sizes = [8, 8], strides = [1, 1]} : vector<16x32xf32> to vector<8x8xf32>
    %cst_41 = arith.constant dense<0.000000e+00> : vector<8x8xf32>
    %72 = tpu.matmul %69, %70, %cst_41 {dimension_numbers = #tpu.dot_dimension_numbers<[1], [1], [0], [0], [0, 0, 1, 0], [], []>} : vector<8x8xf32>, vector<8x8xf32>, vector<8x8xf32> -> vector<8x8xf32>
    %73 = vector.broadcast %28 : vector<1x8xf32> to vector<8x8xf32>
    %74 = arith.addf %72, %73 : vector<8x8xf32>
    %cst_42 = arith.constant dense<0xFF800000> : vector<8xf32>
    %75 = vector.multi_reduction <maximumf>, %74, %cst_42 [1] : vector<8x8xf32> to vector<8xf32>
    %76 = vector.shape_cast %75 : vector<8xf32> to vector<8x1xf32>
    %77 = vector.broadcast %76 : vector<8x1xf32> to vector<8x8xf32>
    %78 = arith.subf %74, %77 : vector<8x8xf32>
    %79 = math.exp %78 : vector<8x8xf32>
    %cst_43 = arith.constant dense<0.000000e+00> : vector<8xf32>
    %80 = vector.multi_reduction <add>, %79, %cst_43 [1] : vector<8x8xf32> to vector<8xf32>
    %81 = vector.shape_cast %80 : vector<8xf32> to vector<8x1xf32>
    %cst_44 = arith.constant dense<0.000000e+00> : vector<8x8xf32>
    %82 = tpu.matmul %79, %71, %cst_44 {dimension_numbers = #tpu.dot_dimension_numbers<[1], [0], [0], [1], [0, 0, 1, 1], [], []>} : vector<8x8xf32>, vector<8x8xf32>, vector<8x8xf32> -> vector<8x8xf32>
    %83 = tpu.reciprocal %81 {approx = true} : vector<8x1xf32> -> vector<8x1xf32>
    %84 = vector.broadcast %83 : vector<8x1xf32> to vector<8x8xf32>
    %85 = arith.mulf %82, %84 : vector<8x8xf32>
    %86 = vector.extract_strided_slice %22 {offsets = [16, 0], sizes = [8, 32], strides = [1, 1]} : vector<32x32xf32> to vector<8x32xf32>
    %cst_45 = arith.constant dense<0.000000e+00> : vector<8x32xf32>
    %87 = tpu.matmul %85, %86, %cst_45 {dimension_numbers = #tpu.dot_dimension_numbers<[1], [0], [0], [1], [0, 0, 1, 1], [], []>} : vector<8x8xf32>, vector<8x32xf32>, vector<8x32xf32> -> vector<8x32xf32>
    %88 = arith.addf %68, %87 : vector<8x32xf32>
    %89 = vector.extract_strided_slice %10 {offsets = [0, 24], sizes = [8, 8], strides = [1, 1]} : vector<16x32xf32> to vector<8x8xf32>
    %90 = vector.extract_strided_slice %15 {offsets = [0, 24], sizes = [8, 8], strides = [1, 1]} : vector<16x32xf32> to vector<8x8xf32>
    %91 = vector.extract_strided_slice %20 {offsets = [0, 24], sizes = [8, 8], strides = [1, 1]} : vector<16x32xf32> to vector<8x8xf32>
    %cst_46 = arith.constant dense<0.000000e+00> : vector<8x8xf32>
    %92 = tpu.matmul %89, %90, %cst_46 {dimension_numbers = #tpu.dot_dimension_numbers<[1], [1], [0], [0], [0, 0, 1, 0], [], []>} : vector<8x8xf32>, vector<8x8xf32>, vector<8x8xf32> -> vector<8x8xf32>
    %93 = vector.broadcast %28 : vector<1x8xf32> to vector<8x8xf32>
    %94 = arith.addf %92, %93 : vector<8x8xf32>
    %cst_47 = arith.constant dense<0xFF800000> : vector<8xf32>
    %95 = vector.multi_reduction <maximumf>, %94, %cst_47 [1] : vector<8x8xf32> to vector<8xf32>
    %96 = vector.shape_cast %95 : vector<8xf32> to vector<8x1xf32>
    %97 = vector.broadcast %96 : vector<8x1xf32> to vector<8x8xf32>
    %98 = arith.subf %94, %97 : vector<8x8xf32>
    %99 = math.exp %98 : vector<8x8xf32>
    %cst_48 = arith.constant dense<0.000000e+00> : vector<8xf32>
    %100 = vector.multi_reduction <add>, %99, %cst_48 [1] : vector<8x8xf32> to vector<8xf32>
    %101 = vector.shape_cast %100 : vector<8xf32> to vector<8x1xf32>
    %cst_49 = arith.constant dense<0.000000e+00> : vector<8x8xf32>
    %102 = tpu.matmul %99, %91, %cst_49 {dimension_numbers = #tpu.dot_dimension_numbers<[1], [0], [0], [1], [0, 0, 1, 1], [], []>} : vector<8x8xf32>, vector<8x8xf32>, vector<8x8xf32> -> vector<8x8xf32>
    %103 = tpu.reciprocal %101 {approx = true} : vector<8x1xf32> -> vector<8x1xf32>
    %104 = vector.broadcast %103 : vector<8x1xf32> to vector<8x8xf32>
    %105 = arith.mulf %102, %104 : vector<8x8xf32>
    %106 = vector.extract_strided_slice %22 {offsets = [24, 0], sizes = [8, 32], strides = [1, 1]} : vector<32x32xf32> to vector<8x32xf32>
    %cst_50 = arith.constant dense<0.000000e+00> : vector<8x32xf32>
    %107 = tpu.matmul %105, %106, %cst_50 {dimension_numbers = #tpu.dot_dimension_numbers<[1], [0], [0], [1], [0, 0, 1, 1], [], []>} : vector<8x8xf32>, vector<8x32xf32>, vector<8x32xf32> -> vector<8x32xf32>
    %108 = arith.addf %88, %107 : vector<8x32xf32>
    %109 = vector.extract_strided_slice %0 {offsets = [0, 0], sizes = [8, 32], strides = [1, 1]} : vector<16x32xf32> to vector<8x32xf32>
    %110 = arith.addf %109, %108 : vector<8x32xf32>
    %cst_51 = arith.constant dense<0.000000e+00> : vector<8xf32>
    %111 = vector.multi_reduction <add>, %110, %cst_51 [1] : vector<8x32xf32> to vector<8xf32>
    %112 = vector.shape_cast %111 : vector<8xf32> to vector<8x1xf32>
    %cst_52 = arith.constant 3.200000e+01 : f32
    %113 = vector.broadcast %cst_52 : f32 to vector<8x1xf32>
    %114 = arith.divf %112, %113 : vector<8x1xf32>
    %115 = vector.broadcast %114 : vector<8x1xf32> to vector<8x32xf32>
    %116 = arith.subf %110, %115 : vector<8x32xf32>
    %117 = vector.broadcast %114 : vector<8x1xf32> to vector<8x32xf32>
    %118 = arith.subf %110, %117 : vector<8x32xf32>
    %119 = arith.mulf %116, %118 : vector<8x32xf32>
    %cst_53 = arith.constant dense<0.000000e+00> : vector<8xf32>
    %120 = vector.multi_reduction <add>, %119, %cst_53 [1] : vector<8x32xf32> to vector<8xf32>
    %121 = vector.shape_cast %120 : vector<8xf32> to vector<8x1xf32>
    %cst_54 = arith.constant 3.200000e+01 : f32
    %122 = vector.broadcast %cst_54 : f32 to vector<8x1xf32>
    %123 = arith.divf %121, %122 : vector<8x1xf32>
    %cst_55 = arith.constant 9.99999974E-6 : f32
    %124 = vector.broadcast %cst_55 : f32 to vector<8x1xf32>
    %125 = arith.addf %123, %124 : vector<8x1xf32>
    %126 = math.rsqrt %125 : vector<8x1xf32>
    %127 = vector.broadcast %114 : vector<8x1xf32> to vector<8x32xf32>
    %128 = arith.subf %110, %127 : vector<8x32xf32>
    %129 = vector.broadcast %126 : vector<8x1xf32> to vector<8x32xf32>
    %130 = arith.mulf %128, %129 : vector<8x32xf32>
    %131 = vector.broadcast %26 : vector<1x32xf32> to vector<8x32xf32>
    %132 = arith.mulf %130, %131 : vector<8x32xf32>
    %133 = vector.broadcast %27 : vector<1x32xf32> to vector<8x32xf32>
    %134 = arith.addf %132, %133 : vector<8x32xf32>
    %c0_56 = arith.constant 0 : index
    %c0_57 = arith.constant 0 : index
    %135 = vector.load %arg15[%c0_56, %c0_57] : memref<16x32xf32, #tpu.memory_space<vmem>>, vector<8x32xf32>
    tpu.vector_store %arg15[%c0_56, %c0_57], %134 {strides = array<i32>} : memref<16x32xf32, #tpu.memory_space<vmem>>, vector<8x32xf32>,
    %136 = vector.extract_strided_slice %21 {offsets = [1, 0], sizes = [1, 8], strides = [1, 1]} : vector<2x8xf32> to vector<1x8xf32>
    %137 = vector.extract_strided_slice %10 {offsets = [8, 0], sizes = [8, 8], strides = [1, 1]} : vector<16x32xf32> to vector<8x8xf32>
    %138 = vector.extract_strided_slice %15 {offsets = [8, 0], sizes = [8, 8], strides = [1, 1]} : vector<16x32xf32> to vector<8x8xf32>
    %139 = vector.extract_strided_slice %20 {offsets = [8, 0], sizes = [8, 8], strides = [1, 1]} : vector<16x32xf32> to vector<8x8xf32>
    %cst_58 = arith.constant dense<0.000000e+00> : vector<8x8xf32>
    %140 = tpu.matmul %137, %138, %cst_58 {dimension_numbers = #tpu.dot_dimension_numbers<[1], [1], [0], [0], [0, 0, 1, 0], [], []>} : vector<8x8xf32>, vector<8x8xf32>, vector<8x8xf32> -> vector<8x8xf32>
    %141 = vector.broadcast %136 : vector<1x8xf32> to vector<8x8xf32>
    %142 = arith.addf %140, %141 : vector<8x8xf32>
    %cst_59 = arith.constant dense<0xFF800000> : vector<8xf32>
    %143 = vector.multi_reduction <maximumf>, %142, %cst_59 [1] : vector<8x8xf32> to vector<8xf32>
    %144 = vector.shape_cast %143 : vector<8xf32> to vector<8x1xf32>
    %145 = vector.broadcast %144 : vector<8x1xf32> to vector<8x8xf32>
    %146 = arith.subf %142, %145 : vector<8x8xf32>
    %147 = math.exp %146 : vector<8x8xf32>
    %cst_60 = arith.constant dense<0.000000e+00> : vector<8xf32>
    %148 = vector.multi_reduction <add>, %147, %cst_60 [1] : vector<8x8xf32> to vector<8xf32>
    %149 = vector.shape_cast %148 : vector<8xf32> to vector<8x1xf32>
    %cst_61 = arith.constant dense<0.000000e+00> : vector<8x8xf32>
    %150 = tpu.matmul %147, %139, %cst_61 {dimension_numbers = #tpu.dot_dimension_numbers<[1], [0], [0], [1], [0, 0, 1, 1], [], []>} : vector<8x8xf32>, vector<8x8xf32>, vector<8x8xf32> -> vector<8x8xf32>
    %151 = tpu.reciprocal %149 {approx = true} : vector<8x1xf32> -> vector<8x1xf32>
    %152 = vector.broadcast %151 : vector<8x1xf32> to vector<8x8xf32>
    %153 = arith.mulf %150, %152 : vector<8x8xf32>
    %154 = vector.extract_strided_slice %22 {offsets = [0, 0], sizes = [8, 32], strides = [1, 1]} : vector<32x32xf32> to vector<8x32xf32>
    %cst_62 = arith.constant dense<0.000000e+00> : vector<8x32xf32>
    %155 = tpu.matmul %153, %154, %cst_62 {dimension_numbers = #tpu.dot_dimension_numbers<[1], [0], [0], [1], [0, 0, 1, 1], [], []>} : vector<8x8xf32>, vector<8x32xf32>, vector<8x32xf32> -> vector<8x32xf32>
    %156 = arith.addf %25, %155 : vector<8x32xf32>
    %157 = vector.extract_strided_slice %10 {offsets = [8, 8], sizes = [8, 8], strides = [1, 1]} : vector<16x32xf32> to vector<8x8xf32>
    %158 = vector.extract_strided_slice %15 {offsets = [8, 8], sizes = [8, 8], strides = [1, 1]} : vector<16x32xf32> to vector<8x8xf32>
    %159 = vector.extract_strided_slice %20 {offsets = [8, 8], sizes = [8, 8], strides = [1, 1]} : vector<16x32xf32> to vector<8x8xf32>
    %cst_63 = arith.constant dense<0.000000e+00> : vector<8x8xf32>
    %160 = tpu.matmul %157, %158, %cst_63 {dimension_numbers = #tpu.dot_dimension_numbers<[1], [1], [0], [0], [0, 0, 1, 0], [], []>} : vector<8x8xf32>, vector<8x8xf32>, vector<8x8xf32> -> vector<8x8xf32>
    %161 = vector.broadcast %136 : vector<1x8xf32> to vector<8x8xf32>
    %162 = arith.addf %160, %161 : vector<8x8xf32>
    %cst_64 = arith.constant dense<0xFF800000> : vector<8xf32>
    %163 = vector.multi_reduction <maximumf>, %162, %cst_64 [1] : vector<8x8xf32> to vector<8xf32>
    %164 = vector.shape_cast %163 : vector<8xf32> to vector<8x1xf32>
    %165 = vector.broadcast %164 : vector<8x1xf32> to vector<8x8xf32>
    %166 = arith.subf %162, %165 : vector<8x8xf32>
    %167 = math.exp %166 : vector<8x8xf32>
    %cst_65 = arith.constant dense<0.000000e+00> : vector<8xf32>
    %168 = vector.multi_reduction <add>, %167, %cst_65 [1] : vector<8x8xf32> to vector<8xf32>
    %169 = vector.shape_cast %168 : vector<8xf32> to vector<8x1xf32>
    %cst_66 = arith.constant dense<0.000000e+00> : vector<8x8xf32>
    %170 = tpu.matmul %167, %159, %cst_66 {dimension_numbers = #tpu.dot_dimension_numbers<[1], [0], [0], [1], [0, 0, 1, 1], [], []>} : vector<8x8xf32>, vector<8x8xf32>, vector<8x8xf32> -> vector<8x8xf32>
    %171 = tpu.reciprocal %169 {approx = true} : vector<8x1xf32> -> vector<8x1xf32>
    %172 = vector.broadcast %171 : vector<8x1xf32> to vector<8x8xf32>
    %173 = arith.mulf %170, %172 : vector<8x8xf32>
    %174 = vector.extract_strided_slice %22 {offsets = [8, 0], sizes = [8, 32], strides = [1, 1]} : vector<32x32xf32> to vector<8x32xf32>
    %cst_67 = arith.constant dense<0.000000e+00> : vector<8x32xf32>
    %175 = tpu.matmul %173, %174, %cst_67 {dimension_numbers = #tpu.dot_dimension_numbers<[1], [0], [0], [1], [0, 0, 1, 1], [], []>} : vector<8x8xf32>, vector<8x32xf32>, vector<8x32xf32> -> vector<8x32xf32>
    %176 = arith.addf %156, %175 : vector<8x32xf32>
    %177 = vector.extract_strided_slice %10 {offsets = [8, 16], sizes = [8, 8], strides = [1, 1]} : vector<16x32xf32> to vector<8x8xf32>
    %178 = vector.extract_strided_slice %15 {offsets = [8, 16], sizes = [8, 8], strides = [1, 1]} : vector<16x32xf32> to vector<8x8xf32>
    %179 = vector.extract_strided_slice %20 {offsets = [8, 16], sizes = [8, 8], strides = [1, 1]} : vector<16x32xf32> to vector<8x8xf32>
    %cst_68 = arith.constant dense<0.000000e+00> : vector<8x8xf32>
    %180 = tpu.matmul %177, %178, %cst_68 {dimension_numbers = #tpu.dot_dimension_numbers<[1], [1], [0], [0], [0, 0, 1, 0], [], []>} : vector<8x8xf32>, vector<8x8xf32>, vector<8x8xf32> -> vector<8x8xf32>
    %181 = vector.broadcast %136 : vector<1x8xf32> to vector<8x8xf32>
    %182 = arith.addf %180, %181 : vector<8x8xf32>
    %cst_69 = arith.constant dense<0xFF800000> : vector<8xf32>
    %183 = vector.multi_reduction <maximumf>, %182, %cst_69 [1] : vector<8x8xf32> to vector<8xf32>
    %184 = vector.shape_cast %183 : vector<8xf32> to vector<8x1xf32>
    %185 = vector.broadcast %184 : vector<8x1xf32> to vector<8x8xf32>
    %186 = arith.subf %182, %185 : vector<8x8xf32>
    %187 = math.exp %186 : vector<8x8xf32>
    %cst_70 = arith.constant dense<0.000000e+00> : vector<8xf32>
    %188 = vector.multi_reduction <add>, %187, %cst_70 [1] : vector<8x8xf32> to vector<8xf32>
    %189 = vector.shape_cast %188 : vector<8xf32> to vector<8x1xf32>
    %cst_71 = arith.constant dense<0.000000e+00> : vector<8x8xf32>
    %190 = tpu.matmul %187, %179, %cst_71 {dimension_numbers = #tpu.dot_dimension_numbers<[1], [0], [0], [1], [0, 0, 1, 1], [], []>} : vector<8x8xf32>, vector<8x8xf32>, vector<8x8xf32> -> vector<8x8xf32>
    %191 = tpu.reciprocal %189 {approx = true} : vector<8x1xf32> -> vector<8x1xf32>
    %192 = vector.broadcast %191 : vector<8x1xf32> to vector<8x8xf32>
    %193 = arith.mulf %190, %192 : vector<8x8xf32>
    %194 = vector.extract_strided_slice %22 {offsets = [16, 0], sizes = [8, 32], strides = [1, 1]} : vector<32x32xf32> to vector<8x32xf32>
    %cst_72 = arith.constant dense<0.000000e+00> : vector<8x32xf32>
    %195 = tpu.matmul %193, %194, %cst_72 {dimension_numbers = #tpu.dot_dimension_numbers<[1], [0], [0], [1], [0, 0, 1, 1], [], []>} : vector<8x8xf32>, vector<8x32xf32>, vector<8x32xf32> -> vector<8x32xf32>
    %196 = arith.addf %176, %195 : vector<8x32xf32>
    %197 = vector.extract_strided_slice %10 {offsets = [8, 24], sizes = [8, 8], strides = [1, 1]} : vector<16x32xf32> to vector<8x8xf32>
    %198 = vector.extract_strided_slice %15 {offsets = [8, 24], sizes = [8, 8], strides = [1, 1]} : vector<16x32xf32> to vector<8x8xf32>
    %199 = vector.extract_strided_slice %20 {offsets = [8, 24], sizes = [8, 8], strides = [1, 1]} : vector<16x32xf32> to vector<8x8xf32>
    %cst_73 = arith.constant dense<0.000000e+00> : vector<8x8xf32>
    %200 = tpu.matmul %197, %198, %cst_73 {dimension_numbers = #tpu.dot_dimension_numbers<[1], [1], [0], [0], [0, 0, 1, 0], [], []>} : vector<8x8xf32>, vector<8x8xf32>, vector<8x8xf32> -> vector<8x8xf32>
    %201 = vector.broadcast %136 : vector<1x8xf32> to vector<8x8xf32>
    %202 = arith.addf %200, %201 : vector<8x8xf32>
    %cst_74 = arith.constant dense<0xFF800000> : vector<8xf32>
    %203 = vector.multi_reduction <maximumf>, %202, %cst_74 [1] : vector<8x8xf32> to vector<8xf32>
    %204 = vector.shape_cast %203 : vector<8xf32> to vector<8x1xf32>
    %205 = vector.broadcast %204 : vector<8x1xf32> to vector<8x8xf32>
    %206 = arith.subf %202, %205 : vector<8x8xf32>
    %207 = math.exp %206 : vector<8x8xf32>
    %cst_75 = arith.constant dense<0.000000e+00> : vector<8xf32>
    %208 = vector.multi_reduction <add>, %207, %cst_75 [1] : vector<8x8xf32> to vector<8xf32>
    %209 = vector.shape_cast %208 : vector<8xf32> to vector<8x1xf32>
    %cst_76 = arith.constant dense<0.000000e+00> : vector<8x8xf32>
    %210 = tpu.matmul %207, %199, %cst_76 {dimension_numbers = #tpu.dot_dimension_numbers<[1], [0], [0], [1], [0, 0, 1, 1], [], []>} : vector<8x8xf32>, vector<8x8xf32>, vector<8x8xf32> -> vector<8x8xf32>
    %211 = tpu.reciprocal %209 {approx = true} : vector<8x1xf32> -> vector<8x1xf32>
    %212 = vector.broadcast %211 : vector<8x1xf32> to vector<8x8xf32>
    %213 = arith.mulf %210, %212 : vector<8x8xf32>
    %214 = vector.extract_strided_slice %22 {offsets = [24, 0], sizes = [8, 32], strides = [1, 1]} : vector<32x32xf32> to vector<8x32xf32>
    %cst_77 = arith.constant dense<0.000000e+00> : vector<8x32xf32>
    %215 = tpu.matmul %213, %214, %cst_77 {dimension_numbers = #tpu.dot_dimension_numbers<[1], [0], [0], [1], [0, 0, 1, 1], [], []>} : vector<8x8xf32>, vector<8x32xf32>, vector<8x32xf32> -> vector<8x32xf32>
    %216 = arith.addf %196, %215 : vector<8x32xf32>
    %217 = vector.extract_strided_slice %0 {offsets = [8, 0], sizes = [8, 32], strides = [1, 1]} : vector<16x32xf32> to vector<8x32xf32>
    %218 = arith.addf %217, %216 : vector<8x32xf32>
    %cst_78 = arith.constant dense<0.000000e+00> : vector<8xf32>
    %219 = vector.multi_reduction <add>, %218, %cst_78 [1] : vector<8x32xf32> to vector<8xf32>
    %220 = vector.shape_cast %219 : vector<8xf32> to vector<8x1xf32>
    %cst_79 = arith.constant 3.200000e+01 : f32
    %221 = vector.broadcast %cst_79 : f32 to vector<8x1xf32>
    %222 = arith.divf %220, %221 : vector<8x1xf32>
    %223 = vector.broadcast %222 : vector<8x1xf32> to vector<8x32xf32>
    %224 = arith.subf %218, %223 : vector<8x32xf32>
    %225 = vector.broadcast %222 : vector<8x1xf32> to vector<8x32xf32>
    %226 = arith.subf %218, %225 : vector<8x32xf32>
    %227 = arith.mulf %224, %226 : vector<8x32xf32>
    %cst_80 = arith.constant dense<0.000000e+00> : vector<8xf32>
    %228 = vector.multi_reduction <add>, %227, %cst_80 [1] : vector<8x32xf32> to vector<8xf32>
    %229 = vector.shape_cast %228 : vector<8xf32> to vector<8x1xf32>
    %cst_81 = arith.constant 3.200000e+01 : f32
    %230 = vector.broadcast %cst_81 : f32 to vector<8x1xf32>
    %231 = arith.divf %229, %230 : vector<8x1xf32>
    %cst_82 = arith.constant 9.99999974E-6 : f32
    %232 = vector.broadcast %cst_82 : f32 to vector<8x1xf32>
    %233 = arith.addf %231, %232 : vector<8x1xf32>
    %234 = math.rsqrt %233 : vector<8x1xf32>
    %235 = vector.broadcast %222 : vector<8x1xf32> to vector<8x32xf32>
    %236 = arith.subf %218, %235 : vector<8x32xf32>
    %237 = vector.broadcast %234 : vector<8x1xf32> to vector<8x32xf32>
    %238 = arith.mulf %236, %237 : vector<8x32xf32>
    %239 = vector.broadcast %26 : vector<1x32xf32> to vector<8x32xf32>
    %240 = arith.mulf %238, %239 : vector<8x32xf32>
    %241 = vector.broadcast %27 : vector<1x32xf32> to vector<8x32xf32>
    %242 = arith.addf %240, %241 : vector<8x32xf32>
    %c8 = arith.constant 8 : index
    %c0_83 = arith.constant 0 : index
    %243 = vector.load %arg15[%c8, %c0_83] : memref<16x32xf32, #tpu.memory_space<vmem>>, vector<8x32xf32>
    tpu.vector_store %arg15[%c8, %c0_83], %242 {strides = array<i32>} : memref<16x32xf32, #tpu.memory_space<vmem>>, vector<8x32xf32>,
    return
  }
}

module attributes {stable_mosaic.version = 11 : i64} {
  func.func @_ffn_block_kernel(%arg0: memref<16x32xf32, #tpu.memory_space<vmem>>, %arg1: memref<32x64xf32, #tpu.memory_space<vmem>>, %arg2: memref<1x64xf32, #tpu.memory_space<vmem>>, %arg3: memref<64x32xf32, #tpu.memory_space<vmem>>, %arg4: memref<1x32xf32, #tpu.memory_space<vmem>>, %arg5: memref<1x32xf32, #tpu.memory_space<vmem>>, %arg6: memref<1x32xf32, #tpu.memory_space<vmem>>, %arg7: memref<16x32xf32, #tpu.memory_space<vmem>>) attributes {dimension_semantics = [], scalar_prefetch = 0 : i64, scratch_operands = 0 : i64, tpu.core_type = #tpu.core_type<tc>} {
    %c0 = arith.constant 0 : index
    %c0_0 = arith.constant 0 : index
    %0 = vector.load %arg0[%c0, %c0_0] : memref<16x32xf32, #tpu.memory_space<vmem>>, vector<16x32xf32>
    %c0_1 = arith.constant 0 : index
    %c0_2 = arith.constant 0 : index
    %1 = vector.load %arg1[%c0_1, %c0_2] : memref<32x64xf32, #tpu.memory_space<vmem>>, vector<32x64xf32>
    %cst = arith.constant dense<0.000000e+00> : vector<16x64xf32>
    %2 = tpu.matmul %0, %1, %cst {dimension_numbers = #tpu.dot_dimension_numbers<[1], [0], [0], [1], [0, 0, 1, 1], [], []>} : vector<16x32xf32>, vector<32x64xf32>, vector<16x64xf32> -> vector<16x64xf32>
    %c0_3 = arith.constant 0 : index
    %c0_4 = arith.constant 0 : index
    %3 = vector.load %arg2[%c0_3, %c0_4] : memref<1x64xf32, #tpu.memory_space<vmem>>, vector<1x64xf32>
    %4 = vector.broadcast %3 : vector<1x64xf32> to vector<16x64xf32>
    %5 = arith.addf %2, %4 : vector<16x64xf32>
    %cst_5 = arith.constant 0.000000e+00 : f32
    %6 = vector.broadcast %cst_5 : f32 to vector<16x64xf32>
    %7 = arith.maximumf %5, %6 : vector<16x64xf32>
    %c0_6 = arith.constant 0 : index
    %c0_7 = arith.constant 0 : index
    %8 = vector.load %arg3[%c0_6, %c0_7] : memref<64x32xf32, #tpu.memory_space<vmem>>, vector<64x32xf32>
    %cst_8 = arith.constant dense<0.000000e+00> : vector<16x32xf32>
    %9 = tpu.matmul %7, %8, %cst_8 {dimension_numbers = #tpu.dot_dimension_numbers<[1], [0], [0], [1], [0, 0, 1, 1], [], []>} : vector<16x64xf32>, vector<64x32xf32>, vector<16x32xf32> -> vector<16x32xf32>
    %10 = arith.addf %0, %9 : vector<16x32xf32>
    %c0_9 = arith.constant 0 : index
    %c0_10 = arith.constant 0 : index
    %11 = vector.load %arg4[%c0_9, %c0_10] : memref<1x32xf32, #tpu.memory_space<vmem>>, vector<1x32xf32>
    %12 = vector.broadcast %11 : vector<1x32xf32> to vector<16x32xf32>
    %13 = arith.addf %10, %12 : vector<16x32xf32>
    %c0_11 = arith.constant 0 : index
    %c0_12 = arith.constant 0 : index
    %14 = vector.load %arg5[%c0_11, %c0_12] : memref<1x32xf32, #tpu.memory_space<vmem>>, vector<1x32xf32>
    %c0_13 = arith.constant 0 : index
    %c0_14 = arith.constant 0 : index
    %15 = vector.load %arg6[%c0_13, %c0_14] : memref<1x32xf32, #tpu.memory_space<vmem>>, vector<1x32xf32>
    %cst_15 = arith.constant dense<0.000000e+00> : vector<16xf32>
    %16 = vector.multi_reduction <add>, %13, %cst_15 [1] : vector<16x32xf32> to vector<16xf32>
    %17 = vector.shape_cast %16 : vector<16xf32> to vector<16x1xf32>
    %cst_16 = arith.constant 3.200000e+01 : f32
    %18 = vector.broadcast %cst_16 : f32 to vector<16x1xf32>
    %19 = arith.divf %17, %18 : vector<16x1xf32>
    %20 = vector.broadcast %19 : vector<16x1xf32> to vector<16x32xf32>
    %21 = arith.subf %13, %20 : vector<16x32xf32>
    %22 = vector.broadcast %19 : vector<16x1xf32> to vector<16x32xf32>
    %23 = arith.subf %13, %22 : vector<16x32xf32>
    %24 = arith.mulf %21, %23 : vector<16x32xf32>
    %cst_17 = arith.constant dense<0.000000e+00> : vector<16xf32>
    %25 = vector.multi_reduction <add>, %24, %cst_17 [1] : vector<16x32xf32> to vector<16xf32>
    %26 = vector.shape_cast %25 : vector<16xf32> to vector<16x1xf32>
    %cst_18 = arith.constant 3.200000e+01 : f32
    %27 = vector.broadcast %cst_18 : f32 to vector<16x1xf32>
    %28 = arith.divf %26, %27 : vector<16x1xf32>
    %cst_19 = arith.constant 9.99999974E-6 : f32
    %29 = vector.broadcast %cst_19 : f32 to vector<16x1xf32>
    %30 = arith.addf %28, %29 : vector<16x1xf32>
    %31 = math.rsqrt %30 : vector<16x1xf32>
    %32 = vector.broadcast %19 : vector<16x1xf32> to vector<16x32xf32>
    %33 = arith.subf %13, %32 : vector<16x32xf32>
    %34 = vector.broadcast %31 : vector<16x1xf32> to vector<16x32xf32>
    %35 = arith.mulf %33, %34 : vector<16x32xf32>
    %36 = vector.broadcast %14 : vector<1x32xf32> to vector<16x32xf32>
    %37 = arith.mulf %35, %36 : vector<16x32xf32>
    %38 = vector.broadcast %15 : vector<1x32xf32> to vector<16x32xf32>
    %39 = arith.addf %37, %38 : vector<16x32xf32>
    %c0_20 = arith.constant 0 : index
    %c0_21 = arith.constant 0 : index
    %40 = vector.load %arg7[%c0_20, %c0_21] : memref<16x32xf32, #tpu.memory_space<vmem>>, vector<16x32xf32>
    tpu.vector_store %arg7[%c0_20, %c0_21], %39 {strides = array<i32>} : memref<16x32xf32, #tpu.memory_space<vmem>>, vector<16x32xf32>,
    return
  }
}

module attributes {stable_mosaic.version = 11 : i64} {
  func.func @_layernorm_kernel(%arg0: memref<16x32xf32, #tpu.memory_space<vmem>>, %arg1: memref<1x32xf32, #tpu.memory_space<vmem>>, %arg2: memref<1x32xf32, #tpu.memory_space<vmem>>, %arg3: memref<16x32xf32, #tpu.memory_space<vmem>>) attributes {dimension_semantics = [], scalar_prefetch = 0 : i64, scratch_operands = 0 : i64, tpu.core_type = #tpu.core_type<tc>} {
    %c0 = arith.constant 0 : index
    %c0_0 = arith.constant 0 : index
    %0 = vector.load %arg0[%c0, %c0_0] : memref<16x32xf32, #tpu.memory_space<vmem>>, vector<16x32xf32>
    %c0_1 = arith.constant 0 : index
    %c0_2 = arith.constant 0 : index
    %1 = vector.load %arg1[%c0_1, %c0_2] : memref<1x32xf32, #tpu.memory_space<vmem>>, vector<1x32xf32>
    %c0_3 = arith.constant 0 : index
    %c0_4 = arith.constant 0 : index
    %2 = vector.load %arg2[%c0_3, %c0_4] : memref<1x32xf32, #tpu.memory_space<vmem>>, vector<1x32xf32>
    %cst = arith.constant dense<0.000000e+00> : vector<16xf32>
    %3 = vector.multi_reduction <add>, %0, %cst [1] : vector<16x32xf32> to vector<16xf32>
    %4 = vector.shape_cast %3 : vector<16xf32> to vector<16x1xf32>
    %cst_5 = arith.constant 3.200000e+01 : f32
    %5 = vector.broadcast %cst_5 : f32 to vector<16x1xf32>
    %6 = arith.divf %4, %5 : vector<16x1xf32>
    %7 = vector.broadcast %6 : vector<16x1xf32> to vector<16x32xf32>
    %8 = arith.subf %0, %7 : vector<16x32xf32>
    %9 = vector.broadcast %6 : vector<16x1xf32> to vector<16x32xf32>
    %10 = arith.subf %0, %9 : vector<16x32xf32>
    %11 = arith.mulf %8, %10 : vector<16x32xf32>
    %cst_6 = arith.constant dense<0.000000e+00> : vector<16xf32>
    %12 = vector.multi_reduction <add>, %11, %cst_6 [1] : vector<16x32xf32> to vector<16xf32>
    %13 = vector.shape_cast %12 : vector<16xf32> to vector<16x1xf32>
    %cst_7 = arith.constant 3.200000e+01 : f32
    %14 = vector.broadcast %cst_7 : f32 to vector<16x1xf32>
    %15 = arith.divf %13, %14 : vector<16x1xf32>
    %cst_8 = arith.constant 9.99999974E-6 : f32
    %16 = vector.broadcast %cst_8 : f32 to vector<16x1xf32>
    %17 = arith.addf %15, %16 : vector<16x1xf32>
    %18 = math.rsqrt %17 : vector<16x1xf32>
    %19 = vector.broadcast %6 : vector<16x1xf32> to vector<16x32xf32>
    %20 = arith.subf %0, %19 : vector<16x32xf32>
    %21 = vector.broadcast %18 : vector<16x1xf32> to vector<16x32xf32>
    %22 = arith.mulf %20, %21 : vector<16x32xf32>
    %23 = vector.broadcast %1 : vector<1x32xf32> to vector<16x32xf32>
    %24 = arith.mulf %22, %23 : vector<16x32xf32>
    %25 = vector.broadcast %2 : vector<1x32xf32> to vector<16x32xf32>
    %26 = arith.addf %24, %25 : vector<16x32xf32>
    %c0_9 = arith.constant 0 : index
    %c0_10 = arith.constant 0 : index
    %27 = vector.load %arg3[%c0_9, %c0_10] : memref<16x32xf32, #tpu.memory_space<vmem>>, vector<16x32xf32>
    tpu.vector_store %arg3[%c0_9, %c0_10], %26 {strides = array<i32>} : memref<16x32xf32, #tpu.memory_space<vmem>>, vector<16x32xf32>,
    return
  }
}

</mosaic_0001>

<llo_original>
// kernel: transformer_forward.12
$region0: #{transformer_forward.12}
  #allocation0 [shape = 'u32[]', space=smem, size = 0x4, offset = 0x4, fixed_abs, tag = 'smem constant byte address 0x4 - core index']
  #allocation1 [shape = 'u32[144,128]{1,0:T(1,128)}', space=vmem, size = 0x12000, scoped, tag = 'internal scratch']
  %s0 = inlined_call_operand.vmem [shape: f32[32,32], index: 0, kind: input, shape index: {}]
  %s1 = inlined_call_operand.vmem [shape: f32[32,64], index: 1, kind: input, shape index: {}]
  %s2 = inlined_call_operand.vmem [shape: f32[1,64], index: 2, kind: input, shape index: {}]
  %s3 = inlined_call_operand.vmem [shape: f32[64,32], index: 3, kind: input, shape index: {}]
  %s4 = inlined_call_operand.vmem [shape: f32[1,32], index: 4, kind: input, shape index: {}]
  %s5 = inlined_call_operand.vmem [shape: f32[1,32], index: 5, kind: input, shape index: {}]
  %s6 = inlined_call_operand.vmem [shape: f32[1,32], index: 6, kind: input, shape index: {}]
  %s7 = inlined_call_operand.vmem [shape: f32[32,32], index: 7, kind: output, shape index: {}]
  %s8 = sld [smem:[#allocation0]]
  $region38: #{transformer_forward.12} parent=0
    _
  %s10 = ssub.s32 1, %s8
  %s11 = scalar_select 0, %s10, %s8
  // Predicated region
  $region2: #{transformer_forward.12} parent=0 // pred_check
    _
  $region3: #{transformer_forward.12} parent=0 // pred_check_branch
    %13 = sbr.rel (0) target = $region5
  $region4: #{transformer_forward.12} parent=0 // pred_region
    _
  $region5: #{transformer_forward.12} parent=0 // pred_fallthru
    _
  // Predicated region
  $region6: #{transformer_forward.12} parent=0 // pred_check
    _
  $region7: #{transformer_forward.12} parent=0 // pred_check_branch
    %15 = sbr.rel (0) target = $region9
  $region8: #{transformer_forward.12} parent=0 // pred_region
    _
  $region9: #{transformer_forward.12} parent=0 // pred_fallthru
    _
  // Predicated region
  $region10: #{transformer_forward.12} parent=0 // pred_check
    _
  $region11: #{transformer_forward.12} parent=0 // pred_check_branch
    %17 = sbr.rel (0) target = $region13
  $region12: #{transformer_forward.12} parent=0 // pred_region
    _
  $region13: #{transformer_forward.12} parent=0 // pred_fallthru
    _
  // Predicated region
  $region14: #{transformer_forward.12} parent=0 // pred_check
    _
  $region15: #{transformer_forward.12} parent=0 // pred_check_branch
    %19 = sbr.rel (0) target = $region17
  $region16: #{transformer_forward.12} parent=0 // pred_region
    _
  $region17: #{transformer_forward.12} parent=0 // pred_fallthru
    _
  // Predicated region
  $region18: #{transformer_forward.12} parent=0 // pred_check
    _
  $region19: #{transformer_forward.12} parent=0 // pred_check_branch
    %21 = sbr.rel (0) target = $region21
  $region20: #{transformer_forward.12} parent=0 // pred_region
    _
  $region21: #{transformer_forward.12} parent=0 // pred_fallthru
    _
  // Predicated region
  $region22: #{transformer_forward.12} parent=0 // pred_check
    _
  $region23: #{transformer_forward.12} parent=0 // pred_check_branch
    %23 = sbr.rel (0) target = $region25
  $region24: #{transformer_forward.12} parent=0 // pred_region
    _
  $region25: #{transformer_forward.12} parent=0 // pred_fallthru
    _
  // Predicated region
  $region26: #{transformer_forward.12} parent=0 // pred_check
    _
  $region27: #{transformer_forward.12} parent=0 // pred_check_branch
    %25 = sbr.rel (0) target = $region29
  $region28: #{transformer_forward.12} parent=0 // pred_region
    _
  $region29: #{transformer_forward.12} parent=0 // pred_fallthru
    _
  %v26 = vld [vmem:[%s0] sm:$0xff]
  %v27 = vld [vmem:[%s0 + $0x8] sm:$0xff]
  %v28 = vld [vmem:[%s0 + $0x10] sm:$0xff]
  %v29 = vld [vmem:[%s0 + $0x18] sm:$0xff]
  %v30 = vld [vmem:[%s1] sm:$0xff]
  %v31 = vld [vmem:[%s1 + $0x8] sm:$0xff]
  %v32 = vld [vmem:[%s1 + $0x10] sm:$0xff]
  %v33 = vld [vmem:[%s1 + $0x18] sm:$0xff]
  %v34 = vld [vmem:[%s2] sm:$0x1]
  %v36 = vlaneseq
  %v37 = vshrl.u32 %v36, 7
  %v38 = vsub.s32 0, %v37
  %v39 = vrot.slane %v34, %v38
  %vm41 = vcmask 261120
  %v43 = vsel %vm41, %v26, 0
  %v46 = vsel %vm41, %v27, 0
  %v49 = vsel %vm41, %v28, 0
  %v52 = vsel %vm41, %v29, 0
  %54 = vmatprep.subr.mxu0 0.0
  %55 = vmatpush1.msra.mxu0 %v30
  %56 = vmatprep.subr.mxu0 0.0
  %57 = vmatpush1.msra.mxu0 %v31
  %58 = vmatprep.subr.mxu0 0.0
  %59 = vmatpush1.msra.mxu0 %v32
  %60 = vmatprep.subr.mxu0 0.0
  %61 = vmatpush1.msra.mxu0 %v33
  %62 = vmatprep.subr.mxu0 0.0
  %63 = vmatpush1.msra.mxu0 0.0
  %64 = vmatprep.subr.mxu0 0.0
  %65 = vmatpush1.msra.mxu0 0.0
  %66 = vmatprep.subr.mxu0 0.0
  %67 = vmatpush1.msra.mxu0 0.0
  %68 = vmatprep.subr.mxu0 0.0
  %69 = vmatpush1.msra.mxu0 0.0
  %70 = vmatprep.subr.mxu0 0.0
  %71 = vmatpush1.msra.mxu0 0.0
  %72 = vmatprep.subr.mxu0 0.0
  %73 = vmatpush1.msra.mxu0 0.0
  %74 = vmatprep.subr.mxu0 0.0
  %75 = vmatpush1.msra.mxu0 0.0
  %76 = vmatprep.subr.mxu0 0.0
  %77 = vmatpush1.msra.mxu0 0.0
  %78 = vmatprep.subr.mxu0 0.0
  %79 = vmatpush1.msra.mxu0 0.0
  %80 = vmatprep.subr.mxu0 0.0
  %81 = vmatpush1.msra.mxu0 0.0
  %82 = vmatprep.subr.mxu0 0.0
  %83 = vmatpush1.msra.mxu0 0.0
  %84 = vmatprep.subr.mxu0 0.0
  %85 = vmatpush1.msra.mxu0 0.0
  %86 = vmatprep.subr.mxu0 0.0
  %87 = vmatpush1.msra.mxu0 0.0
  %88 = vmatprep.subr.mxu0 0.0
  %89 = vmatpush1.msra.mxu0 0.0
  %90 = vmatprep.subr.mxu0 0.0
  %91 = vmatpush1.msra.mxu0 0.0
  %92 = vmatprep.subr.mxu0 0.0
  %93 = vmatpush1.msra.mxu0 0.0
  %94 = vmatprep.subr.mxu0 0.0
  %95 = vmatpush1.msra.mxu0 0.0
  %96 = vmatprep.subr.mxu0 0.0
  %97 = vmatpush1.msra.mxu0 0.0
  %98 = vmatprep.subr.mxu0 0.0
  %99 = vmatpush1.msra.mxu0 0.0
  %100 = vmatprep.subr.mxu0 0.0
  %101 = vmatpush1.msra.mxu0 0.0
  %102 = vmatprep.subr.mxu0 0.0
  %103 = vmatpush1.msra.mxu0 0.0
  %104 = vmatprep.subr.mxu0 0.0
  %105 = vmatpush1.msra.mxu0 0.0
  %106 = vmatprep.subr.mxu0 0.0
  %107 = vmatpush1.msra.mxu0 0.0
  %108 = vmatprep.subr.mxu0 0.0
  %109 = vmatpush1.msra.mxu0 0.0
  %110 = vmatprep.subr.mxu0 0.0
  %111 = vmatpush1.msra.mxu0 0.0
  %112 = vmatprep.subr.mxu0 0.0
  %113 = vmatpush1.msra.mxu0 0.0
  %114 = vmatprep.subr.mxu0 0.0
  %115 = vmatpush1.msra.mxu0 0.0
  %116 = vmatprep.subr.mxu0 0.0
  %117 = vmatpush1.msra.mxu0 0.0
  %118 = vmatprep.mubr.f32.mxu0 0.0
  %119 = vmatmul.mubr.f32.gmra.mrb[0].mxu0 %v43
  %v120 = vpop.f32.mrb[0].mxu0
  %v121 = vadd.f32 %v39, %v120
  %v122 = vpop.f32.mrb[0].mxu0
  %123 = vmatprep.mubr.f32.mxu0 0.0
  %124 = vmatmul.mubr.f32.gmra.mrb[0].mxu0 %v46
  %v125 = vpop.f32.mrb[0].mxu0
  %v126 = vadd.f32 %v39, %v125
  %v127 = vpop.f32.mrb[0].mxu0
  %128 = vmatprep.mubr.f32.mxu0 0.0
  %129 = vmatmul.mubr.f32.gmra.mrb[0].mxu0 %v49
  %v130 = vpop.f32.mrb[0].mxu0
  %v131 = vadd.f32 %v39, %v130
  %v132 = vpop.f32.mrb[0].mxu0
  %133 = vmatprep.mubr.f32.mxu0 0.0
  %134 = vmatmul.mubr.f32.gmra.mrb[0].mxu0 %v52
  %v135 = vpop.f32.mrb[0].mxu0
  %v136 = vadd.f32 %v39, %v135
  %v137 = vpop.f32.mrb[0].mxu0
  %138 = vdwg.mxu0
  %v139 = vmax.f32 %v121, 0.0
  %v140 = vmax.f32 %v126, 0.0
  %v141 = vmax.f32 %v131, 0.0
  %v142 = vmax.f32 %v136, 0.0
  %v143 = vld [vmem:[%s3] sm:$0xff]
  %v144 = vld [vmem:[%s3 + $0x8] sm:$0xff]
  %v145 = vld [vmem:[%s3 + $0x10] sm:$0xff]
  %v146 = vld [vmem:[%s3 + $0x18] sm:$0xff]
  %v147 = vld [vmem:[%s3 + $0x20] sm:$0xff]
  %v148 = vld [vmem:[%s3 + $0x28] sm:$0xff]
  %v149 = vld [vmem:[%s3 + $0x30] sm:$0xff]
  %v150 = vld [vmem:[%s3 + $0x38] sm:$0xff]
  %vm151 = vcmask 523264
  %v153 = vsel %vm151, %v139, 0
  %v156 = vsel %vm151, %v140, 0
  %v159 = vsel %vm151, %v141, 0
  %v162 = vsel %vm151, %v142, 0
  %164 = vmatprep.subr.mxu0 0.0
  %165 = vmatpush1.msra.mxu0 %v143
  %166 = vmatprep.subr.mxu0 0.0
  %167 = vmatpush1.msra.mxu0 %v144
  %168 = vmatprep.subr.mxu0 0.0
  %169 = vmatpush1.msra.mxu0 %v145
  %170 = vmatprep.subr.mxu0 0.0
  %171 = vmatpush1.msra.mxu0 %v146
  %172 = vmatprep.subr.mxu0 0.0
  %173 = vmatpush1.msra.mxu0 %v147
  %174 = vmatprep.subr.mxu0 0.0
  %175 = vmatpush1.msra.mxu0 %v148
  %176 = vmatprep.subr.mxu0 0.0
  %177 = vmatpush1.msra.mxu0 %v149
  %178 = vmatprep.subr.mxu0 0.0
  %179 = vmatpush1.msra.mxu0 %v150
  %180 = vmatprep.subr.mxu0 0.0
  %181 = vmatpush1.msra.mxu0 0.0
  %182 = vmatprep.subr.mxu0 0.0
  %183 = vmatpush1.msra.mxu0 0.0
  %184 = vmatprep.subr.mxu0 0.0
  %185 = vmatpush1.msra.mxu0 0.0
  %186 = vmatprep.subr.mxu0 0.0
  %187 = vmatpush1.msra.mxu0 0.0
  %188 = vmatprep.subr.mxu0 0.0
  %189 = vmatpush1.msra.mxu0 0.0
  %190 = vmatprep.subr.mxu0 0.0
  %191 = vmatpush1.msra.mxu0 0.0
  %192 = vmatprep.subr.mxu0 0.0
  %193 = vmatpush1.msra.mxu0 0.0
  %194 = vmatprep.subr.mxu0 0.0
  %195 = vmatpush1.msra.mxu0 0.0
  %196 = vmatprep.subr.mxu0 0.0
  %197 = vmatpush1.msra.mxu0 0.0
  %198 = vmatprep.subr.mxu0 0.0
  %199 = vmatpush1.msra.mxu0 0.0
  %200 = vmatprep.subr.mxu0 0.0
  %201 = vmatpush1.msra.mxu0 0.0
  %202 = vmatprep.subr.mxu0 0.0
  %203 = vmatpush1.msra.mxu0 0.0
  %204 = vmatprep.subr.mxu0 0.0
  %205 = vmatpush1.msra.mxu0 0.0
  %206 = vmatprep.subr.mxu0 0.0
  %207 = vmatpush1.msra.mxu0 0.0
  %208 = vmatprep.subr.mxu0 0.0
  %209 = vmatpush1.msra.mxu0 0.0
  %210 = vmatprep.subr.mxu0 0.0
  %211 = vmatpush1.msra.mxu0 0.0
  %212 = vmatprep.subr.mxu0 0.0
  %213 = vmatpush1.msra.mxu0 0.0
  %214 = vmatprep.subr.mxu0 0.0
  %215 = vmatpush1.msra.mxu0 0.0
  %216 = vmatprep.subr.mxu0 0.0
  %217 = vmatpush1.msra.mxu0 0.0
  %218 = vmatprep.subr.mxu0 0.0
  %219 = vmatpush1.msra.mxu0 0.0
  %220 = vmatprep.subr.mxu0 0.0
  %221 = vmatpush1.msra.mxu0 0.0
  %222 = vmatprep.subr.mxu0 0.0
  %223 = vmatpush1.msra.mxu0 0.0
  %224 = vmatprep.subr.mxu0 0.0
  %225 = vmatpush1.msra.mxu0 0.0
  %226 = vmatprep.subr.mxu0 0.0
  %227 = vmatpush1.msra.mxu0 0.0
  %228 = vmatprep.mubr.f32.mxu0 0.0
  %229 = vmatmul.mubr.f32.gmra.mrb[0].mxu0 %v153
  %v230 = vpop.f32.mrb[0].mxu0
  %v231 = vadd.f32 0.0, %v230
  %v232 = vpop.f32.mrb[0].mxu0
  %233 = vmatprep.mubr.f32.mxu0 0.0
  %234 = vmatmul.mubr.f32.gmra.mrb[0].mxu0 %v156
  %v235 = vpop.f32.mrb[0].mxu0
  %v236 = vadd.f32 0.0, %v235
  %v237 = vpop.f32.mrb[0].mxu0
  %238 = vmatprep.mubr.f32.mxu0 0.0
  %239 = vmatmul.mubr.f32.gmra.mrb[0].mxu0 %v159
  %v240 = vpop.f32.mrb[0].mxu0
  %v241 = vadd.f32 0.0, %v240
  %v242 = vpop.f32.mrb[0].mxu0
  %243 = vmatprep.mubr.f32.mxu0 0.0
  %244 = vmatmul.mubr.f32.gmra.mrb[0].mxu0 %v162
  %v245 = vpop.f32.mrb[0].mxu0
  %v246 = vadd.f32 0.0, %v245
  %v247 = vpop.f32.mrb[0].mxu0
  %248 = vdwg.mxu0
  %v249 = vadd.f32 %v26, %v231
  %v250 = vadd.f32 %v27, %v236
  %v251 = vadd.f32 %v28, %v241
  %v252 = vadd.f32 %v29, %v246
  %v253 = vld [vmem:[%s4] sm:$0x1]
  %v255 = vlaneseq
  %v256 = vshrl.u32 %v255, 7
  %v257 = vsub.s32 0, %v256
  %v258 = vrot.slane %v253, %v257
  %v260 = vadd.f32 %v249, %v258
  %v261 = vadd.f32 %v250, %v258
  %v262 = vadd.f32 %v251, %v258
  %v263 = vadd.f32 %v252, %v258
  %v264 = vld [vmem:[%s5] sm:$0x1]
  %v265 = vld [vmem:[%s6] sm:$0x1]
  %v266 = vsel %vm41, %v260, 0.0
  %267 = vadd.xlane.f32.xlu0 %v266
  %v268 = vpop.xlane.xlu0 %267
  %v269 = vsel %vm41, %v261, 0.0
  %270 = vadd.xlane.f32.xlu0 %v269
  %v271 = vpop.xlane.xlu0 %270
  %v272 = vsel %vm41, %v262, 0.0
  %273 = vadd.xlane.f32.xlu0 %v272
  %v274 = vpop.xlane.xlu0 %273
  %v275 = vsel %vm41, %v263, 0.0
  %276 = vadd.xlane.f32.xlu0 %v275
  %v277 = vpop.xlane.xlu0 %276
  %v278 = vrcp.pop 32.0
  %v279 = vmul.f32 %v268, %v278
  %v280 = vmul.f32 %v271, %v278
  %v281 = vmul.f32 %v274, %v278
  %v282 = vmul.f32 %v277, %v278
  %v283 = vsub.f32 %v260, %v279
  %v284 = vsub.f32 %v261, %v280
  %v285 = vsub.f32 %v262, %v281
  %v286 = vsub.f32 %v263, %v282
  %v287 = vmul.f32 %v283, %v283
  %v288 = vmul.f32 %v284, %v284
  %v289 = vmul.f32 %v285, %v285
  %v290 = vmul.f32 %v286, %v286
  %v291 = vsel %vm41, %v287, 0.0
  %292 = vadd.xlane.f32.xlu0 %v291
  %v293 = vpop.xlane.xlu0 %292
  %v294 = vsel %vm41, %v288, 0.0
  %295 = vadd.xlane.f32.xlu0 %v294
  %v296 = vpop.xlane.xlu0 %295
  %v297 = vsel %vm41, %v289, 0.0
  %298 = vadd.xlane.f32.xlu0 %v297
  %v299 = vpop.xlane.xlu0 %298
  %v300 = vsel %vm41, %v290, 0.0
  %301 = vadd.xlane.f32.xlu0 %v300
  %v302 = vpop.xlane.xlu0 %301
  %v303 = vmul.f32 %v293, %v278
  %v304 = vmul.f32 %v296, %v278
  %v305 = vmul.f32 %v299, %v278
  %v306 = vmul.f32 %v302, %v278
  %v307 = vadd.f32 %v303, 1e-05
  %v308 = vadd.f32 %v304, 1e-05
  %v309 = vadd.f32 %v305, 1e-05
  %v310 = vadd.f32 %v306, 1e-05
  %v311 = vrsqrt.pop %v307
  %v312 = vrsqrt.pop %v308
  %v313 = vrsqrt.pop %v309
  %v314 = vrsqrt.pop %v310
  %v315 = vmul.f32 %v283, %v311
  %v316 = vmul.f32 %v284, %v312
  %v317 = vmul.f32 %v285, %v313
  %v318 = vmul.f32 %v286, %v314
  %v320 = vlaneseq
  %v321 = vshrl.u32 %v320, 7
  %v322 = vsub.s32 0, %v321
  %v323 = vrot.slane %v264, %v322
  %v325 = vmul.f32 %v315, %v323
  %v326 = vmul.f32 %v316, %v323
  %v327 = vmul.f32 %v317, %v323
  %v328 = vmul.f32 %v318, %v323
  %v330 = vlaneseq
  %v331 = vshrl.u32 %v330, 7
  %v332 = vsub.s32 0, %v331
  %v333 = vrot.slane %v265, %v332
  %v335 = vadd.f32 %v325, %v333
  %v336 = vadd.f32 %v326, %v333
  %v337 = vadd.f32 %v327, %v333
  %v338 = vadd.f32 %v328, %v333
  %339 = vst.msk [vmem:[%s7] sm:$0xff] %vm41, %v335
  %340 = vst.msk [vmem:[%s7 + $0x8] sm:$0xff] %vm41, %v336
  %341 = vst.msk [vmem:[%s7 + $0x10] sm:$0xff] %vm41, %v337
  %342 = vst.msk [vmem:[%s7 + $0x18] sm:$0xff] %vm41, %v338
  // Predicated region
  $region30: #{transformer_forward.12} parent=0 // pred_check
    _
  $region31: #{transformer_forward.12} parent=0 // pred_check_branch
    %344 = sbr.rel (0) target = $region33
  $region32: #{transformer_forward.12} parent=0 // pred_region
    _
  $region33: #{transformer_forward.12} parent=0 // pred_fallthru
    _
  // Predicated region
  $region34: #{transformer_forward.12} parent=0 // pred_check
    _
  $region35: #{transformer_forward.12} parent=0 // pred_check_branch
    %346 = sbr.rel (0) target = $region37
  $region36: #{transformer_forward.12} parent=0 // pred_region
    _
  $region37: #{transformer_forward.12} parent=0 // pred_fallthru
    _

// kernel: transformer_forward.17
$region0: #{transformer_forward.17}
  #allocation0 [shape = 'u32[]', space=smem, size = 0x4, offset = 0x4, fixed_abs, tag = 'smem constant byte address 0x4 - core index']
  #allocation1 [shape = 'u32[144,128]{1,0:T(1,128)}', space=vmem, size = 0x12000, scoped, tag = 'internal scratch']
  %s0 = inlined_call_operand.vmem [shape: f32[16,32], index: 0, kind: input, shape index: {}]
  %s1 = inlined_call_operand.vmem [shape: f32[32,64], index: 1, kind: input, shape index: {}]
  %s2 = inlined_call_operand.vmem [shape: f32[1,64], index: 2, kind: input, shape index: {}]
  %s3 = inlined_call_operand.vmem [shape: f32[64,32], index: 3, kind: input, shape index: {}]
  %s4 = inlined_call_operand.vmem [shape: f32[1,32], index: 4, kind: input, shape index: {}]
  %s5 = inlined_call_operand.vmem [shape: f32[1,32], index: 5, kind: input, shape index: {}]
  %s6 = inlined_call_operand.vmem [shape: f32[1,32], index: 6, kind: input, shape index: {}]
  %s7 = inlined_call_operand.vmem [shape: f32[16,32], index: 7, kind: output, shape index: {}]
  %s8 = sld [smem:[#allocation0]]
  $region38: #{transformer_forward.17} parent=0
    _
  %s10 = ssub.s32 1, %s8
  %s11 = scalar_select 0, %s10, %s8
  // Predicated region
  $region2: #{transformer_forward.17} parent=0 // pred_check
    _
  $region3: #{transformer_forward.17} parent=0 // pred_check_branch
    %13 = sbr.rel (0) target = $region5
  $region4: #{transformer_forward.17} parent=0 // pred_region
    _
  $region5: #{transformer_forward.17} parent=0 // pred_fallthru
    _
  // Predicated region
  $region6: #{transformer_forward.17} parent=0 // pred_check
    _
  $region7: #{transformer_forward.17} parent=0 // pred_check_branch
    %15 = sbr.rel (0) target = $region9
  $region8: #{transformer_forward.17} parent=0 // pred_region
    _
  $region9: #{transformer_forward.17} parent=0 // pred_fallthru
    _
  // Predicated region
  $region10: #{transformer_forward.17} parent=0 // pred_check
    _
  $region11: #{transformer_forward.17} parent=0 // pred_check_branch
    %17 = sbr.rel (0) target = $region13
  $region12: #{transformer_forward.17} parent=0 // pred_region
    _
  $region13: #{transformer_forward.17} parent=0 // pred_fallthru
    _
  // Predicated region
  $region14: #{transformer_forward.17} parent=0 // pred_check
    _
  $region15: #{transformer_forward.17} parent=0 // pred_check_branch
    %19 = sbr.rel (0) target = $region17
  $region16: #{transformer_forward.17} parent=0 // pred_region
    _
  $region17: #{transformer_forward.17} parent=0 // pred_fallthru
    _
  // Predicated region
  $region18: #{transformer_forward.17} parent=0 // pred_check
    _
  $region19: #{transformer_forward.17} parent=0 // pred_check_branch
    %21 = sbr.rel (0) target = $region21
  $region20: #{transformer_forward.17} parent=0 // pred_region
    _
  $region21: #{transformer_forward.17} parent=0 // pred_fallthru
    _
  // Predicated region
  $region22: #{transformer_forward.17} parent=0 // pred_check
    _
  $region23: #{transformer_forward.17} parent=0 // pred_check_branch
    %23 = sbr.rel (0) target = $region25
  $region24: #{transformer_forward.17} parent=0 // pred_region
    _
  $region25: #{transformer_forward.17} parent=0 // pred_fallthru
    _
  // Predicated region
  $region26: #{transformer_forward.17} parent=0 // pred_check
    _
  $region27: #{transformer_forward.17} parent=0 // pred_check_branch
    %25 = sbr.rel (0) target = $region29
  $region28: #{transformer_forward.17} parent=0 // pred_region
    _
  $region29: #{transformer_forward.17} parent=0 // pred_fallthru
    _
  %v26 = vld [vmem:[%s0] sm:$0xff]
  %v27 = vld [vmem:[%s0 + $0x8] sm:$0xff]
  %v28 = vld [vmem:[%s1] sm:$0xff]
  %v29 = vld [vmem:[%s1 + $0x8] sm:$0xff]
  %v30 = vld [vmem:[%s1 + $0x10] sm:$0xff]
  %v31 = vld [vmem:[%s1 + $0x18] sm:$0xff]
  %v32 = vld [vmem:[%s2] sm:$0x1]
  %v34 = vlaneseq
  %v35 = vshrl.u32 %v34, 7
  %v36 = vsub.s32 0, %v35
  %v37 = vrot.slane %v32, %v36
  %vm39 = vcmask 261120
  %v41 = vsel %vm39, %v26, 0
  %v44 = vsel %vm39, %v27, 0
  %46 = vmatprep.subr.mxu0 0.0
  %47 = vmatpush1.msra.mxu0 %v28
  %48 = vmatprep.subr.mxu0 0.0
  %49 = vmatpush1.msra.mxu0 %v29
  %50 = vmatprep.subr.mxu0 0.0
  %51 = vmatpush1.msra.mxu0 %v30
  %52 = vmatprep.subr.mxu0 0.0
  %53 = vmatpush1.msra.mxu0 %v31
  %54 = vmatprep.subr.mxu0 0.0
  %55 = vmatpush1.msra.mxu0 0.0
  %56 = vmatprep.subr.mxu0 0.0
  %57 = vmatpush1.msra.mxu0 0.0
  %58 = vmatprep.subr.mxu0 0.0
  %59 = vmatpush1.msra.mxu0 0.0
  %60 = vmatprep.subr.mxu0 0.0
  %61 = vmatpush1.msra.mxu0 0.0
  %62 = vmatprep.subr.mxu0 0.0
  %63 = vmatpush1.msra.mxu0 0.0
  %64 = vmatprep.subr.mxu0 0.0
  %65 = vmatpush1.msra.mxu0 0.0
  %66 = vmatprep.subr.mxu0 0.0
  %67 = vmatpush1.msra.mxu0 0.0
  %68 = vmatprep.subr.mxu0 0.0
  %69 = vmatpush1.msra.mxu0 0.0
  %70 = vmatprep.subr.mxu0 0.0
  %71 = vmatpush1.msra.mxu0 0.0
  %72 = vmatprep.subr.mxu0 0.0
  %73 = vmatpush1.msra.mxu0 0.0
  %74 = vmatprep.subr.mxu0 0.0
  %75 = vmatpush1.msra.mxu0 0.0
  %76 = vmatprep.subr.mxu0 0.0
  %77 = vmatpush1.msra.mxu0 0.0
  %78 = vmatprep.subr.mxu0 0.0
  %79 = vmatpush1.msra.mxu0 0.0
  %80 = vmatprep.subr.mxu0 0.0
  %81 = vmatpush1.msra.mxu0 0.0
  %82 = vmatprep.subr.mxu0 0.0
  %83 = vmatpush1.msra.mxu0 0.0
  %84 = vmatprep.subr.mxu0 0.0
  %85 = vmatpush1.msra.mxu0 0.0
  %86 = vmatprep.subr.mxu0 0.0
  %87 = vmatpush1.msra.mxu0 0.0
  %88 = vmatprep.subr.mxu0 0.0
  %89 = vmatpush1.msra.mxu0 0.0
  %90 = vmatprep.subr.mxu0 0.0
  %91 = vmatpush1.msra.mxu0 0.0
  %92 = vmatprep.subr.mxu0 0.0
  %93 = vmatpush1.msra.mxu0 0.0
  %94 = vmatprep.subr.mxu0 0.0
  %95 = vmatpush1.msra.mxu0 0.0
  %96 = vmatprep.subr.mxu0 0.0
  %97 = vmatpush1.msra.mxu0 0.0
  %98 = vmatprep.subr.mxu0 0.0
  %99 = vmatpush1.msra.mxu0 0.0
  %100 = vmatprep.subr.mxu0 0.0
  %101 = vmatpush1.msra.mxu0 0.0
  %102 = vmatprep.subr.mxu0 0.0
  %103 = vmatpush1.msra.mxu0 0.0
  %104 = vmatprep.subr.mxu0 0.0
  %105 = vmatpush1.msra.mxu0 0.0
  %106 = vmatprep.subr.mxu0 0.0
  %107 = vmatpush1.msra.mxu0 0.0
  %108 = vmatprep.subr.mxu0 0.0
  %109 = vmatpush1.msra.mxu0 0.0
  %110 = vmatprep.mubr.f32.mxu0 0.0
  %111 = vmatmul.mubr.f32.gmra.mrb[0].mxu0 %v41
  %v112 = vpop.f32.mrb[0].mxu0
  %v113 = vadd.f32 %v37, %v112
  %v114 = vpop.f32.mrb[0].mxu0
  %115 = vmatprep.mubr.f32.mxu0 0.0
  %116 = vmatmul.mubr.f32.gmra.mrb[0].mxu0 %v44
  %v117 = vpop.f32.mrb[0].mxu0
  %v118 = vadd.f32 %v37, %v117
  %v119 = vpop.f32.mrb[0].mxu0
  %120 = vdwg.mxu0
  %v121 = vmax.f32 %v113, 0.0
  %v122 = vmax.f32 %v118, 0.0
  %v123 = vld [vmem:[%s3] sm:$0xff]
  %v124 = vld [vmem:[%s3 + $0x8] sm:$0xff]
  %v125 = vld [vmem:[%s3 + $0x10] sm:$0xff]
  %v126 = vld [vmem:[%s3 + $0x18] sm:$0xff]
  %v127 = vld [vmem:[%s3 + $0x20] sm:$0xff]
  %v128 = vld [vmem:[%s3 + $0x28] sm:$0xff]
  %v129 = vld [vmem:[%s3 + $0x30] sm:$0xff]
  %v130 = vld [vmem:[%s3 + $0x38] sm:$0xff]
  %vm131 = vcmask 523264
  %v133 = vsel %vm131, %v121, 0
  %v136 = vsel %vm131, %v122, 0
  %138 = vmatprep.subr.mxu0 0.0
  %139 = vmatpush1.msra.mxu0 %v123
  %140 = vmatprep.subr.mxu0 0.0
  %141 = vmatpush1.msra.mxu0 %v124
  %142 = vmatprep.subr.mxu0 0.0
  %143 = vmatpush1.msra.mxu0 %v125
  %144 = vmatprep.subr.mxu0 0.0
  %145 = vmatpush1.msra.mxu0 %v126
  %146 = vmatprep.subr.mxu0 0.0
  %147 = vmatpush1.msra.mxu0 %v127
  %148 = vmatprep.subr.mxu0 0.0
  %149 = vmatpush1.msra.mxu0 %v128
  %150 = vmatprep.subr.mxu0 0.0
  %151 = vmatpush1.msra.mxu0 %v129
  %152 = vmatprep.subr.mxu0 0.0
  %153 = vmatpush1.msra.mxu0 %v130
  %154 = vmatprep.subr.mxu0 0.0
  %155 = vmatpush1.msra.mxu0 0.0
  %156 = vmatprep.subr.mxu0 0.0
  %157 = vmatpush1.msra.mxu0 0.0
  %158 = vmatprep.subr.mxu0 0.0
  %159 = vmatpush1.msra.mxu0 0.0
  %160 = vmatprep.subr.mxu0 0.0
  %161 = vmatpush1.msra.mxu0 0.0
  %162 = vmatprep.subr.mxu0 0.0
  %163 = vmatpush1.msra.mxu0 0.0
  %164 = vmatprep.subr.mxu0 0.0
  %165 = vmatpush1.msra.mxu0 0.0
  %166 = vmatprep.subr.mxu0 0.0
  %167 = vmatpush1.msra.mxu0 0.0
  %168 = vmatprep.subr.mxu0 0.0
  %169 = vmatpush1.msra.mxu0 0.0
  %170 = vmatprep.subr.mxu0 0.0
  %171 = vmatpush1.msra.mxu0 0.0
  %172 = vmatprep.subr.mxu0 0.0
  %173 = vmatpush1.msra.mxu0 0.0
  %174 = vmatprep.subr.mxu0 0.0
  %175 = vmatpush1.msra.mxu0 0.0
  %176 = vmatprep.subr.mxu0 0.0
  %177 = vmatpush1.msra.mxu0 0.0
  %178 = vmatprep.subr.mxu0 0.0
  %179 = vmatpush1.msra.mxu0 0.0
  %180 = vmatprep.subr.mxu0 0.0
  %181 = vmatpush1.msra.mxu0 0.0
  %182 = vmatprep.subr.mxu0 0.0
  %183 = vmatpush1.msra.mxu0 0.0
  %184 = vmatprep.subr.mxu0 0.0
  %185 = vmatpush1.msra.mxu0 0.0
  %186 = vmatprep.subr.mxu0 0.0
  %187 = vmatpush1.msra.mxu0 0.0
  %188 = vmatprep.subr.mxu0 0.0
  %189 = vmatpush1.msra.mxu0 0.0
  %190 = vmatprep.subr.mxu0 0.0
  %191 = vmatpush1.msra.mxu0 0.0
  %192 = vmatprep.subr.mxu0 0.0
  %193 = vmatpush1.msra.mxu0 0.0
  %194 = vmatprep.subr.mxu0 0.0
  %195 = vmatpush1.msra.mxu0 0.0
  %196 = vmatprep.subr.mxu0 0.0
  %197 = vmatpush1.msra.mxu0 0.0
  %198 = vmatprep.subr.mxu0 0.0
  %199 = vmatpush1.msra.mxu0 0.0
  %200 = vmatprep.subr.mxu0 0.0
  %201 = vmatpush1.msra.mxu0 0.0
  %202 = vmatprep.mubr.f32.mxu0 0.0
  %203 = vmatmul.mubr.f32.gmra.mrb[0].mxu0 %v133
  %v204 = vpop.f32.mrb[0].mxu0
  %v205 = vadd.f32 0.0, %v204
  %v206 = vpop.f32.mrb[0].mxu0
  %207 = vmatprep.mubr.f32.mxu0 0.0
  %208 = vmatmul.mubr.f32.gmra.mrb[0].mxu0 %v136
  %v209 = vpop.f32.mrb[0].mxu0
  %v210 = vadd.f32 0.0, %v209
  %v211 = vpop.f32.mrb[0].mxu0
  %212 = vdwg.mxu0
  %v213 = vadd.f32 %v26, %v205
  %v214 = vadd.f32 %v27, %v210
  %v215 = vld [vmem:[%s4] sm:$0x1]
  %v217 = vlaneseq
  %v218 = vshrl.u32 %v217, 7
  %v219 = vsub.s32 0, %v218
  %v220 = vrot.slane %v215, %v219
  %v222 = vadd.f32 %v213, %v220
  %v223 = vadd.f32 %v214, %v220
  %v224 = vld [vmem:[%s5] sm:$0x1]
  %v225 = vld [vmem:[%s6] sm:$0x1]
  %v226 = vsel %vm39, %v222, 0.0
  %227 = vadd.xlane.f32.xlu0 %v226
  %v228 = vpop.xlane.xlu0 %227
  %v229 = vsel %vm39, %v223, 0.0
  %230 = vadd.xlane.f32.xlu0 %v229
  %v231 = vpop.xlane.xlu0 %230
  %v232 = vrcp.pop 32.0
  %v233 = vmul.f32 %v228, %v232
  %v234 = vmul.f32 %v231, %v232
  %v235 = vsub.f32 %v222, %v233
  %v236 = vsub.f32 %v223, %v234
  %v237 = vmul.f32 %v235, %v235
  %v238 = vmul.f32 %v236, %v236
  %v239 = vsel %vm39, %v237, 0.0
  %240 = vadd.xlane.f32.xlu0 %v239
  %v241 = vpop.xlane.xlu0 %240
  %v242 = vsel %vm39, %v238, 0.0
  %243 = vadd.xlane.f32.xlu0 %v242
  %v244 = vpop.xlane.xlu0 %243
  %v245 = vmul.f32 %v241, %v232
  %v246 = vmul.f32 %v244, %v232
  %v247 = vadd.f32 %v245, 1e-05
  %v248 = vadd.f32 %v246, 1e-05
  %v249 = vrsqrt.pop %v247
  %v250 = vrsqrt.pop %v248
  %v251 = vmul.f32 %v235, %v249
  %v252 = vmul.f32 %v236, %v250
  %v254 = vlaneseq
  %v255 = vshrl.u32 %v254, 7
  %v256 = vsub.s32 0, %v255
  %v257 = vrot.slane %v224, %v256
  %v259 = vmul.f32 %v251, %v257
  %v260 = vmul.f32 %v252, %v257
  %v262 = vlaneseq
  %v263 = vshrl.u32 %v262, 7
  %v264 = vsub.s32 0, %v263
  %v265 = vrot.slane %v225, %v264
  %v267 = vadd.f32 %v259, %v265
  %v268 = vadd.f32 %v260, %v265
  %269 = vst.msk [vmem:[%s7] sm:$0xff] %vm39, %v267
  %270 = vst.msk [vmem:[%s7 + $0x8] sm:$0xff] %vm39, %v268
  // Predicated region
  $region30: #{transformer_forward.17} parent=0 // pred_check
    _
  $region31: #{transformer_forward.17} parent=0 // pred_check_branch
    %272 = sbr.rel (0) target = $region33
  $region32: #{transformer_forward.17} parent=0 // pred_region
    _
  $region33: #{transformer_forward.17} parent=0 // pred_fallthru
    _
  // Predicated region
  $region34: #{transformer_forward.17} parent=0 // pred_check
    _
  $region35: #{transformer_forward.17} parent=0 // pred_check_branch
    %274 = sbr.rel (0) target = $region37
  $region36: #{transformer_forward.17} parent=0 // pred_region
    _
  $region37: #{transformer_forward.17} parent=0 // pred_fallthru
    _

// kernel: transformer_forward.15
$region0: #{transformer_forward.15}
  #allocation0 [shape = 'u32[]', space=smem, size = 0x4, offset = 0x4, fixed_abs, tag = 'smem constant byte address 0x4 - core index']
  #allocation1 [shape = 'u32[144,128]{1,0:T(1,128)}', space=vmem, size = 0x12000, scoped, tag = 'internal scratch']
  %s0 = inlined_call_operand.vmem [shape: f32[16,32], index: 0, kind: input, shape index: {}, may-alias: {0,2}]
  %s1 = inlined_call_operand.vmem [shape: f32[16,32], index: 1, kind: input, shape index: {}, may-alias: {1,3}]
  %s2 = inlined_call_operand.vmem [shape: f32[16,32], index: 2, kind: input, shape index: {}, may-alias: {0,2}]
  %s3 = inlined_call_operand.vmem [shape: f32[16,32], index: 3, kind: input, shape index: {}, may-alias: {1,3}]
  %s4 = inlined_call_operand.vmem [shape: f32[2,8], index: 4, kind: input, shape index: {}]
  %s5 = inlined_call_operand.vmem [shape: f32[32,32], index: 5, kind: input, shape index: {}]
  %s6 = inlined_call_operand.vmem [shape: f32[1,32], index: 6, kind: input, shape index: {}]
  %s7 = inlined_call_operand.vmem [shape: f32[32,32], index: 7, kind: input, shape index: {}]
  %s8 = inlined_call_operand.vmem [shape: f32[1,32], index: 8, kind: input, shape index: {}]
  %s9 = inlined_call_operand.vmem [shape: f32[32,32], index: 9, kind: input, shape index: {}]
  %s10 = inlined_call_operand.vmem [shape: f32[1,32], index: 10, kind: input, shape index: {}]
  %s11 = inlined_call_operand.vmem [shape: f32[32,32], index: 11, kind: input, shape index: {}]
  %s12 = inlined_call_operand.vmem [shape: f32[1,32], index: 12, kind: input, shape index: {}]
  %s13 = inlined_call_operand.vmem [shape: f32[1,32], index: 13, kind: input, shape index: {}]
  %s14 = inlined_call_operand.vmem [shape: f32[1,32], index: 14, kind: input, shape index: {}]
  %s15 = inlined_call_operand.vmem [shape: f32[16,32], index: 15, kind: output, shape index: {}]
  %s16 = sld [smem:[#allocation0]]
  $region70: #{transformer_forward.15} parent=0
    _
  %s18 = ssub.s32 1, %s16
  %s19 = scalar_select 0, %s18, %s16
  // Predicated region
  $region2: #{transformer_forward.15} parent=0 // pred_check
    _
  $region3: #{transformer_forward.15} parent=0 // pred_check_branch
    %21 = sbr.rel (0) target = $region5
  $region4: #{transformer_forward.15} parent=0 // pred_region
    _
  $region5: #{transformer_forward.15} parent=0 // pred_fallthru
    _
  // Predicated region
  $region6: #{transformer_forward.15} parent=0 // pred_check
    _
  $region7: #{transformer_forward.15} parent=0 // pred_check_branch
    %23 = sbr.rel (0) target = $region9
  $region8: #{transformer_forward.15} parent=0 // pred_region
    _
  $region9: #{transformer_forward.15} parent=0 // pred_fallthru
    _
  // Predicated region
  $region10: #{transformer_forward.15} parent=0 // pred_check
    _
  $region11: #{transformer_forward.15} parent=0 // pred_check_branch
    %25 = sbr.rel (0) target = $region13
  $region12: #{transformer_forward.15} parent=0 // pred_region
    _
  $region13: #{transformer_forward.15} parent=0 // pred_fallthru
    _
  // Predicated region
  $region14: #{transformer_forward.15} parent=0 // pred_check
    _
  $region15: #{transformer_forward.15} parent=0 // pred_check_branch
    %27 = sbr.rel (0) target = $region17
  $region16: #{transformer_forward.15} parent=0 // pred_region
    _
  $region17: #{transformer_forward.15} parent=0 // pred_fallthru
    _
  // Predicated region
  $region18: #{transformer_forward.15} parent=0 // pred_check
    _
  $region19: #{transformer_forward.15} parent=0 // pred_check_branch
    %29 = sbr.rel (0) target = $region21
  $region20: #{transformer_forward.15} parent=0 // pred_region
    _
  $region21: #{transformer_forward.15} parent=0 // pred_fallthru
    _
  // Predicated region
  $region22: #{transformer_forward.15} parent=0 // pred_check
    _
  $region23: #{transformer_forward.15} parent=0 // pred_check_branch
    %31 = sbr.rel (0) target = $region25
  $region24: #{transformer_forward.15} parent=0 // pred_region
    _
  $region25: #{transformer_forward.15} parent=0 // pred_fallthru
    _
  // Predicated region
  $region26: #{transformer_forward.15} parent=0 // pred_check
    _
  $region27: #{transformer_forward.15} parent=0 // pred_check_branch
    %33 = sbr.rel (0) target = $region29
  $region28: #{transformer_forward.15} parent=0 // pred_region
    _
  $region29: #{transformer_forward.15} parent=0 // pred_fallthru
    _
  // Predicated region
  $region30: #{transformer_forward.15} parent=0 // pred_check
    _
  $region31: #{transformer_forward.15} parent=0 // pred_check_branch
    %35 = sbr.rel (0) target = $region33
  $region32: #{transformer_forward.15} parent=0 // pred_region
    _
  $region33: #{transformer_forward.15} parent=0 // pred_fallthru
    _
  // Predicated region
  $region34: #{transformer_forward.15} parent=0 // pred_check
    _
  $region35: #{transformer_forward.15} parent=0 // pred_check_branch
    %37 = sbr.rel (0) target = $region37
  $region36: #{transformer_forward.15} parent=0 // pred_region
    _
  $region37: #{transformer_forward.15} parent=0 // pred_fallthru
    _
  // Predicated region
  $region38: #{transformer_forward.15} parent=0 // pred_check
    _
  $region39: #{transformer_forward.15} parent=0 // pred_check_branch
    %39 = sbr.rel (0) target = $region41
  $region40: #{transformer_forward.15} parent=0 // pred_region
    _
  $region41: #{transformer_forward.15} parent=0 // pred_fallthru
    _
  // Predicated region
  $region42: #{transformer_forward.15} parent=0 // pred_check
    _
  $region43: #{transformer_forward.15} parent=0 // pred_check_branch
    %41 = sbr.rel (0) target = $region45
  $region44: #{transformer_forward.15} parent=0 // pred_region
    _
  $region45: #{transformer_forward.15} parent=0 // pred_fallthru
    _
  // Predicated region
  $region46: #{transformer_forward.15} parent=0 // pred_check
    _
  $region47: #{transformer_forward.15} parent=0 // pred_check_branch
    %43 = sbr.rel (0) target = $region49
  $region48: #{transformer_forward.15} parent=0 // pred_region
    _
  $region49: #{transformer_forward.15} parent=0 // pred_fallthru
    _
  // Predicated region
  $region50: #{transformer_forward.15} parent=0 // pred_check
    _
  $region51: #{transformer_forward.15} parent=0 // pred_check_branch
    %45 = sbr.rel (0) target = $region53
  $region52: #{transformer_forward.15} parent=0 // pred_region
    _
  $region53: #{transformer_forward.15} parent=0 // pred_fallthru
    _
  // Predicated region
  $region54: #{transformer_forward.15} parent=0 // pred_check
    _
  $region55: #{transformer_forward.15} parent=0 // pred_check_branch
    %47 = sbr.rel (0) target = $region57
  $region56: #{transformer_forward.15} parent=0 // pred_region
    _
  $region57: #{transformer_forward.15} parent=0 // pred_fallthru
    _
  // Predicated region
  $region58: #{transformer_forward.15} parent=0 // pred_check
    _
  $region59: #{transformer_forward.15} parent=0 // pred_check_branch
    %49 = sbr.rel (0) target = $region61
  $region60: #{transformer_forward.15} parent=0 // pred_region
    _
  $region61: #{transformer_forward.15} parent=0 // pred_fallthru
    _
  %v50 = vld [vmem:[%s0] sm:$0xff]
  %v51 = vld [vmem:[%s0 + $0x8] sm:$0xff]
  %v52 = vld [vmem:[%s1] sm:$0xff]
  %v53 = vld [vmem:[%s1 + $0x8] sm:$0xff]
  %v54 = vadd.f32 %v50, %v52
  %v55 = vadd.f32 %v51, %v53
  %v56 = vld [vmem:[%s2] sm:$0xff]
  %v57 = vld [vmem:[%s2 + $0x8] sm:$0xff]
  %v58 = vld [vmem:[%s3] sm:$0xff]
  %v59 = vld [vmem:[%s3 + $0x8] sm:$0xff]
  %v60 = vadd.f32 %v56, %v58
  %v61 = vadd.f32 %v57, %v59
  %v62 = vld [vmem:[%s5] sm:$0xff]
  %v63 = vld [vmem:[%s5 + $0x8] sm:$0xff]
  %v64 = vld [vmem:[%s5 + $0x10] sm:$0xff]
  %v65 = vld [vmem:[%s5 + $0x18] sm:$0xff]
  %v66 = vld [vmem:[%s6] sm:$0x1]
  %v68 = vlaneseq
  %v69 = vshrl.u32 %v68, 7
  %v70 = vsub.s32 0, %v69
  %v71 = vrot.slane %v66, %v70
  %vm73 = vcmask 261120
  %v75 = vsel %vm73, %v54, 0
  %v78 = vsel %vm73, %v55, 0
  %80 = vmatprep.subr.mxu0 0.0
  %81 = vmatpush1.msra.mxu0 %v62
  %82 = vmatprep.subr.mxu0 0.0
  %83 = vmatpush1.msra.mxu0 %v63
  %84 = vmatprep.subr.mxu0 0.0
  %85 = vmatpush1.msra.mxu0 %v64
  %86 = vmatprep.subr.mxu0 0.0
  %87 = vmatpush1.msra.mxu0 %v65
  %88 = vmatprep.subr.mxu0 0.0
  %89 = vmatpush1.msra.mxu0 0.0
  %90 = vmatprep.subr.mxu0 0.0
  %91 = vmatpush1.msra.mxu0 0.0
  %92 = vmatprep.subr.mxu0 0.0
  %93 = vmatpush1.msra.mxu0 0.0
  %94 = vmatprep.subr.mxu0 0.0
  %95 = vmatpush1.msra.mxu0 0.0
  %96 = vmatprep.subr.mxu0 0.0
  %97 = vmatpush1.msra.mxu0 0.0
  %98 = vmatprep.subr.mxu0 0.0
  %99 = vmatpush1.msra.mxu0 0.0
  %100 = vmatprep.subr.mxu0 0.0
  %101 = vmatpush1.msra.mxu0 0.0
  %102 = vmatprep.subr.mxu0 0.0
  %103 = vmatpush1.msra.mxu0 0.0
  %104 = vmatprep.subr.mxu0 0.0
  %105 = vmatpush1.msra.mxu0 0.0
  %106 = vmatprep.subr.mxu0 0.0
  %107 = vmatpush1.msra.mxu0 0.0
  %108 = vmatprep.subr.mxu0 0.0
  %109 = vmatpush1.msra.mxu0 0.0
  %110 = vmatprep.subr.mxu0 0.0
  %111 = vmatpush1.msra.mxu0 0.0
  %112 = vmatprep.subr.mxu0 0.0
  %113 = vmatpush1.msra.mxu0 0.0
  %114 = vmatprep.subr.mxu0 0.0
  %115 = vmatpush1.msra.mxu0 0.0
  %116 = vmatprep.subr.mxu0 0.0
  %117 = vmatpush1.msra.mxu0 0.0
  %118 = vmatprep.subr.mxu0 0.0
  %119 = vmatpush1.msra.mxu0 0.0
  %120 = vmatprep.subr.mxu0 0.0
  %121 = vmatpush1.msra.mxu0 0.0
  %122 = vmatprep.subr.mxu0 0.0
  %123 = vmatpush1.msra.mxu0 0.0
  %124 = vmatprep.subr.mxu0 0.0
  %125 = vmatpush1.msra.mxu0 0.0
  %126 = vmatprep.subr.mxu0 0.0
  %127 = vmatpush1.msra.mxu0 0.0
  %128 = vmatprep.subr.mxu0 0.0
  %129 = vmatpush1.msra.mxu0 0.0
  %130 = vmatprep.subr.mxu0 0.0
  %131 = vmatpush1.msra.mxu0 0.0
  %132 = vmatprep.subr.mxu0 0.0
  %133 = vmatpush1.msra.mxu0 0.0
  %134 = vmatprep.subr.mxu0 0.0
  %135 = vmatpush1.msra.mxu0 0.0
  %136 = vmatprep.subr.mxu0 0.0
  %137 = vmatpush1.msra.mxu0 0.0
  %138 = vmatprep.subr.mxu0 0.0
  %139 = vmatpush1.msra.mxu0 0.0
  %140 = vmatprep.subr.mxu0 0.0
  %141 = vmatpush1.msra.mxu0 0.0
  %142 = vmatprep.subr.mxu0 0.0
  %143 = vmatpush1.msra.mxu0 0.0
  %144 = vmatprep.mubr.f32.mxu0 0.0
  %145 = vmatmul.mubr.f32.gmra.mrb[0].mxu0 %v75
  %v146 = vpop.f32.mrb[0].mxu0
  %v147 = vadd.f32 %v71, %v146
  %v148 = vpop.f32.mrb[0].mxu0
  %149 = vmatprep.mubr.f32.mxu0 0.0
  %150 = vmatmul.mubr.f32.gmra.mrb[0].mxu0 %v78
  %v151 = vpop.f32.mrb[0].mxu0
  %v152 = vadd.f32 %v71, %v151
  %v153 = vpop.f32.mrb[0].mxu0
  %154 = vdwg.mxu0
  %v155 = vld [vmem:[%s7] sm:$0xff]
  %v156 = vld [vmem:[%s7 + $0x8] sm:$0xff]
  %v157 = vld [vmem:[%s7 + $0x10] sm:$0xff]
  %v158 = vld [vmem:[%s7 + $0x18] sm:$0xff]
  %v159 = vld [vmem:[%s8] sm:$0x1]
  %v161 = vlaneseq
  %v162 = vshrl.u32 %v161, 7
  %v163 = vsub.s32 0, %v162
  %v164 = vrot.slane %v159, %v163
  %v167 = vsel %vm73, %v60, 0
  %v170 = vsel %vm73, %v61, 0
  %172 = vmatprep.subr.mxu0 0.0
  %173 = vmatpush1.msra.mxu0 %v155
  %174 = vmatprep.subr.mxu0 0.0
  %175 = vmatpush1.msra.mxu0 %v156
  %176 = vmatprep.subr.mxu0 0.0
  %177 = vmatpush1.msra.mxu0 %v157
  %178 = vmatprep.subr.mxu0 0.0
  %179 = vmatpush1.msra.mxu0 %v158
  %180 = vmatprep.subr.mxu0 0.0
  %181 = vmatpush1.msra.mxu0 0.0
  %182 = vmatprep.subr.mxu0 0.0
  %183 = vmatpush1.msra.mxu0 0.0
  %184 = vmatprep.subr.mxu0 0.0
  %185 = vmatpush1.msra.mxu0 0.0
  %186 = vmatprep.subr.mxu0 0.0
  %187 = vmatpush1.msra.mxu0 0.0
  %188 = vmatprep.subr.mxu0 0.0
  %189 = vmatpush1.msra.mxu0 0.0
  %190 = vmatprep.subr.mxu0 0.0
  %191 = vmatpush1.msra.mxu0 0.0
  %192 = vmatprep.subr.mxu0 0.0
  %193 = vmatpush1.msra.mxu0 0.0
  %194 = vmatprep.subr.mxu0 0.0
  %195 = vmatpush1.msra.mxu0 0.0
  %196 = vmatprep.subr.mxu0 0.0
  %197 = vmatpush1.msra.mxu0 0.0
  %198 = vmatprep.subr.mxu0 0.0
  %199 = vmatpush1.msra.mxu0 0.0
  %200 = vmatprep.subr.mxu0 0.0
  %201 = vmatpush1.msra.mxu0 0.0
  %202 = vmatprep.subr.mxu0 0.0
  %203 = vmatpush1.msra.mxu0 0.0
  %204 = vmatprep.subr.mxu0 0.0
  %205 = vmatpush1.msra.mxu0 0.0
  %206 = vmatprep.subr.mxu0 0.0
  %207 = vmatpush1.msra.mxu0 0.0
  %208 = vmatprep.subr.mxu0 0.0
  %209 = vmatpush1.msra.mxu0 0.0
  %210 = vmatprep.subr.mxu0 0.0
  %211 = vmatpush1.msra.mxu0 0.0
  %212 = vmatprep.subr.mxu0 0.0
  %213 = vmatpush1.msra.mxu0 0.0
  %214 = vmatprep.subr.mxu0 0.0
  %215 = vmatpush1.msra.mxu0 0.0
  %216 = vmatprep.subr.mxu0 0.0
  %217 = vmatpush1.msra.mxu0 0.0
  %218 = vmatprep.subr.mxu0 0.0
  %219 = vmatpush1.msra.mxu0 0.0
  %220 = vmatprep.subr.mxu0 0.0
  %221 = vmatpush1.msra.mxu0 0.0
  %222 = vmatprep.subr.mxu0 0.0
  %223 = vmatpush1.msra.mxu0 0.0
  %224 = vmatprep.subr.mxu0 0.0
  %225 = vmatpush1.msra.mxu0 0.0
  %226 = vmatprep.subr.mxu0 0.0
  %227 = vmatpush1.msra.mxu0 0.0
  %228 = vmatprep.subr.mxu0 0.0
  %229 = vmatpush1.msra.mxu0 0.0
  %230 = vmatprep.subr.mxu0 0.0
  %231 = vmatpush1.msra.mxu0 0.0
  %232 = vmatprep.subr.mxu0 0.0
  %233 = vmatpush1.msra.mxu0 0.0
  %234 = vmatprep.subr.mxu0 0.0
  %235 = vmatpush1.msra.mxu0 0.0
  %236 = vmatprep.mubr.f32.mxu0 0.0
  %237 = vmatmul.mubr.f32.gmra.mrb[0].mxu0 %v167
  %v238 = vpop.f32.mrb[0].mxu0
  %v239 = vadd.f32 %v164, %v238
  %v240 = vpop.f32.mrb[0].mxu0
  %241 = vmatprep.mubr.f32.mxu0 0.0
  %242 = vmatmul.mubr.f32.gmra.mrb[0].mxu0 %v170
  %v243 = vpop.f32.mrb[0].mxu0
  %v244 = vadd.f32 %v164, %v243
  %v245 = vpop.f32.mrb[0].mxu0
  %246 = vdwg.mxu0
  %v247 = vld [vmem:[%s9] sm:$0xff]
  %v248 = vld [vmem:[%s9 + $0x8] sm:$0xff]
  %v249 = vld [vmem:[%s9 + $0x10] sm:$0xff]
  %v250 = vld [vmem:[%s9 + $0x18] sm:$0xff]
  %v251 = vld [vmem:[%s10] sm:$0x1]
  %v253 = vlaneseq
  %v254 = vshrl.u32 %v253, 7
  %v255 = vsub.s32 0, %v254
  %v256 = vrot.slane %v251, %v255
  %v259 = vsel %vm73, %v56, 0
  %v262 = vsel %vm73, %v57, 0
  %264 = vmatprep.subr.mxu0 0.0
  %265 = vmatpush1.msra.mxu0 %v247
  %266 = vmatprep.subr.mxu0 0.0
  %267 = vmatpush1.msra.mxu0 %v248
  %268 = vmatprep.subr.mxu0 0.0
  %269 = vmatpush1.msra.mxu0 %v249
  %270 = vmatprep.subr.mxu0 0.0
  %271 = vmatpush1.msra.mxu0 %v250
  %272 = vmatprep.subr.mxu0 0.0
  %273 = vmatpush1.msra.mxu0 0.0
  %274 = vmatprep.subr.mxu0 0.0
  %275 = vmatpush1.msra.mxu0 0.0
  %276 = vmatprep.subr.mxu0 0.0
  %277 = vmatpush1.msra.mxu0 0.0
  %278 = vmatprep.subr.mxu0 0.0
  %279 = vmatpush1.msra.mxu0 0.0
  %280 = vmatprep.subr.mxu0 0.0
  %281 = vmatpush1.msra.mxu0 0.0
  %282 = vmatprep.subr.mxu0 0.0
  %283 = vmatpush1.msra.mxu0 0.0
  %284 = vmatprep.subr.mxu0 0.0
  %285 = vmatpush1.msra.mxu0 0.0
  %286 = vmatprep.subr.mxu0 0.0
  %287 = vmatpush1.msra.mxu0 0.0
  %288 = vmatprep.subr.mxu0 0.0
  %289 = vmatpush1.msra.mxu0 0.0
  %290 = vmatprep.subr.mxu0 0.0
  %291 = vmatpush1.msra.mxu0 0.0
  %292 = vmatprep.subr.mxu0 0.0
  %293 = vmatpush1.msra.mxu0 0.0
  %294 = vmatprep.subr.mxu0 0.0
  %295 = vmatpush1.msra.mxu0 0.0
  %296 = vmatprep.subr.mxu0 0.0
  %297 = vmatpush1.msra.mxu0 0.0
  %298 = vmatprep.subr.mxu0 0.0
  %299 = vmatpush1.msra.mxu0 0.0
  %300 = vmatprep.subr.mxu0 0.0
  %301 = vmatpush1.msra.mxu0 0.0
  %302 = vmatprep.subr.mxu0 0.0
  %303 = vmatpush1.msra.mxu0 0.0
  %304 = vmatprep.subr.mxu0 0.0
  %305 = vmatpush1.msra.mxu0 0.0
  %306 = vmatprep.subr.mxu0 0.0
  %307 = vmatpush1.msra.mxu0 0.0
  %308 = vmatprep.subr.mxu0 0.0
  %309 = vmatpush1.msra.mxu0 0.0
  %310 = vmatprep.subr.mxu0 0.0
  %311 = vmatpush1.msra.mxu0 0.0
  %312 = vmatprep.subr.mxu0 0.0
  %313 = vmatpush1.msra.mxu0 0.0
  %314 = vmatprep.subr.mxu0 0.0
  %315 = vmatpush1.msra.mxu0 0.0
  %316 = vmatprep.subr.mxu0 0.0
  %317 = vmatpush1.msra.mxu0 0.0
  %318 = vmatprep.subr.mxu0 0.0
  %319 = vmatpush1.msra.mxu0 0.0
  %320 = vmatprep.subr.mxu0 0.0
  %321 = vmatpush1.msra.mxu0 0.0
  %322 = vmatprep.subr.mxu0 0.0
  %323 = vmatpush1.msra.mxu0 0.0
  %324 = vmatprep.subr.mxu0 0.0
  %325 = vmatpush1.msra.mxu0 0.0
  %326 = vmatprep.subr.mxu0 0.0
  %327 = vmatpush1.msra.mxu0 0.0
  %328 = vmatprep.mubr.f32.mxu0 0.0
  %329 = vmatmul.mubr.f32.gmra.mrb[0].mxu0 %v259
  %v330 = vpop.f32.mrb[0].mxu0
  %v331 = vadd.f32 %v256, %v330
  %v332 = vpop.f32.mrb[0].mxu0
  %333 = vmatprep.mubr.f32.mxu0 0.0
  %334 = vmatmul.mubr.f32.gmra.mrb[0].mxu0 %v262
  %v335 = vpop.f32.mrb[0].mxu0
  %v336 = vadd.f32 %v256, %v335
  %v337 = vpop.f32.mrb[0].mxu0
  %338 = vdwg.mxu0
  %v339 = vld [vmem:[%s4] sm:$0x3]
  %v340 = vld [vmem:[%s11] sm:$0xff]
  %v341 = vld [vmem:[%s11 + $0x8] sm:$0xff]
  %v342 = vld [vmem:[%s11 + $0x10] sm:$0xff]
  %v343 = vld [vmem:[%s11 + $0x18] sm:$0xff]
  %v344 = vld [vmem:[%s12] sm:$0x1]
  %v346 = vlaneseq
  %v347 = vshrl.u32 %v346, 7
  %v348 = vsub.s32 0, %v347
  %v349 = vrot.slane %v344, %v348
  %v351 = vld [vmem:[%s13] sm:$0x1]
  %v352 = vld [vmem:[%s14] sm:$0x1]
  %v353 = vlaneseq
  %v354 = vshrl.u32 %v353, 7
  %v355 = vsub.s32 0, %v354
  %v356 = vrot.slane %v339, %v355
  %vm357 = vcmask 64512
  %v359 = vsel %vm357, %v147, 0
  %v362 = vsel %vm357, %v239, 0
  %364 = vmatprep.subr.mxu0 0.0
  %365 = vmatpush1.xpose.msra.mxu0 %v362
  %366 = vmatprep.subr.mxu0 0.0
  %367 = vmatpush1.xpose.msra.mxu0 0.0
  %368 = vmatprep.subr.mxu0 0.0
  %369 = vmatpush1.xpose.msra.mxu0 0.0
  %370 = vmatprep.subr.mxu0 0.0
  %371 = vmatpush1.xpose.msra.mxu0 0.0
  %372 = vmatprep.subr.mxu0 0.0
  %373 = vmatpush1.xpose.msra.mxu0 0.0
  %374 = vmatprep.subr.mxu0 0.0
  %375 = vmatpush1.xpose.msra.mxu0 0.0
  %376 = vmatprep.subr.mxu0 0.0
  %377 = vmatpush1.xpose.msra.mxu0 0.0
  %378 = vmatprep.subr.mxu0 0.0
  %379 = vmatpush1.xpose.msra.mxu0 0.0
  %380 = vmatprep.subr.mxu0 0.0
  %381 = vmatpush1.xpose.msra.mxu0 0.0
  %382 = vmatprep.subr.mxu0 0.0
  %383 = vmatpush1.xpose.msra.mxu0 0.0
  %384 = vmatprep.subr.mxu0 0.0
  %385 = vmatpush1.xpose.msra.mxu0 0.0
  %386 = vmatprep.subr.mxu0 0.0
  %387 = vmatpush1.xpose.msra.mxu0 0.0
  %388 = vmatprep.subr.mxu0 0.0
  %389 = vmatpush1.xpose.msra.mxu0 0.0
  %390 = vmatprep.subr.mxu0 0.0
  %391 = vmatpush1.xpose.msra.mxu0 0.0
  %392 = vmatprep.subr.mxu0 0.0
  %393 = vmatpush1.xpose.msra.mxu0 0.0
  %394 = vmatprep.subr.mxu0 0.0
  %395 = vmatpush1.xpose.msra.mxu0 0.0
  %396 = vmatprep.subr.mxu0 0.0
  %397 = vmatpush1.xpose.msra.mxu0 0.0
  %398 = vmatprep.subr.mxu0 0.0
  %399 = vmatpush1.xpose.msra.mxu0 0.0
  %400 = vmatprep.subr.mxu0 0.0
  %401 = vmatpush1.xpose.msra.mxu0 0.0
  %402 = vmatprep.subr.mxu0 0.0
  %403 = vmatpush1.xpose.msra.mxu0 0.0
  %404 = vmatprep.subr.mxu0 0.0
  %405 = vmatpush1.xpose.msra.mxu0 0.0
  %406 = vmatprep.subr.mxu0 0.0
  %407 = vmatpush1.xpose.msra.mxu0 0.0
  %408 = vmatprep.subr.mxu0 0.0
  %409 = vmatpush1.xpose.msra.mxu0 0.0
  %410 = vmatprep.subr.mxu0 0.0
  %411 = vmatpush1.xpose.msra.mxu0 0.0
  %412 = vmatprep.subr.mxu0 0.0
  %413 = vmatpush1.xpose.msra.mxu0 0.0
  %414 = vmatprep.subr.mxu0 0.0
  %415 = vmatpush1.xpose.msra.mxu0 0.0
  %416 = vmatprep.subr.mxu0 0.0
  %417 = vmatpush1.xpose.msra.mxu0 0.0
  %418 = vmatprep.subr.mxu0 0.0
  %419 = vmatpush1.xpose.msra.mxu0 0.0
  %420 = vmatprep.subr.mxu0 0.0
  %421 = vmatpush1.xpose.msra.mxu0 0.0
  %422 = vmatprep.subr.mxu0 0.0
  %423 = vmatpush1.xpose.msra.mxu0 0.0
  %424 = vmatprep.subr.mxu0 0.0
  %425 = vmatpush1.xpose.msra.mxu0 0.0
  %426 = vmatprep.subr.mxu0 0.0
  %427 = vmatpush1.xpose.msra.mxu0 0.0
  %428 = vmatprep.mubr.f32.mxu0 0.0
  %429 = vmatmul.mubr.f32.gmra.mrb[0].mxu0 %v359
  %v430 = vpop.f32.mrb[0].mxu0
  %v431 = vadd.f32 %v356, %v430
  %v432 = vpop.f32.mrb[0].mxu0
  %433 = vdwg.mxu0
  %v434 = vsel %vm357, %v431, -inf
  %435 = vmax.xlane.f32.xlu0 %v434
  %v436 = vpop.xlane.xlu0 %435
  %v437 = vsub.f32 %v431, %v436
  %v438 = vmul.f32 %v437, 1.442695
  %v439 = vpow.pop %v438
  %v440 = vsel %vm357, %v439, 0.0
  %441 = vadd.xlane.f32.xlu0 %v440
  %v442 = vpop.xlane.xlu0 %441
  %v444 = vsel %vm357, %v439, 0
  %446 = vmatprep.subr.mxu0 0.0
  %447 = vmatpush1.msra.mxu0 %v331
  %448 = vmatprep.subr.mxu0 0.0
  %449 = vmatpush1.msra.mxu0 0.0
  %450 = vmatprep.subr.mxu0 0.0
  %451 = vmatpush1.msra.mxu0 0.0
  %452 = vmatprep.subr.mxu0 0.0
  %453 = vmatpush1.msra.mxu0 0.0
  %454 = vmatprep.subr.mxu0 0.0
  %455 = vmatpush1.msra.mxu0 0.0
  %456 = vmatprep.subr.mxu0 0.0
  %457 = vmatpush1.msra.mxu0 0.0
  %458 = vmatprep.subr.mxu0 0.0
  %459 = vmatpush1.msra.mxu0 0.0
  %460 = vmatprep.subr.mxu0 0.0
  %461 = vmatpush1.msra.mxu0 0.0
  %462 = vmatprep.subr.mxu0 0.0
  %463 = vmatpush1.msra.mxu0 0.0
  %464 = vmatprep.subr.mxu0 0.0
  %465 = vmatpush1.msra.mxu0 0.0
  %466 = vmatprep.subr.mxu0 0.0
  %467 = vmatpush1.msra.mxu0 0.0
  %468 = vmatprep.subr.mxu0 0.0
  %469 = vmatpush1.msra.mxu0 0.0
  %470 = vmatprep.subr.mxu0 0.0
  %471 = vmatpush1.msra.mxu0 0.0
  %472 = vmatprep.subr.mxu0 0.0
  %473 = vmatpush1.msra.mxu0 0.0
  %474 = vmatprep.subr.mxu0 0.0
  %475 = vmatpush1.msra.mxu0 0.0
  %476 = vmatprep.subr.mxu0 0.0
  %477 = vmatpush1.msra.mxu0 0.0
  %478 = vmatprep.subr.mxu0 0.0
  %479 = vmatpush1.msra.mxu0 0.0
  %480 = vmatprep.subr.mxu0 0.0
  %481 = vmatpush1.msra.mxu0 0.0
  %482 = vmatprep.subr.mxu0 0.0
  %483 = vmatpush1.msra.mxu0 0.0
  %484 = vmatprep.subr.mxu0 0.0
  %485 = vmatpush1.msra.mxu0 0.0
  %486 = vmatprep.subr.mxu0 0.0
  %487 = vmatpush1.msra.mxu0 0.0
  %488 = vmatprep.subr.mxu0 0.0
  %489 = vmatpush1.msra.mxu0 0.0
  %490 = vmatprep.subr.mxu0 0.0
  %491 = vmatpush1.msra.mxu0 0.0
  %492 = vmatprep.subr.mxu0 0.0
  %493 = vmatpush1.msra.mxu0 0.0
  %494 = vmatprep.subr.mxu0 0.0
  %495 = vmatpush1.msra.mxu0 0.0
  %496 = vmatprep.subr.mxu0 0.0
  %497 = vmatpush1.msra.mxu0 0.0
  %498 = vmatprep.subr.mxu0 0.0
  %499 = vmatpush1.msra.mxu0 0.0
  %500 = vmatprep.subr.mxu0 0.0
  %501 = vmatpush1.msra.mxu0 0.0
  %502 = vmatprep.subr.mxu0 0.0
  %503 = vmatpush1.msra.mxu0 0.0
  %504 = vmatprep.subr.mxu0 0.0
  %505 = vmatpush1.msra.mxu0 0.0
  %506 = vmatprep.subr.mxu0 0.0
  %507 = vmatpush1.msra.mxu0 0.0
  %508 = vmatprep.subr.mxu0 0.0
  %509 = vmatpush1.msra.mxu0 0.0
  %510 = vmatprep.mubr.f32.mxu0 0.0
  %511 = vmatmul.mubr.f32.gmra.mrb[0].mxu0 %v444
  %v512 = vpop.f32.mrb[0].mxu0
  %v513 = vadd.f32 0.0, %v512
  %v514 = vpop.f32.mrb[0].mxu0
  %515 = vdwg.mxu0
  %v516 = vrcp.pop %v442
  %v517 = vmul.f32 %v513, %v516
  %v519 = vsel %vm357, %v517, 0
  %521 = vmatprep.subr.mxu0 0.0
  %522 = vmatpush1.msra.mxu0 %v340
  %523 = vmatprep.subr.mxu0 0.0
  %524 = vmatpush1.msra.mxu0 0.0
  %525 = vmatprep.subr.mxu0 0.0
  %526 = vmatpush1.msra.mxu0 0.0
  %527 = vmatprep.subr.mxu0 0.0
  %528 = vmatpush1.msra.mxu0 0.0
  %529 = vmatprep.subr.mxu0 0.0
  %530 = vmatpush1.msra.mxu0 0.0
  %531 = vmatprep.subr.mxu0 0.0
  %532 = vmatpush1.msra.mxu0 0.0
  %533 = vmatprep.subr.mxu0 0.0
  %534 = vmatpush1.msra.mxu0 0.0
  %535 = vmatprep.subr.mxu0 0.0
  %536 = vmatpush1.msra.mxu0 0.0
  %537 = vmatprep.subr.mxu0 0.0
  %538 = vmatpush1.msra.mxu0 0.0
  %539 = vmatprep.subr.mxu0 0.0
  %540 = vmatpush1.msra.mxu0 0.0
  %541 = vmatprep.subr.mxu0 0.0
  %542 = vmatpush1.msra.mxu0 0.0
  %543 = vmatprep.subr.mxu0 0.0
  %544 = vmatpush1.msra.mxu0 0.0
  %545 = vmatprep.subr.mxu0 0.0
  %546 = vmatpush1.msra.mxu0 0.0
  %547 = vmatprep.subr.mxu0 0.0
  %548 = vmatpush1.msra.mxu0 0.0
  %549 = vmatprep.subr.mxu0 0.0
  %550 = vmatpush1.msra.mxu0 0.0
  %551 = vmatprep.subr.mxu0 0.0
  %552 = vmatpush1.msra.mxu0 0.0
  %553 = vmatprep.subr.mxu0 0.0
  %554 = vmatpush1.msra.mxu0 0.0
  %555 = vmatprep.subr.mxu0 0.0
  %556 = vmatpush1.msra.mxu0 0.0
  %557 = vmatprep.subr.mxu0 0.0
  %558 = vmatpush1.msra.mxu0 0.0
  %559 = vmatprep.subr.mxu0 0.0
  %560 = vmatpush1.msra.mxu0 0.0
  %561 = vmatprep.subr.mxu0 0.0
  %562 = vmatpush1.msra.mxu0 0.0
  %563 = vmatprep.subr.mxu0 0.0
  %564 = vmatpush1.msra.mxu0 0.0
  %565 = vmatprep.subr.mxu0 0.0
  %566 = vmatpush1.msra.mxu0 0.0
  %567 = vmatprep.subr.mxu0 0.0
  %568 = vmatpush1.msra.mxu0 0.0
  %569 = vmatprep.subr.mxu0 0.0
  %570 = vmatpush1.msra.mxu0 0.0
  %571 = vmatprep.subr.mxu0 0.0
  %572 = vmatpush1.msra.mxu0 0.0
  %573 = vmatprep.subr.mxu0 0.0
  %574 = vmatpush1.msra.mxu0 0.0
  %575 = vmatprep.subr.mxu0 0.0
  %576 = vmatpush1.msra.mxu0 0.0
  %577 = vmatprep.subr.mxu0 0.0
  %578 = vmatpush1.msra.mxu0 0.0
  %579 = vmatprep.subr.mxu0 0.0
  %580 = vmatpush1.msra.mxu0 0.0
  %581 = vmatprep.subr.mxu0 0.0
  %582 = vmatpush1.msra.mxu0 0.0
  %583 = vmatprep.subr.mxu0 0.0
  %584 = vmatpush1.msra.mxu0 0.0
  %585 = vmatprep.mubr.f32.mxu0 0.0
  %586 = vmatmul.mubr.f32.gmra.mrb[0].mxu0 %v519
  %v587 = vpop.f32.mrb[0].mxu0
  %v588 = vadd.f32 0.0, %v587
  %v589 = vpop.f32.mrb[0].mxu0
  %590 = vdwg.mxu0
  %v591 = vadd.f32 %v349, %v588
  %592 = vrot.lane.b32.xlu0 %v147, 120
  %v593 = vpop.permute.xlu0 %592
  %594 = vrot.lane.b32.xlu0 %v239, 120
  %v595 = vpop.permute.xlu0 %594
  %v596 = vsel %vm357, %v593, 0
  %v598 = vsel %vm357, %v595, 0
  %600 = vmatprep.subr.mxu0 0.0
  %601 = vmatpush1.xpose.msra.mxu0 %v598
  %602 = vmatprep.subr.mxu0 0.0
  %603 = vmatpush1.xpose.msra.mxu0 0.0
  %604 = vmatprep.subr.mxu0 0.0
  %605 = vmatpush1.xpose.msra.mxu0 0.0
  %606 = vmatprep.subr.mxu0 0.0
  %607 = vmatpush1.xpose.msra.mxu0 0.0
  %608 = vmatprep.subr.mxu0 0.0
  %609 = vmatpush1.xpose.msra.mxu0 0.0
  %610 = vmatprep.subr.mxu0 0.0
  %611 = vmatpush1.xpose.msra.mxu0 0.0
  %612 = vmatprep.subr.mxu0 0.0
  %613 = vmatpush1.xpose.msra.mxu0 0.0
  %614 = vmatprep.subr.mxu0 0.0
  %615 = vmatpush1.xpose.msra.mxu0 0.0
  %616 = vmatprep.subr.mxu0 0.0
  %617 = vmatpush1.xpose.msra.mxu0 0.0
  %618 = vmatprep.subr.mxu0 0.0
  %619 = vmatpush1.xpose.msra.mxu0 0.0
  %620 = vmatprep.subr.mxu0 0.0
  %621 = vmatpush1.xpose.msra.mxu0 0.0
  %622 = vmatprep.subr.mxu0 0.0
  %623 = vmatpush1.xpose.msra.mxu0 0.0
  %624 = vmatprep.subr.mxu0 0.0
  %625 = vmatpush1.xpose.msra.mxu0 0.0
  %626 = vmatprep.subr.mxu0 0.0
  %627 = vmatpush1.xpose.msra.mxu0 0.0
  %628 = vmatprep.subr.mxu0 0.0
  %629 = vmatpush1.xpose.msra.mxu0 0.0
  %630 = vmatprep.subr.mxu0 0.0
  %631 = vmatpush1.xpose.msra.mxu0 0.0
  %632 = vmatprep.subr.mxu0 0.0
  %633 = vmatpush1.xpose.msra.mxu0 0.0
  %634 = vmatprep.subr.mxu0 0.0
  %635 = vmatpush1.xpose.msra.mxu0 0.0
  %636 = vmatprep.subr.mxu0 0.0
  %637 = vmatpush1.xpose.msra.mxu0 0.0
  %638 = vmatprep.subr.mxu0 0.0
  %639 = vmatpush1.xpose.msra.mxu0 0.0
  %640 = vmatprep.subr.mxu0 0.0
  %641 = vmatpush1.xpose.msra.mxu0 0.0
  %642 = vmatprep.subr.mxu0 0.0
  %643 = vmatpush1.xpose.msra.mxu0 0.0
  %644 = vmatprep.subr.mxu0 0.0
  %645 = vmatpush1.xpose.msra.mxu0 0.0
  %646 = vmatprep.subr.mxu0 0.0
  %647 = vmatpush1.xpose.msra.mxu0 0.0
  %648 = vmatprep.subr.mxu0 0.0
  %649 = vmatpush1.xpose.msra.mxu0 0.0
  %650 = vmatprep.subr.mxu0 0.0
  %651 = vmatpush1.xpose.msra.mxu0 0.0
  %652 = vmatprep.subr.mxu0 0.0
  %653 = vmatpush1.xpose.msra.mxu0 0.0
  %654 = vmatprep.subr.mxu0 0.0
  %655 = vmatpush1.xpose.msra.mxu0 0.0
  %656 = vmatprep.subr.mxu0 0.0
  %657 = vmatpush1.xpose.msra.mxu0 0.0
  %658 = vmatprep.subr.mxu0 0.0
  %659 = vmatpush1.xpose.msra.mxu0 0.0
  %660 = vmatprep.subr.mxu0 0.0
  %661 = vmatpush1.xpose.msra.mxu0 0.0
  %662 = vmatprep.subr.mxu0 0.0
  %663 = vmatpush1.xpose.msra.mxu0 0.0
  %664 = vmatprep.mubr.f32.mxu0 0.0
  %665 = vmatmul.mubr.f32.gmra.mrb[0].mxu0 %v596
  %v666 = vpop.f32.mrb[0].mxu0
  %v667 = vadd.f32 %v356, %v666
  %v668 = vpop.f32.mrb[0].mxu0
  %669 = vdwg.mxu0
  %v670 = vsel %vm357, %v667, -inf
  %671 = vmax.xlane.f32.xlu0 %v670
  %v672 = vpop.xlane.xlu0 %671
  %v673 = vsub.f32 %v667, %v672
  %v674 = vmul.f32 %v673, 1.442695
  %v675 = vpow.pop %v674
  %v676 = vsel %vm357, %v675, 0.0
  %677 = vadd.xlane.f32.xlu0 %v676
  %v678 = vpop.xlane.xlu0 %677
  %680 = vrot.lane.b32.xlu0 %v331, 120
  %v681 = vpop.permute.xlu0 %680
  %v684 = vsel %vm357, %v675, 0
  %686 = vmatprep.subr.mxu0 0.0
  %687 = vmatpush1.msra.mxu0 %v681
  %688 = vmatprep.subr.mxu0 0.0
  %689 = vmatpush1.msra.mxu0 0.0
  %690 = vmatprep.subr.mxu0 0.0
  %691 = vmatpush1.msra.mxu0 0.0
  %692 = vmatprep.subr.mxu0 0.0
  %693 = vmatpush1.msra.mxu0 0.0
  %694 = vmatprep.subr.mxu0 0.0
  %695 = vmatpush1.msra.mxu0 0.0
  %696 = vmatprep.subr.mxu0 0.0
  %697 = vmatpush1.msra.mxu0 0.0
  %698 = vmatprep.subr.mxu0 0.0
  %699 = vmatpush1.msra.mxu0 0.0
  %700 = vmatprep.subr.mxu0 0.0
  %701 = vmatpush1.msra.mxu0 0.0
  %702 = vmatprep.subr.mxu0 0.0
  %703 = vmatpush1.msra.mxu0 0.0
  %704 = vmatprep.subr.mxu0 0.0
  %705 = vmatpush1.msra.mxu0 0.0
  %706 = vmatprep.subr.mxu0 0.0
  %707 = vmatpush1.msra.mxu0 0.0
  %708 = vmatprep.subr.mxu0 0.0
  %709 = vmatpush1.msra.mxu0 0.0
  %710 = vmatprep.subr.mxu0 0.0
  %711 = vmatpush1.msra.mxu0 0.0
  %712 = vmatprep.subr.mxu0 0.0
  %713 = vmatpush1.msra.mxu0 0.0
  %714 = vmatprep.subr.mxu0 0.0
  %715 = vmatpush1.msra.mxu0 0.0
  %716 = vmatprep.subr.mxu0 0.0
  %717 = vmatpush1.msra.mxu0 0.0
  %718 = vmatprep.subr.mxu0 0.0
  %719 = vmatpush1.msra.mxu0 0.0
  %720 = vmatprep.subr.mxu0 0.0
  %721 = vmatpush1.msra.mxu0 0.0
  %722 = vmatprep.subr.mxu0 0.0
  %723 = vmatpush1.msra.mxu0 0.0
  %724 = vmatprep.subr.mxu0 0.0
  %725 = vmatpush1.msra.mxu0 0.0
  %726 = vmatprep.subr.mxu0 0.0
  %727 = vmatpush1.msra.mxu0 0.0
  %728 = vmatprep.subr.mxu0 0.0
  %729 = vmatpush1.msra.mxu0 0.0
  %730 = vmatprep.subr.mxu0 0.0
  %731 = vmatpush1.msra.mxu0 0.0
  %732 = vmatprep.subr.mxu0 0.0
  %733 = vmatpush1.msra.mxu0 0.0
  %734 = vmatprep.subr.mxu0 0.0
  %735 = vmatpush1.msra.mxu0 0.0
  %736 = vmatprep.subr.mxu0 0.0
  %737 = vmatpush1.msra.mxu0 0.0
  %738 = vmatprep.subr.mxu0 0.0
  %739 = vmatpush1.msra.mxu0 0.0
  %740 = vmatprep.subr.mxu0 0.0
  %741 = vmatpush1.msra.mxu0 0.0
  %742 = vmatprep.subr.mxu0 0.0
  %743 = vmatpush1.msra.mxu0 0.0
  %744 = vmatprep.subr.mxu0 0.0
  %745 = vmatpush1.msra.mxu0 0.0
  %746 = vmatprep.subr.mxu0 0.0
  %747 = vmatpush1.msra.mxu0 0.0
  %748 = vmatprep.subr.mxu0 0.0
  %749 = vmatpush1.msra.mxu0 0.0
  %750 = vmatprep.mubr.f32.mxu0 0.0
  %751 = vmatmul.mubr.f32.gmra.mrb[0].mxu0 %v684
  %v752 = vpop.f32.mrb[0].mxu0
  %v753 = vadd.f32 0.0, %v752
  %v754 = vpop.f32.mrb[0].mxu0
  %755 = vdwg.mxu0
  %v756 = vrcp.pop %v678
  %v757 = vmul.f32 %v753, %v756
  %v759 = vsel %vm357, %v757, 0
  %761 = vmatprep.subr.mxu0 0.0
  %762 = vmatpush1.msra.mxu0 %v341
  %763 = vmatprep.subr.mxu0 0.0
  %764 = vmatpush1.msra.mxu0 0.0
  %765 = vmatprep.subr.mxu0 0.0
  %766 = vmatpush1.msra.mxu0 0.0
  %767 = vmatprep.subr.mxu0 0.0
  %768 = vmatpush1.msra.mxu0 0.0
  %769 = vmatprep.subr.mxu0 0.0
  %770 = vmatpush1.msra.mxu0 0.0
  %771 = vmatprep.subr.mxu0 0.0
  %772 = vmatpush1.msra.mxu0 0.0
  %773 = vmatprep.subr.mxu0 0.0
  %774 = vmatpush1.msra.mxu0 0.0
  %775 = vmatprep.subr.mxu0 0.0
  %776 = vmatpush1.msra.mxu0 0.0
  %777 = vmatprep.subr.mxu0 0.0
  %778 = vmatpush1.msra.mxu0 0.0
  %779 = vmatprep.subr.mxu0 0.0
  %780 = vmatpush1.msra.mxu0 0.0
  %781 = vmatprep.subr.mxu0 0.0
  %782 = vmatpush1.msra.mxu0 0.0
  %783 = vmatprep.subr.mxu0 0.0
  %784 = vmatpush1.msra.mxu0 0.0
  %785 = vmatprep.subr.mxu0 0.0
  %786 = vmatpush1.msra.mxu0 0.0
  %787 = vmatprep.subr.mxu0 0.0
  %788 = vmatpush1.msra.mxu0 0.0
  %789 = vmatprep.subr.mxu0 0.0
  %790 = vmatpush1.msra.mxu0 0.0
  %791 = vmatprep.subr.mxu0 0.0
  %792 = vmatpush1.msra.mxu0 0.0
  %793 = vmatprep.subr.mxu0 0.0
  %794 = vmatpush1.msra.mxu0 0.0
  %795 = vmatprep.subr.mxu0 0.0
  %796 = vmatpush1.msra.mxu0 0.0
  %797 = vmatprep.subr.mxu0 0.0
  %798 = vmatpush1.msra.mxu0 0.0
  %799 = vmatprep.subr.mxu0 0.0
  %800 = vmatpush1.msra.mxu0 0.0
  %801 = vmatprep.subr.mxu0 0.0
  %802 = vmatpush1.msra.mxu0 0.0
  %803 = vmatprep.subr.mxu0 0.0
  %804 = vmatpush1.msra.mxu0 0.0
  %805 = vmatprep.subr.mxu0 0.0
  %806 = vmatpush1.msra.mxu0 0.0
  %807 = vmatprep.subr.mxu0 0.0
  %808 = vmatpush1.msra.mxu0 0.0
  %809 = vmatprep.subr.mxu0 0.0
  %810 = vmatpush1.msra.mxu0 0.0
  %811 = vmatprep.subr.mxu0 0.0
  %812 = vmatpush1.msra.mxu0 0.0
  %813 = vmatprep.subr.mxu0 0.0
  %814 = vmatpush1.msra.mxu0 0.0
  %815 = vmatprep.subr.mxu0 0.0
  %816 = vmatpush1.msra.mxu0 0.0
  %817 = vmatprep.subr.mxu0 0.0
  %818 = vmatpush1.msra.mxu0 0.0
  %819 = vmatprep.subr.mxu0 0.0
  %820 = vmatpush1.msra.mxu0 0.0
  %821 = vmatprep.subr.mxu0 0.0
  %822 = vmatpush1.msra.mxu0 0.0
  %823 = vmatprep.subr.mxu0 0.0
  %824 = vmatpush1.msra.mxu0 0.0
  %825 = vmatprep.mubr.f32.mxu0 0.0
  %826 = vmatmul.mubr.f32.gmra.mrb[0].mxu0 %v759
  %v827 = vpop.f32.mrb[0].mxu0
  %v828 = vadd.f32 0.0, %v827
  %v829 = vpop.f32.mrb[0].mxu0
  %830 = vdwg.mxu0
  %v831 = vadd.f32 %v591, %v828
  %832 = vrot.lane.b32.xlu0 %v147, 112
  %v833 = vpop.permute.xlu0 %832
  %834 = vrot.lane.b32.xlu0 %v239, 112
  %v835 = vpop.permute.xlu0 %834
  %v836 = vsel %vm357, %v833, 0
  %v838 = vsel %vm357, %v835, 0
  %840 = vmatprep.subr.mxu0 0.0
  %841 = vmatpush1.xpose.msra.mxu0 %v838
  %842 = vmatprep.subr.mxu0 0.0
  %843 = vmatpush1.xpose.msra.mxu0 0.0
  %844 = vmatprep.subr.mxu0 0.0
  %845 = vmatpush1.xpose.msra.mxu0 0.0
  %846 = vmatprep.subr.mxu0 0.0
  %847 = vmatpush1.xpose.msra.mxu0 0.0
  %848 = vmatprep.subr.mxu0 0.0
  %849 = vmatpush1.xpose.msra.mxu0 0.0
  %850 = vmatprep.subr.mxu0 0.0
  %851 = vmatpush1.xpose.msra.mxu0 0.0
  %852 = vmatprep.subr.mxu0 0.0
  %853 = vmatpush1.xpose.msra.mxu0 0.0
  %854 = vmatprep.subr.mxu0 0.0
  %855 = vmatpush1.xpose.msra.mxu0 0.0
  %856 = vmatprep.subr.mxu0 0.0
  %857 = vmatpush1.xpose.msra.mxu0 0.0
  %858 = vmatprep.subr.mxu0 0.0
  %859 = vmatpush1.xpose.msra.mxu0 0.0
  %860 = vmatprep.subr.mxu0 0.0
  %861 = vmatpush1.xpose.msra.mxu0 0.0
  %862 = vmatprep.subr.mxu0 0.0
  %863 = vmatpush1.xpose.msra.mxu0 0.0
  %864 = vmatprep.subr.mxu0 0.0
  %865 = vmatpush1.xpose.msra.mxu0 0.0
  %866 = vmatprep.subr.mxu0 0.0
  %867 = vmatpush1.xpose.msra.mxu0 0.0
  %868 = vmatprep.subr.mxu0 0.0
  %869 = vmatpush1.xpose.msra.mxu0 0.0
  %870 = vmatprep.subr.mxu0 0.0
  %871 = vmatpush1.xpose.msra.mxu0 0.0
  %872 = vmatprep.subr.mxu0 0.0
  %873 = vmatpush1.xpose.msra.mxu0 0.0
  %874 = vmatprep.subr.mxu0 0.0
  %875 = vmatpush1.xpose.msra.mxu0 0.0
  %876 = vmatprep.subr.mxu0 0.0
  %877 = vmatpush1.xpose.msra.mxu0 0.0
  %878 = vmatprep.subr.mxu0 0.0
  %879 = vmatpush1.xpose.msra.mxu0 0.0
  %880 = vmatprep.subr.mxu0 0.0
  %881 = vmatpush1.xpose.msra.mxu0 0.0
  %882 = vmatprep.subr.mxu0 0.0
  %883 = vmatpush1.xpose.msra.mxu0 0.0
  %884 = vmatprep.subr.mxu0 0.0
  %885 = vmatpush1.xpose.msra.mxu0 0.0
  %886 = vmatprep.subr.mxu0 0.0
  %887 = vmatpush1.xpose.msra.mxu0 0.0
  %888 = vmatprep.subr.mxu0 0.0
  %889 = vmatpush1.xpose.msra.mxu0 0.0
  %890 = vmatprep.subr.mxu0 0.0
  %891 = vmatpush1.xpose.msra.mxu0 0.0
  %892 = vmatprep.subr.mxu0 0.0
  %893 = vmatpush1.xpose.msra.mxu0 0.0
  %894 = vmatprep.subr.mxu0 0.0
  %895 = vmatpush1.xpose.msra.mxu0 0.0
  %896 = vmatprep.subr.mxu0 0.0
  %897 = vmatpush1.xpose.msra.mxu0 0.0
  %898 = vmatprep.subr.mxu0 0.0
  %899 = vmatpush1.xpose.msra.mxu0 0.0
  %900 = vmatprep.subr.mxu0 0.0
  %901 = vmatpush1.xpose.msra.mxu0 0.0
  %902 = vmatprep.subr.mxu0 0.0
  %903 = vmatpush1.xpose.msra.mxu0 0.0
  %904 = vmatprep.mubr.f32.mxu0 0.0
  %905 = vmatmul.mubr.f32.gmra.mrb[0].mxu0 %v836
  %v906 = vpop.f32.mrb[0].mxu0
  %v907 = vadd.f32 %v356, %v906
  %v908 = vpop.f32.mrb[0].mxu0
  %909 = vdwg.mxu0
  %v910 = vsel %vm357, %v907, -inf
  %911 = vmax.xlane.f32.xlu0 %v910
  %v912 = vpop.xlane.xlu0 %911
  %v913 = vsub.f32 %v907, %v912
  %v914 = vmul.f32 %v913, 1.442695
  %v915 = vpow.pop %v914
  %v916 = vsel %vm357, %v915, 0.0
  %917 = vadd.xlane.f32.xlu0 %v916
  %v918 = vpop.xlane.xlu0 %917
  %919 = vrot.lane.b32.xlu0 %v331, 112
  %v920 = vpop.permute.xlu0 %919
  %v923 = vsel %vm357, %v915, 0
  %925 = vmatprep.subr.mxu0 0.0
  %926 = vmatpush1.msra.mxu0 %v920
  %927 = vmatprep.subr.mxu0 0.0
  %928 = vmatpush1.msra.mxu0 0.0
  %929 = vmatprep.subr.mxu0 0.0
  %930 = vmatpush1.msra.mxu0 0.0
  %931 = vmatprep.subr.mxu0 0.0
  %932 = vmatpush1.msra.mxu0 0.0
  %933 = vmatprep.subr.mxu0 0.0
  %934 = vmatpush1.msra.mxu0 0.0
  %935 = vmatprep.subr.mxu0 0.0
  %936 = vmatpush1.msra.mxu0 0.0
  %937 = vmatprep.subr.mxu0 0.0
  %938 = vmatpush1.msra.mxu0 0.0
  %939 = vmatprep.subr.mxu0 0.0
  %940 = vmatpush1.msra.mxu0 0.0
  %941 = vmatprep.subr.mxu0 0.0
  %942 = vmatpush1.msra.mxu0 0.0
  %943 = vmatprep.subr.mxu0 0.0
  %944 = vmatpush1.msra.mxu0 0.0
  %945 = vmatprep.subr.mxu0 0.0
  %946 = vmatpush1.msra.mxu0 0.0
  %947 = vmatprep.subr.mxu0 0.0
  %948 = vmatpush1.msra.mxu0 0.0
  %949 = vmatprep.subr.mxu0 0.0
  %950 = vmatpush1.msra.mxu0 0.0
  %951 = vmatprep.subr.mxu0 0.0
  %952 = vmatpush1.msra.mxu0 0.0
  %953 = vmatprep.subr.mxu0 0.0
  %954 = vmatpush1.msra.mxu0 0.0
  %955 = vmatprep.subr.mxu0 0.0
  %956 = vmatpush1.msra.mxu0 0.0
  %957 = vmatprep.subr.mxu0 0.0
  %958 = vmatpush1.msra.mxu0 0.0
  %959 = vmatprep.subr.mxu0 0.0
  %960 = vmatpush1.msra.mxu0 0.0
  %961 = vmatprep.subr.mxu0 0.0
  %962 = vmatpush1.msra.mxu0 0.0
  %963 = vmatprep.subr.mxu0 0.0
  %964 = vmatpush1.msra.mxu0 0.0
  %965 = vmatprep.subr.mxu0 0.0
  %966 = vmatpush1.msra.mxu0 0.0
  %967 = vmatprep.subr.mxu0 0.0
  %968 = vmatpush1.msra.mxu0 0.0
  %969 = vmatprep.subr.mxu0 0.0
  %970 = vmatpush1.msra.mxu0 0.0
  %971 = vmatprep.subr.mxu0 0.0
  %972 = vmatpush1.msra.mxu0 0.0
  %973 = vmatprep.subr.mxu0 0.0
  %974 = vmatpush1.msra.mxu0 0.0
  %975 = vmatprep.subr.mxu0 0.0
  %976 = vmatpush1.msra.mxu0 0.0
  %977 = vmatprep.subr.mxu0 0.0
  %978 = vmatpush1.msra.mxu0 0.0
  %979 = vmatprep.subr.mxu0 0.0
  %980 = vmatpush1.msra.mxu0 0.0
  %981 = vmatprep.subr.mxu0 0.0
  %982 = vmatpush1.msra.mxu0 0.0
  %983 = vmatprep.subr.mxu0 0.0
  %984 = vmatpush1.msra.mxu0 0.0
  %985 = vmatprep.subr.mxu0 0.0
  %986 = vmatpush1.msra.mxu0 0.0
  %987 = vmatprep.subr.mxu0 0.0
  %988 = vmatpush1.msra.mxu0 0.0
  %989 = vmatprep.mubr.f32.mxu0 0.0
  %990 = vmatmul.mubr.f32.gmra.mrb[0].mxu0 %v923
  %v991 = vpop.f32.mrb[0].mxu0
  %v992 = vadd.f32 0.0, %v991
  %v993 = vpop.f32.mrb[0].mxu0
  %994 = vdwg.mxu0
  %v995 = vrcp.pop %v918
  %v996 = vmul.f32 %v992, %v995
  %v998 = vsel %vm357, %v996, 0
  %1000 = vmatprep.subr.mxu0 0.0
  %1001 = vmatpush1.msra.mxu0 %v342
  %1002 = vmatprep.subr.mxu0 0.0
  %1003 = vmatpush1.msra.mxu0 0.0
  %1004 = vmatprep.subr.mxu0 0.0
  %1005 = vmatpush1.msra.mxu0 0.0
  %1006 = vmatprep.subr.mxu0 0.0
  %1007 = vmatpush1.msra.mxu0 0.0
  %1008 = vmatprep.subr.mxu0 0.0
  %1009 = vmatpush1.msra.mxu0 0.0
  %1010 = vmatprep.subr.mxu0 0.0
  %1011 = vmatpush1.msra.mxu0 0.0
  %1012 = vmatprep.subr.mxu0 0.0
  %1013 = vmatpush1.msra.mxu0 0.0
  %1014 = vmatprep.subr.mxu0 0.0
  %1015 = vmatpush1.msra.mxu0 0.0
  %1016 = vmatprep.subr.mxu0 0.0
  %1017 = vmatpush1.msra.mxu0 0.0
  %1018 = vmatprep.subr.mxu0 0.0
  %1019 = vmatpush1.msra.mxu0 0.0
  %1020 = vmatprep.subr.mxu0 0.0
  %1021 = vmatpush1.msra.mxu0 0.0
  %1022 = vmatprep.subr.mxu0 0.0
  %1023 = vmatpush1.msra.mxu0 0.0
  %1024 = vmatprep.subr.mxu0 0.0
  %1025 = vmatpush1.msra.mxu0 0.0
  %1026 = vmatprep.subr.mxu0 0.0
  %1027 = vmatpush1.msra.mxu0 0.0
  %1028 = vmatprep.subr.mxu0 0.0
  %1029 = vmatpush1.msra.mxu0 0.0
  %1030 = vmatprep.subr.mxu0 0.0
  %1031 = vmatpush1.msra.mxu0 0.0
  %1032 = vmatprep.subr.mxu0 0.0
  %1033 = vmatpush1.msra.mxu0 0.0
  %1034 = vmatprep.subr.mxu0 0.0
  %1035 = vmatpush1.msra.mxu0 0.0
  %1036 = vmatprep.subr.mxu0 0.0
  %1037 = vmatpush1.msra.mxu0 0.0
  %1038 = vmatprep.subr.mxu0 0.0
  %1039 = vmatpush1.msra.mxu0 0.0
  %1040 = vmatprep.subr.mxu0 0.0
  %1041 = vmatpush1.msra.mxu0 0.0
  %1042 = vmatprep.subr.mxu0 0.0
  %1043 = vmatpush1.msra.mxu0 0.0
  %1044 = vmatprep.subr.mxu0 0.0
  %1045 = vmatpush1.msra.mxu0 0.0
  %1046 = vmatprep.subr.mxu0 0.0
  %1047 = vmatpush1.msra.mxu0 0.0
  %1048 = vmatprep.subr.mxu0 0.0
  %1049 = vmatpush1.msra.mxu0 0.0
  %1050 = vmatprep.subr.mxu0 0.0
  %1051 = vmatpush1.msra.mxu0 0.0
  %1052 = vmatprep.subr.mxu0 0.0
  %1053 = vmatpush1.msra.mxu0 0.0
  %1054 = vmatprep.subr.mxu0 0.0
  %1055 = vmatpush1.msra.mxu0 0.0
  %1056 = vmatprep.subr.mxu0 0.0
  %1057 = vmatpush1.msra.mxu0 0.0
  %1058 = vmatprep.subr.mxu0 0.0
  %1059 = vmatpush1.msra.mxu0 0.0
  %1060 = vmatprep.subr.mxu0 0.0
  %1061 = vmatpush1.msra.mxu0 0.0
  %1062 = vmatprep.subr.mxu0 0.0
  %1063 = vmatpush1.msra.mxu0 0.0
  %1064 = vmatprep.mubr.f32.mxu0 0.0
  %1065 = vmatmul.mubr.f32.gmra.mrb[0].mxu0 %v998
  %v1066 = vpop.f32.mrb[0].mxu0
  %v1067 = vadd.f32 0.0, %v1066
  %v1068 = vpop.f32.mrb[0].mxu0
  %1069 = vdwg.mxu0
  %v1070 = vadd.f32 %v831, %v1067
  %1071 = vrot.lane.b32.xlu0 %v147, 104
  %v1072 = vpop.permute.xlu0 %1071
  %1073 = vrot.lane.b32.xlu0 %v239, 104
  %v1074 = vpop.permute.xlu0 %1073
  %v1075 = vsel %vm357, %v1072, 0
  %v1077 = vsel %vm357, %v1074, 0
  %1079 = vmatprep.subr.mxu0 0.0
  %1080 = vmatpush1.xpose.msra.mxu0 %v1077
  %1081 = vmatprep.subr.mxu0 0.0
  %1082 = vmatpush1.xpose.msra.mxu0 0.0
  %1083 = vmatprep.subr.mxu0 0.0
  %1084 = vmatpush1.xpose.msra.mxu0 0.0
  %1085 = vmatprep.subr.mxu0 0.0
  %1086 = vmatpush1.xpose.msra.mxu0 0.0
  %1087 = vmatprep.subr.mxu0 0.0
  %1088 = vmatpush1.xpose.msra.mxu0 0.0
  %1089 = vmatprep.subr.mxu0 0.0
  %1090 = vmatpush1.xpose.msra.mxu0 0.0
  %1091 = vmatprep.subr.mxu0 0.0
  %1092 = vmatpush1.xpose.msra.mxu0 0.0
  %1093 = vmatprep.subr.mxu0 0.0
  %1094 = vmatpush1.xpose.msra.mxu0 0.0
  %1095 = vmatprep.subr.mxu0 0.0
  %1096 = vmatpush1.xpose.msra.mxu0 0.0
  %1097 = vmatprep.subr.mxu0 0.0
  %1098 = vmatpush1.xpose.msra.mxu0 0.0
  %1099 = vmatprep.subr.mxu0 0.0
  %1100 = vmatpush1.xpose.msra.mxu0 0.0
  %1101 = vmatprep.subr.mxu0 0.0
  %1102 = vmatpush1.xpose.msra.mxu0 0.0
  %1103 = vmatprep.subr.mxu0 0.0
  %1104 = vmatpush1.xpose.msra.mxu0 0.0
  %1105 = vmatprep.subr.mxu0 0.0
  %1106 = vmatpush1.xpose.msra.mxu0 0.0
  %1107 = vmatprep.subr.mxu0 0.0
  %1108 = vmatpush1.xpose.msra.mxu0 0.0
  %1109 = vmatprep.subr.mxu0 0.0
  %1110 = vmatpush1.xpose.msra.mxu0 0.0
  %1111 = vmatprep.subr.mxu0 0.0
  %1112 = vmatpush1.xpose.msra.mxu0 0.0
  %1113 = vmatprep.subr.mxu0 0.0
  %1114 = vmatpush1.xpose.msra.mxu0 0.0
  %1115 = vmatprep.subr.mxu0 0.0
  %1116 = vmatpush1.xpose.msra.mxu0 0.0
  %1117 = vmatprep.subr.mxu0 0.0
  %1118 = vmatpush1.xpose.msra.mxu0 0.0
  %1119 = vmatprep.subr.mxu0 0.0
  %1120 = vmatpush1.xpose.msra.mxu0 0.0
  %1121 = vmatprep.subr.mxu0 0.0
  %1122 = vmatpush1.xpose.msra.mxu0 0.0
  %1123 = vmatprep.subr.mxu0 0.0
  %1124 = vmatpush1.xpose.msra.mxu0 0.0
  %1125 = vmatprep.subr.mxu0 0.0
  %1126 = vmatpush1.xpose.msra.mxu0 0.0
  %1127 = vmatprep.subr.mxu0 0.0
  %1128 = vmatpush1.xpose.msra.mxu0 0.0
  %1129 = vmatprep.subr.mxu0 0.0
  %1130 = vmatpush1.xpose.msra.mxu0 0.0
  %1131 = vmatprep.subr.mxu0 0.0
  %1132 = vmatpush1.xpose.msra.mxu0 0.0
  %1133 = vmatprep.subr.mxu0 0.0
  %1134 = vmatpush1.xpose.msra.mxu0 0.0
  %1135 = vmatprep.subr.mxu0 0.0
  %1136 = vmatpush1.xpose.msra.mxu0 0.0
  %1137 = vmatprep.subr.mxu0 0.0
  %1138 = vmatpush1.xpose.msra.mxu0 0.0
  %1139 = vmatprep.subr.mxu0 0.0
  %1140 = vmatpush1.xpose.msra.mxu0 0.0
  %1141 = vmatprep.subr.mxu0 0.0
  %1142 = vmatpush1.xpose.msra.mxu0 0.0
  %1143 = vmatprep.mubr.f32.mxu0 0.0
  %1144 = vmatmul.mubr.f32.gmra.mrb[0].mxu0 %v1075
  %v1145 = vpop.f32.mrb[0].mxu0
  %v1146 = vadd.f32 %v356, %v1145
  %v1147 = vpop.f32.mrb[0].mxu0
  %1148 = vdwg.mxu0
  %v1149 = vsel %vm357, %v1146, -inf
  %1150 = vmax.xlane.f32.xlu0 %v1149
  %v1151 = vpop.xlane.xlu0 %1150
  %v1152 = vsub.f32 %v1146, %v1151
  %v1153 = vmul.f32 %v1152, 1.442695
  %v1154 = vpow.pop %v1153
  %v1155 = vsel %vm357, %v1154, 0.0
  %1156 = vadd.xlane.f32.xlu0 %v1155
  %v1157 = vpop.xlane.xlu0 %1156
  %1158 = vrot.lane.b32.xlu0 %v331, 104
  %v1159 = vpop.permute.xlu0 %1158
  %v1162 = vsel %vm357, %v1154, 0
  %1164 = vmatprep.subr.mxu0 0.0
  %1165 = vmatpush1.msra.mxu0 %v1159
  %1166 = vmatprep.subr.mxu0 0.0
  %1167 = vmatpush1.msra.mxu0 0.0
  %1168 = vmatprep.subr.mxu0 0.0
  %1169 = vmatpush1.msra.mxu0 0.0
  %1170 = vmatprep.subr.mxu0 0.0
  %1171 = vmatpush1.msra.mxu0 0.0
  %1172 = vmatprep.subr.mxu0 0.0
  %1173 = vmatpush1.msra.mxu0 0.0
  %1174 = vmatprep.subr.mxu0 0.0
  %1175 = vmatpush1.msra.mxu0 0.0
  %1176 = vmatprep.subr.mxu0 0.0
  %1177 = vmatpush1.msra.mxu0 0.0
  %1178 = vmatprep.subr.mxu0 0.0
  %1179 = vmatpush1.msra.mxu0 0.0
  %1180 = vmatprep.subr.mxu0 0.0
  %1181 = vmatpush1.msra.mxu0 0.0
  %1182 = vmatprep.subr.mxu0 0.0
  %1183 = vmatpush1.msra.mxu0 0.0
  %1184 = vmatprep.subr.mxu0 0.0
  %1185 = vmatpush1.msra.mxu0 0.0
  %1186 = vmatprep.subr.mxu0 0.0
  %1187 = vmatpush1.msra.mxu0 0.0
  %1188 = vmatprep.subr.mxu0 0.0
  %1189 = vmatpush1.msra.mxu0 0.0
  %1190 = vmatprep.subr.mxu0 0.0
  %1191 = vmatpush1.msra.mxu0 0.0
  %1192 = vmatprep.subr.mxu0 0.0
  %1193 = vmatpush1.msra.mxu0 0.0
  %1194 = vmatprep.subr.mxu0 0.0
  %1195 = vmatpush1.msra.mxu0 0.0
  %1196 = vmatprep.subr.mxu0 0.0
  %1197 = vmatpush1.msra.mxu0 0.0
  %1198 = vmatprep.subr.mxu0 0.0
  %1199 = vmatpush1.msra.mxu0 0.0
  %1200 = vmatprep.subr.mxu0 0.0
  %1201 = vmatpush1.msra.mxu0 0.0
  %1202 = vmatprep.subr.mxu0 0.0
  %1203 = vmatpush1.msra.mxu0 0.0
  %1204 = vmatprep.subr.mxu0 0.0
  %1205 = vmatpush1.msra.mxu0 0.0
  %1206 = vmatprep.subr.mxu0 0.0
  %1207 = vmatpush1.msra.mxu0 0.0
  %1208 = vmatprep.subr.mxu0 0.0
  %1209 = vmatpush1.msra.mxu0 0.0
  %1210 = vmatprep.subr.mxu0 0.0
  %1211 = vmatpush1.msra.mxu0 0.0
  %1212 = vmatprep.subr.mxu0 0.0
  %1213 = vmatpush1.msra.mxu0 0.0
  %1214 = vmatprep.subr.mxu0 0.0
  %1215 = vmatpush1.msra.mxu0 0.0
  %1216 = vmatprep.subr.mxu0 0.0
  %1217 = vmatpush1.msra.mxu0 0.0
  %1218 = vmatprep.subr.mxu0 0.0
  %1219 = vmatpush1.msra.mxu0 0.0
  %1220 = vmatprep.subr.mxu0 0.0
  %1221 = vmatpush1.msra.mxu0 0.0
  %1222 = vmatprep.subr.mxu0 0.0
  %1223 = vmatpush1.msra.mxu0 0.0
  %1224 = vmatprep.subr.mxu0 0.0
  %1225 = vmatpush1.msra.mxu0 0.0
  %1226 = vmatprep.subr.mxu0 0.0
  %1227 = vmatpush1.msra.mxu0 0.0
  %1228 = vmatprep.mubr.f32.mxu0 0.0
  %1229 = vmatmul.mubr.f32.gmra.mrb[0].mxu0 %v1162
  %v1230 = vpop.f32.mrb[0].mxu0
  %v1231 = vadd.f32 0.0, %v1230
  %v1232 = vpop.f32.mrb[0].mxu0
  %1233 = vdwg.mxu0
  %v1234 = vrcp.pop %v1157
  %v1235 = vmul.f32 %v1231, %v1234
  %v1237 = vsel %vm357, %v1235, 0
  %1239 = vmatprep.subr.mxu0 0.0
  %1240 = vmatpush1.msra.mxu0 %v343
  %1241 = vmatprep.subr.mxu0 0.0
  %1242 = vmatpush1.msra.mxu0 0.0
  %1243 = vmatprep.subr.mxu0 0.0
  %1244 = vmatpush1.msra.mxu0 0.0
  %1245 = vmatprep.subr.mxu0 0.0
  %1246 = vmatpush1.msra.mxu0 0.0
  %1247 = vmatprep.subr.mxu0 0.0
  %1248 = vmatpush1.msra.mxu0 0.0
  %1249 = vmatprep.subr.mxu0 0.0
  %1250 = vmatpush1.msra.mxu0 0.0
  %1251 = vmatprep.subr.mxu0 0.0
  %1252 = vmatpush1.msra.mxu0 0.0
  %1253 = vmatprep.subr.mxu0 0.0
  %1254 = vmatpush1.msra.mxu0 0.0
  %1255 = vmatprep.subr.mxu0 0.0
  %1256 = vmatpush1.msra.mxu0 0.0
  %1257 = vmatprep.subr.mxu0 0.0
  %1258 = vmatpush1.msra.mxu0 0.0
  %1259 = vmatprep.subr.mxu0 0.0
  %1260 = vmatpush1.msra.mxu0 0.0
  %1261 = vmatprep.subr.mxu0 0.0
  %1262 = vmatpush1.msra.mxu0 0.0
  %1263 = vmatprep.subr.mxu0 0.0
  %1264 = vmatpush1.msra.mxu0 0.0
  %1265 = vmatprep.subr.mxu0 0.0
  %1266 = vmatpush1.msra.mxu0 0.0
  %1267 = vmatprep.subr.mxu0 0.0
  %1268 = vmatpush1.msra.mxu0 0.0
  %1269 = vmatprep.subr.mxu0 0.0
  %1270 = vmatpush1.msra.mxu0 0.0
  %1271 = vmatprep.subr.mxu0 0.0
  %1272 = vmatpush1.msra.mxu0 0.0
  %1273 = vmatprep.subr.mxu0 0.0
  %1274 = vmatpush1.msra.mxu0 0.0
  %1275 = vmatprep.subr.mxu0 0.0
  %1276 = vmatpush1.msra.mxu0 0.0
  %1277 = vmatprep.subr.mxu0 0.0
  %1278 = vmatpush1.msra.mxu0 0.0
  %1279 = vmatprep.subr.mxu0 0.0
  %1280 = vmatpush1.msra.mxu0 0.0
  %1281 = vmatprep.subr.mxu0 0.0
  %1282 = vmatpush1.msra.mxu0 0.0
  %1283 = vmatprep.subr.mxu0 0.0
  %1284 = vmatpush1.msra.mxu0 0.0
  %1285 = vmatprep.subr.mxu0 0.0
  %1286 = vmatpush1.msra.mxu0 0.0
  %1287 = vmatprep.subr.mxu0 0.0
  %1288 = vmatpush1.msra.mxu0 0.0
  %1289 = vmatprep.subr.mxu0 0.0
  %1290 = vmatpush1.msra.mxu0 0.0
  %1291 = vmatprep.subr.mxu0 0.0
  %1292 = vmatpush1.msra.mxu0 0.0
  %1293 = vmatprep.subr.mxu0 0.0
  %1294 = vmatpush1.msra.mxu0 0.0
  %1295 = vmatprep.subr.mxu0 0.0
  %1296 = vmatpush1.msra.mxu0 0.0
  %1297 = vmatprep.subr.mxu0 0.0
  %1298 = vmatpush1.msra.mxu0 0.0
  %1299 = vmatprep.subr.mxu0 0.0
  %1300 = vmatpush1.msra.mxu0 0.0
  %1301 = vmatprep.subr.mxu0 0.0
  %1302 = vmatpush1.msra.mxu0 0.0
  %1303 = vmatprep.mubr.f32.mxu0 0.0
  %1304 = vmatmul.mubr.f32.gmra.mrb[0].mxu0 %v1237
  %v1305 = vpop.f32.mrb[0].mxu0
  %v1306 = vadd.f32 0.0, %v1305
  %v1307 = vpop.f32.mrb[0].mxu0
  %1308 = vdwg.mxu0
  %v1309 = vadd.f32 %v1070, %v1306
  %v1310 = vadd.f32 %v50, %v1309
  %v1311 = vsel %vm73, %v1310, 0.0
  %1312 = vadd.xlane.f32.xlu0 %v1311
  %v1313 = vpop.xlane.xlu0 %1312
  %v1314 = vrcp.pop 32.0
  %v1315 = vmul.f32 %v1313, %v1314
  %v1316 = vsub.f32 %v1310, %v1315
  %v1317 = vmul.f32 %v1316, %v1316
  %v1318 = vsel %vm73, %v1317, 0.0
  %1319 = vadd.xlane.f32.xlu0 %v1318
  %v1320 = vpop.xlane.xlu0 %1319
  %v1321 = vmul.f32 %v1320, %v1314
  %v1322 = vadd.f32 %v1321, 1e-05
  %v1323 = vrsqrt.pop %v1322
  %v1324 = vmul.f32 %v1316, %v1323
  %v1326 = vlaneseq
  %v1327 = vshrl.u32 %v1326, 7
  %v1328 = vsub.s32 0, %v1327
  %v1329 = vrot.slane %v351, %v1328
  %v1331 = vmul.f32 %v1324, %v1329
  %v1333 = vlaneseq
  %v1334 = vshrl.u32 %v1333, 7
  %v1335 = vsub.s32 0, %v1334
  %v1336 = vrot.slane %v352, %v1335
  %v1338 = vadd.f32 %v1331, %v1336
  %1339 = vst.msk [vmem:[%s15] sm:$0xff] %vm73, %v1338
  %v1340 = vlaneseq
  %v1341 = vshrl.u32 %v1340, 7
  %v1342 = vsub.s32 1, %v1341
  %v1343 = vrot.slane %v339, %v1342
  %v1345 = vsel %vm357, %v152, 0
  %v1348 = vsel %vm357, %v244, 0
  %1350 = vmatprep.subr.mxu0 0.0
  %1351 = vmatpush1.xpose.msra.mxu0 %v1348
  %1352 = vmatprep.subr.mxu0 0.0
  %1353 = vmatpush1.xpose.msra.mxu0 0.0
  %1354 = vmatprep.subr.mxu0 0.0
  %1355 = vmatpush1.xpose.msra.mxu0 0.0
  %1356 = vmatprep.subr.mxu0 0.0
  %1357 = vmatpush1.xpose.msra.mxu0 0.0
  %1358 = vmatprep.subr.mxu0 0.0
  %1359 = vmatpush1.xpose.msra.mxu0 0.0
  %1360 = vmatprep.subr.mxu0 0.0
  %1361 = vmatpush1.xpose.msra.mxu0 0.0
  %1362 = vmatprep.subr.mxu0 0.0
  %1363 = vmatpush1.xpose.msra.mxu0 0.0
  %1364 = vmatprep.subr.mxu0 0.0
  %1365 = vmatpush1.xpose.msra.mxu0 0.0
  %1366 = vmatprep.subr.mxu0 0.0
  %1367 = vmatpush1.xpose.msra.mxu0 0.0
  %1368 = vmatprep.subr.mxu0 0.0
  %1369 = vmatpush1.xpose.msra.mxu0 0.0
  %1370 = vmatprep.subr.mxu0 0.0
  %1371 = vmatpush1.xpose.msra.mxu0 0.0
  %1372 = vmatprep.subr.mxu0 0.0
  %1373 = vmatpush1.xpose.msra.mxu0 0.0
  %1374 = vmatprep.subr.mxu0 0.0
  %1375 = vmatpush1.xpose.msra.mxu0 0.0
  %1376 = vmatprep.subr.mxu0 0.0
  %1377 = vmatpush1.xpose.msra.mxu0 0.0
  %1378 = vmatprep.subr.mxu0 0.0
  %1379 = vmatpush1.xpose.msra.mxu0 0.0
  %1380 = vmatprep.subr.mxu0 0.0
  %1381 = vmatpush1.xpose.msra.mxu0 0.0
  %1382 = vmatprep.subr.mxu0 0.0
  %1383 = vmatpush1.xpose.msra.mxu0 0.0
  %1384 = vmatprep.subr.mxu0 0.0
  %1385 = vmatpush1.xpose.msra.mxu0 0.0
  %1386 = vmatprep.subr.mxu0 0.0
  %1387 = vmatpush1.xpose.msra.mxu0 0.0
  %1388 = vmatprep.subr.mxu0 0.0
  %1389 = vmatpush1.xpose.msra.mxu0 0.0
  %1390 = vmatprep.subr.mxu0 0.0
  %1391 = vmatpush1.xpose.msra.mxu0 0.0
  %1392 = vmatprep.subr.mxu0 0.0
  %1393 = vmatpush1.xpose.msra.mxu0 0.0
  %1394 = vmatprep.subr.mxu0 0.0
  %1395 = vmatpush1.xpose.msra.mxu0 0.0
  %1396 = vmatprep.subr.mxu0 0.0
  %1397 = vmatpush1.xpose.msra.mxu0 0.0
  %1398 = vmatprep.subr.mxu0 0.0
  %1399 = vmatpush1.xpose.msra.mxu0 0.0
  %1400 = vmatprep.subr.mxu0 0.0
  %1401 = vmatpush1.xpose.msra.mxu0 0.0
  %1402 = vmatprep.subr.mxu0 0.0
  %1403 = vmatpush1.xpose.msra.mxu0 0.0
  %1404 = vmatprep.subr.mxu0 0.0
  %1405 = vmatpush1.xpose.msra.mxu0 0.0
  %1406 = vmatprep.subr.mxu0 0.0
  %1407 = vmatpush1.xpose.msra.mxu0 0.0
  %1408 = vmatprep.subr.mxu0 0.0
  %1409 = vmatpush1.xpose.msra.mxu0 0.0
  %1410 = vmatprep.subr.mxu0 0.0
  %1411 = vmatpush1.xpose.msra.mxu0 0.0
  %1412 = vmatprep.subr.mxu0 0.0
  %1413 = vmatpush1.xpose.msra.mxu0 0.0
  %1414 = vmatprep.mubr.f32.mxu0 0.0
  %1415 = vmatmul.mubr.f32.gmra.mrb[0].mxu0 %v1345
  %v1416 = vpop.f32.mrb[0].mxu0
  %v1417 = vadd.f32 %v1343, %v1416
  %v1418 = vpop.f32.mrb[0].mxu0
  %1419 = vdwg.mxu0
  %v1420 = vsel %vm357, %v1417, -inf
  %1421 = vmax.xlane.f32.xlu0 %v1420
  %v1422 = vpop.xlane.xlu0 %1421
  %v1423 = vsub.f32 %v1417, %v1422
  %v1424 = vmul.f32 %v1423, 1.442695
  %v1425 = vpow.pop %v1424
  %v1426 = vsel %vm357, %v1425, 0.0
  %1427 = vadd.xlane.f32.xlu0 %v1426
  %v1428 = vpop.xlane.xlu0 %1427
  %v1430 = vsel %vm357, %v1425, 0
  %1432 = vmatprep.subr.mxu0 0.0
  %1433 = vmatpush1.msra.mxu0 %v336
  %1434 = vmatprep.subr.mxu0 0.0
  %1435 = vmatpush1.msra.mxu0 0.0
  %1436 = vmatprep.subr.mxu0 0.0
  %1437 = vmatpush1.msra.mxu0 0.0
  %1438 = vmatprep.subr.mxu0 0.0
  %1439 = vmatpush1.msra.mxu0 0.0
  %1440 = vmatprep.subr.mxu0 0.0
  %1441 = vmatpush1.msra.mxu0 0.0
  %1442 = vmatprep.subr.mxu0 0.0
  %1443 = vmatpush1.msra.mxu0 0.0
  %1444 = vmatprep.subr.mxu0 0.0
  %1445 = vmatpush1.msra.mxu0 0.0
  %1446 = vmatprep.subr.mxu0 0.0
  %1447 = vmatpush1.msra.mxu0 0.0
  %1448 = vmatprep.subr.mxu0 0.0
  %1449 = vmatpush1.msra.mxu0 0.0
  %1450 = vmatprep.subr.mxu0 0.0
  %1451 = vmatpush1.msra.mxu0 0.0
  %1452 = vmatprep.subr.mxu0 0.0
  %1453 = vmatpush1.msra.mxu0 0.0
  %1454 = vmatprep.subr.mxu0 0.0
  %1455 = vmatpush1.msra.mxu0 0.0
  %1456 = vmatprep.subr.mxu0 0.0
  %1457 = vmatpush1.msra.mxu0 0.0
  %1458 = vmatprep.subr.mxu0 0.0
  %1459 = vmatpush1.msra.mxu0 0.0
  %1460 = vmatprep.subr.mxu0 0.0
  %1461 = vmatpush1.msra.mxu0 0.0
  %1462 = vmatprep.subr.mxu0 0.0
  %1463 = vmatpush1.msra.mxu0 0.0
  %1464 = vmatprep.subr.mxu0 0.0
  %1465 = vmatpush1.msra.mxu0 0.0
  %1466 = vmatprep.subr.mxu0 0.0
  %1467 = vmatpush1.msra.mxu0 0.0
  %1468 = vmatprep.subr.mxu0 0.0
  %1469 = vmatpush1.msra.mxu0 0.0
  %1470 = vmatprep.subr.mxu0 0.0
  %1471 = vmatpush1.msra.mxu0 0.0
  %1472 = vmatprep.subr.mxu0 0.0
  %1473 = vmatpush1.msra.mxu0 0.0
  %1474 = vmatprep.subr.mxu0 0.0
  %1475 = vmatpush1.msra.mxu0 0.0
  %1476 = vmatprep.subr.mxu0 0.0
  %1477 = vmatpush1.msra.mxu0 0.0
  %1478 = vmatprep.subr.mxu0 0.0
  %1479 = vmatpush1.msra.mxu0 0.0
  %1480 = vmatprep.subr.mxu0 0.0
  %1481 = vmatpush1.msra.mxu0 0.0
  %1482 = vmatprep.subr.mxu0 0.0
  %1483 = vmatpush1.msra.mxu0 0.0
  %1484 = vmatprep.subr.mxu0 0.0
  %1485 = vmatpush1.msra.mxu0 0.0
  %1486 = vmatprep.subr.mxu0 0.0
  %1487 = vmatpush1.msra.mxu0 0.0
  %1488 = vmatprep.subr.mxu0 0.0
  %1489 = vmatpush1.msra.mxu0 0.0
  %1490 = vmatprep.subr.mxu0 0.0
  %1491 = vmatpush1.msra.mxu0 0.0
  %1492 = vmatprep.subr.mxu0 0.0
  %1493 = vmatpush1.msra.mxu0 0.0
  %1494 = vmatprep.subr.mxu0 0.0
  %1495 = vmatpush1.msra.mxu0 0.0
  %1496 = vmatprep.mubr.f32.mxu0 0.0
  %1497 = vmatmul.mubr.f32.gmra.mrb[0].mxu0 %v1430
  %v1498 = vpop.f32.mrb[0].mxu0
  %v1499 = vadd.f32 0.0, %v1498
  %v1500 = vpop.f32.mrb[0].mxu0
  %1501 = vdwg.mxu0
  %v1502 = vrcp.pop %v1428
  %v1503 = vmul.f32 %v1499, %v1502
  %v1505 = vsel %vm357, %v1503, 0
  %1507 = vmatprep.subr.mxu0 0.0
  %1508 = vmatpush1.msra.mxu0 %v340
  %1509 = vmatprep.subr.mxu0 0.0
  %1510 = vmatpush1.msra.mxu0 0.0
  %1511 = vmatprep.subr.mxu0 0.0
  %1512 = vmatpush1.msra.mxu0 0.0
  %1513 = vmatprep.subr.mxu0 0.0
  %1514 = vmatpush1.msra.mxu0 0.0
  %1515 = vmatprep.subr.mxu0 0.0
  %1516 = vmatpush1.msra.mxu0 0.0
  %1517 = vmatprep.subr.mxu0 0.0
  %1518 = vmatpush1.msra.mxu0 0.0
  %1519 = vmatprep.subr.mxu0 0.0
  %1520 = vmatpush1.msra.mxu0 0.0
  %1521 = vmatprep.subr.mxu0 0.0
  %1522 = vmatpush1.msra.mxu0 0.0
  %1523 = vmatprep.subr.mxu0 0.0
  %1524 = vmatpush1.msra.mxu0 0.0
  %1525 = vmatprep.subr.mxu0 0.0
  %1526 = vmatpush1.msra.mxu0 0.0
  %1527 = vmatprep.subr.mxu0 0.0
  %1528 = vmatpush1.msra.mxu0 0.0
  %1529 = vmatprep.subr.mxu0 0.0
  %1530 = vmatpush1.msra.mxu0 0.0
  %1531 = vmatprep.subr.mxu0 0.0
  %1532 = vmatpush1.msra.mxu0 0.0
  %1533 = vmatprep.subr.mxu0 0.0
  %1534 = vmatpush1.msra.mxu0 0.0
  %1535 = vmatprep.subr.mxu0 0.0
  %1536 = vmatpush1.msra.mxu0 0.0
  %1537 = vmatprep.subr.mxu0 0.0
  %1538 = vmatpush1.msra.mxu0 0.0
  %1539 = vmatprep.subr.mxu0 0.0
  %1540 = vmatpush1.msra.mxu0 0.0
  %1541 = vmatprep.subr.mxu0 0.0
  %1542 = vmatpush1.msra.mxu0 0.0
  %1543 = vmatprep.subr.mxu0 0.0
  %1544 = vmatpush1.msra.mxu0 0.0
  %1545 = vmatprep.subr.mxu0 0.0
  %1546 = vmatpush1.msra.mxu0 0.0
  %1547 = vmatprep.subr.mxu0 0.0
  %1548 = vmatpush1.msra.mxu0 0.0
  %1549 = vmatprep.subr.mxu0 0.0
  %1550 = vmatpush1.msra.mxu0 0.0
  %1551 = vmatprep.subr.mxu0 0.0
  %1552 = vmatpush1.msra.mxu0 0.0
  %1553 = vmatprep.subr.mxu0 0.0
  %1554 = vmatpush1.msra.mxu0 0.0
  %1555 = vmatprep.subr.mxu0 0.0
  %1556 = vmatpush1.msra.mxu0 0.0
  %1557 = vmatprep.subr.mxu0 0.0
  %1558 = vmatpush1.msra.mxu0 0.0
  %1559 = vmatprep.subr.mxu0 0.0
  %1560 = vmatpush1.msra.mxu0 0.0
  %1561 = vmatprep.subr.mxu0 0.0
  %1562 = vmatpush1.msra.mxu0 0.0
  %1563 = vmatprep.subr.mxu0 0.0
  %1564 = vmatpush1.msra.mxu0 0.0
  %1565 = vmatprep.subr.mxu0 0.0
  %1566 = vmatpush1.msra.mxu0 0.0
  %1567 = vmatprep.subr.mxu0 0.0
  %1568 = vmatpush1.msra.mxu0 0.0
  %1569 = vmatprep.subr.mxu0 0.0
  %1570 = vmatpush1.msra.mxu0 0.0
  %1571 = vmatprep.mubr.f32.mxu0 0.0
  %1572 = vmatmul.mubr.f32.gmra.mrb[0].mxu0 %v1505
  %v1573 = vpop.f32.mrb[0].mxu0
  %v1574 = vadd.f32 0.0, %v1573
  %v1575 = vpop.f32.mrb[0].mxu0
  %1576 = vdwg.mxu0
  %v1577 = vadd.f32 %v349, %v1574
  %1578 = vrot.lane.b32.xlu0 %v152, 120
  %v1579 = vpop.permute.xlu0 %1578
  %1580 = vrot.lane.b32.xlu0 %v244, 120
  %v1581 = vpop.permute.xlu0 %1580
  %v1582 = vsel %vm357, %v1579, 0
  %v1584 = vsel %vm357, %v1581, 0
  %1586 = vmatprep.subr.mxu0 0.0
  %1587 = vmatpush1.xpose.msra.mxu0 %v1584
  %1588 = vmatprep.subr.mxu0 0.0
  %1589 = vmatpush1.xpose.msra.mxu0 0.0
  %1590 = vmatprep.subr.mxu0 0.0
  %1591 = vmatpush1.xpose.msra.mxu0 0.0
  %1592 = vmatprep.subr.mxu0 0.0
  %1593 = vmatpush1.xpose.msra.mxu0 0.0
  %1594 = vmatprep.subr.mxu0 0.0
  %1595 = vmatpush1.xpose.msra.mxu0 0.0
  %1596 = vmatprep.subr.mxu0 0.0
  %1597 = vmatpush1.xpose.msra.mxu0 0.0
  %1598 = vmatprep.subr.mxu0 0.0
  %1599 = vmatpush1.xpose.msra.mxu0 0.0
  %1600 = vmatprep.subr.mxu0 0.0
  %1601 = vmatpush1.xpose.msra.mxu0 0.0
  %1602 = vmatprep.subr.mxu0 0.0
  %1603 = vmatpush1.xpose.msra.mxu0 0.0
  %1604 = vmatprep.subr.mxu0 0.0
  %1605 = vmatpush1.xpose.msra.mxu0 0.0
  %1606 = vmatprep.subr.mxu0 0.0
  %1607 = vmatpush1.xpose.msra.mxu0 0.0
  %1608 = vmatprep.subr.mxu0 0.0
  %1609 = vmatpush1.xpose.msra.mxu0 0.0
  %1610 = vmatprep.subr.mxu0 0.0
  %1611 = vmatpush1.xpose.msra.mxu0 0.0
  %1612 = vmatprep.subr.mxu0 0.0
  %1613 = vmatpush1.xpose.msra.mxu0 0.0
  %1614 = vmatprep.subr.mxu0 0.0
  %1615 = vmatpush1.xpose.msra.mxu0 0.0
  %1616 = vmatprep.subr.mxu0 0.0
  %1617 = vmatpush1.xpose.msra.mxu0 0.0
  %1618 = vmatprep.subr.mxu0 0.0
  %1619 = vmatpush1.xpose.msra.mxu0 0.0
  %1620 = vmatprep.subr.mxu0 0.0
  %1621 = vmatpush1.xpose.msra.mxu0 0.0
  %1622 = vmatprep.subr.mxu0 0.0
  %1623 = vmatpush1.xpose.msra.mxu0 0.0
  %1624 = vmatprep.subr.mxu0 0.0
  %1625 = vmatpush1.xpose.msra.mxu0 0.0
  %1626 = vmatprep.subr.mxu0 0.0
  %1627 = vmatpush1.xpose.msra.mxu0 0.0
  %1628 = vmatprep.subr.mxu0 0.0
  %1629 = vmatpush1.xpose.msra.mxu0 0.0
  %1630 = vmatprep.subr.mxu0 0.0
  %1631 = vmatpush1.xpose.msra.mxu0 0.0
  %1632 = vmatprep.subr.mxu0 0.0
  %1633 = vmatpush1.xpose.msra.mxu0 0.0
  %1634 = vmatprep.subr.mxu0 0.0
  %1635 = vmatpush1.xpose.msra.mxu0 0.0
  %1636 = vmatprep.subr.mxu0 0.0
  %1637 = vmatpush1.xpose.msra.mxu0 0.0
  %1638 = vmatprep.subr.mxu0 0.0
  %1639 = vmatpush1.xpose.msra.mxu0 0.0
  %1640 = vmatprep.subr.mxu0 0.0
  %1641 = vmatpush1.xpose.msra.mxu0 0.0
  %1642 = vmatprep.subr.mxu0 0.0
  %1643 = vmatpush1.xpose.msra.mxu0 0.0
  %1644 = vmatprep.subr.mxu0 0.0
  %1645 = vmatpush1.xpose.msra.mxu0 0.0
  %1646 = vmatprep.subr.mxu0 0.0
  %1647 = vmatpush1.xpose.msra.mxu0 0.0
  %1648 = vmatprep.subr.mxu0 0.0
  %1649 = vmatpush1.xpose.msra.mxu0 0.0
  %1650 = vmatprep.mubr.f32.mxu0 0.0
  %1651 = vmatmul.mubr.f32.gmra.mrb[0].mxu0 %v1582
  %v1652 = vpop.f32.mrb[0].mxu0
  %v1653 = vadd.f32 %v1343, %v1652
  %v1654 = vpop.f32.mrb[0].mxu0
  %1655 = vdwg.mxu0
  %v1656 = vsel %vm357, %v1653, -inf
  %1657 = vmax.xlane.f32.xlu0 %v1656
  %v1658 = vpop.xlane.xlu0 %1657
  %v1659 = vsub.f32 %v1653, %v1658
  %v1660 = vmul.f32 %v1659, 1.442695
  %v1661 = vpow.pop %v1660
  %v1662 = vsel %vm357, %v1661, 0.0
  %1663 = vadd.xlane.f32.xlu0 %v1662
  %v1664 = vpop.xlane.xlu0 %1663
  %1666 = vrot.lane.b32.xlu0 %v336, 120
  %v1667 = vpop.permute.xlu0 %1666
  %v1670 = vsel %vm357, %v1661, 0
  %1672 = vmatprep.subr.mxu0 0.0
  %1673 = vmatpush1.msra.mxu0 %v1667
  %1674 = vmatprep.subr.mxu0 0.0
  %1675 = vmatpush1.msra.mxu0 0.0
  %1676 = vmatprep.subr.mxu0 0.0
  %1677 = vmatpush1.msra.mxu0 0.0
  %1678 = vmatprep.subr.mxu0 0.0
  %1679 = vmatpush1.msra.mxu0 0.0
  %1680 = vmatprep.subr.mxu0 0.0
  %1681 = vmatpush1.msra.mxu0 0.0
  %1682 = vmatprep.subr.mxu0 0.0
  %1683 = vmatpush1.msra.mxu0 0.0
  %1684 = vmatprep.subr.mxu0 0.0
  %1685 = vmatpush1.msra.mxu0 0.0
  %1686 = vmatprep.subr.mxu0 0.0
  %1687 = vmatpush1.msra.mxu0 0.0
  %1688 = vmatprep.subr.mxu0 0.0
  %1689 = vmatpush1.msra.mxu0 0.0
  %1690 = vmatprep.subr.mxu0 0.0
  %1691 = vmatpush1.msra.mxu0 0.0
  %1692 = vmatprep.subr.mxu0 0.0
  %1693 = vmatpush1.msra.mxu0 0.0
  %1694 = vmatprep.subr.mxu0 0.0
  %1695 = vmatpush1.msra.mxu0 0.0
  %1696 = vmatprep.subr.mxu0 0.0
  %1697 = vmatpush1.msra.mxu0 0.0
  %1698 = vmatprep.subr.mxu0 0.0
  %1699 = vmatpush1.msra.mxu0 0.0
  %1700 = vmatprep.subr.mxu0 0.0
  %1701 = vmatpush1.msra.mxu0 0.0
  %1702 = vmatprep.subr.mxu0 0.0
  %1703 = vmatpush1.msra.mxu0 0.0
  %1704 = vmatprep.subr.mxu0 0.0
  %1705 = vmatpush1.msra.mxu0 0.0
  %1706 = vmatprep.subr.mxu0 0.0
  %1707 = vmatpush1.msra.mxu0 0.0
  %1708 = vmatprep.subr.mxu0 0.0
  %1709 = vmatpush1.msra.mxu0 0.0
  %1710 = vmatprep.subr.mxu0 0.0
  %1711 = vmatpush1.msra.mxu0 0.0
  %1712 = vmatprep.subr.mxu0 0.0
  %1713 = vmatpush1.msra.mxu0 0.0
  %1714 = vmatprep.subr.mxu0 0.0
  %1715 = vmatpush1.msra.mxu0 0.0
  %1716 = vmatprep.subr.mxu0 0.0
  %1717 = vmatpush1.msra.mxu0 0.0
  %1718 = vmatprep.subr.mxu0 0.0
  %1719 = vmatpush1.msra.mxu0 0.0
  %1720 = vmatprep.subr.mxu0 0.0
  %1721 = vmatpush1.msra.mxu0 0.0
  %1722 = vmatprep.subr.mxu0 0.0
  %1723 = vmatpush1.msra.mxu0 0.0
  %1724 = vmatprep.subr.mxu0 0.0
  %1725 = vmatpush1.msra.mxu0 0.0
  %1726 = vmatprep.subr.mxu0 0.0
  %1727 = vmatpush1.msra.mxu0 0.0
  %1728 = vmatprep.subr.mxu0 0.0
  %1729 = vmatpush1.msra.mxu0 0.0
  %1730 = vmatprep.subr.mxu0 0.0
  %1731 = vmatpush1.msra.mxu0 0.0
  %1732 = vmatprep.subr.mxu0 0.0
  %1733 = vmatpush1.msra.mxu0 0.0
  %1734 = vmatprep.subr.mxu0 0.0
  %1735 = vmatpush1.msra.mxu0 0.0
  %1736 = vmatprep.mubr.f32.mxu0 0.0
  %1737 = vmatmul.mubr.f32.gmra.mrb[0].mxu0 %v1670
  %v1738 = vpop.f32.mrb[0].mxu0
  %v1739 = vadd.f32 0.0, %v1738
  %v1740 = vpop.f32.mrb[0].mxu0
  %1741 = vdwg.mxu0
  %v1742 = vrcp.pop %v1664
  %v1743 = vmul.f32 %v1739, %v1742
  %v1745 = vsel %vm357, %v1743, 0
  %1747 = vmatprep.subr.mxu0 0.0
  %1748 = vmatpush1.msra.mxu0 %v341
  %1749 = vmatprep.subr.mxu0 0.0
  %1750 = vmatpush1.msra.mxu0 0.0
  %1751 = vmatprep.subr.mxu0 0.0
  %1752 = vmatpush1.msra.mxu0 0.0
  %1753 = vmatprep.subr.mxu0 0.0
  %1754 = vmatpush1.msra.mxu0 0.0
  %1755 = vmatprep.subr.mxu0 0.0
  %1756 = vmatpush1.msra.mxu0 0.0
  %1757 = vmatprep.subr.mxu0 0.0
  %1758 = vmatpush1.msra.mxu0 0.0
  %1759 = vmatprep.subr.mxu0 0.0
  %1760 = vmatpush1.msra.mxu0 0.0
  %1761 = vmatprep.subr.mxu0 0.0
  %1762 = vmatpush1.msra.mxu0 0.0
  %1763 = vmatprep.subr.mxu0 0.0
  %1764 = vmatpush1.msra.mxu0 0.0
  %1765 = vmatprep.subr.mxu0 0.0
  %1766 = vmatpush1.msra.mxu0 0.0
  %1767 = vmatprep.subr.mxu0 0.0
  %1768 = vmatpush1.msra.mxu0 0.0
  %1769 = vmatprep.subr.mxu0 0.0
  %1770 = vmatpush1.msra.mxu0 0.0
  %1771 = vmatprep.subr.mxu0 0.0
  %1772 = vmatpush1.msra.mxu0 0.0
  %1773 = vmatprep.subr.mxu0 0.0
  %1774 = vmatpush1.msra.mxu0 0.0
  %1775 = vmatprep.subr.mxu0 0.0
  %1776 = vmatpush1.msra.mxu0 0.0
  %1777 = vmatprep.subr.mxu0 0.0
  %1778 = vmatpush1.msra.mxu0 0.0
  %1779 = vmatprep.subr.mxu0 0.0
  %1780 = vmatpush1.msra.mxu0 0.0
  %1781 = vmatprep.subr.mxu0 0.0
  %1782 = vmatpush1.msra.mxu0 0.0
  %1783 = vmatprep.subr.mxu0 0.0
  %1784 = vmatpush1.msra.mxu0 0.0
  %1785 = vmatprep.subr.mxu0 0.0
  %1786 = vmatpush1.msra.mxu0 0.0
  %1787 = vmatprep.subr.mxu0 0.0
  %1788 = vmatpush1.msra.mxu0 0.0
  %1789 = vmatprep.subr.mxu0 0.0
  %1790 = vmatpush1.msra.mxu0 0.0
  %1791 = vmatprep.subr.mxu0 0.0
  %1792 = vmatpush1.msra.mxu0 0.0
  %1793 = vmatprep.subr.mxu0 0.0
  %1794 = vmatpush1.msra.mxu0 0.0
  %1795 = vmatprep.subr.mxu0 0.0
  %1796 = vmatpush1.msra.mxu0 0.0
  %1797 = vmatprep.subr.mxu0 0.0
  %1798 = vmatpush1.msra.mxu0 0.0
  %1799 = vmatprep.subr.mxu0 0.0
  %1800 = vmatpush1.msra.mxu0 0.0
  %1801 = vmatprep.subr.mxu0 0.0
  %1802 = vmatpush1.msra.mxu0 0.0
  %1803 = vmatprep.subr.mxu0 0.0
  %1804 = vmatpush1.msra.mxu0 0.0
  %1805 = vmatprep.subr.mxu0 0.0
  %1806 = vmatpush1.msra.mxu0 0.0
  %1807 = vmatprep.subr.mxu0 0.0
  %1808 = vmatpush1.msra.mxu0 0.0
  %1809 = vmatprep.subr.mxu0 0.0
  %1810 = vmatpush1.msra.mxu0 0.0
  %1811 = vmatprep.mubr.f32.mxu0 0.0
  %1812 = vmatmul.mubr.f32.gmra.mrb[0].mxu0 %v1745
  %v1813 = vpop.f32.mrb[0].mxu0
  %v1814 = vadd.f32 0.0, %v1813
  %v1815 = vpop.f32.mrb[0].mxu0
  %1816 = vdwg.mxu0
  %v1817 = vadd.f32 %v1577, %v1814
  %1818 = vrot.lane.b32.xlu0 %v152, 112
  %v1819 = vpop.permute.xlu0 %1818
  %1820 = vrot.lane.b32.xlu0 %v244, 112
  %v1821 = vpop.permute.xlu0 %1820
  %v1822 = vsel %vm357, %v1819, 0
  %v1824 = vsel %vm357, %v1821, 0
  %1826 = vmatprep.subr.mxu0 0.0
  %1827 = vmatpush1.xpose.msra.mxu0 %v1824
  %1828 = vmatprep.subr.mxu0 0.0
  %1829 = vmatpush1.xpose.msra.mxu0 0.0
  %1830 = vmatprep.subr.mxu0 0.0
  %1831 = vmatpush1.xpose.msra.mxu0 0.0
  %1832 = vmatprep.subr.mxu0 0.0
  %1833 = vmatpush1.xpose.msra.mxu0 0.0
  %1834 = vmatprep.subr.mxu0 0.0
  %1835 = vmatpush1.xpose.msra.mxu0 0.0
  %1836 = vmatprep.subr.mxu0 0.0
  %1837 = vmatpush1.xpose.msra.mxu0 0.0
  %1838 = vmatprep.subr.mxu0 0.0
  %1839 = vmatpush1.xpose.msra.mxu0 0.0
  %1840 = vmatprep.subr.mxu0 0.0
  %1841 = vmatpush1.xpose.msra.mxu0 0.0
  %1842 = vmatprep.subr.mxu0 0.0
  %1843 = vmatpush1.xpose.msra.mxu0 0.0
  %1844 = vmatprep.subr.mxu0 0.0
  %1845 = vmatpush1.xpose.msra.mxu0 0.0
  %1846 = vmatprep.subr.mxu0 0.0
  %1847 = vmatpush1.xpose.msra.mxu0 0.0
  %1848 = vmatprep.subr.mxu0 0.0
  %1849 = vmatpush1.xpose.msra.mxu0 0.0
  %1850 = vmatprep.subr.mxu0 0.0
  %1851 = vmatpush1.xpose.msra.mxu0 0.0
  %1852 = vmatprep.subr.mxu0 0.0
  %1853 = vmatpush1.xpose.msra.mxu0 0.0
  %1854 = vmatprep.subr.mxu0 0.0
  %1855 = vmatpush1.xpose.msra.mxu0 0.0
  %1856 = vmatprep.subr.mxu0 0.0
  %1857 = vmatpush1.xpose.msra.mxu0 0.0
  %1858 = vmatprep.subr.mxu0 0.0
  %1859 = vmatpush1.xpose.msra.mxu0 0.0
  %1860 = vmatprep.subr.mxu0 0.0
  %1861 = vmatpush1.xpose.msra.mxu0 0.0
  %1862 = vmatprep.subr.mxu0 0.0
  %1863 = vmatpush1.xpose.msra.mxu0 0.0
  %1864 = vmatprep.subr.mxu0 0.0
  %1865 = vmatpush1.xpose.msra.mxu0 0.0
  %1866 = vmatprep.subr.mxu0 0.0
  %1867 = vmatpush1.xpose.msra.mxu0 0.0
  %1868 = vmatprep.subr.mxu0 0.0
  %1869 = vmatpush1.xpose.msra.mxu0 0.0
  %1870 = vmatprep.subr.mxu0 0.0
  %1871 = vmatpush1.xpose.msra.mxu0 0.0
  %1872 = vmatprep.subr.mxu0 0.0
  %1873 = vmatpush1.xpose.msra.mxu0 0.0
  %1874 = vmatprep.subr.mxu0 0.0
  %1875 = vmatpush1.xpose.msra.mxu0 0.0
  %1876 = vmatprep.subr.mxu0 0.0
  %1877 = vmatpush1.xpose.msra.mxu0 0.0
  %1878 = vmatprep.subr.mxu0 0.0
  %1879 = vmatpush1.xpose.msra.mxu0 0.0
  %1880 = vmatprep.subr.mxu0 0.0
  %1881 = vmatpush1.xpose.msra.mxu0 0.0
  %1882 = vmatprep.subr.mxu0 0.0
  %1883 = vmatpush1.xpose.msra.mxu0 0.0
  %1884 = vmatprep.subr.mxu0 0.0
  %1885 = vmatpush1.xpose.msra.mxu0 0.0
  %1886 = vmatprep.subr.mxu0 0.0
  %1887 = vmatpush1.xpose.msra.mxu0 0.0
  %1888 = vmatprep.subr.mxu0 0.0
  %1889 = vmatpush1.xpose.msra.mxu0 0.0
  %1890 = vmatprep.mubr.f32.mxu0 0.0
  %1891 = vmatmul.mubr.f32.gmra.mrb[0].mxu0 %v1822
  %v1892 = vpop.f32.mrb[0].mxu0
  %v1893 = vadd.f32 %v1343, %v1892
  %v1894 = vpop.f32.mrb[0].mxu0
  %1895 = vdwg.mxu0
  %v1896 = vsel %vm357, %v1893, -inf
  %1897 = vmax.xlane.f32.xlu0 %v1896
  %v1898 = vpop.xlane.xlu0 %1897
  %v1899 = vsub.f32 %v1893, %v1898
  %v1900 = vmul.f32 %v1899, 1.442695
  %v1901 = vpow.pop %v1900
  %v1902 = vsel %vm357, %v1901, 0.0
  %1903 = vadd.xlane.f32.xlu0 %v1902
  %v1904 = vpop.xlane.xlu0 %1903
  %1905 = vrot.lane.b32.xlu0 %v336, 112
  %v1906 = vpop.permute.xlu0 %1905
  %v1909 = vsel %vm357, %v1901, 0
  %1911 = vmatprep.subr.mxu0 0.0
  %1912 = vmatpush1.msra.mxu0 %v1906
  %1913 = vmatprep.subr.mxu0 0.0
  %1914 = vmatpush1.msra.mxu0 0.0
  %1915 = vmatprep.subr.mxu0 0.0
  %1916 = vmatpush1.msra.mxu0 0.0
  %1917 = vmatprep.subr.mxu0 0.0
  %1918 = vmatpush1.msra.mxu0 0.0
  %1919 = vmatprep.subr.mxu0 0.0
  %1920 = vmatpush1.msra.mxu0 0.0
  %1921 = vmatprep.subr.mxu0 0.0
  %1922 = vmatpush1.msra.mxu0 0.0
  %1923 = vmatprep.subr.mxu0 0.0
  %1924 = vmatpush1.msra.mxu0 0.0
  %1925 = vmatprep.subr.mxu0 0.0
  %1926 = vmatpush1.msra.mxu0 0.0
  %1927 = vmatprep.subr.mxu0 0.0
  %1928 = vmatpush1.msra.mxu0 0.0
  %1929 = vmatprep.subr.mxu0 0.0
  %1930 = vmatpush1.msra.mxu0 0.0
  %1931 = vmatprep.subr.mxu0 0.0
  %1932 = vmatpush1.msra.mxu0 0.0
  %1933 = vmatprep.subr.mxu0 0.0
  %1934 = vmatpush1.msra.mxu0 0.0
  %1935 = vmatprep.subr.mxu0 0.0
  %1936 = vmatpush1.msra.mxu0 0.0
  %1937 = vmatprep.subr.mxu0 0.0
  %1938 = vmatpush1.msra.mxu0 0.0
  %1939 = vmatprep.subr.mxu0 0.0
  %1940 = vmatpush1.msra.mxu0 0.0
  %1941 = vmatprep.subr.mxu0 0.0
  %1942 = vmatpush1.msra.mxu0 0.0
  %1943 = vmatprep.subr.mxu0 0.0
  %1944 = vmatpush1.msra.mxu0 0.0
  %1945 = vmatprep.subr.mxu0 0.0
  %1946 = vmatpush1.msra.mxu0 0.0
  %1947 = vmatprep.subr.mxu0 0.0
  %1948 = vmatpush1.msra.mxu0 0.0
  %1949 = vmatprep.subr.mxu0 0.0
  %1950 = vmatpush1.msra.mxu0 0.0
  %1951 = vmatprep.subr.mxu0 0.0
  %1952 = vmatpush1.msra.mxu0 0.0
  %1953 = vmatprep.subr.mxu0 0.0
  %1954 = vmatpush1.msra.mxu0 0.0
  %1955 = vmatprep.subr.mxu0 0.0
  %1956 = vmatpush1.msra.mxu0 0.0
  %1957 = vmatprep.subr.mxu0 0.0
  %1958 = vmatpush1.msra.mxu0 0.0
  %1959 = vmatprep.subr.mxu0 0.0
  %1960 = vmatpush1.msra.mxu0 0.0
  %1961 = vmatprep.subr.mxu0 0.0
  %1962 = vmatpush1.msra.mxu0 0.0
  %1963 = vmatprep.subr.mxu0 0.0
  %1964 = vmatpush1.msra.mxu0 0.0
  %1965 = vmatprep.subr.mxu0 0.0
  %1966 = vmatpush1.msra.mxu0 0.0
  %1967 = vmatprep.subr.mxu0 0.0
  %1968 = vmatpush1.msra.mxu0 0.0
  %1969 = vmatprep.subr.mxu0 0.0
  %1970 = vmatpush1.msra.mxu0 0.0
  %1971 = vmatprep.subr.mxu0 0.0
  %1972 = vmatpush1.msra.mxu0 0.0
  %1973 = vmatprep.subr.mxu0 0.0
  %1974 = vmatpush1.msra.mxu0 0.0
  %1975 = vmatprep.mubr.f32.mxu0 0.0
  %1976 = vmatmul.mubr.f32.gmra.mrb[0].mxu0 %v1909
  %v1977 = vpop.f32.mrb[0].mxu0
  %v1978 = vadd.f32 0.0, %v1977
  %v1979 = vpop.f32.mrb[0].mxu0
  %1980 = vdwg.mxu0
  %v1981 = vrcp.pop %v1904
  %v1982 = vmul.f32 %v1978, %v1981
  %v1984 = vsel %vm357, %v1982, 0
  %1986 = vmatprep.subr.mxu0 0.0
  %1987 = vmatpush1.msra.mxu0 %v342
  %1988 = vmatprep.subr.mxu0 0.0
  %1989 = vmatpush1.msra.mxu0 0.0
  %1990 = vmatprep.subr.mxu0 0.0
  %1991 = vmatpush1.msra.mxu0 0.0
  %1992 = vmatprep.subr.mxu0 0.0
  %1993 = vmatpush1.msra.mxu0 0.0
  %1994 = vmatprep.subr.mxu0 0.0
  %1995 = vmatpush1.msra.mxu0 0.0
  %1996 = vmatprep.subr.mxu0 0.0
  %1997 = vmatpush1.msra.mxu0 0.0
  %1998 = vmatprep.subr.mxu0 0.0
  %1999 = vmatpush1.msra.mxu0 0.0
  %2000 = vmatprep.subr.mxu0 0.0
  %2001 = vmatpush1.msra.mxu0 0.0
  %2002 = vmatprep.subr.mxu0 0.0
  %2003 = vmatpush1.msra.mxu0 0.0
  %2004 = vmatprep.subr.mxu0 0.0
  %2005 = vmatpush1.msra.mxu0 0.0
  %2006 = vmatprep.subr.mxu0 0.0
  %2007 = vmatpush1.msra.mxu0 0.0
  %2008 = vmatprep.subr.mxu0 0.0
  %2009 = vmatpush1.msra.mxu0 0.0
  %2010 = vmatprep.subr.mxu0 0.0
  %2011 = vmatpush1.msra.mxu0 0.0
  %2012 = vmatprep.subr.mxu0 0.0
  %2013 = vmatpush1.msra.mxu0 0.0
  %2014 = vmatprep.subr.mxu0 0.0
  %2015 = vmatpush1.msra.mxu0 0.0
  %2016 = vmatprep.subr.mxu0 0.0
  %2017 = vmatpush1.msra.mxu0 0.0
  %2018 = vmatprep.subr.mxu0 0.0
  %2019 = vmatpush1.msra.mxu0 0.0
  %2020 = vmatprep.subr.mxu0 0.0
  %2021 = vmatpush1.msra.mxu0 0.0
  %2022 = vmatprep.subr.mxu0 0.0
  %2023 = vmatpush1.msra.mxu0 0.0
  %2024 = vmatprep.subr.mxu0 0.0
  %2025 = vmatpush1.msra.mxu0 0.0
  %2026 = vmatprep.subr.mxu0 0.0
  %2027 = vmatpush1.msra.mxu0 0.0
  %2028 = vmatprep.subr.mxu0 0.0
  %2029 = vmatpush1.msra.mxu0 0.0
  %2030 = vmatprep.subr.mxu0 0.0
  %2031 = vmatpush1.msra.mxu0 0.0
  %2032 = vmatprep.subr.mxu0 0.0
  %2033 = vmatpush1.msra.mxu0 0.0
  %2034 = vmatprep.subr.mxu0 0.0
  %2035 = vmatpush1.msra.mxu0 0.0
  %2036 = vmatprep.subr.mxu0 0.0
  %2037 = vmatpush1.msra.mxu0 0.0
  %2038 = vmatprep.subr.mxu0 0.0
  %2039 = vmatpush1.msra.mxu0 0.0
  %2040 = vmatprep.subr.mxu0 0.0
  %2041 = vmatpush1.msra.mxu0 0.0
  %2042 = vmatprep.subr.mxu0 0.0
  %2043 = vmatpush1.msra.mxu0 0.0
  %2044 = vmatprep.subr.mxu0 0.0
  %2045 = vmatpush1.msra.mxu0 0.0
  %2046 = vmatprep.subr.mxu0 0.0
  %2047 = vmatpush1.msra.mxu0 0.0
  %2048 = vmatprep.subr.mxu0 0.0
  %2049 = vmatpush1.msra.mxu0 0.0
  %2050 = vmatprep.mubr.f32.mxu0 0.0
  %2051 = vmatmul.mubr.f32.gmra.mrb[0].mxu0 %v1984
  %v2052 = vpop.f32.mrb[0].mxu0
  %v2053 = vadd.f32 0.0, %v2052
  %v2054 = vpop.f32.mrb[0].mxu0
  %2055 = vdwg.mxu0
  %v2056 = vadd.f32 %v1817, %v2053
  %2057 = vrot.lane.b32.xlu0 %v152, 104
  %v2058 = vpop.permute.xlu0 %2057
  %2059 = vrot.lane.b32.xlu0 %v244, 104
  %v2060 = vpop.permute.xlu0 %2059
  %v2061 = vsel %vm357, %v2058, 0
  %v2063 = vsel %vm357, %v2060, 0
  %2065 = vmatprep.subr.mxu0 0.0
  %2066 = vmatpush1.xpose.msra.mxu0 %v2063
  %2067 = vmatprep.subr.mxu0 0.0
  %2068 = vmatpush1.xpose.msra.mxu0 0.0
  %2069 = vmatprep.subr.mxu0 0.0
  %2070 = vmatpush1.xpose.msra.mxu0 0.0
  %2071 = vmatprep.subr.mxu0 0.0
  %2072 = vmatpush1.xpose.msra.mxu0 0.0
  %2073 = vmatprep.subr.mxu0 0.0
  %2074 = vmatpush1.xpose.msra.mxu0 0.0
  %2075 = vmatprep.subr.mxu0 0.0
  %2076 = vmatpush1.xpose.msra.mxu0 0.0
  %2077 = vmatprep.subr.mxu0 0.0
  %2078 = vmatpush1.xpose.msra.mxu0 0.0
  %2079 = vmatprep.subr.mxu0 0.0
  %2080 = vmatpush1.xpose.msra.mxu0 0.0
  %2081 = vmatprep.subr.mxu0 0.0
  %2082 = vmatpush1.xpose.msra.mxu0 0.0
  %2083 = vmatprep.subr.mxu0 0.0
  %2084 = vmatpush1.xpose.msra.mxu0 0.0
  %2085 = vmatprep.subr.mxu0 0.0
  %2086 = vmatpush1.xpose.msra.mxu0 0.0
  %2087 = vmatprep.subr.mxu0 0.0
  %2088 = vmatpush1.xpose.msra.mxu0 0.0
  %2089 = vmatprep.subr.mxu0 0.0
  %2090 = vmatpush1.xpose.msra.mxu0 0.0
  %2091 = vmatprep.subr.mxu0 0.0
  %2092 = vmatpush1.xpose.msra.mxu0 0.0
  %2093 = vmatprep.subr.mxu0 0.0
  %2094 = vmatpush1.xpose.msra.mxu0 0.0
  %2095 = vmatprep.subr.mxu0 0.0
  %2096 = vmatpush1.xpose.msra.mxu0 0.0
  %2097 = vmatprep.subr.mxu0 0.0
  %2098 = vmatpush1.xpose.msra.mxu0 0.0
  %2099 = vmatprep.subr.mxu0 0.0
  %2100 = vmatpush1.xpose.msra.mxu0 0.0
  %2101 = vmatprep.subr.mxu0 0.0
  %2102 = vmatpush1.xpose.msra.mxu0 0.0
  %2103 = vmatprep.subr.mxu0 0.0
  %2104 = vmatpush1.xpose.msra.mxu0 0.0
  %2105 = vmatprep.subr.mxu0 0.0
  %2106 = vmatpush1.xpose.msra.mxu0 0.0
  %2107 = vmatprep.subr.mxu0 0.0
  %2108 = vmatpush1.xpose.msra.mxu0 0.0
  %2109 = vmatprep.subr.mxu0 0.0
  %2110 = vmatpush1.xpose.msra.mxu0 0.0
  %2111 = vmatprep.subr.mxu0 0.0
  %2112 = vmatpush1.xpose.msra.mxu0 0.0
  %2113 = vmatprep.subr.mxu0 0.0
  %2114 = vmatpush1.xpose.msra.mxu0 0.0
  %2115 = vmatprep.subr.mxu0 0.0
  %2116 = vmatpush1.xpose.msra.mxu0 0.0
  %2117 = vmatprep.subr.mxu0 0.0
  %2118 = vmatpush1.xpose.msra.mxu0 0.0
  %2119 = vmatprep.subr.mxu0 0.0
  %2120 = vmatpush1.xpose.msra.mxu0 0.0
  %2121 = vmatprep.subr.mxu0 0.0
  %2122 = vmatpush1.xpose.msra.mxu0 0.0
  %2123 = vmatprep.subr.mxu0 0.0
  %2124 = vmatpush1.xpose.msra.mxu0 0.0
  %2125 = vmatprep.subr.mxu0 0.0
  %2126 = vmatpush1.xpose.msra.mxu0 0.0
  %2127 = vmatprep.subr.mxu0 0.0
  %2128 = vmatpush1.xpose.msra.mxu0 0.0
  %2129 = vmatprep.mubr.f32.mxu0 0.0
  %2130 = vmatmul.mubr.f32.gmra.mrb[0].mxu0 %v2061
  %v2131 = vpop.f32.mrb[0].mxu0
  %v2132 = vadd.f32 %v1343, %v2131
  %v2133 = vpop.f32.mrb[0].mxu0
  %2134 = vdwg.mxu0
  %v2135 = vsel %vm357, %v2132, -inf
  %2136 = vmax.xlane.f32.xlu0 %v2135
  %v2137 = vpop.xlane.xlu0 %2136
  %v2138 = vsub.f32 %v2132, %v2137
  %v2139 = vmul.f32 %v2138, 1.442695
  %v2140 = vpow.pop %v2139
  %v2141 = vsel %vm357, %v2140, 0.0
  %2142 = vadd.xlane.f32.xlu0 %v2141
  %v2143 = vpop.xlane.xlu0 %2142
  %2144 = vrot.lane.b32.xlu0 %v336, 104
  %v2145 = vpop.permute.xlu0 %2144
  %v2148 = vsel %vm357, %v2140, 0
  %2150 = vmatprep.subr.mxu0 0.0
  %2151 = vmatpush1.msra.mxu0 %v2145
  %2152 = vmatprep.subr.mxu0 0.0
  %2153 = vmatpush1.msra.mxu0 0.0
  %2154 = vmatprep.subr.mxu0 0.0
  %2155 = vmatpush1.msra.mxu0 0.0
  %2156 = vmatprep.subr.mxu0 0.0
  %2157 = vmatpush1.msra.mxu0 0.0
  %2158 = vmatprep.subr.mxu0 0.0
  %2159 = vmatpush1.msra.mxu0 0.0
  %2160 = vmatprep.subr.mxu0 0.0
  %2161 = vmatpush1.msra.mxu0 0.0
  %2162 = vmatprep.subr.mxu0 0.0
  %2163 = vmatpush1.msra.mxu0 0.0
  %2164 = vmatprep.subr.mxu0 0.0
  %2165 = vmatpush1.msra.mxu0 0.0
  %2166 = vmatprep.subr.mxu0 0.0
  %2167 = vmatpush1.msra.mxu0 0.0
  %2168 = vmatprep.subr.mxu0 0.0
  %2169 = vmatpush1.msra.mxu0 0.0
  %2170 = vmatprep.subr.mxu0 0.0
  %2171 = vmatpush1.msra.mxu0 0.0
  %2172 = vmatprep.subr.mxu0 0.0
  %2173 = vmatpush1.msra.mxu0 0.0
  %2174 = vmatprep.subr.mxu0 0.0
  %2175 = vmatpush1.msra.mxu0 0.0
  %2176 = vmatprep.subr.mxu0 0.0
  %2177 = vmatpush1.msra.mxu0 0.0
  %2178 = vmatprep.subr.mxu0 0.0
  %2179 = vmatpush1.msra.mxu0 0.0
  %2180 = vmatprep.subr.mxu0 0.0
  %2181 = vmatpush1.msra.mxu0 0.0
  %2182 = vmatprep.subr.mxu0 0.0
  %2183 = vmatpush1.msra.mxu0 0.0
  %2184 = vmatprep.subr.mxu0 0.0
  %2185 = vmatpush1.msra.mxu0 0.0
  %2186 = vmatprep.subr.mxu0 0.0
  %2187 = vmatpush1.msra.mxu0 0.0
  %2188 = vmatprep.subr.mxu0 0.0
  %2189 = vmatpush1.msra.mxu0 0.0
  %2190 = vmatprep.subr.mxu0 0.0
  %2191 = vmatpush1.msra.mxu0 0.0
  %2192 = vmatprep.subr.mxu0 0.0
  %2193 = vmatpush1.msra.mxu0 0.0
  %2194 = vmatprep.subr.mxu0 0.0
  %2195 = vmatpush1.msra.mxu0 0.0
  %2196 = vmatprep.subr.mxu0 0.0
  %2197 = vmatpush1.msra.mxu0 0.0
  %2198 = vmatprep.subr.mxu0 0.0
  %2199 = vmatpush1.msra.mxu0 0.0
  %2200 = vmatprep.subr.mxu0 0.0
  %2201 = vmatpush1.msra.mxu0 0.0
  %2202 = vmatprep.subr.mxu0 0.0
  %2203 = vmatpush1.msra.mxu0 0.0
  %2204 = vmatprep.subr.mxu0 0.0
  %2205 = vmatpush1.msra.mxu0 0.0
  %2206 = vmatprep.subr.mxu0 0.0
  %2207 = vmatpush1.msra.mxu0 0.0
  %2208 = vmatprep.subr.mxu0 0.0
  %2209 = vmatpush1.msra.mxu0 0.0
  %2210 = vmatprep.subr.mxu0 0.0
  %2211 = vmatpush1.msra.mxu0 0.0
  %2212 = vmatprep.subr.mxu0 0.0
  %2213 = vmatpush1.msra.mxu0 0.0
  %2214 = vmatprep.mubr.f32.mxu0 0.0
  %2215 = vmatmul.mubr.f32.gmra.mrb[0].mxu0 %v2148
  %v2216 = vpop.f32.mrb[0].mxu0
  %v2217 = vadd.f32 0.0, %v2216
  %v2218 = vpop.f32.mrb[0].mxu0
  %2219 = vdwg.mxu0
  %v2220 = vrcp.pop %v2143
  %v2221 = vmul.f32 %v2217, %v2220
  %v2223 = vsel %vm357, %v2221, 0
  %2225 = vmatprep.subr.mxu0 0.0
  %2226 = vmatpush1.msra.mxu0 %v343
  %2227 = vmatprep.subr.mxu0 0.0
  %2228 = vmatpush1.msra.mxu0 0.0
  %2229 = vmatprep.subr.mxu0 0.0
  %2230 = vmatpush1.msra.mxu0 0.0
  %2231 = vmatprep.subr.mxu0 0.0
  %2232 = vmatpush1.msra.mxu0 0.0
  %2233 = vmatprep.subr.mxu0 0.0
  %2234 = vmatpush1.msra.mxu0 0.0
  %2235 = vmatprep.subr.mxu0 0.0
  %2236 = vmatpush1.msra.mxu0 0.0
  %2237 = vmatprep.subr.mxu0 0.0
  %2238 = vmatpush1.msra.mxu0 0.0
  %2239 = vmatprep.subr.mxu0 0.0
  %2240 = vmatpush1.msra.mxu0 0.0
  %2241 = vmatprep.subr.mxu0 0.0
  %2242 = vmatpush1.msra.mxu0 0.0
  %2243 = vmatprep.subr.mxu0 0.0
  %2244 = vmatpush1.msra.mxu0 0.0
  %2245 = vmatprep.subr.mxu0 0.0
  %2246 = vmatpush1.msra.mxu0 0.0
  %2247 = vmatprep.subr.mxu0 0.0
  %2248 = vmatpush1.msra.mxu0 0.0
  %2249 = vmatprep.subr.mxu0 0.0
  %2250 = vmatpush1.msra.mxu0 0.0
  %2251 = vmatprep.subr.mxu0 0.0
  %2252 = vmatpush1.msra.mxu0 0.0
  %2253 = vmatprep.subr.mxu0 0.0
  %2254 = vmatpush1.msra.mxu0 0.0
  %2255 = vmatprep.subr.mxu0 0.0
  %2256 = vmatpush1.msra.mxu0 0.0
  %2257 = vmatprep.subr.mxu0 0.0
  %2258 = vmatpush1.msra.mxu0 0.0
  %2259 = vmatprep.subr.mxu0 0.0
  %2260 = vmatpush1.msra.mxu0 0.0
  %2261 = vmatprep.subr.mxu0 0.0
  %2262 = vmatpush1.msra.mxu0 0.0
  %2263 = vmatprep.subr.mxu0 0.0
  %2264 = vmatpush1.msra.mxu0 0.0
  %2265 = vmatprep.subr.mxu0 0.0
  %2266 = vmatpush1.msra.mxu0 0.0
  %2267 = vmatprep.subr.mxu0 0.0
  %2268 = vmatpush1.msra.mxu0 0.0
  %2269 = vmatprep.subr.mxu0 0.0
  %2270 = vmatpush1.msra.mxu0 0.0
  %2271 = vmatprep.subr.mxu0 0.0
  %2272 = vmatpush1.msra.mxu0 0.0
  %2273 = vmatprep.subr.mxu0 0.0
  %2274 = vmatpush1.msra.mxu0 0.0
  %2275 = vmatprep.subr.mxu0 0.0
  %2276 = vmatpush1.msra.mxu0 0.0
  %2277 = vmatprep.subr.mxu0 0.0
  %2278 = vmatpush1.msra.mxu0 0.0
  %2279 = vmatprep.subr.mxu0 0.0
  %2280 = vmatpush1.msra.mxu0 0.0
  %2281 = vmatprep.subr.mxu0 0.0
  %2282 = vmatpush1.msra.mxu0 0.0
  %2283 = vmatprep.subr.mxu0 0.0
  %2284 = vmatpush1.msra.mxu0 0.0
  %2285 = vmatprep.subr.mxu0 0.0
  %2286 = vmatpush1.msra.mxu0 0.0
  %2287 = vmatprep.subr.mxu0 0.0
  %2288 = vmatpush1.msra.mxu0 0.0
  %2289 = vmatprep.mubr.f32.mxu0 0.0
  %2290 = vmatmul.mubr.f32.gmra.mrb[0].mxu0 %v2223
  %v2291 = vpop.f32.mrb[0].mxu0
  %v2292 = vadd.f32 0.0, %v2291
  %v2293 = vpop.f32.mrb[0].mxu0
  %2294 = vdwg.mxu0
  %v2295 = vadd.f32 %v2056, %v2292
  %v2296 = vadd.f32 %v51, %v2295
  %v2297 = vsel %vm73, %v2296, 0.0
  %2298 = vadd.xlane.f32.xlu0 %v2297
  %v2299 = vpop.xlane.xlu0 %2298
  %v2300 = vmul.f32 %v2299, %v1314
  %v2301 = vsub.f32 %v2296, %v2300
  %v2302 = vmul.f32 %v2301, %v2301
  %v2303 = vsel %vm73, %v2302, 0.0
  %2304 = vadd.xlane.f32.xlu0 %v2303
  %v2305 = vpop.xlane.xlu0 %2304
  %v2306 = vmul.f32 %v2305, %v1314
  %v2307 = vadd.f32 %v2306, 1e-05
  %v2308 = vrsqrt.pop %v2307
  %v2309 = vmul.f32 %v2301, %v2308
  %v2310 = vmul.f32 %v2309, %v1329
  %v2311 = vadd.f32 %v2310, %v1336
  %2312 = vst.msk [vmem:[%s15 + $0x8] sm:$0xff] %vm73, %v2311
  // Predicated region
  $region62: #{transformer_forward.15} parent=0 // pred_check
    _
  $region63: #{transformer_forward.15} parent=0 // pred_check_branch
    %2314 = sbr.rel (0) target = $region65
  $region64: #{transformer_forward.15} parent=0 // pred_region
    _
  $region65: #{transformer_forward.15} parent=0 // pred_fallthru
    _
  // Predicated region
  $region66: #{transformer_forward.15} parent=0 // pred_check
    _
  $region67: #{transformer_forward.15} parent=0 // pred_check_branch
    %2316 = sbr.rel (0) target = $region69
  $region68: #{transformer_forward.15} parent=0 // pred_region
    _
  $region69: #{transformer_forward.15} parent=0 // pred_fallthru
    _

// kernel: transformer_forward.11
$region0: #{transformer_forward.11}
  #allocation0 [shape = 'u32[]', space=smem, size = 0x4, offset = 0x4, fixed_abs, tag = 'smem constant byte address 0x4 - core index']
  #allocation1 [shape = 'u32[144,128]{1,0:T(1,128)}', space=vmem, size = 0x12000, scoped, tag = 'internal scratch']
  %s0 = inlined_call_operand.vmem [shape: f32[32,32], index: 0, kind: input, shape index: {}, may-alias: {0,2}]
  %s1 = inlined_call_operand.vmem [shape: f32[32,32], index: 1, kind: input, shape index: {}, may-alias: {1,3}]
  %s2 = inlined_call_operand.vmem [shape: f32[32,32], index: 2, kind: input, shape index: {}, may-alias: {0,2}]
  %s3 = inlined_call_operand.vmem [shape: f32[32,32], index: 3, kind: input, shape index: {}, may-alias: {1,3}]
  %s4 = inlined_call_operand.vmem [shape: f32[2,16], index: 4, kind: input, shape index: {}]
  %s5 = inlined_call_operand.vmem [shape: f32[32,32], index: 5, kind: input, shape index: {}]
  %s6 = inlined_call_operand.vmem [shape: f32[1,32], index: 6, kind: input, shape index: {}]
  %s7 = inlined_call_operand.vmem [shape: f32[32,32], index: 7, kind: input, shape index: {}]
  %s8 = inlined_call_operand.vmem [shape: f32[1,32], index: 8, kind: input, shape index: {}]
  %s9 = inlined_call_operand.vmem [shape: f32[32,32], index: 9, kind: input, shape index: {}]
  %s10 = inlined_call_operand.vmem [shape: f32[1,32], index: 10, kind: input, shape index: {}]
  %s11 = inlined_call_operand.vmem [shape: f32[32,32], index: 11, kind: input, shape index: {}]
  %s12 = inlined_call_operand.vmem [shape: f32[1,32], index: 12, kind: input, shape index: {}]
  %s13 = inlined_call_operand.vmem [shape: f32[1,32], index: 13, kind: input, shape index: {}]
  %s14 = inlined_call_operand.vmem [shape: f32[1,32], index: 14, kind: input, shape index: {}]
  %s15 = inlined_call_operand.vmem [shape: f32[32,32], index: 15, kind: output, shape index: {}]
  %s16 = sld [smem:[#allocation0]]
  $region70: #{transformer_forward.11} parent=0
    _
  %s18 = ssub.s32 1, %s16
  %s19 = scalar_select 0, %s18, %s16
  // Predicated region
  $region2: #{transformer_forward.11} parent=0 // pred_check
    _
  $region3: #{transformer_forward.11} parent=0 // pred_check_branch
    %21 = sbr.rel (0) target = $region5
  $region4: #{transformer_forward.11} parent=0 // pred_region
    _
  $region5: #{transformer_forward.11} parent=0 // pred_fallthru
    _
  // Predicated region
  $region6: #{transformer_forward.11} parent=0 // pred_check
    _
  $region7: #{transformer_forward.11} parent=0 // pred_check_branch
    %23 = sbr.rel (0) target = $region9
  $region8: #{transformer_forward.11} parent=0 // pred_region
    _
  $region9: #{transformer_forward.11} parent=0 // pred_fallthru
    _
  // Predicated region
  $region10: #{transformer_forward.11} parent=0 // pred_check
    _
  $region11: #{transformer_forward.11} parent=0 // pred_check_branch
    %25 = sbr.rel (0) target = $region13
  $region12: #{transformer_forward.11} parent=0 // pred_region
    _
  $region13: #{transformer_forward.11} parent=0 // pred_fallthru
    _
  // Predicated region
  $region14: #{transformer_forward.11} parent=0 // pred_check
    _
  $region15: #{transformer_forward.11} parent=0 // pred_check_branch
    %27 = sbr.rel (0) target = $region17
  $region16: #{transformer_forward.11} parent=0 // pred_region
    _
  $region17: #{transformer_forward.11} parent=0 // pred_fallthru
    _
  // Predicated region
  $region18: #{transformer_forward.11} parent=0 // pred_check
    _
  $region19: #{transformer_forward.11} parent=0 // pred_check_branch
    %29 = sbr.rel (0) target = $region21
  $region20: #{transformer_forward.11} parent=0 // pred_region
    _
  $region21: #{transformer_forward.11} parent=0 // pred_fallthru
    _
  // Predicated region
  $region22: #{transformer_forward.11} parent=0 // pred_check
    _
  $region23: #{transformer_forward.11} parent=0 // pred_check_branch
    %31 = sbr.rel (0) target = $region25
  $region24: #{transformer_forward.11} parent=0 // pred_region
    _
  $region25: #{transformer_forward.11} parent=0 // pred_fallthru
    _
  // Predicated region
  $region26: #{transformer_forward.11} parent=0 // pred_check
    _
  $region27: #{transformer_forward.11} parent=0 // pred_check_branch
    %33 = sbr.rel (0) target = $region29
  $region28: #{transformer_forward.11} parent=0 // pred_region
    _
  $region29: #{transformer_forward.11} parent=0 // pred_fallthru
    _
  // Predicated region
  $region30: #{transformer_forward.11} parent=0 // pred_check
    _
  $region31: #{transformer_forward.11} parent=0 // pred_check_branch
    %35 = sbr.rel (0) target = $region33
  $region32: #{transformer_forward.11} parent=0 // pred_region
    _
  $region33: #{transformer_forward.11} parent=0 // pred_fallthru
    _
  // Predicated region
  $region34: #{transformer_forward.11} parent=0 // pred_check
    _
  $region35: #{transformer_forward.11} parent=0 // pred_check_branch
    %37 = sbr.rel (0) target = $region37
  $region36: #{transformer_forward.11} parent=0 // pred_region
    _
  $region37: #{transformer_forward.11} parent=0 // pred_fallthru
    _
  // Predicated region
  $region38: #{transformer_forward.11} parent=0 // pred_check
    _
  $region39: #{transformer_forward.11} parent=0 // pred_check_branch
    %39 = sbr.rel (0) target = $region41
  $region40: #{transformer_forward.11} parent=0 // pred_region
    _
  $region41: #{transformer_forward.11} parent=0 // pred_fallthru
    _
  // Predicated region
  $region42: #{transformer_forward.11} parent=0 // pred_check
    _
  $region43: #{transformer_forward.11} parent=0 // pred_check_branch
    %41 = sbr.rel (0) target = $region45
  $region44: #{transformer_forward.11} parent=0 // pred_region
    _
  $region45: #{transformer_forward.11} parent=0 // pred_fallthru
    _
  // Predicated region
  $region46: #{transformer_forward.11} parent=0 // pred_check
    _
  $region47: #{transformer_forward.11} parent=0 // pred_check_branch
    %43 = sbr.rel (0) target = $region49
  $region48: #{transformer_forward.11} parent=0 // pred_region
    _
  $region49: #{transformer_forward.11} parent=0 // pred_fallthru
    _
  // Predicated region
  $region50: #{transformer_forward.11} parent=0 // pred_check
    _
  $region51: #{transformer_forward.11} parent=0 // pred_check_branch
    %45 = sbr.rel (0) target = $region53
  $region52: #{transformer_forward.11} parent=0 // pred_region
    _
  $region53: #{transformer_forward.11} parent=0 // pred_fallthru
    _
  // Predicated region
  $region54: #{transformer_forward.11} parent=0 // pred_check
    _
  $region55: #{transformer_forward.11} parent=0 // pred_check_branch
    %47 = sbr.rel (0) target = $region57
  $region56: #{transformer_forward.11} parent=0 // pred_region
    _
  $region57: #{transformer_forward.11} parent=0 // pred_fallthru
    _
  // Predicated region
  $region58: #{transformer_forward.11} parent=0 // pred_check
    _
  $region59: #{transformer_forward.11} parent=0 // pred_check_branch
    %49 = sbr.rel (0) target = $region61
  $region60: #{transformer_forward.11} parent=0 // pred_region
    _
  $region61: #{transformer_forward.11} parent=0 // pred_fallthru
    _
  %v50 = vld [vmem:[%s0] sm:$0xff]
  %v51 = vld [vmem:[%s0 + $0x8] sm:$0xff]
  %v52 = vld [vmem:[%s0 + $0x10] sm:$0xff]
  %v53 = vld [vmem:[%s0 + $0x18] sm:$0xff]
  %v54 = vld [vmem:[%s1] sm:$0xff]
  %v55 = vld [vmem:[%s1 + $0x8] sm:$0xff]
  %v56 = vld [vmem:[%s1 + $0x10] sm:$0xff]
  %v57 = vld [vmem:[%s1 + $0x18] sm:$0xff]
  %v58 = vadd.f32 %v50, %v54
  %v59 = vadd.f32 %v51, %v55
  %v60 = vadd.f32 %v52, %v56
  %v61 = vadd.f32 %v53, %v57
  %v62 = vld [vmem:[%s2] sm:$0xff]
  %v63 = vld [vmem:[%s2 + $0x8] sm:$0xff]
  %v64 = vld [vmem:[%s2 + $0x10] sm:$0xff]
  %v65 = vld [vmem:[%s2 + $0x18] sm:$0xff]
  %v66 = vld [vmem:[%s3] sm:$0xff]
  %v67 = vld [vmem:[%s3 + $0x8] sm:$0xff]
  %v68 = vld [vmem:[%s3 + $0x10] sm:$0xff]
  %v69 = vld [vmem:[%s3 + $0x18] sm:$0xff]
  %v70 = vadd.f32 %v62, %v66
  %v71 = vadd.f32 %v63, %v67
  %v72 = vadd.f32 %v64, %v68
  %v73 = vadd.f32 %v65, %v69
  %v74 = vld [vmem:[%s5] sm:$0xff]
  %v75 = vld [vmem:[%s5 + $0x8] sm:$0xff]
  %v76 = vld [vmem:[%s5 + $0x10] sm:$0xff]
  %v77 = vld [vmem:[%s5 + $0x18] sm:$0xff]
  %v78 = vld [vmem:[%s6] sm:$0x1]
  %v80 = vlaneseq
  %v81 = vshrl.u32 %v80, 7
  %v82 = vsub.s32 0, %v81
  %v83 = vrot.slane %v78, %v82
  %vm85 = vcmask 261120
  %v87 = vsel %vm85, %v58, 0
  %v90 = vsel %vm85, %v59, 0
  %v93 = vsel %vm85, %v60, 0
  %v96 = vsel %vm85, %v61, 0
  %98 = vmatprep.subr.mxu0 0.0
  %99 = vmatpush1.msra.mxu0 %v74
  %100 = vmatprep.subr.mxu0 0.0
  %101 = vmatpush1.msra.mxu0 %v75
  %102 = vmatprep.subr.mxu0 0.0
  %103 = vmatpush1.msra.mxu0 %v76
  %104 = vmatprep.subr.mxu0 0.0
  %105 = vmatpush1.msra.mxu0 %v77
  %106 = vmatprep.subr.mxu0 0.0
  %107 = vmatpush1.msra.mxu0 0.0
  %108 = vmatprep.subr.mxu0 0.0
  %109 = vmatpush1.msra.mxu0 0.0
  %110 = vmatprep.subr.mxu0 0.0
  %111 = vmatpush1.msra.mxu0 0.0
  %112 = vmatprep.subr.mxu0 0.0
  %113 = vmatpush1.msra.mxu0 0.0
  %114 = vmatprep.subr.mxu0 0.0
  %115 = vmatpush1.msra.mxu0 0.0
  %116 = vmatprep.subr.mxu0 0.0
  %117 = vmatpush1.msra.mxu0 0.0
  %118 = vmatprep.subr.mxu0 0.0
  %119 = vmatpush1.msra.mxu0 0.0
  %120 = vmatprep.subr.mxu0 0.0
  %121 = vmatpush1.msra.mxu0 0.0
  %122 = vmatprep.subr.mxu0 0.0
  %123 = vmatpush1.msra.mxu0 0.0
  %124 = vmatprep.subr.mxu0 0.0
  %125 = vmatpush1.msra.mxu0 0.0
  %126 = vmatprep.subr.mxu0 0.0
  %127 = vmatpush1.msra.mxu0 0.0
  %128 = vmatprep.subr.mxu0 0.0
  %129 = vmatpush1.msra.mxu0 0.0
  %130 = vmatprep.subr.mxu0 0.0
  %131 = vmatpush1.msra.mxu0 0.0
  %132 = vmatprep.subr.mxu0 0.0
  %133 = vmatpush1.msra.mxu0 0.0
  %134 = vmatprep.subr.mxu0 0.0
  %135 = vmatpush1.msra.mxu0 0.0
  %136 = vmatprep.subr.mxu0 0.0
  %137 = vmatpush1.msra.mxu0 0.0
  %138 = vmatprep.subr.mxu0 0.0
  %139 = vmatpush1.msra.mxu0 0.0
  %140 = vmatprep.subr.mxu0 0.0
  %141 = vmatpush1.msra.mxu0 0.0
  %142 = vmatprep.subr.mxu0 0.0
  %143 = vmatpush1.msra.mxu0 0.0
  %144 = vmatprep.subr.mxu0 0.0
  %145 = vmatpush1.msra.mxu0 0.0
  %146 = vmatprep.subr.mxu0 0.0
  %147 = vmatpush1.msra.mxu0 0.0
  %148 = vmatprep.subr.mxu0 0.0
  %149 = vmatpush1.msra.mxu0 0.0
  %150 = vmatprep.subr.mxu0 0.0
  %151 = vmatpush1.msra.mxu0 0.0
  %152 = vmatprep.subr.mxu0 0.0
  %153 = vmatpush1.msra.mxu0 0.0
  %154 = vmatprep.subr.mxu0 0.0
  %155 = vmatpush1.msra.mxu0 0.0
  %156 = vmatprep.subr.mxu0 0.0
  %157 = vmatpush1.msra.mxu0 0.0
  %158 = vmatprep.subr.mxu0 0.0
  %159 = vmatpush1.msra.mxu0 0.0
  %160 = vmatprep.subr.mxu0 0.0
  %161 = vmatpush1.msra.mxu0 0.0
  %162 = vmatprep.mubr.f32.mxu0 0.0
  %163 = vmatmul.mubr.f32.gmra.mrb[0].mxu0 %v87
  %v164 = vpop.f32.mrb[0].mxu0
  %v165 = vadd.f32 %v83, %v164
  %v166 = vpop.f32.mrb[0].mxu0
  %167 = vmatprep.mubr.f32.mxu0 0.0
  %168 = vmatmul.mubr.f32.gmra.mrb[0].mxu0 %v90
  %v169 = vpop.f32.mrb[0].mxu0
  %v170 = vadd.f32 %v83, %v169
  %v171 = vpop.f32.mrb[0].mxu0
  %172 = vmatprep.mubr.f32.mxu0 0.0
  %173 = vmatmul.mubr.f32.gmra.mrb[0].mxu0 %v93
  %v174 = vpop.f32.mrb[0].mxu0
  %v175 = vadd.f32 %v83, %v174
  %v176 = vpop.f32.mrb[0].mxu0
  %177 = vmatprep.mubr.f32.mxu0 0.0
  %178 = vmatmul.mubr.f32.gmra.mrb[0].mxu0 %v96
  %v179 = vpop.f32.mrb[0].mxu0
  %v180 = vadd.f32 %v83, %v179
  %v181 = vpop.f32.mrb[0].mxu0
  %182 = vdwg.mxu0
  %v183 = vld [vmem:[%s7] sm:$0xff]
  %v184 = vld [vmem:[%s7 + $0x8] sm:$0xff]
  %v185 = vld [vmem:[%s7 + $0x10] sm:$0xff]
  %v186 = vld [vmem:[%s7 + $0x18] sm:$0xff]
  %v187 = vld [vmem:[%s8] sm:$0x1]
  %v189 = vlaneseq
  %v190 = vshrl.u32 %v189, 7
  %v191 = vsub.s32 0, %v190
  %v192 = vrot.slane %v187, %v191
  %v195 = vsel %vm85, %v70, 0
  %v198 = vsel %vm85, %v71, 0
  %v201 = vsel %vm85, %v72, 0
  %v204 = vsel %vm85, %v73, 0
  %206 = vmatprep.subr.mxu0 0.0
  %207 = vmatpush1.msra.mxu0 %v183
  %208 = vmatprep.subr.mxu0 0.0
  %209 = vmatpush1.msra.mxu0 %v184
  %210 = vmatprep.subr.mxu0 0.0
  %211 = vmatpush1.msra.mxu0 %v185
  %212 = vmatprep.subr.mxu0 0.0
  %213 = vmatpush1.msra.mxu0 %v186
  %214 = vmatprep.subr.mxu0 0.0
  %215 = vmatpush1.msra.mxu0 0.0
  %216 = vmatprep.subr.mxu0 0.0
  %217 = vmatpush1.msra.mxu0 0.0
  %218 = vmatprep.subr.mxu0 0.0
  %219 = vmatpush1.msra.mxu0 0.0
  %220 = vmatprep.subr.mxu0 0.0
  %221 = vmatpush1.msra.mxu0 0.0
  %222 = vmatprep.subr.mxu0 0.0
  %223 = vmatpush1.msra.mxu0 0.0
  %224 = vmatprep.subr.mxu0 0.0
  %225 = vmatpush1.msra.mxu0 0.0
  %226 = vmatprep.subr.mxu0 0.0
  %227 = vmatpush1.msra.mxu0 0.0
  %228 = vmatprep.subr.mxu0 0.0
  %229 = vmatpush1.msra.mxu0 0.0
  %230 = vmatprep.subr.mxu0 0.0
  %231 = vmatpush1.msra.mxu0 0.0
  %232 = vmatprep.subr.mxu0 0.0
  %233 = vmatpush1.msra.mxu0 0.0
  %234 = vmatprep.subr.mxu0 0.0
  %235 = vmatpush1.msra.mxu0 0.0
  %236 = vmatprep.subr.mxu0 0.0
  %237 = vmatpush1.msra.mxu0 0.0
  %238 = vmatprep.subr.mxu0 0.0
  %239 = vmatpush1.msra.mxu0 0.0
  %240 = vmatprep.subr.mxu0 0.0
  %241 = vmatpush1.msra.mxu0 0.0
  %242 = vmatprep.subr.mxu0 0.0
  %243 = vmatpush1.msra.mxu0 0.0
  %244 = vmatprep.subr.mxu0 0.0
  %245 = vmatpush1.msra.mxu0 0.0
  %246 = vmatprep.subr.mxu0 0.0
  %247 = vmatpush1.msra.mxu0 0.0
  %248 = vmatprep.subr.mxu0 0.0
  %249 = vmatpush1.msra.mxu0 0.0
  %250 = vmatprep.subr.mxu0 0.0
  %251 = vmatpush1.msra.mxu0 0.0
  %252 = vmatprep.subr.mxu0 0.0
  %253 = vmatpush1.msra.mxu0 0.0
  %254 = vmatprep.subr.mxu0 0.0
  %255 = vmatpush1.msra.mxu0 0.0
  %256 = vmatprep.subr.mxu0 0.0
  %257 = vmatpush1.msra.mxu0 0.0
  %258 = vmatprep.subr.mxu0 0.0
  %259 = vmatpush1.msra.mxu0 0.0
  %260 = vmatprep.subr.mxu0 0.0
  %261 = vmatpush1.msra.mxu0 0.0
  %262 = vmatprep.subr.mxu0 0.0
  %263 = vmatpush1.msra.mxu0 0.0
  %264 = vmatprep.subr.mxu0 0.0
  %265 = vmatpush1.msra.mxu0 0.0
  %266 = vmatprep.subr.mxu0 0.0
  %267 = vmatpush1.msra.mxu0 0.0
  %268 = vmatprep.subr.mxu0 0.0
  %269 = vmatpush1.msra.mxu0 0.0
  %270 = vmatprep.mubr.f32.mxu0 0.0
  %271 = vmatmul.mubr.f32.gmra.mrb[0].mxu0 %v195
  %v272 = vpop.f32.mrb[0].mxu0
  %v273 = vadd.f32 %v192, %v272
  %v274 = vpop.f32.mrb[0].mxu0
  %275 = vmatprep.mubr.f32.mxu0 0.0
  %276 = vmatmul.mubr.f32.gmra.mrb[0].mxu0 %v198
  %v277 = vpop.f32.mrb[0].mxu0
  %v278 = vadd.f32 %v192, %v277
  %v279 = vpop.f32.mrb[0].mxu0
  %280 = vmatprep.mubr.f32.mxu0 0.0
  %281 = vmatmul.mubr.f32.gmra.mrb[0].mxu0 %v201
  %v282 = vpop.f32.mrb[0].mxu0
  %v283 = vadd.f32 %v192, %v282
  %v284 = vpop.f32.mrb[0].mxu0
  %285 = vmatprep.mubr.f32.mxu0 0.0
  %286 = vmatmul.mubr.f32.gmra.mrb[0].mxu0 %v204
  %v287 = vpop.f32.mrb[0].mxu0
  %v288 = vadd.f32 %v192, %v287
  %v289 = vpop.f32.mrb[0].mxu0
  %290 = vdwg.mxu0
  %v291 = vld [vmem:[%s9] sm:$0xff]
  %v292 = vld [vmem:[%s9 + $0x8] sm:$0xff]
  %v293 = vld [vmem:[%s9 + $0x10] sm:$0xff]
  %v294 = vld [vmem:[%s9 + $0x18] sm:$0xff]
  %v295 = vld [vmem:[%s10] sm:$0x1]
  %v297 = vlaneseq
  %v298 = vshrl.u32 %v297, 7
  %v299 = vsub.s32 0, %v298
  %v300 = vrot.slane %v295, %v299
  %v303 = vsel %vm85, %v62, 0
  %v306 = vsel %vm85, %v63, 0
  %v309 = vsel %vm85, %v64, 0
  %v312 = vsel %vm85, %v65, 0
  %314 = vmatprep.subr.mxu0 0.0
  %315 = vmatpush1.msra.mxu0 %v291
  %316 = vmatprep.subr.mxu0 0.0
  %317 = vmatpush1.msra.mxu0 %v292
  %318 = vmatprep.subr.mxu0 0.0
  %319 = vmatpush1.msra.mxu0 %v293
  %320 = vmatprep.subr.mxu0 0.0
  %321 = vmatpush1.msra.mxu0 %v294
  %322 = vmatprep.subr.mxu0 0.0
  %323 = vmatpush1.msra.mxu0 0.0
  %324 = vmatprep.subr.mxu0 0.0
  %325 = vmatpush1.msra.mxu0 0.0
  %326 = vmatprep.subr.mxu0 0.0
  %327 = vmatpush1.msra.mxu0 0.0
  %328 = vmatprep.subr.mxu0 0.0
  %329 = vmatpush1.msra.mxu0 0.0
  %330 = vmatprep.subr.mxu0 0.0
  %331 = vmatpush1.msra.mxu0 0.0
  %332 = vmatprep.subr.mxu0 0.0
  %333 = vmatpush1.msra.mxu0 0.0
  %334 = vmatprep.subr.mxu0 0.0
  %335 = vmatpush1.msra.mxu0 0.0
  %336 = vmatprep.subr.mxu0 0.0
  %337 = vmatpush1.msra.mxu0 0.0
  %338 = vmatprep.subr.mxu0 0.0
  %339 = vmatpush1.msra.mxu0 0.0
  %340 = vmatprep.subr.mxu0 0.0
  %341 = vmatpush1.msra.mxu0 0.0
  %342 = vmatprep.subr.mxu0 0.0
  %343 = vmatpush1.msra.mxu0 0.0
  %344 = vmatprep.subr.mxu0 0.0
  %345 = vmatpush1.msra.mxu0 0.0
  %346 = vmatprep.subr.mxu0 0.0
  %347 = vmatpush1.msra.mxu0 0.0
  %348 = vmatprep.subr.mxu0 0.0
  %349 = vmatpush1.msra.mxu0 0.0
  %350 = vmatprep.subr.mxu0 0.0
  %351 = vmatpush1.msra.mxu0 0.0
  %352 = vmatprep.subr.mxu0 0.0
  %353 = vmatpush1.msra.mxu0 0.0
  %354 = vmatprep.subr.mxu0 0.0
  %355 = vmatpush1.msra.mxu0 0.0
  %356 = vmatprep.subr.mxu0 0.0
  %357 = vmatpush1.msra.mxu0 0.0
  %358 = vmatprep.subr.mxu0 0.0
  %359 = vmatpush1.msra.mxu0 0.0
  %360 = vmatprep.subr.mxu0 0.0
  %361 = vmatpush1.msra.mxu0 0.0
  %362 = vmatprep.subr.mxu0 0.0
  %363 = vmatpush1.msra.mxu0 0.0
  %364 = vmatprep.subr.mxu0 0.0
  %365 = vmatpush1.msra.mxu0 0.0
  %366 = vmatprep.subr.mxu0 0.0
  %367 = vmatpush1.msra.mxu0 0.0
  %368 = vmatprep.subr.mxu0 0.0
  %369 = vmatpush1.msra.mxu0 0.0
  %370 = vmatprep.subr.mxu0 0.0
  %371 = vmatpush1.msra.mxu0 0.0
  %372 = vmatprep.subr.mxu0 0.0
  %373 = vmatpush1.msra.mxu0 0.0
  %374 = vmatprep.subr.mxu0 0.0
  %375 = vmatpush1.msra.mxu0 0.0
  %376 = vmatprep.subr.mxu0 0.0
  %377 = vmatpush1.msra.mxu0 0.0
  %378 = vmatprep.mubr.f32.mxu0 0.0
  %379 = vmatmul.mubr.f32.gmra.mrb[0].mxu0 %v303
  %v380 = vpop.f32.mrb[0].mxu0
  %v381 = vadd.f32 %v300, %v380
  %v382 = vpop.f32.mrb[0].mxu0
  %383 = vmatprep.mubr.f32.mxu0 0.0
  %384 = vmatmul.mubr.f32.gmra.mrb[0].mxu0 %v306
  %v385 = vpop.f32.mrb[0].mxu0
  %v386 = vadd.f32 %v300, %v385
  %v387 = vpop.f32.mrb[0].mxu0
  %388 = vmatprep.mubr.f32.mxu0 0.0
  %389 = vmatmul.mubr.f32.gmra.mrb[0].mxu0 %v309
  %v390 = vpop.f32.mrb[0].mxu0
  %v391 = vadd.f32 %v300, %v390
  %v392 = vpop.f32.mrb[0].mxu0
  %393 = vmatprep.mubr.f32.mxu0 0.0
  %394 = vmatmul.mubr.f32.gmra.mrb[0].mxu0 %v312
  %v395 = vpop.f32.mrb[0].mxu0
  %v396 = vadd.f32 %v300, %v395
  %v397 = vpop.f32.mrb[0].mxu0
  %398 = vdwg.mxu0
  %v399 = vld [vmem:[%s4] sm:$0x3]
  %v400 = vld [vmem:[%s11] sm:$0xff]
  %v401 = vld [vmem:[%s11 + $0x8] sm:$0xff]
  %v402 = vld [vmem:[%s11 + $0x10] sm:$0xff]
  %v403 = vld [vmem:[%s11 + $0x18] sm:$0xff]
  %v404 = vld [vmem:[%s12] sm:$0x1]
  %v406 = vlaneseq
  %v407 = vshrl.u32 %v406, 7
  %v408 = vsub.s32 0, %v407
  %v409 = vrot.slane %v404, %v408
  %v411 = vld [vmem:[%s13] sm:$0x1]
  %v412 = vld [vmem:[%s14] sm:$0x1]
  %v413 = vlaneseq
  %v414 = vshrl.u32 %v413, 7
  %v415 = vsub.s32 0, %v414
  %v416 = vrot.slane %v399, %v415
  %vm417 = vcmask 64512
  %v419 = vsel %vm417, %v165, 0
  %v422 = vsel %vm417, %v170, 0
  %v425 = vsel %vm417, %v273, 0
  %v428 = vsel %vm417, %v278, 0
  %430 = vmatprep.subr.mxu0 0.0
  %431 = vmatpush1.xpose.msra.mxu0 %v425
  %432 = vmatprep.subr.mxu0 0.0
  %433 = vmatpush1.xpose.msra.mxu0 %v428
  %434 = vmatprep.subr.mxu0 0.0
  %435 = vmatpush1.xpose.msra.mxu0 0.0
  %436 = vmatprep.subr.mxu0 0.0
  %437 = vmatpush1.xpose.msra.mxu0 0.0
  %438 = vmatprep.subr.mxu0 0.0
  %439 = vmatpush1.xpose.msra.mxu0 0.0
  %440 = vmatprep.subr.mxu0 0.0
  %441 = vmatpush1.xpose.msra.mxu0 0.0
  %442 = vmatprep.subr.mxu0 0.0
  %443 = vmatpush1.xpose.msra.mxu0 0.0
  %444 = vmatprep.subr.mxu0 0.0
  %445 = vmatpush1.xpose.msra.mxu0 0.0
  %446 = vmatprep.subr.mxu0 0.0
  %447 = vmatpush1.xpose.msra.mxu0 0.0
  %448 = vmatprep.subr.mxu0 0.0
  %449 = vmatpush1.xpose.msra.mxu0 0.0
  %450 = vmatprep.subr.mxu0 0.0
  %451 = vmatpush1.xpose.msra.mxu0 0.0
  %452 = vmatprep.subr.mxu0 0.0
  %453 = vmatpush1.xpose.msra.mxu0 0.0
  %454 = vmatprep.subr.mxu0 0.0
  %455 = vmatpush1.xpose.msra.mxu0 0.0
  %456 = vmatprep.subr.mxu0 0.0
  %457 = vmatpush1.xpose.msra.mxu0 0.0
  %458 = vmatprep.subr.mxu0 0.0
  %459 = vmatpush1.xpose.msra.mxu0 0.0
  %460 = vmatprep.subr.mxu0 0.0
  %461 = vmatpush1.xpose.msra.mxu0 0.0
  %462 = vmatprep.subr.mxu0 0.0
  %463 = vmatpush1.xpose.msra.mxu0 0.0
  %464 = vmatprep.subr.mxu0 0.0
  %465 = vmatpush1.xpose.msra.mxu0 0.0
  %466 = vmatprep.subr.mxu0 0.0
  %467 = vmatpush1.xpose.msra.mxu0 0.0
  %468 = vmatprep.subr.mxu0 0.0
  %469 = vmatpush1.xpose.msra.mxu0 0.0
  %470 = vmatprep.subr.mxu0 0.0
  %471 = vmatpush1.xpose.msra.mxu0 0.0
  %472 = vmatprep.subr.mxu0 0.0
  %473 = vmatpush1.xpose.msra.mxu0 0.0
  %474 = vmatprep.subr.mxu0 0.0
  %475 = vmatpush1.xpose.msra.mxu0 0.0
  %476 = vmatprep.subr.mxu0 0.0
  %477 = vmatpush1.xpose.msra.mxu0 0.0
  %478 = vmatprep.subr.mxu0 0.0
  %479 = vmatpush1.xpose.msra.mxu0 0.0
  %480 = vmatprep.subr.mxu0 0.0
  %481 = vmatpush1.xpose.msra.mxu0 0.0
  %482 = vmatprep.subr.mxu0 0.0
  %483 = vmatpush1.xpose.msra.mxu0 0.0
  %484 = vmatprep.subr.mxu0 0.0
  %485 = vmatpush1.xpose.msra.mxu0 0.0
  %486 = vmatprep.subr.mxu0 0.0
  %487 = vmatpush1.xpose.msra.mxu0 0.0
  %488 = vmatprep.subr.mxu0 0.0
  %489 = vmatpush1.xpose.msra.mxu0 0.0
  %490 = vmatprep.subr.mxu0 0.0
  %491 = vmatpush1.xpose.msra.mxu0 0.0
  %492 = vmatprep.subr.mxu0 0.0
  %493 = vmatpush1.xpose.msra.mxu0 0.0
  %494 = vmatprep.mubr.f32.mxu0 0.0
  %495 = vmatmul.mubr.f32.gmra.mrb[0].mxu0 %v419
  %v496 = vpop.f32.mrb[0].mxu0
  %v497 = vadd.f32 %v416, %v496
  %v498 = vpop.f32.mrb[0].mxu0
  %499 = vmatprep.mubr.f32.mxu0 0.0
  %500 = vmatmul.mubr.f32.gmra.mrb[0].mxu0 %v422
  %v501 = vpop.f32.mrb[0].mxu0
  %v502 = vadd.f32 %v416, %v501
  %v503 = vpop.f32.mrb[0].mxu0
  %504 = vdwg.mxu0
  %vm505 = vcmask 130048
  %v506 = vsel %vm505, %v497, -inf
  %507 = vmax.xlane.f32.xlu0 %v506
  %v508 = vpop.xlane.xlu0 %507
  %v509 = vsel %vm505, %v502, -inf
  %510 = vmax.xlane.f32.xlu0 %v509
  %v511 = vpop.xlane.xlu0 %510
  %v512 = vsub.f32 %v497, %v508
  %v513 = vsub.f32 %v502, %v511
  %v514 = vmul.f32 %v512, 1.442695
  %v515 = vpow.pop %v514
  %v516 = vmul.f32 %v513, 1.442695
  %v517 = vpow.pop %v516
  %v518 = vsel %vm505, %v515, 0.0
  %519 = vadd.xlane.f32.xlu0 %v518
  %v520 = vpop.xlane.xlu0 %519
  %v521 = vsel %vm505, %v517, 0.0
  %522 = vadd.xlane.f32.xlu0 %v521
  %v523 = vpop.xlane.xlu0 %522
  %v525 = vsel %vm505, %v515, 0
  %v528 = vsel %vm505, %v517, 0
  %530 = vmatprep.subr.mxu0 0.0
  %531 = vmatpush1.msra.mxu0 %v381
  %532 = vmatprep.subr.mxu0 0.0
  %533 = vmatpush1.msra.mxu0 %v386
  %534 = vmatprep.subr.mxu0 0.0
  %535 = vmatpush1.msra.mxu0 0.0
  %536 = vmatprep.subr.mxu0 0.0
  %537 = vmatpush1.msra.mxu0 0.0
  %538 = vmatprep.subr.mxu0 0.0
  %539 = vmatpush1.msra.mxu0 0.0
  %540 = vmatprep.subr.mxu0 0.0
  %541 = vmatpush1.msra.mxu0 0.0
  %542 = vmatprep.subr.mxu0 0.0
  %543 = vmatpush1.msra.mxu0 0.0
  %544 = vmatprep.subr.mxu0 0.0
  %545 = vmatpush1.msra.mxu0 0.0
  %546 = vmatprep.subr.mxu0 0.0
  %547 = vmatpush1.msra.mxu0 0.0
  %548 = vmatprep.subr.mxu0 0.0
  %549 = vmatpush1.msra.mxu0 0.0
  %550 = vmatprep.subr.mxu0 0.0
  %551 = vmatpush1.msra.mxu0 0.0
  %552 = vmatprep.subr.mxu0 0.0
  %553 = vmatpush1.msra.mxu0 0.0
  %554 = vmatprep.subr.mxu0 0.0
  %555 = vmatpush1.msra.mxu0 0.0
  %556 = vmatprep.subr.mxu0 0.0
  %557 = vmatpush1.msra.mxu0 0.0
  %558 = vmatprep.subr.mxu0 0.0
  %559 = vmatpush1.msra.mxu0 0.0
  %560 = vmatprep.subr.mxu0 0.0
  %561 = vmatpush1.msra.mxu0 0.0
  %562 = vmatprep.subr.mxu0 0.0
  %563 = vmatpush1.msra.mxu0 0.0
  %564 = vmatprep.subr.mxu0 0.0
  %565 = vmatpush1.msra.mxu0 0.0
  %566 = vmatprep.subr.mxu0 0.0
  %567 = vmatpush1.msra.mxu0 0.0
  %568 = vmatprep.subr.mxu0 0.0
  %569 = vmatpush1.msra.mxu0 0.0
  %570 = vmatprep.subr.mxu0 0.0
  %571 = vmatpush1.msra.mxu0 0.0
  %572 = vmatprep.subr.mxu0 0.0
  %573 = vmatpush1.msra.mxu0 0.0
  %574 = vmatprep.subr.mxu0 0.0
  %575 = vmatpush1.msra.mxu0 0.0
  %576 = vmatprep.subr.mxu0 0.0
  %577 = vmatpush1.msra.mxu0 0.0
  %578 = vmatprep.subr.mxu0 0.0
  %579 = vmatpush1.msra.mxu0 0.0
  %580 = vmatprep.subr.mxu0 0.0
  %581 = vmatpush1.msra.mxu0 0.0
  %582 = vmatprep.subr.mxu0 0.0
  %583 = vmatpush1.msra.mxu0 0.0
  %584 = vmatprep.subr.mxu0 0.0
  %585 = vmatpush1.msra.mxu0 0.0
  %586 = vmatprep.subr.mxu0 0.0
  %587 = vmatpush1.msra.mxu0 0.0
  %588 = vmatprep.subr.mxu0 0.0
  %589 = vmatpush1.msra.mxu0 0.0
  %590 = vmatprep.subr.mxu0 0.0
  %591 = vmatpush1.msra.mxu0 0.0
  %592 = vmatprep.subr.mxu0 0.0
  %593 = vmatpush1.msra.mxu0 0.0
  %594 = vmatprep.mubr.f32.mxu0 0.0
  %595 = vmatmul.mubr.f32.gmra.mrb[0].mxu0 %v525
  %v596 = vpop.f32.mrb[0].mxu0
  %v597 = vadd.f32 0.0, %v596
  %v598 = vpop.f32.mrb[0].mxu0
  %599 = vmatprep.mubr.f32.mxu0 0.0
  %600 = vmatmul.mubr.f32.gmra.mrb[0].mxu0 %v528
  %v601 = vpop.f32.mrb[0].mxu0
  %v602 = vadd.f32 0.0, %v601
  %v603 = vpop.f32.mrb[0].mxu0
  %604 = vdwg.mxu0
  %v605 = vrcp.pop %v520
  %v606 = vrcp.pop %v523
  %v607 = vmul.f32 %v597, %v605
  %v608 = vmul.f32 %v602, %v606
  %v610 = vsel %vm417, %v607, 0
  %v613 = vsel %vm417, %v608, 0
  %615 = vmatprep.subr.mxu0 0.0
  %616 = vmatpush1.msra.mxu0 %v400
  %617 = vmatprep.subr.mxu0 0.0
  %618 = vmatpush1.msra.mxu0 0.0
  %619 = vmatprep.subr.mxu0 0.0
  %620 = vmatpush1.msra.mxu0 0.0
  %621 = vmatprep.subr.mxu0 0.0
  %622 = vmatpush1.msra.mxu0 0.0
  %623 = vmatprep.subr.mxu0 0.0
  %624 = vmatpush1.msra.mxu0 0.0
  %625 = vmatprep.subr.mxu0 0.0
  %626 = vmatpush1.msra.mxu0 0.0
  %627 = vmatprep.subr.mxu0 0.0
  %628 = vmatpush1.msra.mxu0 0.0
  %629 = vmatprep.subr.mxu0 0.0
  %630 = vmatpush1.msra.mxu0 0.0
  %631 = vmatprep.subr.mxu0 0.0
  %632 = vmatpush1.msra.mxu0 0.0
  %633 = vmatprep.subr.mxu0 0.0
  %634 = vmatpush1.msra.mxu0 0.0
  %635 = vmatprep.subr.mxu0 0.0
  %636 = vmatpush1.msra.mxu0 0.0
  %637 = vmatprep.subr.mxu0 0.0
  %638 = vmatpush1.msra.mxu0 0.0
  %639 = vmatprep.subr.mxu0 0.0
  %640 = vmatpush1.msra.mxu0 0.0
  %641 = vmatprep.subr.mxu0 0.0
  %642 = vmatpush1.msra.mxu0 0.0
  %643 = vmatprep.subr.mxu0 0.0
  %644 = vmatpush1.msra.mxu0 0.0
  %645 = vmatprep.subr.mxu0 0.0
  %646 = vmatpush1.msra.mxu0 0.0
  %647 = vmatprep.subr.mxu0 0.0
  %648 = vmatpush1.msra.mxu0 0.0
  %649 = vmatprep.subr.mxu0 0.0
  %650 = vmatpush1.msra.mxu0 0.0
  %651 = vmatprep.subr.mxu0 0.0
  %652 = vmatpush1.msra.mxu0 0.0
  %653 = vmatprep.subr.mxu0 0.0
  %654 = vmatpush1.msra.mxu0 0.0
  %655 = vmatprep.subr.mxu0 0.0
  %656 = vmatpush1.msra.mxu0 0.0
  %657 = vmatprep.subr.mxu0 0.0
  %658 = vmatpush1.msra.mxu0 0.0
  %659 = vmatprep.subr.mxu0 0.0
  %660 = vmatpush1.msra.mxu0 0.0
  %661 = vmatprep.subr.mxu0 0.0
  %662 = vmatpush1.msra.mxu0 0.0
  %663 = vmatprep.subr.mxu0 0.0
  %664 = vmatpush1.msra.mxu0 0.0
  %665 = vmatprep.subr.mxu0 0.0
  %666 = vmatpush1.msra.mxu0 0.0
  %667 = vmatprep.subr.mxu0 0.0
  %668 = vmatpush1.msra.mxu0 0.0
  %669 = vmatprep.subr.mxu0 0.0
  %670 = vmatpush1.msra.mxu0 0.0
  %671 = vmatprep.subr.mxu0 0.0
  %672 = vmatpush1.msra.mxu0 0.0
  %673 = vmatprep.subr.mxu0 0.0
  %674 = vmatpush1.msra.mxu0 0.0
  %675 = vmatprep.subr.mxu0 0.0
  %676 = vmatpush1.msra.mxu0 0.0
  %677 = vmatprep.subr.mxu0 0.0
  %678 = vmatpush1.msra.mxu0 0.0
  %679 = vmatprep.mubr.f32.mxu0 0.0
  %680 = vmatmul.mubr.f32.gmra.mrb[0].mxu0 %v610
  %v681 = vpop.f32.mrb[0].mxu0
  %v682 = vadd.f32 0.0, %v681
  %v683 = vpop.f32.mrb[0].mxu0
  %684 = vmatprep.mubr.f32.mxu0 0.0
  %685 = vmatmul.mubr.f32.gmra.mrb[0].mxu0 %v613
  %v686 = vpop.f32.mrb[0].mxu0
  %v687 = vadd.f32 0.0, %v686
  %v688 = vpop.f32.mrb[0].mxu0
  %689 = vdwg.mxu0
  %v690 = vadd.f32 %v409, %v682
  %v691 = vadd.f32 %v409, %v687
  %692 = vrot.lane.b32.xlu0 %v165, 120
  %v693 = vpop.permute.xlu0 %692
  %694 = vrot.lane.b32.xlu0 %v170, 120
  %v695 = vpop.permute.xlu0 %694
  %696 = vrot.lane.b32.xlu0 %v273, 120
  %v697 = vpop.permute.xlu0 %696
  %698 = vrot.lane.b32.xlu0 %v278, 120
  %v699 = vpop.permute.xlu0 %698
  %v700 = vsel %vm417, %v693, 0
  %v702 = vsel %vm417, %v695, 0
  %v704 = vsel %vm417, %v697, 0
  %v706 = vsel %vm417, %v699, 0
  %708 = vmatprep.subr.mxu0 0.0
  %709 = vmatpush1.xpose.msra.mxu0 %v704
  %710 = vmatprep.subr.mxu0 0.0
  %711 = vmatpush1.xpose.msra.mxu0 %v706
  %712 = vmatprep.subr.mxu0 0.0
  %713 = vmatpush1.xpose.msra.mxu0 0.0
  %714 = vmatprep.subr.mxu0 0.0
  %715 = vmatpush1.xpose.msra.mxu0 0.0
  %716 = vmatprep.subr.mxu0 0.0
  %717 = vmatpush1.xpose.msra.mxu0 0.0
  %718 = vmatprep.subr.mxu0 0.0
  %719 = vmatpush1.xpose.msra.mxu0 0.0
  %720 = vmatprep.subr.mxu0 0.0
  %721 = vmatpush1.xpose.msra.mxu0 0.0
  %722 = vmatprep.subr.mxu0 0.0
  %723 = vmatpush1.xpose.msra.mxu0 0.0
  %724 = vmatprep.subr.mxu0 0.0
  %725 = vmatpush1.xpose.msra.mxu0 0.0
  %726 = vmatprep.subr.mxu0 0.0
  %727 = vmatpush1.xpose.msra.mxu0 0.0
  %728 = vmatprep.subr.mxu0 0.0
  %729 = vmatpush1.xpose.msra.mxu0 0.0
  %730 = vmatprep.subr.mxu0 0.0
  %731 = vmatpush1.xpose.msra.mxu0 0.0
  %732 = vmatprep.subr.mxu0 0.0
  %733 = vmatpush1.xpose.msra.mxu0 0.0
  %734 = vmatprep.subr.mxu0 0.0
  %735 = vmatpush1.xpose.msra.mxu0 0.0
  %736 = vmatprep.subr.mxu0 0.0
  %737 = vmatpush1.xpose.msra.mxu0 0.0
  %738 = vmatprep.subr.mxu0 0.0
  %739 = vmatpush1.xpose.msra.mxu0 0.0
  %740 = vmatprep.subr.mxu0 0.0
  %741 = vmatpush1.xpose.msra.mxu0 0.0
  %742 = vmatprep.subr.mxu0 0.0
  %743 = vmatpush1.xpose.msra.mxu0 0.0
  %744 = vmatprep.subr.mxu0 0.0
  %745 = vmatpush1.xpose.msra.mxu0 0.0
  %746 = vmatprep.subr.mxu0 0.0
  %747 = vmatpush1.xpose.msra.mxu0 0.0
  %748 = vmatprep.subr.mxu0 0.0
  %749 = vmatpush1.xpose.msra.mxu0 0.0
  %750 = vmatprep.subr.mxu0 0.0
  %751 = vmatpush1.xpose.msra.mxu0 0.0
  %752 = vmatprep.subr.mxu0 0.0
  %753 = vmatpush1.xpose.msra.mxu0 0.0
  %754 = vmatprep.subr.mxu0 0.0
  %755 = vmatpush1.xpose.msra.mxu0 0.0
  %756 = vmatprep.subr.mxu0 0.0
  %757 = vmatpush1.xpose.msra.mxu0 0.0
  %758 = vmatprep.subr.mxu0 0.0
  %759 = vmatpush1.xpose.msra.mxu0 0.0
  %760 = vmatprep.subr.mxu0 0.0
  %761 = vmatpush1.xpose.msra.mxu0 0.0
  %762 = vmatprep.subr.mxu0 0.0
  %763 = vmatpush1.xpose.msra.mxu0 0.0
  %764 = vmatprep.subr.mxu0 0.0
  %765 = vmatpush1.xpose.msra.mxu0 0.0
  %766 = vmatprep.subr.mxu0 0.0
  %767 = vmatpush1.xpose.msra.mxu0 0.0
  %768 = vmatprep.subr.mxu0 0.0
  %769 = vmatpush1.xpose.msra.mxu0 0.0
  %770 = vmatprep.subr.mxu0 0.0
  %771 = vmatpush1.xpose.msra.mxu0 0.0
  %772 = vmatprep.mubr.f32.mxu0 0.0
  %773 = vmatmul.mubr.f32.gmra.mrb[0].mxu0 %v700
  %v774 = vpop.f32.mrb[0].mxu0
  %v775 = vadd.f32 %v416, %v774
  %v776 = vpop.f32.mrb[0].mxu0
  %777 = vmatprep.mubr.f32.mxu0 0.0
  %778 = vmatmul.mubr.f32.gmra.mrb[0].mxu0 %v702
  %v779 = vpop.f32.mrb[0].mxu0
  %v780 = vadd.f32 %v416, %v779
  %v781 = vpop.f32.mrb[0].mxu0
  %782 = vdwg.mxu0
  %v783 = vsel %vm505, %v775, -inf
  %784 = vmax.xlane.f32.xlu0 %v783
  %v785 = vpop.xlane.xlu0 %784
  %v786 = vsel %vm505, %v780, -inf
  %787 = vmax.xlane.f32.xlu0 %v786
  %v788 = vpop.xlane.xlu0 %787
  %v789 = vsub.f32 %v775, %v785
  %v790 = vsub.f32 %v780, %v788
  %v791 = vmul.f32 %v789, 1.442695
  %v792 = vpow.pop %v791
  %v793 = vmul.f32 %v790, 1.442695
  %v794 = vpow.pop %v793
  %v795 = vsel %vm505, %v792, 0.0
  %796 = vadd.xlane.f32.xlu0 %v795
  %v797 = vpop.xlane.xlu0 %796
  %v798 = vsel %vm505, %v794, 0.0
  %799 = vadd.xlane.f32.xlu0 %v798
  %v800 = vpop.xlane.xlu0 %799
  %803 = vrot.lane.b32.xlu0 %v381, 120
  %v804 = vpop.permute.xlu0 %803
  %805 = vrot.lane.b32.xlu0 %v386, 120
  %v806 = vpop.permute.xlu0 %805
  %v810 = vsel %vm505, %v792, 0
  %v813 = vsel %vm505, %v794, 0
  %815 = vmatprep.subr.mxu0 0.0
  %816 = vmatpush1.msra.mxu0 %v804
  %817 = vmatprep.subr.mxu0 0.0
  %818 = vmatpush1.msra.mxu0 %v806
  %819 = vmatprep.subr.mxu0 0.0
  %820 = vmatpush1.msra.mxu0 0.0
  %821 = vmatprep.subr.mxu0 0.0
  %822 = vmatpush1.msra.mxu0 0.0
  %823 = vmatprep.subr.mxu0 0.0
  %824 = vmatpush1.msra.mxu0 0.0
  %825 = vmatprep.subr.mxu0 0.0
  %826 = vmatpush1.msra.mxu0 0.0
  %827 = vmatprep.subr.mxu0 0.0
  %828 = vmatpush1.msra.mxu0 0.0
  %829 = vmatprep.subr.mxu0 0.0
  %830 = vmatpush1.msra.mxu0 0.0
  %831 = vmatprep.subr.mxu0 0.0
  %832 = vmatpush1.msra.mxu0 0.0
  %833 = vmatprep.subr.mxu0 0.0
  %834 = vmatpush1.msra.mxu0 0.0
  %835 = vmatprep.subr.mxu0 0.0
  %836 = vmatpush1.msra.mxu0 0.0
  %837 = vmatprep.subr.mxu0 0.0
  %838 = vmatpush1.msra.mxu0 0.0
  %839 = vmatprep.subr.mxu0 0.0
  %840 = vmatpush1.msra.mxu0 0.0
  %841 = vmatprep.subr.mxu0 0.0
  %842 = vmatpush1.msra.mxu0 0.0
  %843 = vmatprep.subr.mxu0 0.0
  %844 = vmatpush1.msra.mxu0 0.0
  %845 = vmatprep.subr.mxu0 0.0
  %846 = vmatpush1.msra.mxu0 0.0
  %847 = vmatprep.subr.mxu0 0.0
  %848 = vmatpush1.msra.mxu0 0.0
  %849 = vmatprep.subr.mxu0 0.0
  %850 = vmatpush1.msra.mxu0 0.0
  %851 = vmatprep.subr.mxu0 0.0
  %852 = vmatpush1.msra.mxu0 0.0
  %853 = vmatprep.subr.mxu0 0.0
  %854 = vmatpush1.msra.mxu0 0.0
  %855 = vmatprep.subr.mxu0 0.0
  %856 = vmatpush1.msra.mxu0 0.0
  %857 = vmatprep.subr.mxu0 0.0
  %858 = vmatpush1.msra.mxu0 0.0
  %859 = vmatprep.subr.mxu0 0.0
  %860 = vmatpush1.msra.mxu0 0.0
  %861 = vmatprep.subr.mxu0 0.0
  %862 = vmatpush1.msra.mxu0 0.0
  %863 = vmatprep.subr.mxu0 0.0
  %864 = vmatpush1.msra.mxu0 0.0
  %865 = vmatprep.subr.mxu0 0.0
  %866 = vmatpush1.msra.mxu0 0.0
  %867 = vmatprep.subr.mxu0 0.0
  %868 = vmatpush1.msra.mxu0 0.0
  %869 = vmatprep.subr.mxu0 0.0
  %870 = vmatpush1.msra.mxu0 0.0
  %871 = vmatprep.subr.mxu0 0.0
  %872 = vmatpush1.msra.mxu0 0.0
  %873 = vmatprep.subr.mxu0 0.0
  %874 = vmatpush1.msra.mxu0 0.0
  %875 = vmatprep.subr.mxu0 0.0
  %876 = vmatpush1.msra.mxu0 0.0
  %877 = vmatprep.subr.mxu0 0.0
  %878 = vmatpush1.msra.mxu0 0.0
  %879 = vmatprep.mubr.f32.mxu0 0.0
  %880 = vmatmul.mubr.f32.gmra.mrb[0].mxu0 %v810
  %v881 = vpop.f32.mrb[0].mxu0
  %v882 = vadd.f32 0.0, %v881
  %v883 = vpop.f32.mrb[0].mxu0
  %884 = vmatprep.mubr.f32.mxu0 0.0
  %885 = vmatmul.mubr.f32.gmra.mrb[0].mxu0 %v813
  %v886 = vpop.f32.mrb[0].mxu0
  %v887 = vadd.f32 0.0, %v886
  %v888 = vpop.f32.mrb[0].mxu0
  %889 = vdwg.mxu0
  %v890 = vrcp.pop %v797
  %v891 = vrcp.pop %v800
  %v892 = vmul.f32 %v882, %v890
  %v893 = vmul.f32 %v887, %v891
  %v895 = vsel %vm417, %v892, 0
  %v898 = vsel %vm417, %v893, 0
  %900 = vmatprep.subr.mxu0 0.0
  %901 = vmatpush1.msra.mxu0 %v401
  %902 = vmatprep.subr.mxu0 0.0
  %903 = vmatpush1.msra.mxu0 0.0
  %904 = vmatprep.subr.mxu0 0.0
  %905 = vmatpush1.msra.mxu0 0.0
  %906 = vmatprep.subr.mxu0 0.0
  %907 = vmatpush1.msra.mxu0 0.0
  %908 = vmatprep.subr.mxu0 0.0
  %909 = vmatpush1.msra.mxu0 0.0
  %910 = vmatprep.subr.mxu0 0.0
  %911 = vmatpush1.msra.mxu0 0.0
  %912 = vmatprep.subr.mxu0 0.0
  %913 = vmatpush1.msra.mxu0 0.0
  %914 = vmatprep.subr.mxu0 0.0
  %915 = vmatpush1.msra.mxu0 0.0
  %916 = vmatprep.subr.mxu0 0.0
  %917 = vmatpush1.msra.mxu0 0.0
  %918 = vmatprep.subr.mxu0 0.0
  %919 = vmatpush1.msra.mxu0 0.0
  %920 = vmatprep.subr.mxu0 0.0
  %921 = vmatpush1.msra.mxu0 0.0
  %922 = vmatprep.subr.mxu0 0.0
  %923 = vmatpush1.msra.mxu0 0.0
  %924 = vmatprep.subr.mxu0 0.0
  %925 = vmatpush1.msra.mxu0 0.0
  %926 = vmatprep.subr.mxu0 0.0
  %927 = vmatpush1.msra.mxu0 0.0
  %928 = vmatprep.subr.mxu0 0.0
  %929 = vmatpush1.msra.mxu0 0.0
  %930 = vmatprep.subr.mxu0 0.0
  %931 = vmatpush1.msra.mxu0 0.0
  %932 = vmatprep.subr.mxu0 0.0
  %933 = vmatpush1.msra.mxu0 0.0
  %934 = vmatprep.subr.mxu0 0.0
  %935 = vmatpush1.msra.mxu0 0.0
  %936 = vmatprep.subr.mxu0 0.0
  %937 = vmatpush1.msra.mxu0 0.0
  %938 = vmatprep.subr.mxu0 0.0
  %939 = vmatpush1.msra.mxu0 0.0
  %940 = vmatprep.subr.mxu0 0.0
  %941 = vmatpush1.msra.mxu0 0.0
  %942 = vmatprep.subr.mxu0 0.0
  %943 = vmatpush1.msra.mxu0 0.0
  %944 = vmatprep.subr.mxu0 0.0
  %945 = vmatpush1.msra.mxu0 0.0
  %946 = vmatprep.subr.mxu0 0.0
  %947 = vmatpush1.msra.mxu0 0.0
  %948 = vmatprep.subr.mxu0 0.0
  %949 = vmatpush1.msra.mxu0 0.0
  %950 = vmatprep.subr.mxu0 0.0
  %951 = vmatpush1.msra.mxu0 0.0
  %952 = vmatprep.subr.mxu0 0.0
  %953 = vmatpush1.msra.mxu0 0.0
  %954 = vmatprep.subr.mxu0 0.0
  %955 = vmatpush1.msra.mxu0 0.0
  %956 = vmatprep.subr.mxu0 0.0
  %957 = vmatpush1.msra.mxu0 0.0
  %958 = vmatprep.subr.mxu0 0.0
  %959 = vmatpush1.msra.mxu0 0.0
  %960 = vmatprep.subr.mxu0 0.0
  %961 = vmatpush1.msra.mxu0 0.0
  %962 = vmatprep.subr.mxu0 0.0
  %963 = vmatpush1.msra.mxu0 0.0
  %964 = vmatprep.mubr.f32.mxu0 0.0
  %965 = vmatmul.mubr.f32.gmra.mrb[0].mxu0 %v895
  %v966 = vpop.f32.mrb[0].mxu0
  %v967 = vadd.f32 0.0, %v966
  %v968 = vpop.f32.mrb[0].mxu0
  %969 = vmatprep.mubr.f32.mxu0 0.0
  %970 = vmatmul.mubr.f32.gmra.mrb[0].mxu0 %v898
  %v971 = vpop.f32.mrb[0].mxu0
  %v972 = vadd.f32 0.0, %v971
  %v973 = vpop.f32.mrb[0].mxu0
  %974 = vdwg.mxu0
  %v975 = vadd.f32 %v690, %v967
  %v976 = vadd.f32 %v691, %v972
  %977 = vrot.lane.b32.xlu0 %v165, 112
  %v978 = vpop.permute.xlu0 %977
  %979 = vrot.lane.b32.xlu0 %v170, 112
  %v980 = vpop.permute.xlu0 %979
  %981 = vrot.lane.b32.xlu0 %v273, 112
  %v982 = vpop.permute.xlu0 %981
  %983 = vrot.lane.b32.xlu0 %v278, 112
  %v984 = vpop.permute.xlu0 %983
  %v985 = vsel %vm417, %v978, 0
  %v987 = vsel %vm417, %v980, 0
  %v989 = vsel %vm417, %v982, 0
  %v991 = vsel %vm417, %v984, 0
  %993 = vmatprep.subr.mxu0 0.0
  %994 = vmatpush1.xpose.msra.mxu0 %v989
  %995 = vmatprep.subr.mxu0 0.0
  %996 = vmatpush1.xpose.msra.mxu0 %v991
  %997 = vmatprep.subr.mxu0 0.0
  %998 = vmatpush1.xpose.msra.mxu0 0.0
  %999 = vmatprep.subr.mxu0 0.0
  %1000 = vmatpush1.xpose.msra.mxu0 0.0
  %1001 = vmatprep.subr.mxu0 0.0
  %1002 = vmatpush1.xpose.msra.mxu0 0.0
  %1003 = vmatprep.subr.mxu0 0.0
  %1004 = vmatpush1.xpose.msra.mxu0 0.0
  %1005 = vmatprep.subr.mxu0 0.0
  %1006 = vmatpush1.xpose.msra.mxu0 0.0
  %1007 = vmatprep.subr.mxu0 0.0
  %1008 = vmatpush1.xpose.msra.mxu0 0.0
  %1009 = vmatprep.subr.mxu0 0.0
  %1010 = vmatpush1.xpose.msra.mxu0 0.0
  %1011 = vmatprep.subr.mxu0 0.0
  %1012 = vmatpush1.xpose.msra.mxu0 0.0
  %1013 = vmatprep.subr.mxu0 0.0
  %1014 = vmatpush1.xpose.msra.mxu0 0.0
  %1015 = vmatprep.subr.mxu0 0.0
  %1016 = vmatpush1.xpose.msra.mxu0 0.0
  %1017 = vmatprep.subr.mxu0 0.0
  %1018 = vmatpush1.xpose.msra.mxu0 0.0
  %1019 = vmatprep.subr.mxu0 0.0
  %1020 = vmatpush1.xpose.msra.mxu0 0.0
  %1021 = vmatprep.subr.mxu0 0.0
  %1022 = vmatpush1.xpose.msra.mxu0 0.0
  %1023 = vmatprep.subr.mxu0 0.0
  %1024 = vmatpush1.xpose.msra.mxu0 0.0
  %1025 = vmatprep.subr.mxu0 0.0
  %1026 = vmatpush1.xpose.msra.mxu0 0.0
  %1027 = vmatprep.subr.mxu0 0.0
  %1028 = vmatpush1.xpose.msra.mxu0 0.0
  %1029 = vmatprep.subr.mxu0 0.0
  %1030 = vmatpush1.xpose.msra.mxu0 0.0
  %1031 = vmatprep.subr.mxu0 0.0
  %1032 = vmatpush1.xpose.msra.mxu0 0.0
  %1033 = vmatprep.subr.mxu0 0.0
  %1034 = vmatpush1.xpose.msra.mxu0 0.0
  %1035 = vmatprep.subr.mxu0 0.0
  %1036 = vmatpush1.xpose.msra.mxu0 0.0
  %1037 = vmatprep.subr.mxu0 0.0
  %1038 = vmatpush1.xpose.msra.mxu0 0.0
  %1039 = vmatprep.subr.mxu0 0.0
  %1040 = vmatpush1.xpose.msra.mxu0 0.0
  %1041 = vmatprep.subr.mxu0 0.0
  %1042 = vmatpush1.xpose.msra.mxu0 0.0
  %1043 = vmatprep.subr.mxu0 0.0
  %1044 = vmatpush1.xpose.msra.mxu0 0.0
  %1045 = vmatprep.subr.mxu0 0.0
  %1046 = vmatpush1.xpose.msra.mxu0 0.0
  %1047 = vmatprep.subr.mxu0 0.0
  %1048 = vmatpush1.xpose.msra.mxu0 0.0
  %1049 = vmatprep.subr.mxu0 0.0
  %1050 = vmatpush1.xpose.msra.mxu0 0.0
  %1051 = vmatprep.subr.mxu0 0.0
  %1052 = vmatpush1.xpose.msra.mxu0 0.0
  %1053 = vmatprep.subr.mxu0 0.0
  %1054 = vmatpush1.xpose.msra.mxu0 0.0
  %1055 = vmatprep.subr.mxu0 0.0
  %1056 = vmatpush1.xpose.msra.mxu0 0.0
  %1057 = vmatprep.mubr.f32.mxu0 0.0
  %1058 = vmatmul.mubr.f32.gmra.mrb[0].mxu0 %v985
  %v1059 = vpop.f32.mrb[0].mxu0
  %v1060 = vadd.f32 %v416, %v1059
  %v1061 = vpop.f32.mrb[0].mxu0
  %1062 = vmatprep.mubr.f32.mxu0 0.0
  %1063 = vmatmul.mubr.f32.gmra.mrb[0].mxu0 %v987
  %v1064 = vpop.f32.mrb[0].mxu0
  %v1065 = vadd.f32 %v416, %v1064
  %v1066 = vpop.f32.mrb[0].mxu0
  %1067 = vdwg.mxu0
  %v1068 = vsel %vm505, %v1060, -inf
  %1069 = vmax.xlane.f32.xlu0 %v1068
  %v1070 = vpop.xlane.xlu0 %1069
  %v1071 = vsel %vm505, %v1065, -inf
  %1072 = vmax.xlane.f32.xlu0 %v1071
  %v1073 = vpop.xlane.xlu0 %1072
  %v1074 = vsub.f32 %v1060, %v1070
  %v1075 = vsub.f32 %v1065, %v1073
  %v1076 = vmul.f32 %v1074, 1.442695
  %v1077 = vpow.pop %v1076
  %v1078 = vmul.f32 %v1075, 1.442695
  %v1079 = vpow.pop %v1078
  %v1080 = vsel %vm505, %v1077, 0.0
  %1081 = vadd.xlane.f32.xlu0 %v1080
  %v1082 = vpop.xlane.xlu0 %1081
  %v1083 = vsel %vm505, %v1079, 0.0
  %1084 = vadd.xlane.f32.xlu0 %v1083
  %v1085 = vpop.xlane.xlu0 %1084
  %1086 = vrot.lane.b32.xlu0 %v381, 112
  %v1087 = vpop.permute.xlu0 %1086
  %1088 = vrot.lane.b32.xlu0 %v386, 112
  %v1089 = vpop.permute.xlu0 %1088
  %v1093 = vsel %vm505, %v1077, 0
  %v1096 = vsel %vm505, %v1079, 0
  %1098 = vmatprep.subr.mxu0 0.0
  %1099 = vmatpush1.msra.mxu0 %v1087
  %1100 = vmatprep.subr.mxu0 0.0
  %1101 = vmatpush1.msra.mxu0 %v1089
  %1102 = vmatprep.subr.mxu0 0.0
  %1103 = vmatpush1.msra.mxu0 0.0
  %1104 = vmatprep.subr.mxu0 0.0
  %1105 = vmatpush1.msra.mxu0 0.0
  %1106 = vmatprep.subr.mxu0 0.0
  %1107 = vmatpush1.msra.mxu0 0.0
  %1108 = vmatprep.subr.mxu0 0.0
  %1109 = vmatpush1.msra.mxu0 0.0
  %1110 = vmatprep.subr.mxu0 0.0
  %1111 = vmatpush1.msra.mxu0 0.0
  %1112 = vmatprep.subr.mxu0 0.0
  %1113 = vmatpush1.msra.mxu0 0.0
  %1114 = vmatprep.subr.mxu0 0.0
  %1115 = vmatpush1.msra.mxu0 0.0
  %1116 = vmatprep.subr.mxu0 0.0
  %1117 = vmatpush1.msra.mxu0 0.0
  %1118 = vmatprep.subr.mxu0 0.0
  %1119 = vmatpush1.msra.mxu0 0.0
  %1120 = vmatprep.subr.mxu0 0.0
  %1121 = vmatpush1.msra.mxu0 0.0
  %1122 = vmatprep.subr.mxu0 0.0
  %1123 = vmatpush1.msra.mxu0 0.0
  %1124 = vmatprep.subr.mxu0 0.0
  %1125 = vmatpush1.msra.mxu0 0.0
  %1126 = vmatprep.subr.mxu0 0.0
  %1127 = vmatpush1.msra.mxu0 0.0
  %1128 = vmatprep.subr.mxu0 0.0
  %1129 = vmatpush1.msra.mxu0 0.0
  %1130 = vmatprep.subr.mxu0 0.0
  %1131 = vmatpush1.msra.mxu0 0.0
  %1132 = vmatprep.subr.mxu0 0.0
  %1133 = vmatpush1.msra.mxu0 0.0
  %1134 = vmatprep.subr.mxu0 0.0
  %1135 = vmatpush1.msra.mxu0 0.0
  %1136 = vmatprep.subr.mxu0 0.0
  %1137 = vmatpush1.msra.mxu0 0.0
  %1138 = vmatprep.subr.mxu0 0.0
  %1139 = vmatpush1.msra.mxu0 0.0
  %1140 = vmatprep.subr.mxu0 0.0
  %1141 = vmatpush1.msra.mxu0 0.0
  %1142 = vmatprep.subr.mxu0 0.0
  %1143 = vmatpush1.msra.mxu0 0.0
  %1144 = vmatprep.subr.mxu0 0.0
  %1145 = vmatpush1.msra.mxu0 0.0
  %1146 = vmatprep.subr.mxu0 0.0
  %1147 = vmatpush1.msra.mxu0 0.0
  %1148 = vmatprep.subr.mxu0 0.0
  %1149 = vmatpush1.msra.mxu0 0.0
  %1150 = vmatprep.subr.mxu0 0.0
  %1151 = vmatpush1.msra.mxu0 0.0
  %1152 = vmatprep.subr.mxu0 0.0
  %1153 = vmatpush1.msra.mxu0 0.0
  %1154 = vmatprep.subr.mxu0 0.0
  %1155 = vmatpush1.msra.mxu0 0.0
  %1156 = vmatprep.subr.mxu0 0.0
  %1157 = vmatpush1.msra.mxu0 0.0
  %1158 = vmatprep.subr.mxu0 0.0
  %1159 = vmatpush1.msra.mxu0 0.0
  %1160 = vmatprep.subr.mxu0 0.0
  %1161 = vmatpush1.msra.mxu0 0.0
  %1162 = vmatprep.mubr.f32.mxu0 0.0
  %1163 = vmatmul.mubr.f32.gmra.mrb[0].mxu0 %v1093
  %v1164 = vpop.f32.mrb[0].mxu0
  %v1165 = vadd.f32 0.0, %v1164
  %v1166 = vpop.f32.mrb[0].mxu0
  %1167 = vmatprep.mubr.f32.mxu0 0.0
  %1168 = vmatmul.mubr.f32.gmra.mrb[0].mxu0 %v1096
  %v1169 = vpop.f32.mrb[0].mxu0
  %v1170 = vadd.f32 0.0, %v1169
  %v1171 = vpop.f32.mrb[0].mxu0
  %1172 = vdwg.mxu0
  %v1173 = vrcp.pop %v1082
  %v1174 = vrcp.pop %v1085
  %v1175 = vmul.f32 %v1165, %v1173
  %v1176 = vmul.f32 %v1170, %v1174
  %v1178 = vsel %vm417, %v1175, 0
  %v1181 = vsel %vm417, %v1176, 0
  %1183 = vmatprep.subr.mxu0 0.0
  %1184 = vmatpush1.msra.mxu0 %v402
  %1185 = vmatprep.subr.mxu0 0.0
  %1186 = vmatpush1.msra.mxu0 0.0
  %1187 = vmatprep.subr.mxu0 0.0
  %1188 = vmatpush1.msra.mxu0 0.0
  %1189 = vmatprep.subr.mxu0 0.0
  %1190 = vmatpush1.msra.mxu0 0.0
  %1191 = vmatprep.subr.mxu0 0.0
  %1192 = vmatpush1.msra.mxu0 0.0
  %1193 = vmatprep.subr.mxu0 0.0
  %1194 = vmatpush1.msra.mxu0 0.0
  %1195 = vmatprep.subr.mxu0 0.0
  %1196 = vmatpush1.msra.mxu0 0.0
  %1197 = vmatprep.subr.mxu0 0.0
  %1198 = vmatpush1.msra.mxu0 0.0
  %1199 = vmatprep.subr.mxu0 0.0
  %1200 = vmatpush1.msra.mxu0 0.0
  %1201 = vmatprep.subr.mxu0 0.0
  %1202 = vmatpush1.msra.mxu0 0.0
  %1203 = vmatprep.subr.mxu0 0.0
  %1204 = vmatpush1.msra.mxu0 0.0
  %1205 = vmatprep.subr.mxu0 0.0
  %1206 = vmatpush1.msra.mxu0 0.0
  %1207 = vmatprep.subr.mxu0 0.0
  %1208 = vmatpush1.msra.mxu0 0.0
  %1209 = vmatprep.subr.mxu0 0.0
  %1210 = vmatpush1.msra.mxu0 0.0
  %1211 = vmatprep.subr.mxu0 0.0
  %1212 = vmatpush1.msra.mxu0 0.0
  %1213 = vmatprep.subr.mxu0 0.0
  %1214 = vmatpush1.msra.mxu0 0.0
  %1215 = vmatprep.subr.mxu0 0.0
  %1216 = vmatpush1.msra.mxu0 0.0
  %1217 = vmatprep.subr.mxu0 0.0
  %1218 = vmatpush1.msra.mxu0 0.0
  %1219 = vmatprep.subr.mxu0 0.0
  %1220 = vmatpush1.msra.mxu0 0.0
  %1221 = vmatprep.subr.mxu0 0.0
  %1222 = vmatpush1.msra.mxu0 0.0
  %1223 = vmatprep.subr.mxu0 0.0
  %1224 = vmatpush1.msra.mxu0 0.0
  %1225 = vmatprep.subr.mxu0 0.0
  %1226 = vmatpush1.msra.mxu0 0.0
  %1227 = vmatprep.subr.mxu0 0.0
  %1228 = vmatpush1.msra.mxu0 0.0
  %1229 = vmatprep.subr.mxu0 0.0
  %1230 = vmatpush1.msra.mxu0 0.0
  %1231 = vmatprep.subr.mxu0 0.0
  %1232 = vmatpush1.msra.mxu0 0.0
  %1233 = vmatprep.subr.mxu0 0.0
  %1234 = vmatpush1.msra.mxu0 0.0
  %1235 = vmatprep.subr.mxu0 0.0
  %1236 = vmatpush1.msra.mxu0 0.0
  %1237 = vmatprep.subr.mxu0 0.0
  %1238 = vmatpush1.msra.mxu0 0.0
  %1239 = vmatprep.subr.mxu0 0.0
  %1240 = vmatpush1.msra.mxu0 0.0
  %1241 = vmatprep.subr.mxu0 0.0
  %1242 = vmatpush1.msra.mxu0 0.0
  %1243 = vmatprep.subr.mxu0 0.0
  %1244 = vmatpush1.msra.mxu0 0.0
  %1245 = vmatprep.subr.mxu0 0.0
  %1246 = vmatpush1.msra.mxu0 0.0
  %1247 = vmatprep.mubr.f32.mxu0 0.0
  %1248 = vmatmul.mubr.f32.gmra.mrb[0].mxu0 %v1178
  %v1249 = vpop.f32.mrb[0].mxu0
  %v1250 = vadd.f32 0.0, %v1249
  %v1251 = vpop.f32.mrb[0].mxu0
  %1252 = vmatprep.mubr.f32.mxu0 0.0
  %1253 = vmatmul.mubr.f32.gmra.mrb[0].mxu0 %v1181
  %v1254 = vpop.f32.mrb[0].mxu0
  %v1255 = vadd.f32 0.0, %v1254
  %v1256 = vpop.f32.mrb[0].mxu0
  %1257 = vdwg.mxu0
  %v1258 = vadd.f32 %v975, %v1250
  %v1259 = vadd.f32 %v976, %v1255
  %1260 = vrot.lane.b32.xlu0 %v165, 104
  %v1261 = vpop.permute.xlu0 %1260
  %1262 = vrot.lane.b32.xlu0 %v170, 104
  %v1263 = vpop.permute.xlu0 %1262
  %1264 = vrot.lane.b32.xlu0 %v273, 104
  %v1265 = vpop.permute.xlu0 %1264
  %1266 = vrot.lane.b32.xlu0 %v278, 104
  %v1267 = vpop.permute.xlu0 %1266
  %v1268 = vsel %vm417, %v1261, 0
  %v1270 = vsel %vm417, %v1263, 0
  %v1272 = vsel %vm417, %v1265, 0
  %v1274 = vsel %vm417, %v1267, 0
  %1276 = vmatprep.subr.mxu0 0.0
  %1277 = vmatpush1.xpose.msra.mxu0 %v1272
  %1278 = vmatprep.subr.mxu0 0.0
  %1279 = vmatpush1.xpose.msra.mxu0 %v1274
  %1280 = vmatprep.subr.mxu0 0.0
  %1281 = vmatpush1.xpose.msra.mxu0 0.0
  %1282 = vmatprep.subr.mxu0 0.0
  %1283 = vmatpush1.xpose.msra.mxu0 0.0
  %1284 = vmatprep.subr.mxu0 0.0
  %1285 = vmatpush1.xpose.msra.mxu0 0.0
  %1286 = vmatprep.subr.mxu0 0.0
  %1287 = vmatpush1.xpose.msra.mxu0 0.0
  %1288 = vmatprep.subr.mxu0 0.0
  %1289 = vmatpush1.xpose.msra.mxu0 0.0
  %1290 = vmatprep.subr.mxu0 0.0
  %1291 = vmatpush1.xpose.msra.mxu0 0.0
  %1292 = vmatprep.subr.mxu0 0.0
  %1293 = vmatpush1.xpose.msra.mxu0 0.0
  %1294 = vmatprep.subr.mxu0 0.0
  %1295 = vmatpush1.xpose.msra.mxu0 0.0
  %1296 = vmatprep.subr.mxu0 0.0
  %1297 = vmatpush1.xpose.msra.mxu0 0.0
  %1298 = vmatprep.subr.mxu0 0.0
  %1299 = vmatpush1.xpose.msra.mxu0 0.0
  %1300 = vmatprep.subr.mxu0 0.0
  %1301 = vmatpush1.xpose.msra.mxu0 0.0
  %1302 = vmatprep.subr.mxu0 0.0
  %1303 = vmatpush1.xpose.msra.mxu0 0.0
  %1304 = vmatprep.subr.mxu0 0.0
  %1305 = vmatpush1.xpose.msra.mxu0 0.0
  %1306 = vmatprep.subr.mxu0 0.0
  %1307 = vmatpush1.xpose.msra.mxu0 0.0
  %1308 = vmatprep.subr.mxu0 0.0
  %1309 = vmatpush1.xpose.msra.mxu0 0.0
  %1310 = vmatprep.subr.mxu0 0.0
  %1311 = vmatpush1.xpose.msra.mxu0 0.0
  %1312 = vmatprep.subr.mxu0 0.0
  %1313 = vmatpush1.xpose.msra.mxu0 0.0
  %1314 = vmatprep.subr.mxu0 0.0
  %1315 = vmatpush1.xpose.msra.mxu0 0.0
  %1316 = vmatprep.subr.mxu0 0.0
  %1317 = vmatpush1.xpose.msra.mxu0 0.0
  %1318 = vmatprep.subr.mxu0 0.0
  %1319 = vmatpush1.xpose.msra.mxu0 0.0
  %1320 = vmatprep.subr.mxu0 0.0
  %1321 = vmatpush1.xpose.msra.mxu0 0.0
  %1322 = vmatprep.subr.mxu0 0.0
  %1323 = vmatpush1.xpose.msra.mxu0 0.0
  %1324 = vmatprep.subr.mxu0 0.0
  %1325 = vmatpush1.xpose.msra.mxu0 0.0
  %1326 = vmatprep.subr.mxu0 0.0
  %1327 = vmatpush1.xpose.msra.mxu0 0.0
  %1328 = vmatprep.subr.mxu0 0.0
  %1329 = vmatpush1.xpose.msra.mxu0 0.0
  %1330 = vmatprep.subr.mxu0 0.0
  %1331 = vmatpush1.xpose.msra.mxu0 0.0
  %1332 = vmatprep.subr.mxu0 0.0
  %1333 = vmatpush1.xpose.msra.mxu0 0.0
  %1334 = vmatprep.subr.mxu0 0.0
  %1335 = vmatpush1.xpose.msra.mxu0 0.0
  %1336 = vmatprep.subr.mxu0 0.0
  %1337 = vmatpush1.xpose.msra.mxu0 0.0
  %1338 = vmatprep.subr.mxu0 0.0
  %1339 = vmatpush1.xpose.msra.mxu0 0.0
  %1340 = vmatprep.mubr.f32.mxu0 0.0
  %1341 = vmatmul.mubr.f32.gmra.mrb[0].mxu0 %v1268
  %v1342 = vpop.f32.mrb[0].mxu0
  %v1343 = vadd.f32 %v416, %v1342
  %v1344 = vpop.f32.mrb[0].mxu0
  %1345 = vmatprep.mubr.f32.mxu0 0.0
  %1346 = vmatmul.mubr.f32.gmra.mrb[0].mxu0 %v1270
  %v1347 = vpop.f32.mrb[0].mxu0
  %v1348 = vadd.f32 %v416, %v1347
  %v1349 = vpop.f32.mrb[0].mxu0
  %1350 = vdwg.mxu0
  %v1351 = vsel %vm505, %v1343, -inf
  %1352 = vmax.xlane.f32.xlu0 %v1351
  %v1353 = vpop.xlane.xlu0 %1352
  %v1354 = vsel %vm505, %v1348, -inf
  %1355 = vmax.xlane.f32.xlu0 %v1354
  %v1356 = vpop.xlane.xlu0 %1355
  %v1357 = vsub.f32 %v1343, %v1353
  %v1358 = vsub.f32 %v1348, %v1356
  %v1359 = vmul.f32 %v1357, 1.442695
  %v1360 = vpow.pop %v1359
  %v1361 = vmul.f32 %v1358, 1.442695
  %v1362 = vpow.pop %v1361
  %v1363 = vsel %vm505, %v1360, 0.0
  %1364 = vadd.xlane.f32.xlu0 %v1363
  %v1365 = vpop.xlane.xlu0 %1364
  %v1366 = vsel %vm505, %v1362, 0.0
  %1367 = vadd.xlane.f32.xlu0 %v1366
  %v1368 = vpop.xlane.xlu0 %1367
  %1369 = vrot.lane.b32.xlu0 %v381, 104
  %v1370 = vpop.permute.xlu0 %1369
  %1371 = vrot.lane.b32.xlu0 %v386, 104
  %v1372 = vpop.permute.xlu0 %1371
  %v1376 = vsel %vm505, %v1360, 0
  %v1379 = vsel %vm505, %v1362, 0
  %1381 = vmatprep.subr.mxu0 0.0
  %1382 = vmatpush1.msra.mxu0 %v1370
  %1383 = vmatprep.subr.mxu0 0.0
  %1384 = vmatpush1.msra.mxu0 %v1372
  %1385 = vmatprep.subr.mxu0 0.0
  %1386 = vmatpush1.msra.mxu0 0.0
  %1387 = vmatprep.subr.mxu0 0.0
  %1388 = vmatpush1.msra.mxu0 0.0
  %1389 = vmatprep.subr.mxu0 0.0
  %1390 = vmatpush1.msra.mxu0 0.0
  %1391 = vmatprep.subr.mxu0 0.0
  %1392 = vmatpush1.msra.mxu0 0.0
  %1393 = vmatprep.subr.mxu0 0.0
  %1394 = vmatpush1.msra.mxu0 0.0
  %1395 = vmatprep.subr.mxu0 0.0
  %1396 = vmatpush1.msra.mxu0 0.0
  %1397 = vmatprep.subr.mxu0 0.0
  %1398 = vmatpush1.msra.mxu0 0.0
  %1399 = vmatprep.subr.mxu0 0.0
  %1400 = vmatpush1.msra.mxu0 0.0
  %1401 = vmatprep.subr.mxu0 0.0
  %1402 = vmatpush1.msra.mxu0 0.0
  %1403 = vmatprep.subr.mxu0 0.0
  %1404 = vmatpush1.msra.mxu0 0.0
  %1405 = vmatprep.subr.mxu0 0.0
  %1406 = vmatpush1.msra.mxu0 0.0
  %1407 = vmatprep.subr.mxu0 0.0
  %1408 = vmatpush1.msra.mxu0 0.0
  %1409 = vmatprep.subr.mxu0 0.0
  %1410 = vmatpush1.msra.mxu0 0.0
  %1411 = vmatprep.subr.mxu0 0.0
  %1412 = vmatpush1.msra.mxu0 0.0
  %1413 = vmatprep.subr.mxu0 0.0
  %1414 = vmatpush1.msra.mxu0 0.0
  %1415 = vmatprep.subr.mxu0 0.0
  %1416 = vmatpush1.msra.mxu0 0.0
  %1417 = vmatprep.subr.mxu0 0.0
  %1418 = vmatpush1.msra.mxu0 0.0
  %1419 = vmatprep.subr.mxu0 0.0
  %1420 = vmatpush1.msra.mxu0 0.0
  %1421 = vmatprep.subr.mxu0 0.0
  %1422 = vmatpush1.msra.mxu0 0.0
  %1423 = vmatprep.subr.mxu0 0.0
  %1424 = vmatpush1.msra.mxu0 0.0
  %1425 = vmatprep.subr.mxu0 0.0
  %1426 = vmatpush1.msra.mxu0 0.0
  %1427 = vmatprep.subr.mxu0 0.0
  %1428 = vmatpush1.msra.mxu0 0.0
  %1429 = vmatprep.subr.mxu0 0.0
  %1430 = vmatpush1.msra.mxu0 0.0
  %1431 = vmatprep.subr.mxu0 0.0
  %1432 = vmatpush1.msra.mxu0 0.0
  %1433 = vmatprep.subr.mxu0 0.0
  %1434 = vmatpush1.msra.mxu0 0.0
  %1435 = vmatprep.subr.mxu0 0.0
  %1436 = vmatpush1.msra.mxu0 0.0
  %1437 = vmatprep.subr.mxu0 0.0
  %1438 = vmatpush1.msra.mxu0 0.0
  %1439 = vmatprep.subr.mxu0 0.0
  %1440 = vmatpush1.msra.mxu0 0.0
  %1441 = vmatprep.subr.mxu0 0.0
  %1442 = vmatpush1.msra.mxu0 0.0
  %1443 = vmatprep.subr.mxu0 0.0
  %1444 = vmatpush1.msra.mxu0 0.0
  %1445 = vmatprep.mubr.f32.mxu0 0.0
  %1446 = vmatmul.mubr.f32.gmra.mrb[0].mxu0 %v1376
  %v1447 = vpop.f32.mrb[0].mxu0
  %v1448 = vadd.f32 0.0, %v1447
  %v1449 = vpop.f32.mrb[0].mxu0
  %1450 = vmatprep.mubr.f32.mxu0 0.0
  %1451 = vmatmul.mubr.f32.gmra.mrb[0].mxu0 %v1379
  %v1452 = vpop.f32.mrb[0].mxu0
  %v1453 = vadd.f32 0.0, %v1452
  %v1454 = vpop.f32.mrb[0].mxu0
  %1455 = vdwg.mxu0
  %v1456 = vrcp.pop %v1365
  %v1457 = vrcp.pop %v1368
  %v1458 = vmul.f32 %v1448, %v1456
  %v1459 = vmul.f32 %v1453, %v1457
  %v1461 = vsel %vm417, %v1458, 0
  %v1464 = vsel %vm417, %v1459, 0
  %1466 = vmatprep.subr.mxu0 0.0
  %1467 = vmatpush1.msra.mxu0 %v403
  %1468 = vmatprep.subr.mxu0 0.0
  %1469 = vmatpush1.msra.mxu0 0.0
  %1470 = vmatprep.subr.mxu0 0.0
  %1471 = vmatpush1.msra.mxu0 0.0
  %1472 = vmatprep.subr.mxu0 0.0
  %1473 = vmatpush1.msra.mxu0 0.0
  %1474 = vmatprep.subr.mxu0 0.0
  %1475 = vmatpush1.msra.mxu0 0.0
  %1476 = vmatprep.subr.mxu0 0.0
  %1477 = vmatpush1.msra.mxu0 0.0
  %1478 = vmatprep.subr.mxu0 0.0
  %1479 = vmatpush1.msra.mxu0 0.0
  %1480 = vmatprep.subr.mxu0 0.0
  %1481 = vmatpush1.msra.mxu0 0.0
  %1482 = vmatprep.subr.mxu0 0.0
  %1483 = vmatpush1.msra.mxu0 0.0
  %1484 = vmatprep.subr.mxu0 0.0
  %1485 = vmatpush1.msra.mxu0 0.0
  %1486 = vmatprep.subr.mxu0 0.0
  %1487 = vmatpush1.msra.mxu0 0.0
  %1488 = vmatprep.subr.mxu0 0.0
  %1489 = vmatpush1.msra.mxu0 0.0
  %1490 = vmatprep.subr.mxu0 0.0
  %1491 = vmatpush1.msra.mxu0 0.0
  %1492 = vmatprep.subr.mxu0 0.0
  %1493 = vmatpush1.msra.mxu0 0.0
  %1494 = vmatprep.subr.mxu0 0.0
  %1495 = vmatpush1.msra.mxu0 0.0
  %1496 = vmatprep.subr.mxu0 0.0
  %1497 = vmatpush1.msra.mxu0 0.0
  %1498 = vmatprep.subr.mxu0 0.0
  %1499 = vmatpush1.msra.mxu0 0.0
  %1500 = vmatprep.subr.mxu0 0.0
  %1501 = vmatpush1.msra.mxu0 0.0
  %1502 = vmatprep.subr.mxu0 0.0
  %1503 = vmatpush1.msra.mxu0 0.0
  %1504 = vmatprep.subr.mxu0 0.0
  %1505 = vmatpush1.msra.mxu0 0.0
  %1506 = vmatprep.subr.mxu0 0.0
  %1507 = vmatpush1.msra.mxu0 0.0
  %1508 = vmatprep.subr.mxu0 0.0
  %1509 = vmatpush1.msra.mxu0 0.0
  %1510 = vmatprep.subr.mxu0 0.0
  %1511 = vmatpush1.msra.mxu0 0.0
  %1512 = vmatprep.subr.mxu0 0.0
  %1513 = vmatpush1.msra.mxu0 0.0
  %1514 = vmatprep.subr.mxu0 0.0
  %1515 = vmatpush1.msra.mxu0 0.0
  %1516 = vmatprep.subr.mxu0 0.0
  %1517 = vmatpush1.msra.mxu0 0.0
  %1518 = vmatprep.subr.mxu0 0.0
  %1519 = vmatpush1.msra.mxu0 0.0
  %1520 = vmatprep.subr.mxu0 0.0
  %1521 = vmatpush1.msra.mxu0 0.0
  %1522 = vmatprep.subr.mxu0 0.0
  %1523 = vmatpush1.msra.mxu0 0.0
  %1524 = vmatprep.subr.mxu0 0.0
  %1525 = vmatpush1.msra.mxu0 0.0
  %1526 = vmatprep.subr.mxu0 0.0
  %1527 = vmatpush1.msra.mxu0 0.0
  %1528 = vmatprep.subr.mxu0 0.0
  %1529 = vmatpush1.msra.mxu0 0.0
  %1530 = vmatprep.mubr.f32.mxu0 0.0
  %1531 = vmatmul.mubr.f32.gmra.mrb[0].mxu0 %v1461
  %v1532 = vpop.f32.mrb[0].mxu0
  %v1533 = vadd.f32 0.0, %v1532
  %v1534 = vpop.f32.mrb[0].mxu0
  %1535 = vmatprep.mubr.f32.mxu0 0.0
  %1536 = vmatmul.mubr.f32.gmra.mrb[0].mxu0 %v1464
  %v1537 = vpop.f32.mrb[0].mxu0
  %v1538 = vadd.f32 0.0, %v1537
  %v1539 = vpop.f32.mrb[0].mxu0
  %1540 = vdwg.mxu0
  %v1541 = vadd.f32 %v1258, %v1533
  %v1542 = vadd.f32 %v1259, %v1538
  %v1543 = vadd.f32 %v50, %v1541
  %v1544 = vadd.f32 %v51, %v1542
  %v1545 = vsel %vm85, %v1543, 0.0
  %1546 = vadd.xlane.f32.xlu0 %v1545
  %v1547 = vpop.xlane.xlu0 %1546
  %v1548 = vsel %vm85, %v1544, 0.0
  %1549 = vadd.xlane.f32.xlu0 %v1548
  %v1550 = vpop.xlane.xlu0 %1549
  %v1551 = vrcp.pop 32.0
  %v1552 = vmul.f32 %v1547, %v1551
  %v1553 = vmul.f32 %v1550, %v1551
  %v1554 = vsub.f32 %v1543, %v1552
  %v1555 = vsub.f32 %v1544, %v1553
  %v1556 = vmul.f32 %v1554, %v1554
  %v1557 = vmul.f32 %v1555, %v1555
  %v1558 = vsel %vm85, %v1556, 0.0
  %1559 = vadd.xlane.f32.xlu0 %v1558
  %v1560 = vpop.xlane.xlu0 %1559
  %v1561 = vsel %vm85, %v1557, 0.0
  %1562 = vadd.xlane.f32.xlu0 %v1561
  %v1563 = vpop.xlane.xlu0 %1562
  %v1564 = vmul.f32 %v1560, %v1551
  %v1565 = vmul.f32 %v1563, %v1551
  %v1566 = vadd.f32 %v1564, 1e-05
  %v1567 = vadd.f32 %v1565, 1e-05
  %v1568 = vrsqrt.pop %v1566
  %v1569 = vrsqrt.pop %v1567
  %v1570 = vmul.f32 %v1554, %v1568
  %v1571 = vmul.f32 %v1555, %v1569
  %v1573 = vlaneseq
  %v1574 = vshrl.u32 %v1573, 7
  %v1575 = vsub.s32 0, %v1574
  %v1576 = vrot.slane %v411, %v1575
  %v1578 = vmul.f32 %v1570, %v1576
  %v1579 = vmul.f32 %v1571, %v1576
  %v1581 = vlaneseq
  %v1582 = vshrl.u32 %v1581, 7
  %v1583 = vsub.s32 0, %v1582
  %v1584 = vrot.slane %v412, %v1583
  %v1586 = vadd.f32 %v1578, %v1584
  %v1587 = vadd.f32 %v1579, %v1584
  %1588 = vst.msk [vmem:[%s15] sm:$0xff] %vm85, %v1586
  %1589 = vst.msk [vmem:[%s15 + $0x8] sm:$0xff] %vm85, %v1587
  %v1590 = vlaneseq
  %v1591 = vshrl.u32 %v1590, 7
  %v1592 = vsub.s32 1, %v1591
  %v1593 = vrot.slane %v399, %v1592
  %v1595 = vsel %vm417, %v175, 0
  %v1598 = vsel %vm417, %v180, 0
  %v1601 = vsel %vm417, %v283, 0
  %v1604 = vsel %vm417, %v288, 0
  %1606 = vmatprep.subr.mxu0 0.0
  %1607 = vmatpush1.xpose.msra.mxu0 %v1601
  %1608 = vmatprep.subr.mxu0 0.0
  %1609 = vmatpush1.xpose.msra.mxu0 %v1604
  %1610 = vmatprep.subr.mxu0 0.0
  %1611 = vmatpush1.xpose.msra.mxu0 0.0
  %1612 = vmatprep.subr.mxu0 0.0
  %1613 = vmatpush1.xpose.msra.mxu0 0.0
  %1614 = vmatprep.subr.mxu0 0.0
  %1615 = vmatpush1.xpose.msra.mxu0 0.0
  %1616 = vmatprep.subr.mxu0 0.0
  %1617 = vmatpush1.xpose.msra.mxu0 0.0
  %1618 = vmatprep.subr.mxu0 0.0
  %1619 = vmatpush1.xpose.msra.mxu0 0.0
  %1620 = vmatprep.subr.mxu0 0.0
  %1621 = vmatpush1.xpose.msra.mxu0 0.0
  %1622 = vmatprep.subr.mxu0 0.0
  %1623 = vmatpush1.xpose.msra.mxu0 0.0
  %1624 = vmatprep.subr.mxu0 0.0
  %1625 = vmatpush1.xpose.msra.mxu0 0.0
  %1626 = vmatprep.subr.mxu0 0.0
  %1627 = vmatpush1.xpose.msra.mxu0 0.0
  %1628 = vmatprep.subr.mxu0 0.0
  %1629 = vmatpush1.xpose.msra.mxu0 0.0
  %1630 = vmatprep.subr.mxu0 0.0
  %1631 = vmatpush1.xpose.msra.mxu0 0.0
  %1632 = vmatprep.subr.mxu0 0.0
  %1633 = vmatpush1.xpose.msra.mxu0 0.0
  %1634 = vmatprep.subr.mxu0 0.0
  %1635 = vmatpush1.xpose.msra.mxu0 0.0
  %1636 = vmatprep.subr.mxu0 0.0
  %1637 = vmatpush1.xpose.msra.mxu0 0.0
  %1638 = vmatprep.subr.mxu0 0.0
  %1639 = vmatpush1.xpose.msra.mxu0 0.0
  %1640 = vmatprep.subr.mxu0 0.0
  %1641 = vmatpush1.xpose.msra.mxu0 0.0
  %1642 = vmatprep.subr.mxu0 0.0
  %1643 = vmatpush1.xpose.msra.mxu0 0.0
  %1644 = vmatprep.subr.mxu0 0.0
  %1645 = vmatpush1.xpose.msra.mxu0 0.0
  %1646 = vmatprep.subr.mxu0 0.0
  %1647 = vmatpush1.xpose.msra.mxu0 0.0
  %1648 = vmatprep.subr.mxu0 0.0
  %1649 = vmatpush1.xpose.msra.mxu0 0.0
  %1650 = vmatprep.subr.mxu0 0.0
  %1651 = vmatpush1.xpose.msra.mxu0 0.0
  %1652 = vmatprep.subr.mxu0 0.0
  %1653 = vmatpush1.xpose.msra.mxu0 0.0
  %1654 = vmatprep.subr.mxu0 0.0
  %1655 = vmatpush1.xpose.msra.mxu0 0.0
  %1656 = vmatprep.subr.mxu0 0.0
  %1657 = vmatpush1.xpose.msra.mxu0 0.0
  %1658 = vmatprep.subr.mxu0 0.0
  %1659 = vmatpush1.xpose.msra.mxu0 0.0
  %1660 = vmatprep.subr.mxu0 0.0
  %1661 = vmatpush1.xpose.msra.mxu0 0.0
  %1662 = vmatprep.subr.mxu0 0.0
  %1663 = vmatpush1.xpose.msra.mxu0 0.0
  %1664 = vmatprep.subr.mxu0 0.0
  %1665 = vmatpush1.xpose.msra.mxu0 0.0
  %1666 = vmatprep.subr.mxu0 0.0
  %1667 = vmatpush1.xpose.msra.mxu0 0.0
  %1668 = vmatprep.subr.mxu0 0.0
  %1669 = vmatpush1.xpose.msra.mxu0 0.0
  %1670 = vmatprep.mubr.f32.mxu0 0.0
  %1671 = vmatmul.mubr.f32.gmra.mrb[0].mxu0 %v1595
  %v1672 = vpop.f32.mrb[0].mxu0
  %v1673 = vadd.f32 %v1593, %v1672
  %v1674 = vpop.f32.mrb[0].mxu0
  %1675 = vmatprep.mubr.f32.mxu0 0.0
  %1676 = vmatmul.mubr.f32.gmra.mrb[0].mxu0 %v1598
  %v1677 = vpop.f32.mrb[0].mxu0
  %v1678 = vadd.f32 %v1593, %v1677
  %v1679 = vpop.f32.mrb[0].mxu0
  %1680 = vdwg.mxu0
  %v1681 = vsel %vm505, %v1673, -inf
  %1682 = vmax.xlane.f32.xlu0 %v1681
  %v1683 = vpop.xlane.xlu0 %1682
  %v1684 = vsel %vm505, %v1678, -inf
  %1685 = vmax.xlane.f32.xlu0 %v1684
  %v1686 = vpop.xlane.xlu0 %1685
  %v1687 = vsub.f32 %v1673, %v1683
  %v1688 = vsub.f32 %v1678, %v1686
  %v1689 = vmul.f32 %v1687, 1.442695
  %v1690 = vpow.pop %v1689
  %v1691 = vmul.f32 %v1688, 1.442695
  %v1692 = vpow.pop %v1691
  %v1693 = vsel %vm505, %v1690, 0.0
  %1694 = vadd.xlane.f32.xlu0 %v1693
  %v1695 = vpop.xlane.xlu0 %1694
  %v1696 = vsel %vm505, %v1692, 0.0
  %1697 = vadd.xlane.f32.xlu0 %v1696
  %v1698 = vpop.xlane.xlu0 %1697
  %v1700 = vsel %vm505, %v1690, 0
  %v1703 = vsel %vm505, %v1692, 0
  %1705 = vmatprep.subr.mxu0 0.0
  %1706 = vmatpush1.msra.mxu0 %v391
  %1707 = vmatprep.subr.mxu0 0.0
  %1708 = vmatpush1.msra.mxu0 %v396
  %1709 = vmatprep.subr.mxu0 0.0
  %1710 = vmatpush1.msra.mxu0 0.0
  %1711 = vmatprep.subr.mxu0 0.0
  %1712 = vmatpush1.msra.mxu0 0.0
  %1713 = vmatprep.subr.mxu0 0.0
  %1714 = vmatpush1.msra.mxu0 0.0
  %1715 = vmatprep.subr.mxu0 0.0
  %1716 = vmatpush1.msra.mxu0 0.0
  %1717 = vmatprep.subr.mxu0 0.0
  %1718 = vmatpush1.msra.mxu0 0.0
  %1719 = vmatprep.subr.mxu0 0.0
  %1720 = vmatpush1.msra.mxu0 0.0
  %1721 = vmatprep.subr.mxu0 0.0
  %1722 = vmatpush1.msra.mxu0 0.0
  %1723 = vmatprep.subr.mxu0 0.0
  %1724 = vmatpush1.msra.mxu0 0.0
  %1725 = vmatprep.subr.mxu0 0.0
  %1726 = vmatpush1.msra.mxu0 0.0
  %1727 = vmatprep.subr.mxu0 0.0
  %1728 = vmatpush1.msra.mxu0 0.0
  %1729 = vmatprep.subr.mxu0 0.0
  %1730 = vmatpush1.msra.mxu0 0.0
  %1731 = vmatprep.subr.mxu0 0.0
  %1732 = vmatpush1.msra.mxu0 0.0
  %1733 = vmatprep.subr.mxu0 0.0
  %1734 = vmatpush1.msra.mxu0 0.0
  %1735 = vmatprep.subr.mxu0 0.0
  %1736 = vmatpush1.msra.mxu0 0.0
  %1737 = vmatprep.subr.mxu0 0.0
  %1738 = vmatpush1.msra.mxu0 0.0
  %1739 = vmatprep.subr.mxu0 0.0
  %1740 = vmatpush1.msra.mxu0 0.0
  %1741 = vmatprep.subr.mxu0 0.0
  %1742 = vmatpush1.msra.mxu0 0.0
  %1743 = vmatprep.subr.mxu0 0.0
  %1744 = vmatpush1.msra.mxu0 0.0
  %1745 = vmatprep.subr.mxu0 0.0
  %1746 = vmatpush1.msra.mxu0 0.0
  %1747 = vmatprep.subr.mxu0 0.0
  %1748 = vmatpush1.msra.mxu0 0.0
  %1749 = vmatprep.subr.mxu0 0.0
  %1750 = vmatpush1.msra.mxu0 0.0
  %1751 = vmatprep.subr.mxu0 0.0
  %1752 = vmatpush1.msra.mxu0 0.0
  %1753 = vmatprep.subr.mxu0 0.0
  %1754 = vmatpush1.msra.mxu0 0.0
  %1755 = vmatprep.subr.mxu0 0.0
  %1756 = vmatpush1.msra.mxu0 0.0
  %1757 = vmatprep.subr.mxu0 0.0
  %1758 = vmatpush1.msra.mxu0 0.0
  %1759 = vmatprep.subr.mxu0 0.0
  %1760 = vmatpush1.msra.mxu0 0.0
  %1761 = vmatprep.subr.mxu0 0.0
  %1762 = vmatpush1.msra.mxu0 0.0
  %1763 = vmatprep.subr.mxu0 0.0
  %1764 = vmatpush1.msra.mxu0 0.0
  %1765 = vmatprep.subr.mxu0 0.0
  %1766 = vmatpush1.msra.mxu0 0.0
  %1767 = vmatprep.subr.mxu0 0.0
  %1768 = vmatpush1.msra.mxu0 0.0
  %1769 = vmatprep.mubr.f32.mxu0 0.0
  %1770 = vmatmul.mubr.f32.gmra.mrb[0].mxu0 %v1700
  %v1771 = vpop.f32.mrb[0].mxu0
  %v1772 = vadd.f32 0.0, %v1771
  %v1773 = vpop.f32.mrb[0].mxu0
  %1774 = vmatprep.mubr.f32.mxu0 0.0
  %1775 = vmatmul.mubr.f32.gmra.mrb[0].mxu0 %v1703
  %v1776 = vpop.f32.mrb[0].mxu0
  %v1777 = vadd.f32 0.0, %v1776
  %v1778 = vpop.f32.mrb[0].mxu0
  %1779 = vdwg.mxu0
  %v1780 = vrcp.pop %v1695
  %v1781 = vrcp.pop %v1698
  %v1782 = vmul.f32 %v1772, %v1780
  %v1783 = vmul.f32 %v1777, %v1781
  %v1785 = vsel %vm417, %v1782, 0
  %v1788 = vsel %vm417, %v1783, 0
  %1790 = vmatprep.subr.mxu0 0.0
  %1791 = vmatpush1.msra.mxu0 %v400
  %1792 = vmatprep.subr.mxu0 0.0
  %1793 = vmatpush1.msra.mxu0 0.0
  %1794 = vmatprep.subr.mxu0 0.0
  %1795 = vmatpush1.msra.mxu0 0.0
  %1796 = vmatprep.subr.mxu0 0.0
  %1797 = vmatpush1.msra.mxu0 0.0
  %1798 = vmatprep.subr.mxu0 0.0
  %1799 = vmatpush1.msra.mxu0 0.0
  %1800 = vmatprep.subr.mxu0 0.0
  %1801 = vmatpush1.msra.mxu0 0.0
  %1802 = vmatprep.subr.mxu0 0.0
  %1803 = vmatpush1.msra.mxu0 0.0
  %1804 = vmatprep.subr.mxu0 0.0
  %1805 = vmatpush1.msra.mxu0 0.0
  %1806 = vmatprep.subr.mxu0 0.0
  %1807 = vmatpush1.msra.mxu0 0.0
  %1808 = vmatprep.subr.mxu0 0.0
  %1809 = vmatpush1.msra.mxu0 0.0
  %1810 = vmatprep.subr.mxu0 0.0
  %1811 = vmatpush1.msra.mxu0 0.0
  %1812 = vmatprep.subr.mxu0 0.0
  %1813 = vmatpush1.msra.mxu0 0.0
  %1814 = vmatprep.subr.mxu0 0.0
  %1815 = vmatpush1.msra.mxu0 0.0
  %1816 = vmatprep.subr.mxu0 0.0
  %1817 = vmatpush1.msra.mxu0 0.0
  %1818 = vmatprep.subr.mxu0 0.0
  %1819 = vmatpush1.msra.mxu0 0.0
  %1820 = vmatprep.subr.mxu0 0.0
  %1821 = vmatpush1.msra.mxu0 0.0
  %1822 = vmatprep.subr.mxu0 0.0
  %1823 = vmatpush1.msra.mxu0 0.0
  %1824 = vmatprep.subr.mxu0 0.0
  %1825 = vmatpush1.msra.mxu0 0.0
  %1826 = vmatprep.subr.mxu0 0.0
  %1827 = vmatpush1.msra.mxu0 0.0
  %1828 = vmatprep.subr.mxu0 0.0
  %1829 = vmatpush1.msra.mxu0 0.0
  %1830 = vmatprep.subr.mxu0 0.0
  %1831 = vmatpush1.msra.mxu0 0.0
  %1832 = vmatprep.subr.mxu0 0.0
  %1833 = vmatpush1.msra.mxu0 0.0
  %1834 = vmatprep.subr.mxu0 0.0
  %1835 = vmatpush1.msra.mxu0 0.0
  %1836 = vmatprep.subr.mxu0 0.0
  %1837 = vmatpush1.msra.mxu0 0.0
  %1838 = vmatprep.subr.mxu0 0.0
  %1839 = vmatpush1.msra.mxu0 0.0
  %1840 = vmatprep.subr.mxu0 0.0
  %1841 = vmatpush1.msra.mxu0 0.0
  %1842 = vmatprep.subr.mxu0 0.0
  %1843 = vmatpush1.msra.mxu0 0.0
  %1844 = vmatprep.subr.mxu0 0.0
  %1845 = vmatpush1.msra.mxu0 0.0
  %1846 = vmatprep.subr.mxu0 0.0
  %1847 = vmatpush1.msra.mxu0 0.0
  %1848 = vmatprep.subr.mxu0 0.0
  %1849 = vmatpush1.msra.mxu0 0.0
  %1850 = vmatprep.subr.mxu0 0.0
  %1851 = vmatpush1.msra.mxu0 0.0
  %1852 = vmatprep.subr.mxu0 0.0
  %1853 = vmatpush1.msra.mxu0 0.0
  %1854 = vmatprep.mubr.f32.mxu0 0.0
  %1855 = vmatmul.mubr.f32.gmra.mrb[0].mxu0 %v1785
  %v1856 = vpop.f32.mrb[0].mxu0
  %v1857 = vadd.f32 0.0, %v1856
  %v1858 = vpop.f32.mrb[0].mxu0
  %1859 = vmatprep.mubr.f32.mxu0 0.0
  %1860 = vmatmul.mubr.f32.gmra.mrb[0].mxu0 %v1788
  %v1861 = vpop.f32.mrb[0].mxu0
  %v1862 = vadd.f32 0.0, %v1861
  %v1863 = vpop.f32.mrb[0].mxu0
  %1864 = vdwg.mxu0
  %v1865 = vadd.f32 %v409, %v1857
  %v1866 = vadd.f32 %v409, %v1862
  %1867 = vrot.lane.b32.xlu0 %v175, 120
  %v1868 = vpop.permute.xlu0 %1867
  %1869 = vrot.lane.b32.xlu0 %v180, 120
  %v1870 = vpop.permute.xlu0 %1869
  %1871 = vrot.lane.b32.xlu0 %v283, 120
  %v1872 = vpop.permute.xlu0 %1871
  %1873 = vrot.lane.b32.xlu0 %v288, 120
  %v1874 = vpop.permute.xlu0 %1873
  %v1875 = vsel %vm417, %v1868, 0
  %v1877 = vsel %vm417, %v1870, 0
  %v1879 = vsel %vm417, %v1872, 0
  %v1881 = vsel %vm417, %v1874, 0
  %1883 = vmatprep.subr.mxu0 0.0
  %1884 = vmatpush1.xpose.msra.mxu0 %v1879
  %1885 = vmatprep.subr.mxu0 0.0
  %1886 = vmatpush1.xpose.msra.mxu0 %v1881
  %1887 = vmatprep.subr.mxu0 0.0
  %1888 = vmatpush1.xpose.msra.mxu0 0.0
  %1889 = vmatprep.subr.mxu0 0.0
  %1890 = vmatpush1.xpose.msra.mxu0 0.0
  %1891 = vmatprep.subr.mxu0 0.0
  %1892 = vmatpush1.xpose.msra.mxu0 0.0
  %1893 = vmatprep.subr.mxu0 0.0
  %1894 = vmatpush1.xpose.msra.mxu0 0.0
  %1895 = vmatprep.subr.mxu0 0.0
  %1896 = vmatpush1.xpose.msra.mxu0 0.0
  %1897 = vmatprep.subr.mxu0 0.0
  %1898 = vmatpush1.xpose.msra.mxu0 0.0
  %1899 = vmatprep.subr.mxu0 0.0
  %1900 = vmatpush1.xpose.msra.mxu0 0.0
  %1901 = vmatprep.subr.mxu0 0.0
  %1902 = vmatpush1.xpose.msra.mxu0 0.0
  %1903 = vmatprep.subr.mxu0 0.0
  %1904 = vmatpush1.xpose.msra.mxu0 0.0
  %1905 = vmatprep.subr.mxu0 0.0
  %1906 = vmatpush1.xpose.msra.mxu0 0.0
  %1907 = vmatprep.subr.mxu0 0.0
  %1908 = vmatpush1.xpose.msra.mxu0 0.0
  %1909 = vmatprep.subr.mxu0 0.0
  %1910 = vmatpush1.xpose.msra.mxu0 0.0
  %1911 = vmatprep.subr.mxu0 0.0
  %1912 = vmatpush1.xpose.msra.mxu0 0.0
  %1913 = vmatprep.subr.mxu0 0.0
  %1914 = vmatpush1.xpose.msra.mxu0 0.0
  %1915 = vmatprep.subr.mxu0 0.0
  %1916 = vmatpush1.xpose.msra.mxu0 0.0
  %1917 = vmatprep.subr.mxu0 0.0
  %1918 = vmatpush1.xpose.msra.mxu0 0.0
  %1919 = vmatprep.subr.mxu0 0.0
  %1920 = vmatpush1.xpose.msra.mxu0 0.0
  %1921 = vmatprep.subr.mxu0 0.0
  %1922 = vmatpush1.xpose.msra.mxu0 0.0
  %1923 = vmatprep.subr.mxu0 0.0
  %1924 = vmatpush1.xpose.msra.mxu0 0.0
  %1925 = vmatprep.subr.mxu0 0.0
  %1926 = vmatpush1.xpose.msra.mxu0 0.0
  %1927 = vmatprep.subr.mxu0 0.0
  %1928 = vmatpush1.xpose.msra.mxu0 0.0
  %1929 = vmatprep.subr.mxu0 0.0
  %1930 = vmatpush1.xpose.msra.mxu0 0.0
  %1931 = vmatprep.subr.mxu0 0.0
  %1932 = vmatpush1.xpose.msra.mxu0 0.0
  %1933 = vmatprep.subr.mxu0 0.0
  %1934 = vmatpush1.xpose.msra.mxu0 0.0
  %1935 = vmatprep.subr.mxu0 0.0
  %1936 = vmatpush1.xpose.msra.mxu0 0.0
  %1937 = vmatprep.subr.mxu0 0.0
  %1938 = vmatpush1.xpose.msra.mxu0 0.0
  %1939 = vmatprep.subr.mxu0 0.0
  %1940 = vmatpush1.xpose.msra.mxu0 0.0
  %1941 = vmatprep.subr.mxu0 0.0
  %1942 = vmatpush1.xpose.msra.mxu0 0.0
  %1943 = vmatprep.subr.mxu0 0.0
  %1944 = vmatpush1.xpose.msra.mxu0 0.0
  %1945 = vmatprep.subr.mxu0 0.0
  %1946 = vmatpush1.xpose.msra.mxu0 0.0
  %1947 = vmatprep.mubr.f32.mxu0 0.0
  %1948 = vmatmul.mubr.f32.gmra.mrb[0].mxu0 %v1875
  %v1949 = vpop.f32.mrb[0].mxu0
  %v1950 = vadd.f32 %v1593, %v1949
  %v1951 = vpop.f32.mrb[0].mxu0
  %1952 = vmatprep.mubr.f32.mxu0 0.0
  %1953 = vmatmul.mubr.f32.gmra.mrb[0].mxu0 %v1877
  %v1954 = vpop.f32.mrb[0].mxu0
  %v1955 = vadd.f32 %v1593, %v1954
  %v1956 = vpop.f32.mrb[0].mxu0
  %1957 = vdwg.mxu0
  %v1958 = vsel %vm505, %v1950, -inf
  %1959 = vmax.xlane.f32.xlu0 %v1958
  %v1960 = vpop.xlane.xlu0 %1959
  %v1961 = vsel %vm505, %v1955, -inf
  %1962 = vmax.xlane.f32.xlu0 %v1961
  %v1963 = vpop.xlane.xlu0 %1962
  %v1964 = vsub.f32 %v1950, %v1960
  %v1965 = vsub.f32 %v1955, %v1963
  %v1966 = vmul.f32 %v1964, 1.442695
  %v1967 = vpow.pop %v1966
  %v1968 = vmul.f32 %v1965, 1.442695
  %v1969 = vpow.pop %v1968
  %v1970 = vsel %vm505, %v1967, 0.0
  %1971 = vadd.xlane.f32.xlu0 %v1970
  %v1972 = vpop.xlane.xlu0 %1971
  %v1973 = vsel %vm505, %v1969, 0.0
  %1974 = vadd.xlane.f32.xlu0 %v1973
  %v1975 = vpop.xlane.xlu0 %1974
  %1978 = vrot.lane.b32.xlu0 %v391, 120
  %v1979 = vpop.permute.xlu0 %1978
  %1980 = vrot.lane.b32.xlu0 %v396, 120
  %v1981 = vpop.permute.xlu0 %1980
  %v1985 = vsel %vm505, %v1967, 0
  %v1988 = vsel %vm505, %v1969, 0
  %1990 = vmatprep.subr.mxu0 0.0
  %1991 = vmatpush1.msra.mxu0 %v1979
  %1992 = vmatprep.subr.mxu0 0.0
  %1993 = vmatpush1.msra.mxu0 %v1981
  %1994 = vmatprep.subr.mxu0 0.0
  %1995 = vmatpush1.msra.mxu0 0.0
  %1996 = vmatprep.subr.mxu0 0.0
  %1997 = vmatpush1.msra.mxu0 0.0
  %1998 = vmatprep.subr.mxu0 0.0
  %1999 = vmatpush1.msra.mxu0 0.0
  %2000 = vmatprep.subr.mxu0 0.0
  %2001 = vmatpush1.msra.mxu0 0.0
  %2002 = vmatprep.subr.mxu0 0.0
  %2003 = vmatpush1.msra.mxu0 0.0
  %2004 = vmatprep.subr.mxu0 0.0
  %2005 = vmatpush1.msra.mxu0 0.0
  %2006 = vmatprep.subr.mxu0 0.0
  %2007 = vmatpush1.msra.mxu0 0.0
  %2008 = vmatprep.subr.mxu0 0.0
  %2009 = vmatpush1.msra.mxu0 0.0
  %2010 = vmatprep.subr.mxu0 0.0
  %2011 = vmatpush1.msra.mxu0 0.0
  %2012 = vmatprep.subr.mxu0 0.0
  %2013 = vmatpush1.msra.mxu0 0.0
  %2014 = vmatprep.subr.mxu0 0.0
  %2015 = vmatpush1.msra.mxu0 0.0
  %2016 = vmatprep.subr.mxu0 0.0
  %2017 = vmatpush1.msra.mxu0 0.0
  %2018 = vmatprep.subr.mxu0 0.0
  %2019 = vmatpush1.msra.mxu0 0.0
  %2020 = vmatprep.subr.mxu0 0.0
  %2021 = vmatpush1.msra.mxu0 0.0
  %2022 = vmatprep.subr.mxu0 0.0
  %2023 = vmatpush1.msra.mxu0 0.0
  %2024 = vmatprep.subr.mxu0 0.0
  %2025 = vmatpush1.msra.mxu0 0.0
  %2026 = vmatprep.subr.mxu0 0.0
  %2027 = vmatpush1.msra.mxu0 0.0
  %2028 = vmatprep.subr.mxu0 0.0
  %2029 = vmatpush1.msra.mxu0 0.0
  %2030 = vmatprep.subr.mxu0 0.0
  %2031 = vmatpush1.msra.mxu0 0.0
  %2032 = vmatprep.subr.mxu0 0.0
  %2033 = vmatpush1.msra.mxu0 0.0
  %2034 = vmatprep.subr.mxu0 0.0
  %2035 = vmatpush1.msra.mxu0 0.0
  %2036 = vmatprep.subr.mxu0 0.0
  %2037 = vmatpush1.msra.mxu0 0.0
  %2038 = vmatprep.subr.mxu0 0.0
  %2039 = vmatpush1.msra.mxu0 0.0
  %2040 = vmatprep.subr.mxu0 0.0
  %2041 = vmatpush1.msra.mxu0 0.0
  %2042 = vmatprep.subr.mxu0 0.0
  %2043 = vmatpush1.msra.mxu0 0.0
  %2044 = vmatprep.subr.mxu0 0.0
  %2045 = vmatpush1.msra.mxu0 0.0
  %2046 = vmatprep.subr.mxu0 0.0
  %2047 = vmatpush1.msra.mxu0 0.0
  %2048 = vmatprep.subr.mxu0 0.0
  %2049 = vmatpush1.msra.mxu0 0.0
  %2050 = vmatprep.subr.mxu0 0.0
  %2051 = vmatpush1.msra.mxu0 0.0
  %2052 = vmatprep.subr.mxu0 0.0
  %2053 = vmatpush1.msra.mxu0 0.0
  %2054 = vmatprep.mubr.f32.mxu0 0.0
  %2055 = vmatmul.mubr.f32.gmra.mrb[0].mxu0 %v1985
  %v2056 = vpop.f32.mrb[0].mxu0
  %v2057 = vadd.f32 0.0, %v2056
  %v2058 = vpop.f32.mrb[0].mxu0
  %2059 = vmatprep.mubr.f32.mxu0 0.0
  %2060 = vmatmul.mubr.f32.gmra.mrb[0].mxu0 %v1988
  %v2061 = vpop.f32.mrb[0].mxu0
  %v2062 = vadd.f32 0.0, %v2061
  %v2063 = vpop.f32.mrb[0].mxu0
  %2064 = vdwg.mxu0
  %v2065 = vrcp.pop %v1972
  %v2066 = vrcp.pop %v1975
  %v2067 = vmul.f32 %v2057, %v2065
  %v2068 = vmul.f32 %v2062, %v2066
  %v2070 = vsel %vm417, %v2067, 0
  %v2073 = vsel %vm417, %v2068, 0
  %2075 = vmatprep.subr.mxu0 0.0
  %2076 = vmatpush1.msra.mxu0 %v401
  %2077 = vmatprep.subr.mxu0 0.0
  %2078 = vmatpush1.msra.mxu0 0.0
  %2079 = vmatprep.subr.mxu0 0.0
  %2080 = vmatpush1.msra.mxu0 0.0
  %2081 = vmatprep.subr.mxu0 0.0
  %2082 = vmatpush1.msra.mxu0 0.0
  %2083 = vmatprep.subr.mxu0 0.0
  %2084 = vmatpush1.msra.mxu0 0.0
  %2085 = vmatprep.subr.mxu0 0.0
  %2086 = vmatpush1.msra.mxu0 0.0
  %2087 = vmatprep.subr.mxu0 0.0
  %2088 = vmatpush1.msra.mxu0 0.0
  %2089 = vmatprep.subr.mxu0 0.0
  %2090 = vmatpush1.msra.mxu0 0.0
  %2091 = vmatprep.subr.mxu0 0.0
  %2092 = vmatpush1.msra.mxu0 0.0
  %2093 = vmatprep.subr.mxu0 0.0
  %2094 = vmatpush1.msra.mxu0 0.0
  %2095 = vmatprep.subr.mxu0 0.0
  %2096 = vmatpush1.msra.mxu0 0.0
  %2097 = vmatprep.subr.mxu0 0.0
  %2098 = vmatpush1.msra.mxu0 0.0
  %2099 = vmatprep.subr.mxu0 0.0
  %2100 = vmatpush1.msra.mxu0 0.0
  %2101 = vmatprep.subr.mxu0 0.0
  %2102 = vmatpush1.msra.mxu0 0.0
  %2103 = vmatprep.subr.mxu0 0.0
  %2104 = vmatpush1.msra.mxu0 0.0
  %2105 = vmatprep.subr.mxu0 0.0
  %2106 = vmatpush1.msra.mxu0 0.0
  %2107 = vmatprep.subr.mxu0 0.0
  %2108 = vmatpush1.msra.mxu0 0.0
  %2109 = vmatprep.subr.mxu0 0.0
  %2110 = vmatpush1.msra.mxu0 0.0
  %2111 = vmatprep.subr.mxu0 0.0
  %2112 = vmatpush1.msra.mxu0 0.0
  %2113 = vmatprep.subr.mxu0 0.0
  %2114 = vmatpush1.msra.mxu0 0.0
  %2115 = vmatprep.subr.mxu0 0.0
  %2116 = vmatpush1.msra.mxu0 0.0
  %2117 = vmatprep.subr.mxu0 0.0
  %2118 = vmatpush1.msra.mxu0 0.0
  %2119 = vmatprep.subr.mxu0 0.0
  %2120 = vmatpush1.msra.mxu0 0.0
  %2121 = vmatprep.subr.mxu0 0.0
  %2122 = vmatpush1.msra.mxu0 0.0
  %2123 = vmatprep.subr.mxu0 0.0
  %2124 = vmatpush1.msra.mxu0 0.0
  %2125 = vmatprep.subr.mxu0 0.0
  %2126 = vmatpush1.msra.mxu0 0.0
  %2127 = vmatprep.subr.mxu0 0.0
  %2128 = vmatpush1.msra.mxu0 0.0
  %2129 = vmatprep.subr.mxu0 0.0
  %2130 = vmatpush1.msra.mxu0 0.0
  %2131 = vmatprep.subr.mxu0 0.0
  %2132 = vmatpush1.msra.mxu0 0.0
  %2133 = vmatprep.subr.mxu0 0.0
  %2134 = vmatpush1.msra.mxu0 0.0
  %2135 = vmatprep.subr.mxu0 0.0
  %2136 = vmatpush1.msra.mxu0 0.0
  %2137 = vmatprep.subr.mxu0 0.0
  %2138 = vmatpush1.msra.mxu0 0.0
  %2139 = vmatprep.mubr.f32.mxu0 0.0
  %2140 = vmatmul.mubr.f32.gmra.mrb[0].mxu0 %v2070
  %v2141 = vpop.f32.mrb[0].mxu0
  %v2142 = vadd.f32 0.0, %v2141
  %v2143 = vpop.f32.mrb[0].mxu0
  %2144 = vmatprep.mubr.f32.mxu0 0.0
  %2145 = vmatmul.mubr.f32.gmra.mrb[0].mxu0 %v2073
  %v2146 = vpop.f32.mrb[0].mxu0
  %v2147 = vadd.f32 0.0, %v2146
  %v2148 = vpop.f32.mrb[0].mxu0
  %2149 = vdwg.mxu0
  %v2150 = vadd.f32 %v1865, %v2142
  %v2151 = vadd.f32 %v1866, %v2147
  %2152 = vrot.lane.b32.xlu0 %v175, 112
  %v2153 = vpop.permute.xlu0 %2152
  %2154 = vrot.lane.b32.xlu0 %v180, 112
  %v2155 = vpop.permute.xlu0 %2154
  %2156 = vrot.lane.b32.xlu0 %v283, 112
  %v2157 = vpop.permute.xlu0 %2156
  %2158 = vrot.lane.b32.xlu0 %v288, 112
  %v2159 = vpop.permute.xlu0 %2158
  %v2160 = vsel %vm417, %v2153, 0
  %v2162 = vsel %vm417, %v2155, 0
  %v2164 = vsel %vm417, %v2157, 0
  %v2166 = vsel %vm417, %v2159, 0
  %2168 = vmatprep.subr.mxu0 0.0
  %2169 = vmatpush1.xpose.msra.mxu0 %v2164
  %2170 = vmatprep.subr.mxu0 0.0
  %2171 = vmatpush1.xpose.msra.mxu0 %v2166
  %2172 = vmatprep.subr.mxu0 0.0
  %2173 = vmatpush1.xpose.msra.mxu0 0.0
  %2174 = vmatprep.subr.mxu0 0.0
  %2175 = vmatpush1.xpose.msra.mxu0 0.0
  %2176 = vmatprep.subr.mxu0 0.0
  %2177 = vmatpush1.xpose.msra.mxu0 0.0
  %2178 = vmatprep.subr.mxu0 0.0
  %2179 = vmatpush1.xpose.msra.mxu0 0.0
  %2180 = vmatprep.subr.mxu0 0.0
  %2181 = vmatpush1.xpose.msra.mxu0 0.0
  %2182 = vmatprep.subr.mxu0 0.0
  %2183 = vmatpush1.xpose.msra.mxu0 0.0
  %2184 = vmatprep.subr.mxu0 0.0
  %2185 = vmatpush1.xpose.msra.mxu0 0.0
  %2186 = vmatprep.subr.mxu0 0.0
  %2187 = vmatpush1.xpose.msra.mxu0 0.0
  %2188 = vmatprep.subr.mxu0 0.0
  %2189 = vmatpush1.xpose.msra.mxu0 0.0
  %2190 = vmatprep.subr.mxu0 0.0
  %2191 = vmatpush1.xpose.msra.mxu0 0.0
  %2192 = vmatprep.subr.mxu0 0.0
  %2193 = vmatpush1.xpose.msra.mxu0 0.0
  %2194 = vmatprep.subr.mxu0 0.0
  %2195 = vmatpush1.xpose.msra.mxu0 0.0
  %2196 = vmatprep.subr.mxu0 0.0
  %2197 = vmatpush1.xpose.msra.mxu0 0.0
  %2198 = vmatprep.subr.mxu0 0.0
  %2199 = vmatpush1.xpose.msra.mxu0 0.0
  %2200 = vmatprep.subr.mxu0 0.0
  %2201 = vmatpush1.xpose.msra.mxu0 0.0
  %2202 = vmatprep.subr.mxu0 0.0
  %2203 = vmatpush1.xpose.msra.mxu0 0.0
  %2204 = vmatprep.subr.mxu0 0.0
  %2205 = vmatpush1.xpose.msra.mxu0 0.0
  %2206 = vmatprep.subr.mxu0 0.0
  %2207 = vmatpush1.xpose.msra.mxu0 0.0
  %2208 = vmatprep.subr.mxu0 0.0
  %2209 = vmatpush1.xpose.msra.mxu0 0.0
  %2210 = vmatprep.subr.mxu0 0.0
  %2211 = vmatpush1.xpose.msra.mxu0 0.0
  %2212 = vmatprep.subr.mxu0 0.0
  %2213 = vmatpush1.xpose.msra.mxu0 0.0
  %2214 = vmatprep.subr.mxu0 0.0
  %2215 = vmatpush1.xpose.msra.mxu0 0.0
  %2216 = vmatprep.subr.mxu0 0.0
  %2217 = vmatpush1.xpose.msra.mxu0 0.0
  %2218 = vmatprep.subr.mxu0 0.0
  %2219 = vmatpush1.xpose.msra.mxu0 0.0
  %2220 = vmatprep.subr.mxu0 0.0
  %2221 = vmatpush1.xpose.msra.mxu0 0.0
  %2222 = vmatprep.subr.mxu0 0.0
  %2223 = vmatpush1.xpose.msra.mxu0 0.0
  %2224 = vmatprep.subr.mxu0 0.0
  %2225 = vmatpush1.xpose.msra.mxu0 0.0
  %2226 = vmatprep.subr.mxu0 0.0
  %2227 = vmatpush1.xpose.msra.mxu0 0.0
  %2228 = vmatprep.subr.mxu0 0.0
  %2229 = vmatpush1.xpose.msra.mxu0 0.0
  %2230 = vmatprep.subr.mxu0 0.0
  %2231 = vmatpush1.xpose.msra.mxu0 0.0
  %2232 = vmatprep.mubr.f32.mxu0 0.0
  %2233 = vmatmul.mubr.f32.gmra.mrb[0].mxu0 %v2160
  %v2234 = vpop.f32.mrb[0].mxu0
  %v2235 = vadd.f32 %v1593, %v2234
  %v2236 = vpop.f32.mrb[0].mxu0
  %2237 = vmatprep.mubr.f32.mxu0 0.0
  %2238 = vmatmul.mubr.f32.gmra.mrb[0].mxu0 %v2162
  %v2239 = vpop.f32.mrb[0].mxu0
  %v2240 = vadd.f32 %v1593, %v2239
  %v2241 = vpop.f32.mrb[0].mxu0
  %2242 = vdwg.mxu0
  %v2243 = vsel %vm505, %v2235, -inf
  %2244 = vmax.xlane.f32.xlu0 %v2243
  %v2245 = vpop.xlane.xlu0 %2244
  %v2246 = vsel %vm505, %v2240, -inf
  %2247 = vmax.xlane.f32.xlu0 %v2246
  %v2248 = vpop.xlane.xlu0 %2247
  %v2249 = vsub.f32 %v2235, %v2245
  %v2250 = vsub.f32 %v2240, %v2248
  %v2251 = vmul.f32 %v2249, 1.442695
  %v2252 = vpow.pop %v2251
  %v2253 = vmul.f32 %v2250, 1.442695
  %v2254 = vpow.pop %v2253
  %v2255 = vsel %vm505, %v2252, 0.0
  %2256 = vadd.xlane.f32.xlu0 %v2255
  %v2257 = vpop.xlane.xlu0 %2256
  %v2258 = vsel %vm505, %v2254, 0.0
  %2259 = vadd.xlane.f32.xlu0 %v2258
  %v2260 = vpop.xlane.xlu0 %2259
  %2261 = vrot.lane.b32.xlu0 %v391, 112
  %v2262 = vpop.permute.xlu0 %2261
  %2263 = vrot.lane.b32.xlu0 %v396, 112
  %v2264 = vpop.permute.xlu0 %2263
  %v2268 = vsel %vm505, %v2252, 0
  %v2271 = vsel %vm505, %v2254, 0
  %2273 = vmatprep.subr.mxu0 0.0
  %2274 = vmatpush1.msra.mxu0 %v2262
  %2275 = vmatprep.subr.mxu0 0.0
  %2276 = vmatpush1.msra.mxu0 %v2264
  %2277 = vmatprep.subr.mxu0 0.0
  %2278 = vmatpush1.msra.mxu0 0.0
  %2279 = vmatprep.subr.mxu0 0.0
  %2280 = vmatpush1.msra.mxu0 0.0
  %2281 = vmatprep.subr.mxu0 0.0
  %2282 = vmatpush1.msra.mxu0 0.0
  %2283 = vmatprep.subr.mxu0 0.0
  %2284 = vmatpush1.msra.mxu0 0.0
  %2285 = vmatprep.subr.mxu0 0.0
  %2286 = vmatpush1.msra.mxu0 0.0
  %2287 = vmatprep.subr.mxu0 0.0
  %2288 = vmatpush1.msra.mxu0 0.0
  %2289 = vmatprep.subr.mxu0 0.0
  %2290 = vmatpush1.msra.mxu0 0.0
  %2291 = vmatprep.subr.mxu0 0.0
  %2292 = vmatpush1.msra.mxu0 0.0
  %2293 = vmatprep.subr.mxu0 0.0
  %2294 = vmatpush1.msra.mxu0 0.0
  %2295 = vmatprep.subr.mxu0 0.0
  %2296 = vmatpush1.msra.mxu0 0.0
  %2297 = vmatprep.subr.mxu0 0.0
  %2298 = vmatpush1.msra.mxu0 0.0
  %2299 = vmatprep.subr.mxu0 0.0
  %2300 = vmatpush1.msra.mxu0 0.0
  %2301 = vmatprep.subr.mxu0 0.0
  %2302 = vmatpush1.msra.mxu0 0.0
  %2303 = vmatprep.subr.mxu0 0.0
  %2304 = vmatpush1.msra.mxu0 0.0
  %2305 = vmatprep.subr.mxu0 0.0
  %2306 = vmatpush1.msra.mxu0 0.0
  %2307 = vmatprep.subr.mxu0 0.0
  %2308 = vmatpush1.msra.mxu0 0.0
  %2309 = vmatprep.subr.mxu0 0.0
  %2310 = vmatpush1.msra.mxu0 0.0
  %2311 = vmatprep.subr.mxu0 0.0
  %2312 = vmatpush1.msra.mxu0 0.0
  %2313 = vmatprep.subr.mxu0 0.0
  %2314 = vmatpush1.msra.mxu0 0.0
  %2315 = vmatprep.subr.mxu0 0.0
  %2316 = vmatpush1.msra.mxu0 0.0
  %2317 = vmatprep.subr.mxu0 0.0
  %2318 = vmatpush1.msra.mxu0 0.0
  %2319 = vmatprep.subr.mxu0 0.0
  %2320 = vmatpush1.msra.mxu0 0.0
  %2321 = vmatprep.subr.mxu0 0.0
  %2322 = vmatpush1.msra.mxu0 0.0
  %2323 = vmatprep.subr.mxu0 0.0
  %2324 = vmatpush1.msra.mxu0 0.0
  %2325 = vmatprep.subr.mxu0 0.0
  %2326 = vmatpush1.msra.mxu0 0.0
  %2327 = vmatprep.subr.mxu0 0.0
  %2328 = vmatpush1.msra.mxu0 0.0
  %2329 = vmatprep.subr.mxu0 0.0
  %2330 = vmatpush1.msra.mxu0 0.0
  %2331 = vmatprep.subr.mxu0 0.0
  %2332 = vmatpush1.msra.mxu0 0.0
  %2333 = vmatprep.subr.mxu0 0.0
  %2334 = vmatpush1.msra.mxu0 0.0
  %2335 = vmatprep.subr.mxu0 0.0
  %2336 = vmatpush1.msra.mxu0 0.0
  %2337 = vmatprep.mubr.f32.mxu0 0.0
  %2338 = vmatmul.mubr.f32.gmra.mrb[0].mxu0 %v2268
  %v2339 = vpop.f32.mrb[0].mxu0
  %v2340 = vadd.f32 0.0, %v2339
  %v2341 = vpop.f32.mrb[0].mxu0
  %2342 = vmatprep.mubr.f32.mxu0 0.0
  %2343 = vmatmul.mubr.f32.gmra.mrb[0].mxu0 %v2271
  %v2344 = vpop.f32.mrb[0].mxu0
  %v2345 = vadd.f32 0.0, %v2344
  %v2346 = vpop.f32.mrb[0].mxu0
  %2347 = vdwg.mxu0
  %v2348 = vrcp.pop %v2257
  %v2349 = vrcp.pop %v2260
  %v2350 = vmul.f32 %v2340, %v2348
  %v2351 = vmul.f32 %v2345, %v2349
  %v2353 = vsel %vm417, %v2350, 0
  %v2356 = vsel %vm417, %v2351, 0
  %2358 = vmatprep.subr.mxu0 0.0
  %2359 = vmatpush1.msra.mxu0 %v402
  %2360 = vmatprep.subr.mxu0 0.0
  %2361 = vmatpush1.msra.mxu0 0.0
  %2362 = vmatprep.subr.mxu0 0.0
  %2363 = vmatpush1.msra.mxu0 0.0
  %2364 = vmatprep.subr.mxu0 0.0
  %2365 = vmatpush1.msra.mxu0 0.0
  %2366 = vmatprep.subr.mxu0 0.0
  %2367 = vmatpush1.msra.mxu0 0.0
  %2368 = vmatprep.subr.mxu0 0.0
  %2369 = vmatpush1.msra.mxu0 0.0
  %2370 = vmatprep.subr.mxu0 0.0
  %2371 = vmatpush1.msra.mxu0 0.0
  %2372 = vmatprep.subr.mxu0 0.0
  %2373 = vmatpush1.msra.mxu0 0.0
  %2374 = vmatprep.subr.mxu0 0.0
  %2375 = vmatpush1.msra.mxu0 0.0
  %2376 = vmatprep.subr.mxu0 0.0
  %2377 = vmatpush1.msra.mxu0 0.0
  %2378 = vmatprep.subr.mxu0 0.0
  %2379 = vmatpush1.msra.mxu0 0.0
  %2380 = vmatprep.subr.mxu0 0.0
  %2381 = vmatpush1.msra.mxu0 0.0
  %2382 = vmatprep.subr.mxu0 0.0
  %2383 = vmatpush1.msra.mxu0 0.0
  %2384 = vmatprep.subr.mxu0 0.0
  %2385 = vmatpush1.msra.mxu0 0.0
  %2386 = vmatprep.subr.mxu0 0.0
  %2387 = vmatpush1.msra.mxu0 0.0
  %2388 = vmatprep.subr.mxu0 0.0
  %2389 = vmatpush1.msra.mxu0 0.0
  %2390 = vmatprep.subr.mxu0 0.0
  %2391 = vmatpush1.msra.mxu0 0.0
  %2392 = vmatprep.subr.mxu0 0.0
  %2393 = vmatpush1.msra.mxu0 0.0
  %2394 = vmatprep.subr.mxu0 0.0
  %2395 = vmatpush1.msra.mxu0 0.0
  %2396 = vmatprep.subr.mxu0 0.0
  %2397 = vmatpush1.msra.mxu0 0.0
  %2398 = vmatprep.subr.mxu0 0.0
  %2399 = vmatpush1.msra.mxu0 0.0
  %2400 = vmatprep.subr.mxu0 0.0
  %2401 = vmatpush1.msra.mxu0 0.0
  %2402 = vmatprep.subr.mxu0 0.0
  %2403 = vmatpush1.msra.mxu0 0.0
  %2404 = vmatprep.subr.mxu0 0.0
  %2405 = vmatpush1.msra.mxu0 0.0
  %2406 = vmatprep.subr.mxu0 0.0
  %2407 = vmatpush1.msra.mxu0 0.0
  %2408 = vmatprep.subr.mxu0 0.0
  %2409 = vmatpush1.msra.mxu0 0.0
  %2410 = vmatprep.subr.mxu0 0.0
  %2411 = vmatpush1.msra.mxu0 0.0
  %2412 = vmatprep.subr.mxu0 0.0
  %2413 = vmatpush1.msra.mxu0 0.0
  %2414 = vmatprep.subr.mxu0 0.0
  %2415 = vmatpush1.msra.mxu0 0.0
  %2416 = vmatprep.subr.mxu0 0.0
  %2417 = vmatpush1.msra.mxu0 0.0
  %2418 = vmatprep.subr.mxu0 0.0
  %2419 = vmatpush1.msra.mxu0 0.0
  %2420 = vmatprep.subr.mxu0 0.0
  %2421 = vmatpush1.msra.mxu0 0.0
  %2422 = vmatprep.mubr.f32.mxu0 0.0
  %2423 = vmatmul.mubr.f32.gmra.mrb[0].mxu0 %v2353
  %v2424 = vpop.f32.mrb[0].mxu0
  %v2425 = vadd.f32 0.0, %v2424
  %v2426 = vpop.f32.mrb[0].mxu0
  %2427 = vmatprep.mubr.f32.mxu0 0.0
  %2428 = vmatmul.mubr.f32.gmra.mrb[0].mxu0 %v2356
  %v2429 = vpop.f32.mrb[0].mxu0
  %v2430 = vadd.f32 0.0, %v2429
  %v2431 = vpop.f32.mrb[0].mxu0
  %2432 = vdwg.mxu0
  %v2433 = vadd.f32 %v2150, %v2425
  %v2434 = vadd.f32 %v2151, %v2430
  %2435 = vrot.lane.b32.xlu0 %v175, 104
  %v2436 = vpop.permute.xlu0 %2435
  %2437 = vrot.lane.b32.xlu0 %v180, 104
  %v2438 = vpop.permute.xlu0 %2437
  %2439 = vrot.lane.b32.xlu0 %v283, 104
  %v2440 = vpop.permute.xlu0 %2439
  %2441 = vrot.lane.b32.xlu0 %v288, 104
  %v2442 = vpop.permute.xlu0 %2441
  %v2443 = vsel %vm417, %v2436, 0
  %v2445 = vsel %vm417, %v2438, 0
  %v2447 = vsel %vm417, %v2440, 0
  %v2449 = vsel %vm417, %v2442, 0
  %2451 = vmatprep.subr.mxu0 0.0
  %2452 = vmatpush1.xpose.msra.mxu0 %v2447
  %2453 = vmatprep.subr.mxu0 0.0
  %2454 = vmatpush1.xpose.msra.mxu0 %v2449
  %2455 = vmatprep.subr.mxu0 0.0
  %2456 = vmatpush1.xpose.msra.mxu0 0.0
  %2457 = vmatprep.subr.mxu0 0.0
  %2458 = vmatpush1.xpose.msra.mxu0 0.0
  %2459 = vmatprep.subr.mxu0 0.0
  %2460 = vmatpush1.xpose.msra.mxu0 0.0
  %2461 = vmatprep.subr.mxu0 0.0
  %2462 = vmatpush1.xpose.msra.mxu0 0.0
  %2463 = vmatprep.subr.mxu0 0.0
  %2464 = vmatpush1.xpose.msra.mxu0 0.0
  %2465 = vmatprep.subr.mxu0 0.0
  %2466 = vmatpush1.xpose.msra.mxu0 0.0
  %2467 = vmatprep.subr.mxu0 0.0
  %2468 = vmatpush1.xpose.msra.mxu0 0.0
  %2469 = vmatprep.subr.mxu0 0.0
  %2470 = vmatpush1.xpose.msra.mxu0 0.0
  %2471 = vmatprep.subr.mxu0 0.0
  %2472 = vmatpush1.xpose.msra.mxu0 0.0
  %2473 = vmatprep.subr.mxu0 0.0
  %2474 = vmatpush1.xpose.msra.mxu0 0.0
  %2475 = vmatprep.subr.mxu0 0.0
  %2476 = vmatpush1.xpose.msra.mxu0 0.0
  %2477 = vmatprep.subr.mxu0 0.0
  %2478 = vmatpush1.xpose.msra.mxu0 0.0
  %2479 = vmatprep.subr.mxu0 0.0
  %2480 = vmatpush1.xpose.msra.mxu0 0.0
  %2481 = vmatprep.subr.mxu0 0.0
  %2482 = vmatpush1.xpose.msra.mxu0 0.0
  %2483 = vmatprep.subr.mxu0 0.0
  %2484 = vmatpush1.xpose.msra.mxu0 0.0
  %2485 = vmatprep.subr.mxu0 0.0
  %2486 = vmatpush1.xpose.msra.mxu0 0.0
  %2487 = vmatprep.subr.mxu0 0.0
  %2488 = vmatpush1.xpose.msra.mxu0 0.0
  %2489 = vmatprep.subr.mxu0 0.0
  %2490 = vmatpush1.xpose.msra.mxu0 0.0
  %2491 = vmatprep.subr.mxu0 0.0
  %2492 = vmatpush1.xpose.msra.mxu0 0.0
  %2493 = vmatprep.subr.mxu0 0.0
  %2494 = vmatpush1.xpose.msra.mxu0 0.0
  %2495 = vmatprep.subr.mxu0 0.0
  %2496 = vmatpush1.xpose.msra.mxu0 0.0
  %2497 = vmatprep.subr.mxu0 0.0
  %2498 = vmatpush1.xpose.msra.mxu0 0.0
  %2499 = vmatprep.subr.mxu0 0.0
  %2500 = vmatpush1.xpose.msra.mxu0 0.0
  %2501 = vmatprep.subr.mxu0 0.0
  %2502 = vmatpush1.xpose.msra.mxu0 0.0
  %2503 = vmatprep.subr.mxu0 0.0
  %2504 = vmatpush1.xpose.msra.mxu0 0.0
  %2505 = vmatprep.subr.mxu0 0.0
  %2506 = vmatpush1.xpose.msra.mxu0 0.0
  %2507 = vmatprep.subr.mxu0 0.0
  %2508 = vmatpush1.xpose.msra.mxu0 0.0
  %2509 = vmatprep.subr.mxu0 0.0
  %2510 = vmatpush1.xpose.msra.mxu0 0.0
  %2511 = vmatprep.subr.mxu0 0.0
  %2512 = vmatpush1.xpose.msra.mxu0 0.0
  %2513 = vmatprep.subr.mxu0 0.0
  %2514 = vmatpush1.xpose.msra.mxu0 0.0
  %2515 = vmatprep.mubr.f32.mxu0 0.0
  %2516 = vmatmul.mubr.f32.gmra.mrb[0].mxu0 %v2443
  %v2517 = vpop.f32.mrb[0].mxu0
  %v2518 = vadd.f32 %v1593, %v2517
  %v2519 = vpop.f32.mrb[0].mxu0
  %2520 = vmatprep.mubr.f32.mxu0 0.0
  %2521 = vmatmul.mubr.f32.gmra.mrb[0].mxu0 %v2445
  %v2522 = vpop.f32.mrb[0].mxu0
  %v2523 = vadd.f32 %v1593, %v2522
  %v2524 = vpop.f32.mrb[0].mxu0
  %2525 = vdwg.mxu0
  %v2526 = vsel %vm505, %v2518, -inf
  %2527 = vmax.xlane.f32.xlu0 %v2526
  %v2528 = vpop.xlane.xlu0 %2527
  %v2529 = vsel %vm505, %v2523, -inf
  %2530 = vmax.xlane.f32.xlu0 %v2529
  %v2531 = vpop.xlane.xlu0 %2530
  %v2532 = vsub.f32 %v2518, %v2528
  %v2533 = vsub.f32 %v2523, %v2531
  %v2534 = vmul.f32 %v2532, 1.442695
  %v2535 = vpow.pop %v2534
  %v2536 = vmul.f32 %v2533, 1.442695
  %v2537 = vpow.pop %v2536
  %v2538 = vsel %vm505, %v2535, 0.0
  %2539 = vadd.xlane.f32.xlu0 %v2538
  %v2540 = vpop.xlane.xlu0 %2539
  %v2541 = vsel %vm505, %v2537, 0.0
  %2542 = vadd.xlane.f32.xlu0 %v2541
  %v2543 = vpop.xlane.xlu0 %2542
  %2544 = vrot.lane.b32.xlu0 %v391, 104
  %v2545 = vpop.permute.xlu0 %2544
  %2546 = vrot.lane.b32.xlu0 %v396, 104
  %v2547 = vpop.permute.xlu0 %2546
  %v2551 = vsel %vm505, %v2535, 0
  %v2554 = vsel %vm505, %v2537, 0
  %2556 = vmatprep.subr.mxu0 0.0
  %2557 = vmatpush1.msra.mxu0 %v2545
  %2558 = vmatprep.subr.mxu0 0.0
  %2559 = vmatpush1.msra.mxu0 %v2547
  %2560 = vmatprep.subr.mxu0 0.0
  %2561 = vmatpush1.msra.mxu0 0.0
  %2562 = vmatprep.subr.mxu0 0.0
  %2563 = vmatpush1.msra.mxu0 0.0
  %2564 = vmatprep.subr.mxu0 0.0
  %2565 = vmatpush1.msra.mxu0 0.0
  %2566 = vmatprep.subr.mxu0 0.0
  %2567 = vmatpush1.msra.mxu0 0.0
  %2568 = vmatprep.subr.mxu0 0.0
  %2569 = vmatpush1.msra.mxu0 0.0
  %2570 = vmatprep.subr.mxu0 0.0
  %2571 = vmatpush1.msra.mxu0 0.0
  %2572 = vmatprep.subr.mxu0 0.0
  %2573 = vmatpush1.msra.mxu0 0.0
  %2574 = vmatprep.subr.mxu0 0.0
  %2575 = vmatpush1.msra.mxu0 0.0
  %2576 = vmatprep.subr.mxu0 0.0
  %2577 = vmatpush1.msra.mxu0 0.0
  %2578 = vmatprep.subr.mxu0 0.0
  %2579 = vmatpush1.msra.mxu0 0.0
  %2580 = vmatprep.subr.mxu0 0.0
  %2581 = vmatpush1.msra.mxu0 0.0
  %2582 = vmatprep.subr.mxu0 0.0
  %2583 = vmatpush1.msra.mxu0 0.0
  %2584 = vmatprep.subr.mxu0 0.0
  %2585 = vmatpush1.msra.mxu0 0.0
  %2586 = vmatprep.subr.mxu0 0.0
  %2587 = vmatpush1.msra.mxu0 0.0
  %2588 = vmatprep.subr.mxu0 0.0
  %2589 = vmatpush1.msra.mxu0 0.0
  %2590 = vmatprep.subr.mxu0 0.0
  %2591 = vmatpush1.msra.mxu0 0.0
  %2592 = vmatprep.subr.mxu0 0.0
  %2593 = vmatpush1.msra.mxu0 0.0
  %2594 = vmatprep.subr.mxu0 0.0
  %2595 = vmatpush1.msra.mxu0 0.0
  %2596 = vmatprep.subr.mxu0 0.0
  %2597 = vmatpush1.msra.mxu0 0.0
  %2598 = vmatprep.subr.mxu0 0.0
  %2599 = vmatpush1.msra.mxu0 0.0
  %2600 = vmatprep.subr.mxu0 0.0
  %2601 = vmatpush1.msra.mxu0 0.0
  %2602 = vmatprep.subr.mxu0 0.0
  %2603 = vmatpush1.msra.mxu0 0.0
  %2604 = vmatprep.subr.mxu0 0.0
  %2605 = vmatpush1.msra.mxu0 0.0
  %2606 = vmatprep.subr.mxu0 0.0
  %2607 = vmatpush1.msra.mxu0 0.0
  %2608 = vmatprep.subr.mxu0 0.0
  %2609 = vmatpush1.msra.mxu0 0.0
  %2610 = vmatprep.subr.mxu0 0.0
  %2611 = vmatpush1.msra.mxu0 0.0
  %2612 = vmatprep.subr.mxu0 0.0
  %2613 = vmatpush1.msra.mxu0 0.0
  %2614 = vmatprep.subr.mxu0 0.0
  %2615 = vmatpush1.msra.mxu0 0.0
  %2616 = vmatprep.subr.mxu0 0.0
  %2617 = vmatpush1.msra.mxu0 0.0
  %2618 = vmatprep.subr.mxu0 0.0
  %2619 = vmatpush1.msra.mxu0 0.0
  %2620 = vmatprep.mubr.f32.mxu0 0.0
  %2621 = vmatmul.mubr.f32.gmra.mrb[0].mxu0 %v2551
  %v2622 = vpop.f32.mrb[0].mxu0
  %v2623 = vadd.f32 0.0, %v2622
  %v2624 = vpop.f32.mrb[0].mxu0
  %2625 = vmatprep.mubr.f32.mxu0 0.0
  %2626 = vmatmul.mubr.f32.gmra.mrb[0].mxu0 %v2554
  %v2627 = vpop.f32.mrb[0].mxu0
  %v2628 = vadd.f32 0.0, %v2627
  %v2629 = vpop.f32.mrb[0].mxu0
  %2630 = vdwg.mxu0
  %v2631 = vrcp.pop %v2540
  %v2632 = vrcp.pop %v2543
  %v2633 = vmul.f32 %v2623, %v2631
  %v2634 = vmul.f32 %v2628, %v2632
  %v2636 = vsel %vm417, %v2633, 0
  %v2639 = vsel %vm417, %v2634, 0
  %2641 = vmatprep.subr.mxu0 0.0
  %2642 = vmatpush1.msra.mxu0 %v403
  %2643 = vmatprep.subr.mxu0 0.0
  %2644 = vmatpush1.msra.mxu0 0.0
  %2645 = vmatprep.subr.mxu0 0.0
  %2646 = vmatpush1.msra.mxu0 0.0
  %2647 = vmatprep.subr.mxu0 0.0
  %2648 = vmatpush1.msra.mxu0 0.0
  %2649 = vmatprep.subr.mxu0 0.0
  %2650 = vmatpush1.msra.mxu0 0.0
  %2651 = vmatprep.subr.mxu0 0.0
  %2652 = vmatpush1.msra.mxu0 0.0
  %2653 = vmatprep.subr.mxu0 0.0
  %2654 = vmatpush1.msra.mxu0 0.0
  %2655 = vmatprep.subr.mxu0 0.0
  %2656 = vmatpush1.msra.mxu0 0.0
  %2657 = vmatprep.subr.mxu0 0.0
  %2658 = vmatpush1.msra.mxu0 0.0
  %2659 = vmatprep.subr.mxu0 0.0
  %2660 = vmatpush1.msra.mxu0 0.0
  %2661 = vmatprep.subr.mxu0 0.0
  %2662 = vmatpush1.msra.mxu0 0.0
  %2663 = vmatprep.subr.mxu0 0.0
  %2664 = vmatpush1.msra.mxu0 0.0
  %2665 = vmatprep.subr.mxu0 0.0
  %2666 = vmatpush1.msra.mxu0 0.0
  %2667 = vmatprep.subr.mxu0 0.0
  %2668 = vmatpush1.msra.mxu0 0.0
  %2669 = vmatprep.subr.mxu0 0.0
  %2670 = vmatpush1.msra.mxu0 0.0
  %2671 = vmatprep.subr.mxu0 0.0
  %2672 = vmatpush1.msra.mxu0 0.0
  %2673 = vmatprep.subr.mxu0 0.0
  %2674 = vmatpush1.msra.mxu0 0.0
  %2675 = vmatprep.subr.mxu0 0.0
  %2676 = vmatpush1.msra.mxu0 0.0
  %2677 = vmatprep.subr.mxu0 0.0
  %2678 = vmatpush1.msra.mxu0 0.0
  %2679 = vmatprep.subr.mxu0 0.0
  %2680 = vmatpush1.msra.mxu0 0.0
  %2681 = vmatprep.subr.mxu0 0.0
  %2682 = vmatpush1.msra.mxu0 0.0
  %2683 = vmatprep.subr.mxu0 0.0
  %2684 = vmatpush1.msra.mxu0 0.0
  %2685 = vmatprep.subr.mxu0 0.0
  %2686 = vmatpush1.msra.mxu0 0.0
  %2687 = vmatprep.subr.mxu0 0.0
  %2688 = vmatpush1.msra.mxu0 0.0
  %2689 = vmatprep.subr.mxu0 0.0
  %2690 = vmatpush1.msra.mxu0 0.0
  %2691 = vmatprep.subr.mxu0 0.0
  %2692 = vmatpush1.msra.mxu0 0.0
  %2693 = vmatprep.subr.mxu0 0.0
  %2694 = vmatpush1.msra.mxu0 0.0
  %2695 = vmatprep.subr.mxu0 0.0
  %2696 = vmatpush1.msra.mxu0 0.0
  %2697 = vmatprep.subr.mxu0 0.0
  %2698 = vmatpush1.msra.mxu0 0.0
  %2699 = vmatprep.subr.mxu0 0.0
  %2700 = vmatpush1.msra.mxu0 0.0
  %2701 = vmatprep.subr.mxu0 0.0
  %2702 = vmatpush1.msra.mxu0 0.0
  %2703 = vmatprep.subr.mxu0 0.0
  %2704 = vmatpush1.msra.mxu0 0.0
  %2705 = vmatprep.mubr.f32.mxu0 0.0
  %2706 = vmatmul.mubr.f32.gmra.mrb[0].mxu0 %v2636
  %v2707 = vpop.f32.mrb[0].mxu0
  %v2708 = vadd.f32 0.0, %v2707
  %v2709 = vpop.f32.mrb[0].mxu0
  %2710 = vmatprep.mubr.f32.mxu0 0.0
  %2711 = vmatmul.mubr.f32.gmra.mrb[0].mxu0 %v2639
  %v2712 = vpop.f32.mrb[0].mxu0
  %v2713 = vadd.f32 0.0, %v2712
  %v2714 = vpop.f32.mrb[0].mxu0
  %2715 = vdwg.mxu0
  %v2716 = vadd.f32 %v2433, %v2708
  %v2717 = vadd.f32 %v2434, %v2713
  %v2718 = vadd.f32 %v52, %v2716
  %v2719 = vadd.f32 %v53, %v2717
  %v2720 = vsel %vm85, %v2718, 0.0
  %2721 = vadd.xlane.f32.xlu0 %v2720
  %v2722 = vpop.xlane.xlu0 %2721
  %v2723 = vsel %vm85, %v2719, 0.0
  %2724 = vadd.xlane.f32.xlu0 %v2723
  %v2725 = vpop.xlane.xlu0 %2724
  %v2726 = vmul.f32 %v2722, %v1551
  %v2727 = vmul.f32 %v2725, %v1551
  %v2728 = vsub.f32 %v2718, %v2726
  %v2729 = vsub.f32 %v2719, %v2727
  %v2730 = vmul.f32 %v2728, %v2728
  %v2731 = vmul.f32 %v2729, %v2729
  %v2732 = vsel %vm85, %v2730, 0.0
  %2733 = vadd.xlane.f32.xlu0 %v2732
  %v2734 = vpop.xlane.xlu0 %2733
  %v2735 = vsel %vm85, %v2731, 0.0
  %2736 = vadd.xlane.f32.xlu0 %v2735
  %v2737 = vpop.xlane.xlu0 %2736
  %v2738 = vmul.f32 %v2734, %v1551
  %v2739 = vmul.f32 %v2737, %v1551
  %v2740 = vadd.f32 %v2738, 1e-05
  %v2741 = vadd.f32 %v2739, 1e-05
  %v2742 = vrsqrt.pop %v2740
  %v2743 = vrsqrt.pop %v2741
  %v2744 = vmul.f32 %v2728, %v2742
  %v2745 = vmul.f32 %v2729, %v2743
  %v2746 = vmul.f32 %v2744, %v1576
  %v2747 = vmul.f32 %v2745, %v1576
  %v2748 = vadd.f32 %v2746, %v1584
  %v2749 = vadd.f32 %v2747, %v1584
  %2750 = vst.msk [vmem:[%s15 + $0x10] sm:$0xff] %vm85, %v2748
  %2751 = vst.msk [vmem:[%s15 + $0x18] sm:$0xff] %vm85, %v2749
  // Predicated region
  $region62: #{transformer_forward.11} parent=0 // pred_check
    _
  $region63: #{transformer_forward.11} parent=0 // pred_check_branch
    %2753 = sbr.rel (0) target = $region65
  $region64: #{transformer_forward.11} parent=0 // pred_region
    _
  $region65: #{transformer_forward.11} parent=0 // pred_fallthru
    _
  // Predicated region
  $region66: #{transformer_forward.11} parent=0 // pred_check
    _
  $region67: #{transformer_forward.11} parent=0 // pred_check_branch
    %2755 = sbr.rel (0) target = $region69
  $region68: #{transformer_forward.11} parent=0 // pred_region
    _
  $region69: #{transformer_forward.11} parent=0 // pred_fallthru
    _

// kernel: transformer_forward.16
$region0: #{transformer_forward.16}
  #allocation0 [shape = 'u32[]', space=smem, size = 0x4, offset = 0x4, fixed_abs, tag = 'smem constant byte address 0x4 - core index']
  #allocation1 [shape = 'u32[144,128]{1,0:T(1,128)}', space=vmem, size = 0x12000, scoped, tag = 'internal scratch']
  %s0 = inlined_call_operand.vmem [shape: f32[16,32], index: 0, kind: input, shape index: {}]
  %s1 = inlined_call_operand.vmem [shape: f32[16,32], index: 1, kind: input, shape index: {}]
  %s2 = inlined_call_operand.vmem [shape: f32[32,32], index: 2, kind: input, shape index: {}]
  %s3 = inlined_call_operand.vmem [shape: f32[32,32], index: 3, kind: input, shape index: {}]
  %s4 = inlined_call_operand.vmem [shape: f32[2,16], index: 4, kind: input, shape index: {}]
  %s5 = inlined_call_operand.vmem [shape: f32[32,32], index: 5, kind: input, shape index: {}]
  %s6 = inlined_call_operand.vmem [shape: f32[1,32], index: 6, kind: input, shape index: {}]
  %s7 = inlined_call_operand.vmem [shape: f32[32,32], index: 7, kind: input, shape index: {}]
  %s8 = inlined_call_operand.vmem [shape: f32[1,32], index: 8, kind: input, shape index: {}]
  %s9 = inlined_call_operand.vmem [shape: f32[32,32], index: 9, kind: input, shape index: {}]
  %s10 = inlined_call_operand.vmem [shape: f32[1,32], index: 10, kind: input, shape index: {}]
  %s11 = inlined_call_operand.vmem [shape: f32[32,32], index: 11, kind: input, shape index: {}]
  %s12 = inlined_call_operand.vmem [shape: f32[1,32], index: 12, kind: input, shape index: {}]
  %s13 = inlined_call_operand.vmem [shape: f32[1,32], index: 13, kind: input, shape index: {}]
  %s14 = inlined_call_operand.vmem [shape: f32[1,32], index: 14, kind: input, shape index: {}]
  %s15 = inlined_call_operand.vmem [shape: f32[16,32], index: 15, kind: output, shape index: {}]
  %s16 = sld [smem:[#allocation0]]
  $region70: #{transformer_forward.16} parent=0
    _
  %s18 = ssub.s32 1, %s16
  %s19 = scalar_select 0, %s18, %s16
  // Predicated region
  $region2: #{transformer_forward.16} parent=0 // pred_check
    _
  $region3: #{transformer_forward.16} parent=0 // pred_check_branch
    %21 = sbr.rel (0) target = $region5
  $region4: #{transformer_forward.16} parent=0 // pred_region
    _
  $region5: #{transformer_forward.16} parent=0 // pred_fallthru
    _
  // Predicated region
  $region6: #{transformer_forward.16} parent=0 // pred_check
    _
  $region7: #{transformer_forward.16} parent=0 // pred_check_branch
    %23 = sbr.rel (0) target = $region9
  $region8: #{transformer_forward.16} parent=0 // pred_region
    _
  $region9: #{transformer_forward.16} parent=0 // pred_fallthru
    _
  // Predicated region
  $region10: #{transformer_forward.16} parent=0 // pred_check
    _
  $region11: #{transformer_forward.16} parent=0 // pred_check_branch
    %25 = sbr.rel (0) target = $region13
  $region12: #{transformer_forward.16} parent=0 // pred_region
    _
  $region13: #{transformer_forward.16} parent=0 // pred_fallthru
    _
  // Predicated region
  $region14: #{transformer_forward.16} parent=0 // pred_check
    _
  $region15: #{transformer_forward.16} parent=0 // pred_check_branch
    %27 = sbr.rel (0) target = $region17
  $region16: #{transformer_forward.16} parent=0 // pred_region
    _
  $region17: #{transformer_forward.16} parent=0 // pred_fallthru
    _
  // Predicated region
  $region18: #{transformer_forward.16} parent=0 // pred_check
    _
  $region19: #{transformer_forward.16} parent=0 // pred_check_branch
    %29 = sbr.rel (0) target = $region21
  $region20: #{transformer_forward.16} parent=0 // pred_region
    _
  $region21: #{transformer_forward.16} parent=0 // pred_fallthru
    _
  // Predicated region
  $region22: #{transformer_forward.16} parent=0 // pred_check
    _
  $region23: #{transformer_forward.16} parent=0 // pred_check_branch
    %31 = sbr.rel (0) target = $region25
  $region24: #{transformer_forward.16} parent=0 // pred_region
    _
  $region25: #{transformer_forward.16} parent=0 // pred_fallthru
    _
  // Predicated region
  $region26: #{transformer_forward.16} parent=0 // pred_check
    _
  $region27: #{transformer_forward.16} parent=0 // pred_check_branch
    %33 = sbr.rel (0) target = $region29
  $region28: #{transformer_forward.16} parent=0 // pred_region
    _
  $region29: #{transformer_forward.16} parent=0 // pred_fallthru
    _
  // Predicated region
  $region30: #{transformer_forward.16} parent=0 // pred_check
    _
  $region31: #{transformer_forward.16} parent=0 // pred_check_branch
    %35 = sbr.rel (0) target = $region33
  $region32: #{transformer_forward.16} parent=0 // pred_region
    _
  $region33: #{transformer_forward.16} parent=0 // pred_fallthru
    _
  // Predicated region
  $region34: #{transformer_forward.16} parent=0 // pred_check
    _
  $region35: #{transformer_forward.16} parent=0 // pred_check_branch
    %37 = sbr.rel (0) target = $region37
  $region36: #{transformer_forward.16} parent=0 // pred_region
    _
  $region37: #{transformer_forward.16} parent=0 // pred_fallthru
    _
  // Predicated region
  $region38: #{transformer_forward.16} parent=0 // pred_check
    _
  $region39: #{transformer_forward.16} parent=0 // pred_check_branch
    %39 = sbr.rel (0) target = $region41
  $region40: #{transformer_forward.16} parent=0 // pred_region
    _
  $region41: #{transformer_forward.16} parent=0 // pred_fallthru
    _
  // Predicated region
  $region42: #{transformer_forward.16} parent=0 // pred_check
    _
  $region43: #{transformer_forward.16} parent=0 // pred_check_branch
    %41 = sbr.rel (0) target = $region45
  $region44: #{transformer_forward.16} parent=0 // pred_region
    _
  $region45: #{transformer_forward.16} parent=0 // pred_fallthru
    _
  // Predicated region
  $region46: #{transformer_forward.16} parent=0 // pred_check
    _
  $region47: #{transformer_forward.16} parent=0 // pred_check_branch
    %43 = sbr.rel (0) target = $region49
  $region48: #{transformer_forward.16} parent=0 // pred_region
    _
  $region49: #{transformer_forward.16} parent=0 // pred_fallthru
    _
  // Predicated region
  $region50: #{transformer_forward.16} parent=0 // pred_check
    _
  $region51: #{transformer_forward.16} parent=0 // pred_check_branch
    %45 = sbr.rel (0) target = $region53
  $region52: #{transformer_forward.16} parent=0 // pred_region
    _
  $region53: #{transformer_forward.16} parent=0 // pred_fallthru
    _
  // Predicated region
  $region54: #{transformer_forward.16} parent=0 // pred_check
    _
  $region55: #{transformer_forward.16} parent=0 // pred_check_branch
    %47 = sbr.rel (0) target = $region57
  $region56: #{transformer_forward.16} parent=0 // pred_region
    _
  $region57: #{transformer_forward.16} parent=0 // pred_fallthru
    _
  // Predicated region
  $region58: #{transformer_forward.16} parent=0 // pred_check
    _
  $region59: #{transformer_forward.16} parent=0 // pred_check_branch
    %49 = sbr.rel (0) target = $region61
  $region60: #{transformer_forward.16} parent=0 // pred_region
    _
  $region61: #{transformer_forward.16} parent=0 // pred_fallthru
    _
  %v50 = vld [vmem:[%s0] sm:$0xff]
  %v51 = vld [vmem:[%s0 + $0x8] sm:$0xff]
  %v52 = vld [vmem:[%s1] sm:$0xff]
  %v53 = vld [vmem:[%s1 + $0x8] sm:$0xff]
  %v54 = vadd.f32 %v50, %v52
  %v55 = vadd.f32 %v51, %v53
  %v56 = vld [vmem:[%s2] sm:$0xff]
  %v57 = vld [vmem:[%s2 + $0x8] sm:$0xff]
  %v58 = vld [vmem:[%s2 + $0x10] sm:$0xff]
  %v59 = vld [vmem:[%s2 + $0x18] sm:$0xff]
  %v60 = vld [vmem:[%s3] sm:$0xff]
  %v61 = vld [vmem:[%s3 + $0x8] sm:$0xff]
  %v62 = vld [vmem:[%s3 + $0x10] sm:$0xff]
  %v63 = vld [vmem:[%s3 + $0x18] sm:$0xff]
  %v64 = vadd.f32 %v56, %v60
  %v65 = vadd.f32 %v57, %v61
  %v66 = vadd.f32 %v58, %v62
  %v67 = vadd.f32 %v59, %v63
  %v68 = vld [vmem:[%s5] sm:$0xff]
  %v69 = vld [vmem:[%s5 + $0x8] sm:$0xff]
  %v70 = vld [vmem:[%s5 + $0x10] sm:$0xff]
  %v71 = vld [vmem:[%s5 + $0x18] sm:$0xff]
  %v72 = vld [vmem:[%s6] sm:$0x1]
  %v74 = vlaneseq
  %v75 = vshrl.u32 %v74, 7
  %v76 = vsub.s32 0, %v75
  %v77 = vrot.slane %v72, %v76
  %vm79 = vcmask 261120
  %v81 = vsel %vm79, %v54, 0
  %v84 = vsel %vm79, %v55, 0
  %86 = vmatprep.subr.mxu0 0.0
  %87 = vmatpush1.msra.mxu0 %v68
  %88 = vmatprep.subr.mxu0 0.0
  %89 = vmatpush1.msra.mxu0 %v69
  %90 = vmatprep.subr.mxu0 0.0
  %91 = vmatpush1.msra.mxu0 %v70
  %92 = vmatprep.subr.mxu0 0.0
  %93 = vmatpush1.msra.mxu0 %v71
  %94 = vmatprep.subr.mxu0 0.0
  %95 = vmatpush1.msra.mxu0 0.0
  %96 = vmatprep.subr.mxu0 0.0
  %97 = vmatpush1.msra.mxu0 0.0
  %98 = vmatprep.subr.mxu0 0.0
  %99 = vmatpush1.msra.mxu0 0.0
  %100 = vmatprep.subr.mxu0 0.0
  %101 = vmatpush1.msra.mxu0 0.0
  %102 = vmatprep.subr.mxu0 0.0
  %103 = vmatpush1.msra.mxu0 0.0
  %104 = vmatprep.subr.mxu0 0.0
  %105 = vmatpush1.msra.mxu0 0.0
  %106 = vmatprep.subr.mxu0 0.0
  %107 = vmatpush1.msra.mxu0 0.0
  %108 = vmatprep.subr.mxu0 0.0
  %109 = vmatpush1.msra.mxu0 0.0
  %110 = vmatprep.subr.mxu0 0.0
  %111 = vmatpush1.msra.mxu0 0.0
  %112 = vmatprep.subr.mxu0 0.0
  %113 = vmatpush1.msra.mxu0 0.0
  %114 = vmatprep.subr.mxu0 0.0
  %115 = vmatpush1.msra.mxu0 0.0
  %116 = vmatprep.subr.mxu0 0.0
  %117 = vmatpush1.msra.mxu0 0.0
  %118 = vmatprep.subr.mxu0 0.0
  %119 = vmatpush1.msra.mxu0 0.0
  %120 = vmatprep.subr.mxu0 0.0
  %121 = vmatpush1.msra.mxu0 0.0
  %122 = vmatprep.subr.mxu0 0.0
  %123 = vmatpush1.msra.mxu0 0.0
  %124 = vmatprep.subr.mxu0 0.0
  %125 = vmatpush1.msra.mxu0 0.0
  %126 = vmatprep.subr.mxu0 0.0
  %127 = vmatpush1.msra.mxu0 0.0
  %128 = vmatprep.subr.mxu0 0.0
  %129 = vmatpush1.msra.mxu0 0.0
  %130 = vmatprep.subr.mxu0 0.0
  %131 = vmatpush1.msra.mxu0 0.0
  %132 = vmatprep.subr.mxu0 0.0
  %133 = vmatpush1.msra.mxu0 0.0
  %134 = vmatprep.subr.mxu0 0.0
  %135 = vmatpush1.msra.mxu0 0.0
  %136 = vmatprep.subr.mxu0 0.0
  %137 = vmatpush1.msra.mxu0 0.0
  %138 = vmatprep.subr.mxu0 0.0
  %139 = vmatpush1.msra.mxu0 0.0
  %140 = vmatprep.subr.mxu0 0.0
  %141 = vmatpush1.msra.mxu0 0.0
  %142 = vmatprep.subr.mxu0 0.0
  %143 = vmatpush1.msra.mxu0 0.0
  %144 = vmatprep.subr.mxu0 0.0
  %145 = vmatpush1.msra.mxu0 0.0
  %146 = vmatprep.subr.mxu0 0.0
  %147 = vmatpush1.msra.mxu0 0.0
  %148 = vmatprep.subr.mxu0 0.0
  %149 = vmatpush1.msra.mxu0 0.0
  %150 = vmatprep.mubr.f32.mxu0 0.0
  %151 = vmatmul.mubr.f32.gmra.mrb[0].mxu0 %v81
  %v152 = vpop.f32.mrb[0].mxu0
  %v153 = vadd.f32 %v77, %v152
  %v154 = vpop.f32.mrb[0].mxu0
  %155 = vmatprep.mubr.f32.mxu0 0.0
  %156 = vmatmul.mubr.f32.gmra.mrb[0].mxu0 %v84
  %v157 = vpop.f32.mrb[0].mxu0
  %v158 = vadd.f32 %v77, %v157
  %v159 = vpop.f32.mrb[0].mxu0
  %160 = vdwg.mxu0
  %v161 = vld [vmem:[%s7] sm:$0xff]
  %v162 = vld [vmem:[%s7 + $0x8] sm:$0xff]
  %v163 = vld [vmem:[%s7 + $0x10] sm:$0xff]
  %v164 = vld [vmem:[%s7 + $0x18] sm:$0xff]
  %v165 = vld [vmem:[%s8] sm:$0x1]
  %v167 = vlaneseq
  %v168 = vshrl.u32 %v167, 7
  %v169 = vsub.s32 0, %v168
  %v170 = vrot.slane %v165, %v169
  %v173 = vsel %vm79, %v64, 0
  %v176 = vsel %vm79, %v65, 0
  %v179 = vsel %vm79, %v66, 0
  %v182 = vsel %vm79, %v67, 0
  %184 = vmatprep.subr.mxu0 0.0
  %185 = vmatpush1.msra.mxu0 %v161
  %186 = vmatprep.subr.mxu0 0.0
  %187 = vmatpush1.msra.mxu0 %v162
  %188 = vmatprep.subr.mxu0 0.0
  %189 = vmatpush1.msra.mxu0 %v163
  %190 = vmatprep.subr.mxu0 0.0
  %191 = vmatpush1.msra.mxu0 %v164
  %192 = vmatprep.subr.mxu0 0.0
  %193 = vmatpush1.msra.mxu0 0.0
  %194 = vmatprep.subr.mxu0 0.0
  %195 = vmatpush1.msra.mxu0 0.0
  %196 = vmatprep.subr.mxu0 0.0
  %197 = vmatpush1.msra.mxu0 0.0
  %198 = vmatprep.subr.mxu0 0.0
  %199 = vmatpush1.msra.mxu0 0.0
  %200 = vmatprep.subr.mxu0 0.0
  %201 = vmatpush1.msra.mxu0 0.0
  %202 = vmatprep.subr.mxu0 0.0
  %203 = vmatpush1.msra.mxu0 0.0
  %204 = vmatprep.subr.mxu0 0.0
  %205 = vmatpush1.msra.mxu0 0.0
  %206 = vmatprep.subr.mxu0 0.0
  %207 = vmatpush1.msra.mxu0 0.0
  %208 = vmatprep.subr.mxu0 0.0
  %209 = vmatpush1.msra.mxu0 0.0
  %210 = vmatprep.subr.mxu0 0.0
  %211 = vmatpush1.msra.mxu0 0.0
  %212 = vmatprep.subr.mxu0 0.0
  %213 = vmatpush1.msra.mxu0 0.0
  %214 = vmatprep.subr.mxu0 0.0
  %215 = vmatpush1.msra.mxu0 0.0
  %216 = vmatprep.subr.mxu0 0.0
  %217 = vmatpush1.msra.mxu0 0.0
  %218 = vmatprep.subr.mxu0 0.0
  %219 = vmatpush1.msra.mxu0 0.0
  %220 = vmatprep.subr.mxu0 0.0
  %221 = vmatpush1.msra.mxu0 0.0
  %222 = vmatprep.subr.mxu0 0.0
  %223 = vmatpush1.msra.mxu0 0.0
  %224 = vmatprep.subr.mxu0 0.0
  %225 = vmatpush1.msra.mxu0 0.0
  %226 = vmatprep.subr.mxu0 0.0
  %227 = vmatpush1.msra.mxu0 0.0
  %228 = vmatprep.subr.mxu0 0.0
  %229 = vmatpush1.msra.mxu0 0.0
  %230 = vmatprep.subr.mxu0 0.0
  %231 = vmatpush1.msra.mxu0 0.0
  %232 = vmatprep.subr.mxu0 0.0
  %233 = vmatpush1.msra.mxu0 0.0
  %234 = vmatprep.subr.mxu0 0.0
  %235 = vmatpush1.msra.mxu0 0.0
  %236 = vmatprep.subr.mxu0 0.0
  %237 = vmatpush1.msra.mxu0 0.0
  %238 = vmatprep.subr.mxu0 0.0
  %239 = vmatpush1.msra.mxu0 0.0
  %240 = vmatprep.subr.mxu0 0.0
  %241 = vmatpush1.msra.mxu0 0.0
  %242 = vmatprep.subr.mxu0 0.0
  %243 = vmatpush1.msra.mxu0 0.0
  %244 = vmatprep.subr.mxu0 0.0
  %245 = vmatpush1.msra.mxu0 0.0
  %246 = vmatprep.subr.mxu0 0.0
  %247 = vmatpush1.msra.mxu0 0.0
  %248 = vmatprep.mubr.f32.mxu0 0.0
  %249 = vmatmul.mubr.f32.gmra.mrb[0].mxu0 %v173
  %v250 = vpop.f32.mrb[0].mxu0
  %v251 = vadd.f32 %v170, %v250
  %v252 = vpop.f32.mrb[0].mxu0
  %253 = vmatprep.mubr.f32.mxu0 0.0
  %254 = vmatmul.mubr.f32.gmra.mrb[0].mxu0 %v176
  %v255 = vpop.f32.mrb[0].mxu0
  %v256 = vadd.f32 %v170, %v255
  %v257 = vpop.f32.mrb[0].mxu0
  %258 = vmatprep.mubr.f32.mxu0 0.0
  %259 = vmatmul.mubr.f32.gmra.mrb[0].mxu0 %v179
  %v260 = vpop.f32.mrb[0].mxu0
  %v261 = vadd.f32 %v170, %v260
  %v262 = vpop.f32.mrb[0].mxu0
  %263 = vmatprep.mubr.f32.mxu0 0.0
  %264 = vmatmul.mubr.f32.gmra.mrb[0].mxu0 %v182
  %v265 = vpop.f32.mrb[0].mxu0
  %v266 = vadd.f32 %v170, %v265
  %v267 = vpop.f32.mrb[0].mxu0
  %268 = vdwg.mxu0
  %v269 = vld [vmem:[%s9] sm:$0xff]
  %v270 = vld [vmem:[%s9 + $0x8] sm:$0xff]
  %v271 = vld [vmem:[%s9 + $0x10] sm:$0xff]
  %v272 = vld [vmem:[%s9 + $0x18] sm:$0xff]
  %v273 = vld [vmem:[%s10] sm:$0x1]
  %v275 = vlaneseq
  %v276 = vshrl.u32 %v275, 7
  %v277 = vsub.s32 0, %v276
  %v278 = vrot.slane %v273, %v277
  %v281 = vsel %vm79, %v56, 0
  %v284 = vsel %vm79, %v57, 0
  %v287 = vsel %vm79, %v58, 0
  %v290 = vsel %vm79, %v59, 0
  %292 = vmatprep.subr.mxu0 0.0
  %293 = vmatpush1.msra.mxu0 %v269
  %294 = vmatprep.subr.mxu0 0.0
  %295 = vmatpush1.msra.mxu0 %v270
  %296 = vmatprep.subr.mxu0 0.0
  %297 = vmatpush1.msra.mxu0 %v271
  %298 = vmatprep.subr.mxu0 0.0
  %299 = vmatpush1.msra.mxu0 %v272
  %300 = vmatprep.subr.mxu0 0.0
  %301 = vmatpush1.msra.mxu0 0.0
  %302 = vmatprep.subr.mxu0 0.0
  %303 = vmatpush1.msra.mxu0 0.0
  %304 = vmatprep.subr.mxu0 0.0
  %305 = vmatpush1.msra.mxu0 0.0
  %306 = vmatprep.subr.mxu0 0.0
  %307 = vmatpush1.msra.mxu0 0.0
  %308 = vmatprep.subr.mxu0 0.0
  %309 = vmatpush1.msra.mxu0 0.0
  %310 = vmatprep.subr.mxu0 0.0
  %311 = vmatpush1.msra.mxu0 0.0
  %312 = vmatprep.subr.mxu0 0.0
  %313 = vmatpush1.msra.mxu0 0.0
  %314 = vmatprep.subr.mxu0 0.0
  %315 = vmatpush1.msra.mxu0 0.0
  %316 = vmatprep.subr.mxu0 0.0
  %317 = vmatpush1.msra.mxu0 0.0
  %318 = vmatprep.subr.mxu0 0.0
  %319 = vmatpush1.msra.mxu0 0.0
  %320 = vmatprep.subr.mxu0 0.0
  %321 = vmatpush1.msra.mxu0 0.0
  %322 = vmatprep.subr.mxu0 0.0
  %323 = vmatpush1.msra.mxu0 0.0
  %324 = vmatprep.subr.mxu0 0.0
  %325 = vmatpush1.msra.mxu0 0.0
  %326 = vmatprep.subr.mxu0 0.0
  %327 = vmatpush1.msra.mxu0 0.0
  %328 = vmatprep.subr.mxu0 0.0
  %329 = vmatpush1.msra.mxu0 0.0
  %330 = vmatprep.subr.mxu0 0.0
  %331 = vmatpush1.msra.mxu0 0.0
  %332 = vmatprep.subr.mxu0 0.0
  %333 = vmatpush1.msra.mxu0 0.0
  %334 = vmatprep.subr.mxu0 0.0
  %335 = vmatpush1.msra.mxu0 0.0
  %336 = vmatprep.subr.mxu0 0.0
  %337 = vmatpush1.msra.mxu0 0.0
  %338 = vmatprep.subr.mxu0 0.0
  %339 = vmatpush1.msra.mxu0 0.0
  %340 = vmatprep.subr.mxu0 0.0
  %341 = vmatpush1.msra.mxu0 0.0
  %342 = vmatprep.subr.mxu0 0.0
  %343 = vmatpush1.msra.mxu0 0.0
  %344 = vmatprep.subr.mxu0 0.0
  %345 = vmatpush1.msra.mxu0 0.0
  %346 = vmatprep.subr.mxu0 0.0
  %347 = vmatpush1.msra.mxu0 0.0
  %348 = vmatprep.subr.mxu0 0.0
  %349 = vmatpush1.msra.mxu0 0.0
  %350 = vmatprep.subr.mxu0 0.0
  %351 = vmatpush1.msra.mxu0 0.0
  %352 = vmatprep.subr.mxu0 0.0
  %353 = vmatpush1.msra.mxu0 0.0
  %354 = vmatprep.subr.mxu0 0.0
  %355 = vmatpush1.msra.mxu0 0.0
  %356 = vmatprep.mubr.f32.mxu0 0.0
  %357 = vmatmul.mubr.f32.gmra.mrb[0].mxu0 %v281
  %v358 = vpop.f32.mrb[0].mxu0
  %v359 = vadd.f32 %v278, %v358
  %v360 = vpop.f32.mrb[0].mxu0
  %361 = vmatprep.mubr.f32.mxu0 0.0
  %362 = vmatmul.mubr.f32.gmra.mrb[0].mxu0 %v284
  %v363 = vpop.f32.mrb[0].mxu0
  %v364 = vadd.f32 %v278, %v363
  %v365 = vpop.f32.mrb[0].mxu0
  %366 = vmatprep.mubr.f32.mxu0 0.0
  %367 = vmatmul.mubr.f32.gmra.mrb[0].mxu0 %v287
  %v368 = vpop.f32.mrb[0].mxu0
  %v369 = vadd.f32 %v278, %v368
  %v370 = vpop.f32.mrb[0].mxu0
  %371 = vmatprep.mubr.f32.mxu0 0.0
  %372 = vmatmul.mubr.f32.gmra.mrb[0].mxu0 %v290
  %v373 = vpop.f32.mrb[0].mxu0
  %v374 = vadd.f32 %v278, %v373
  %v375 = vpop.f32.mrb[0].mxu0
  %376 = vdwg.mxu0
  %v377 = vld [vmem:[%s4] sm:$0x3]
  %v378 = vld [vmem:[%s11] sm:$0xff]
  %v379 = vld [vmem:[%s11 + $0x8] sm:$0xff]
  %v380 = vld [vmem:[%s11 + $0x10] sm:$0xff]
  %v381 = vld [vmem:[%s11 + $0x18] sm:$0xff]
  %v382 = vld [vmem:[%s12] sm:$0x1]
  %v384 = vlaneseq
  %v385 = vshrl.u32 %v384, 7
  %v386 = vsub.s32 0, %v385
  %v387 = vrot.slane %v382, %v386
  %v389 = vld [vmem:[%s13] sm:$0x1]
  %v390 = vld [vmem:[%s14] sm:$0x1]
  %v391 = vlaneseq
  %v392 = vshrl.u32 %v391, 7
  %v393 = vsub.s32 0, %v392
  %v394 = vrot.slane %v377, %v393
  %vm395 = vcmask 64512
  %v397 = vsel %vm395, %v153, 0
  %v400 = vsel %vm395, %v251, 0
  %v403 = vsel %vm395, %v256, 0
  %405 = vmatprep.subr.mxu0 0.0
  %406 = vmatpush1.xpose.msra.mxu0 %v400
  %407 = vmatprep.subr.mxu0 0.0
  %408 = vmatpush1.xpose.msra.mxu0 %v403
  %409 = vmatprep.subr.mxu0 0.0
  %410 = vmatpush1.xpose.msra.mxu0 0.0
  %411 = vmatprep.subr.mxu0 0.0
  %412 = vmatpush1.xpose.msra.mxu0 0.0
  %413 = vmatprep.subr.mxu0 0.0
  %414 = vmatpush1.xpose.msra.mxu0 0.0
  %415 = vmatprep.subr.mxu0 0.0
  %416 = vmatpush1.xpose.msra.mxu0 0.0
  %417 = vmatprep.subr.mxu0 0.0
  %418 = vmatpush1.xpose.msra.mxu0 0.0
  %419 = vmatprep.subr.mxu0 0.0
  %420 = vmatpush1.xpose.msra.mxu0 0.0
  %421 = vmatprep.subr.mxu0 0.0
  %422 = vmatpush1.xpose.msra.mxu0 0.0
  %423 = vmatprep.subr.mxu0 0.0
  %424 = vmatpush1.xpose.msra.mxu0 0.0
  %425 = vmatprep.subr.mxu0 0.0
  %426 = vmatpush1.xpose.msra.mxu0 0.0
  %427 = vmatprep.subr.mxu0 0.0
  %428 = vmatpush1.xpose.msra.mxu0 0.0
  %429 = vmatprep.subr.mxu0 0.0
  %430 = vmatpush1.xpose.msra.mxu0 0.0
  %431 = vmatprep.subr.mxu0 0.0
  %432 = vmatpush1.xpose.msra.mxu0 0.0
  %433 = vmatprep.subr.mxu0 0.0
  %434 = vmatpush1.xpose.msra.mxu0 0.0
  %435 = vmatprep.subr.mxu0 0.0
  %436 = vmatpush1.xpose.msra.mxu0 0.0
  %437 = vmatprep.subr.mxu0 0.0
  %438 = vmatpush1.xpose.msra.mxu0 0.0
  %439 = vmatprep.subr.mxu0 0.0
  %440 = vmatpush1.xpose.msra.mxu0 0.0
  %441 = vmatprep.subr.mxu0 0.0
  %442 = vmatpush1.xpose.msra.mxu0 0.0
  %443 = vmatprep.subr.mxu0 0.0
  %444 = vmatpush1.xpose.msra.mxu0 0.0
  %445 = vmatprep.subr.mxu0 0.0
  %446 = vmatpush1.xpose.msra.mxu0 0.0
  %447 = vmatprep.subr.mxu0 0.0
  %448 = vmatpush1.xpose.msra.mxu0 0.0
  %449 = vmatprep.subr.mxu0 0.0
  %450 = vmatpush1.xpose.msra.mxu0 0.0
  %451 = vmatprep.subr.mxu0 0.0
  %452 = vmatpush1.xpose.msra.mxu0 0.0
  %453 = vmatprep.subr.mxu0 0.0
  %454 = vmatpush1.xpose.msra.mxu0 0.0
  %455 = vmatprep.subr.mxu0 0.0
  %456 = vmatpush1.xpose.msra.mxu0 0.0
  %457 = vmatprep.subr.mxu0 0.0
  %458 = vmatpush1.xpose.msra.mxu0 0.0
  %459 = vmatprep.subr.mxu0 0.0
  %460 = vmatpush1.xpose.msra.mxu0 0.0
  %461 = vmatprep.subr.mxu0 0.0
  %462 = vmatpush1.xpose.msra.mxu0 0.0
  %463 = vmatprep.subr.mxu0 0.0
  %464 = vmatpush1.xpose.msra.mxu0 0.0
  %465 = vmatprep.subr.mxu0 0.0
  %466 = vmatpush1.xpose.msra.mxu0 0.0
  %467 = vmatprep.subr.mxu0 0.0
  %468 = vmatpush1.xpose.msra.mxu0 0.0
  %469 = vmatprep.mubr.f32.mxu0 0.0
  %470 = vmatmul.mubr.f32.gmra.mrb[0].mxu0 %v397
  %v471 = vpop.f32.mrb[0].mxu0
  %v472 = vadd.f32 %v394, %v471
  %v473 = vpop.f32.mrb[0].mxu0
  %474 = vdwg.mxu0
  %vm475 = vcmask 130048
  %v476 = vsel %vm475, %v472, -inf
  %477 = vmax.xlane.f32.xlu0 %v476
  %v478 = vpop.xlane.xlu0 %477
  %v479 = vsub.f32 %v472, %v478
  %v480 = vmul.f32 %v479, 1.442695
  %v481 = vpow.pop %v480
  %v482 = vsel %vm475, %v481, 0.0
  %483 = vadd.xlane.f32.xlu0 %v482
  %v484 = vpop.xlane.xlu0 %483
  %v486 = vsel %vm475, %v481, 0
  %488 = vmatprep.subr.mxu0 0.0
  %489 = vmatpush1.msra.mxu0 %v359
  %490 = vmatprep.subr.mxu0 0.0
  %491 = vmatpush1.msra.mxu0 %v364
  %492 = vmatprep.subr.mxu0 0.0
  %493 = vmatpush1.msra.mxu0 0.0
  %494 = vmatprep.subr.mxu0 0.0
  %495 = vmatpush1.msra.mxu0 0.0
  %496 = vmatprep.subr.mxu0 0.0
  %497 = vmatpush1.msra.mxu0 0.0
  %498 = vmatprep.subr.mxu0 0.0
  %499 = vmatpush1.msra.mxu0 0.0
  %500 = vmatprep.subr.mxu0 0.0
  %501 = vmatpush1.msra.mxu0 0.0
  %502 = vmatprep.subr.mxu0 0.0
  %503 = vmatpush1.msra.mxu0 0.0
  %504 = vmatprep.subr.mxu0 0.0
  %505 = vmatpush1.msra.mxu0 0.0
  %506 = vmatprep.subr.mxu0 0.0
  %507 = vmatpush1.msra.mxu0 0.0
  %508 = vmatprep.subr.mxu0 0.0
  %509 = vmatpush1.msra.mxu0 0.0
  %510 = vmatprep.subr.mxu0 0.0
  %511 = vmatpush1.msra.mxu0 0.0
  %512 = vmatprep.subr.mxu0 0.0
  %513 = vmatpush1.msra.mxu0 0.0
  %514 = vmatprep.subr.mxu0 0.0
  %515 = vmatpush1.msra.mxu0 0.0
  %516 = vmatprep.subr.mxu0 0.0
  %517 = vmatpush1.msra.mxu0 0.0
  %518 = vmatprep.subr.mxu0 0.0
  %519 = vmatpush1.msra.mxu0 0.0
  %520 = vmatprep.subr.mxu0 0.0
  %521 = vmatpush1.msra.mxu0 0.0
  %522 = vmatprep.subr.mxu0 0.0
  %523 = vmatpush1.msra.mxu0 0.0
  %524 = vmatprep.subr.mxu0 0.0
  %525 = vmatpush1.msra.mxu0 0.0
  %526 = vmatprep.subr.mxu0 0.0
  %527 = vmatpush1.msra.mxu0 0.0
  %528 = vmatprep.subr.mxu0 0.0
  %529 = vmatpush1.msra.mxu0 0.0
  %530 = vmatprep.subr.mxu0 0.0
  %531 = vmatpush1.msra.mxu0 0.0
  %532 = vmatprep.subr.mxu0 0.0
  %533 = vmatpush1.msra.mxu0 0.0
  %534 = vmatprep.subr.mxu0 0.0
  %535 = vmatpush1.msra.mxu0 0.0
  %536 = vmatprep.subr.mxu0 0.0
  %537 = vmatpush1.msra.mxu0 0.0
  %538 = vmatprep.subr.mxu0 0.0
  %539 = vmatpush1.msra.mxu0 0.0
  %540 = vmatprep.subr.mxu0 0.0
  %541 = vmatpush1.msra.mxu0 0.0
  %542 = vmatprep.subr.mxu0 0.0
  %543 = vmatpush1.msra.mxu0 0.0
  %544 = vmatprep.subr.mxu0 0.0
  %545 = vmatpush1.msra.mxu0 0.0
  %546 = vmatprep.subr.mxu0 0.0
  %547 = vmatpush1.msra.mxu0 0.0
  %548 = vmatprep.subr.mxu0 0.0
  %549 = vmatpush1.msra.mxu0 0.0
  %550 = vmatprep.subr.mxu0 0.0
  %551 = vmatpush1.msra.mxu0 0.0
  %552 = vmatprep.mubr.f32.mxu0 0.0
  %553 = vmatmul.mubr.f32.gmra.mrb[0].mxu0 %v486
  %v554 = vpop.f32.mrb[0].mxu0
  %v555 = vadd.f32 0.0, %v554
  %v556 = vpop.f32.mrb[0].mxu0
  %557 = vdwg.mxu0
  %v558 = vrcp.pop %v484
  %v559 = vmul.f32 %v555, %v558
  %v561 = vsel %vm395, %v559, 0
  %563 = vmatprep.subr.mxu0 0.0
  %564 = vmatpush1.msra.mxu0 %v378
  %565 = vmatprep.subr.mxu0 0.0
  %566 = vmatpush1.msra.mxu0 0.0
  %567 = vmatprep.subr.mxu0 0.0
  %568 = vmatpush1.msra.mxu0 0.0
  %569 = vmatprep.subr.mxu0 0.0
  %570 = vmatpush1.msra.mxu0 0.0
  %571 = vmatprep.subr.mxu0 0.0
  %572 = vmatpush1.msra.mxu0 0.0
  %573 = vmatprep.subr.mxu0 0.0
  %574 = vmatpush1.msra.mxu0 0.0
  %575 = vmatprep.subr.mxu0 0.0
  %576 = vmatpush1.msra.mxu0 0.0
  %577 = vmatprep.subr.mxu0 0.0
  %578 = vmatpush1.msra.mxu0 0.0
  %579 = vmatprep.subr.mxu0 0.0
  %580 = vmatpush1.msra.mxu0 0.0
  %581 = vmatprep.subr.mxu0 0.0
  %582 = vmatpush1.msra.mxu0 0.0
  %583 = vmatprep.subr.mxu0 0.0
  %584 = vmatpush1.msra.mxu0 0.0
  %585 = vmatprep.subr.mxu0 0.0
  %586 = vmatpush1.msra.mxu0 0.0
  %587 = vmatprep.subr.mxu0 0.0
  %588 = vmatpush1.msra.mxu0 0.0
  %589 = vmatprep.subr.mxu0 0.0
  %590 = vmatpush1.msra.mxu0 0.0
  %591 = vmatprep.subr.mxu0 0.0
  %592 = vmatpush1.msra.mxu0 0.0
  %593 = vmatprep.subr.mxu0 0.0
  %594 = vmatpush1.msra.mxu0 0.0
  %595 = vmatprep.subr.mxu0 0.0
  %596 = vmatpush1.msra.mxu0 0.0
  %597 = vmatprep.subr.mxu0 0.0
  %598 = vmatpush1.msra.mxu0 0.0
  %599 = vmatprep.subr.mxu0 0.0
  %600 = vmatpush1.msra.mxu0 0.0
  %601 = vmatprep.subr.mxu0 0.0
  %602 = vmatpush1.msra.mxu0 0.0
  %603 = vmatprep.subr.mxu0 0.0
  %604 = vmatpush1.msra.mxu0 0.0
  %605 = vmatprep.subr.mxu0 0.0
  %606 = vmatpush1.msra.mxu0 0.0
  %607 = vmatprep.subr.mxu0 0.0
  %608 = vmatpush1.msra.mxu0 0.0
  %609 = vmatprep.subr.mxu0 0.0
  %610 = vmatpush1.msra.mxu0 0.0
  %611 = vmatprep.subr.mxu0 0.0
  %612 = vmatpush1.msra.mxu0 0.0
  %613 = vmatprep.subr.mxu0 0.0
  %614 = vmatpush1.msra.mxu0 0.0
  %615 = vmatprep.subr.mxu0 0.0
  %616 = vmatpush1.msra.mxu0 0.0
  %617 = vmatprep.subr.mxu0 0.0
  %618 = vmatpush1.msra.mxu0 0.0
  %619 = vmatprep.subr.mxu0 0.0
  %620 = vmatpush1.msra.mxu0 0.0
  %621 = vmatprep.subr.mxu0 0.0
  %622 = vmatpush1.msra.mxu0 0.0
  %623 = vmatprep.subr.mxu0 0.0
  %624 = vmatpush1.msra.mxu0 0.0
  %625 = vmatprep.subr.mxu0 0.0
  %626 = vmatpush1.msra.mxu0 0.0
  %627 = vmatprep.mubr.f32.mxu0 0.0
  %628 = vmatmul.mubr.f32.gmra.mrb[0].mxu0 %v561
  %v629 = vpop.f32.mrb[0].mxu0
  %v630 = vadd.f32 0.0, %v629
  %v631 = vpop.f32.mrb[0].mxu0
  %632 = vdwg.mxu0
  %v633 = vadd.f32 %v387, %v630
  %634 = vrot.lane.b32.xlu0 %v153, 120
  %v635 = vpop.permute.xlu0 %634
  %636 = vrot.lane.b32.xlu0 %v251, 120
  %v637 = vpop.permute.xlu0 %636
  %638 = vrot.lane.b32.xlu0 %v256, 120
  %v639 = vpop.permute.xlu0 %638
  %v640 = vsel %vm395, %v635, 0
  %v642 = vsel %vm395, %v637, 0
  %v644 = vsel %vm395, %v639, 0
  %646 = vmatprep.subr.mxu0 0.0
  %647 = vmatpush1.xpose.msra.mxu0 %v642
  %648 = vmatprep.subr.mxu0 0.0
  %649 = vmatpush1.xpose.msra.mxu0 %v644
  %650 = vmatprep.subr.mxu0 0.0
  %651 = vmatpush1.xpose.msra.mxu0 0.0
  %652 = vmatprep.subr.mxu0 0.0
  %653 = vmatpush1.xpose.msra.mxu0 0.0
  %654 = vmatprep.subr.mxu0 0.0
  %655 = vmatpush1.xpose.msra.mxu0 0.0
  %656 = vmatprep.subr.mxu0 0.0
  %657 = vmatpush1.xpose.msra.mxu0 0.0
  %658 = vmatprep.subr.mxu0 0.0
  %659 = vmatpush1.xpose.msra.mxu0 0.0
  %660 = vmatprep.subr.mxu0 0.0
  %661 = vmatpush1.xpose.msra.mxu0 0.0
  %662 = vmatprep.subr.mxu0 0.0
  %663 = vmatpush1.xpose.msra.mxu0 0.0
  %664 = vmatprep.subr.mxu0 0.0
  %665 = vmatpush1.xpose.msra.mxu0 0.0
  %666 = vmatprep.subr.mxu0 0.0
  %667 = vmatpush1.xpose.msra.mxu0 0.0
  %668 = vmatprep.subr.mxu0 0.0
  %669 = vmatpush1.xpose.msra.mxu0 0.0
  %670 = vmatprep.subr.mxu0 0.0
  %671 = vmatpush1.xpose.msra.mxu0 0.0
  %672 = vmatprep.subr.mxu0 0.0
  %673 = vmatpush1.xpose.msra.mxu0 0.0
  %674 = vmatprep.subr.mxu0 0.0
  %675 = vmatpush1.xpose.msra.mxu0 0.0
  %676 = vmatprep.subr.mxu0 0.0
  %677 = vmatpush1.xpose.msra.mxu0 0.0
  %678 = vmatprep.subr.mxu0 0.0
  %679 = vmatpush1.xpose.msra.mxu0 0.0
  %680 = vmatprep.subr.mxu0 0.0
  %681 = vmatpush1.xpose.msra.mxu0 0.0
  %682 = vmatprep.subr.mxu0 0.0
  %683 = vmatpush1.xpose.msra.mxu0 0.0
  %684 = vmatprep.subr.mxu0 0.0
  %685 = vmatpush1.xpose.msra.mxu0 0.0
  %686 = vmatprep.subr.mxu0 0.0
  %687 = vmatpush1.xpose.msra.mxu0 0.0
  %688 = vmatprep.subr.mxu0 0.0
  %689 = vmatpush1.xpose.msra.mxu0 0.0
  %690 = vmatprep.subr.mxu0 0.0
  %691 = vmatpush1.xpose.msra.mxu0 0.0
  %692 = vmatprep.subr.mxu0 0.0
  %693 = vmatpush1.xpose.msra.mxu0 0.0
  %694 = vmatprep.subr.mxu0 0.0
  %695 = vmatpush1.xpose.msra.mxu0 0.0
  %696 = vmatprep.subr.mxu0 0.0
  %697 = vmatpush1.xpose.msra.mxu0 0.0
  %698 = vmatprep.subr.mxu0 0.0
  %699 = vmatpush1.xpose.msra.mxu0 0.0
  %700 = vmatprep.subr.mxu0 0.0
  %701 = vmatpush1.xpose.msra.mxu0 0.0
  %702 = vmatprep.subr.mxu0 0.0
  %703 = vmatpush1.xpose.msra.mxu0 0.0
  %704 = vmatprep.subr.mxu0 0.0
  %705 = vmatpush1.xpose.msra.mxu0 0.0
  %706 = vmatprep.subr.mxu0 0.0
  %707 = vmatpush1.xpose.msra.mxu0 0.0
  %708 = vmatprep.subr.mxu0 0.0
  %709 = vmatpush1.xpose.msra.mxu0 0.0
  %710 = vmatprep.mubr.f32.mxu0 0.0
  %711 = vmatmul.mubr.f32.gmra.mrb[0].mxu0 %v640
  %v712 = vpop.f32.mrb[0].mxu0
  %v713 = vadd.f32 %v394, %v712
  %v714 = vpop.f32.mrb[0].mxu0
  %715 = vdwg.mxu0
  %v716 = vsel %vm475, %v713, -inf
  %717 = vmax.xlane.f32.xlu0 %v716
  %v718 = vpop.xlane.xlu0 %717
  %v719 = vsub.f32 %v713, %v718
  %v720 = vmul.f32 %v719, 1.442695
  %v721 = vpow.pop %v720
  %v722 = vsel %vm475, %v721, 0.0
  %723 = vadd.xlane.f32.xlu0 %v722
  %v724 = vpop.xlane.xlu0 %723
  %727 = vrot.lane.b32.xlu0 %v359, 120
  %v728 = vpop.permute.xlu0 %727
  %729 = vrot.lane.b32.xlu0 %v364, 120
  %v730 = vpop.permute.xlu0 %729
  %v734 = vsel %vm475, %v721, 0
  %736 = vmatprep.subr.mxu0 0.0
  %737 = vmatpush1.msra.mxu0 %v728
  %738 = vmatprep.subr.mxu0 0.0
  %739 = vmatpush1.msra.mxu0 %v730
  %740 = vmatprep.subr.mxu0 0.0
  %741 = vmatpush1.msra.mxu0 0.0
  %742 = vmatprep.subr.mxu0 0.0
  %743 = vmatpush1.msra.mxu0 0.0
  %744 = vmatprep.subr.mxu0 0.0
  %745 = vmatpush1.msra.mxu0 0.0
  %746 = vmatprep.subr.mxu0 0.0
  %747 = vmatpush1.msra.mxu0 0.0
  %748 = vmatprep.subr.mxu0 0.0
  %749 = vmatpush1.msra.mxu0 0.0
  %750 = vmatprep.subr.mxu0 0.0
  %751 = vmatpush1.msra.mxu0 0.0
  %752 = vmatprep.subr.mxu0 0.0
  %753 = vmatpush1.msra.mxu0 0.0
  %754 = vmatprep.subr.mxu0 0.0
  %755 = vmatpush1.msra.mxu0 0.0
  %756 = vmatprep.subr.mxu0 0.0
  %757 = vmatpush1.msra.mxu0 0.0
  %758 = vmatprep.subr.mxu0 0.0
  %759 = vmatpush1.msra.mxu0 0.0
  %760 = vmatprep.subr.mxu0 0.0
  %761 = vmatpush1.msra.mxu0 0.0
  %762 = vmatprep.subr.mxu0 0.0
  %763 = vmatpush1.msra.mxu0 0.0
  %764 = vmatprep.subr.mxu0 0.0
  %765 = vmatpush1.msra.mxu0 0.0
  %766 = vmatprep.subr.mxu0 0.0
  %767 = vmatpush1.msra.mxu0 0.0
  %768 = vmatprep.subr.mxu0 0.0
  %769 = vmatpush1.msra.mxu0 0.0
  %770 = vmatprep.subr.mxu0 0.0
  %771 = vmatpush1.msra.mxu0 0.0
  %772 = vmatprep.subr.mxu0 0.0
  %773 = vmatpush1.msra.mxu0 0.0
  %774 = vmatprep.subr.mxu0 0.0
  %775 = vmatpush1.msra.mxu0 0.0
  %776 = vmatprep.subr.mxu0 0.0
  %777 = vmatpush1.msra.mxu0 0.0
  %778 = vmatprep.subr.mxu0 0.0
  %779 = vmatpush1.msra.mxu0 0.0
  %780 = vmatprep.subr.mxu0 0.0
  %781 = vmatpush1.msra.mxu0 0.0
  %782 = vmatprep.subr.mxu0 0.0
  %783 = vmatpush1.msra.mxu0 0.0
  %784 = vmatprep.subr.mxu0 0.0
  %785 = vmatpush1.msra.mxu0 0.0
  %786 = vmatprep.subr.mxu0 0.0
  %787 = vmatpush1.msra.mxu0 0.0
  %788 = vmatprep.subr.mxu0 0.0
  %789 = vmatpush1.msra.mxu0 0.0
  %790 = vmatprep.subr.mxu0 0.0
  %791 = vmatpush1.msra.mxu0 0.0
  %792 = vmatprep.subr.mxu0 0.0
  %793 = vmatpush1.msra.mxu0 0.0
  %794 = vmatprep.subr.mxu0 0.0
  %795 = vmatpush1.msra.mxu0 0.0
  %796 = vmatprep.subr.mxu0 0.0
  %797 = vmatpush1.msra.mxu0 0.0
  %798 = vmatprep.subr.mxu0 0.0
  %799 = vmatpush1.msra.mxu0 0.0
  %800 = vmatprep.mubr.f32.mxu0 0.0
  %801 = vmatmul.mubr.f32.gmra.mrb[0].mxu0 %v734
  %v802 = vpop.f32.mrb[0].mxu0
  %v803 = vadd.f32 0.0, %v802
  %v804 = vpop.f32.mrb[0].mxu0
  %805 = vdwg.mxu0
  %v806 = vrcp.pop %v724
  %v807 = vmul.f32 %v803, %v806
  %v809 = vsel %vm395, %v807, 0
  %811 = vmatprep.subr.mxu0 0.0
  %812 = vmatpush1.msra.mxu0 %v379
  %813 = vmatprep.subr.mxu0 0.0
  %814 = vmatpush1.msra.mxu0 0.0
  %815 = vmatprep.subr.mxu0 0.0
  %816 = vmatpush1.msra.mxu0 0.0
  %817 = vmatprep.subr.mxu0 0.0
  %818 = vmatpush1.msra.mxu0 0.0
  %819 = vmatprep.subr.mxu0 0.0
  %820 = vmatpush1.msra.mxu0 0.0
  %821 = vmatprep.subr.mxu0 0.0
  %822 = vmatpush1.msra.mxu0 0.0
  %823 = vmatprep.subr.mxu0 0.0
  %824 = vmatpush1.msra.mxu0 0.0
  %825 = vmatprep.subr.mxu0 0.0
  %826 = vmatpush1.msra.mxu0 0.0
  %827 = vmatprep.subr.mxu0 0.0
  %828 = vmatpush1.msra.mxu0 0.0
  %829 = vmatprep.subr.mxu0 0.0
  %830 = vmatpush1.msra.mxu0 0.0
  %831 = vmatprep.subr.mxu0 0.0
  %832 = vmatpush1.msra.mxu0 0.0
  %833 = vmatprep.subr.mxu0 0.0
  %834 = vmatpush1.msra.mxu0 0.0
  %835 = vmatprep.subr.mxu0 0.0
  %836 = vmatpush1.msra.mxu0 0.0
  %837 = vmatprep.subr.mxu0 0.0
  %838 = vmatpush1.msra.mxu0 0.0
  %839 = vmatprep.subr.mxu0 0.0
  %840 = vmatpush1.msra.mxu0 0.0
  %841 = vmatprep.subr.mxu0 0.0
  %842 = vmatpush1.msra.mxu0 0.0
  %843 = vmatprep.subr.mxu0 0.0
  %844 = vmatpush1.msra.mxu0 0.0
  %845 = vmatprep.subr.mxu0 0.0
  %846 = vmatpush1.msra.mxu0 0.0
  %847 = vmatprep.subr.mxu0 0.0
  %848 = vmatpush1.msra.mxu0 0.0
  %849 = vmatprep.subr.mxu0 0.0
  %850 = vmatpush1.msra.mxu0 0.0
  %851 = vmatprep.subr.mxu0 0.0
  %852 = vmatpush1.msra.mxu0 0.0
  %853 = vmatprep.subr.mxu0 0.0
  %854 = vmatpush1.msra.mxu0 0.0
  %855 = vmatprep.subr.mxu0 0.0
  %856 = vmatpush1.msra.mxu0 0.0
  %857 = vmatprep.subr.mxu0 0.0
  %858 = vmatpush1.msra.mxu0 0.0
  %859 = vmatprep.subr.mxu0 0.0
  %860 = vmatpush1.msra.mxu0 0.0
  %861 = vmatprep.subr.mxu0 0.0
  %862 = vmatpush1.msra.mxu0 0.0
  %863 = vmatprep.subr.mxu0 0.0
  %864 = vmatpush1.msra.mxu0 0.0
  %865 = vmatprep.subr.mxu0 0.0
  %866 = vmatpush1.msra.mxu0 0.0
  %867 = vmatprep.subr.mxu0 0.0
  %868 = vmatpush1.msra.mxu0 0.0
  %869 = vmatprep.subr.mxu0 0.0
  %870 = vmatpush1.msra.mxu0 0.0
  %871 = vmatprep.subr.mxu0 0.0
  %872 = vmatpush1.msra.mxu0 0.0
  %873 = vmatprep.subr.mxu0 0.0
  %874 = vmatpush1.msra.mxu0 0.0
  %875 = vmatprep.mubr.f32.mxu0 0.0
  %876 = vmatmul.mubr.f32.gmra.mrb[0].mxu0 %v809
  %v877 = vpop.f32.mrb[0].mxu0
  %v878 = vadd.f32 0.0, %v877
  %v879 = vpop.f32.mrb[0].mxu0
  %880 = vdwg.mxu0
  %v881 = vadd.f32 %v633, %v878
  %882 = vrot.lane.b32.xlu0 %v153, 112
  %v883 = vpop.permute.xlu0 %882
  %884 = vrot.lane.b32.xlu0 %v251, 112
  %v885 = vpop.permute.xlu0 %884
  %886 = vrot.lane.b32.xlu0 %v256, 112
  %v887 = vpop.permute.xlu0 %886
  %v888 = vsel %vm395, %v883, 0
  %v890 = vsel %vm395, %v885, 0
  %v892 = vsel %vm395, %v887, 0
  %894 = vmatprep.subr.mxu0 0.0
  %895 = vmatpush1.xpose.msra.mxu0 %v890
  %896 = vmatprep.subr.mxu0 0.0
  %897 = vmatpush1.xpose.msra.mxu0 %v892
  %898 = vmatprep.subr.mxu0 0.0
  %899 = vmatpush1.xpose.msra.mxu0 0.0
  %900 = vmatprep.subr.mxu0 0.0
  %901 = vmatpush1.xpose.msra.mxu0 0.0
  %902 = vmatprep.subr.mxu0 0.0
  %903 = vmatpush1.xpose.msra.mxu0 0.0
  %904 = vmatprep.subr.mxu0 0.0
  %905 = vmatpush1.xpose.msra.mxu0 0.0
  %906 = vmatprep.subr.mxu0 0.0
  %907 = vmatpush1.xpose.msra.mxu0 0.0
  %908 = vmatprep.subr.mxu0 0.0
  %909 = vmatpush1.xpose.msra.mxu0 0.0
  %910 = vmatprep.subr.mxu0 0.0
  %911 = vmatpush1.xpose.msra.mxu0 0.0
  %912 = vmatprep.subr.mxu0 0.0
  %913 = vmatpush1.xpose.msra.mxu0 0.0
  %914 = vmatprep.subr.mxu0 0.0
  %915 = vmatpush1.xpose.msra.mxu0 0.0
  %916 = vmatprep.subr.mxu0 0.0
  %917 = vmatpush1.xpose.msra.mxu0 0.0
  %918 = vmatprep.subr.mxu0 0.0
  %919 = vmatpush1.xpose.msra.mxu0 0.0
  %920 = vmatprep.subr.mxu0 0.0
  %921 = vmatpush1.xpose.msra.mxu0 0.0
  %922 = vmatprep.subr.mxu0 0.0
  %923 = vmatpush1.xpose.msra.mxu0 0.0
  %924 = vmatprep.subr.mxu0 0.0
  %925 = vmatpush1.xpose.msra.mxu0 0.0
  %926 = vmatprep.subr.mxu0 0.0
  %927 = vmatpush1.xpose.msra.mxu0 0.0
  %928 = vmatprep.subr.mxu0 0.0
  %929 = vmatpush1.xpose.msra.mxu0 0.0
  %930 = vmatprep.subr.mxu0 0.0
  %931 = vmatpush1.xpose.msra.mxu0 0.0
  %932 = vmatprep.subr.mxu0 0.0
  %933 = vmatpush1.xpose.msra.mxu0 0.0
  %934 = vmatprep.subr.mxu0 0.0
  %935 = vmatpush1.xpose.msra.mxu0 0.0
  %936 = vmatprep.subr.mxu0 0.0
  %937 = vmatpush1.xpose.msra.mxu0 0.0
  %938 = vmatprep.subr.mxu0 0.0
  %939 = vmatpush1.xpose.msra.mxu0 0.0
  %940 = vmatprep.subr.mxu0 0.0
  %941 = vmatpush1.xpose.msra.mxu0 0.0
  %942 = vmatprep.subr.mxu0 0.0
  %943 = vmatpush1.xpose.msra.mxu0 0.0
  %944 = vmatprep.subr.mxu0 0.0
  %945 = vmatpush1.xpose.msra.mxu0 0.0
  %946 = vmatprep.subr.mxu0 0.0
  %947 = vmatpush1.xpose.msra.mxu0 0.0
  %948 = vmatprep.subr.mxu0 0.0
  %949 = vmatpush1.xpose.msra.mxu0 0.0
  %950 = vmatprep.subr.mxu0 0.0
  %951 = vmatpush1.xpose.msra.mxu0 0.0
  %952 = vmatprep.subr.mxu0 0.0
  %953 = vmatpush1.xpose.msra.mxu0 0.0
  %954 = vmatprep.subr.mxu0 0.0
  %955 = vmatpush1.xpose.msra.mxu0 0.0
  %956 = vmatprep.subr.mxu0 0.0
  %957 = vmatpush1.xpose.msra.mxu0 0.0
  %958 = vmatprep.mubr.f32.mxu0 0.0
  %959 = vmatmul.mubr.f32.gmra.mrb[0].mxu0 %v888
  %v960 = vpop.f32.mrb[0].mxu0
  %v961 = vadd.f32 %v394, %v960
  %v962 = vpop.f32.mrb[0].mxu0
  %963 = vdwg.mxu0
  %v964 = vsel %vm475, %v961, -inf
  %965 = vmax.xlane.f32.xlu0 %v964
  %v966 = vpop.xlane.xlu0 %965
  %v967 = vsub.f32 %v961, %v966
  %v968 = vmul.f32 %v967, 1.442695
  %v969 = vpow.pop %v968
  %v970 = vsel %vm475, %v969, 0.0
  %971 = vadd.xlane.f32.xlu0 %v970
  %v972 = vpop.xlane.xlu0 %971
  %973 = vrot.lane.b32.xlu0 %v359, 112
  %v974 = vpop.permute.xlu0 %973
  %975 = vrot.lane.b32.xlu0 %v364, 112
  %v976 = vpop.permute.xlu0 %975
  %v980 = vsel %vm475, %v969, 0
  %982 = vmatprep.subr.mxu0 0.0
  %983 = vmatpush1.msra.mxu0 %v974
  %984 = vmatprep.subr.mxu0 0.0
  %985 = vmatpush1.msra.mxu0 %v976
  %986 = vmatprep.subr.mxu0 0.0
  %987 = vmatpush1.msra.mxu0 0.0
  %988 = vmatprep.subr.mxu0 0.0
  %989 = vmatpush1.msra.mxu0 0.0
  %990 = vmatprep.subr.mxu0 0.0
  %991 = vmatpush1.msra.mxu0 0.0
  %992 = vmatprep.subr.mxu0 0.0
  %993 = vmatpush1.msra.mxu0 0.0
  %994 = vmatprep.subr.mxu0 0.0
  %995 = vmatpush1.msra.mxu0 0.0
  %996 = vmatprep.subr.mxu0 0.0
  %997 = vmatpush1.msra.mxu0 0.0
  %998 = vmatprep.subr.mxu0 0.0
  %999 = vmatpush1.msra.mxu0 0.0
  %1000 = vmatprep.subr.mxu0 0.0
  %1001 = vmatpush1.msra.mxu0 0.0
  %1002 = vmatprep.subr.mxu0 0.0
  %1003 = vmatpush1.msra.mxu0 0.0
  %1004 = vmatprep.subr.mxu0 0.0
  %1005 = vmatpush1.msra.mxu0 0.0
  %1006 = vmatprep.subr.mxu0 0.0
  %1007 = vmatpush1.msra.mxu0 0.0
  %1008 = vmatprep.subr.mxu0 0.0
  %1009 = vmatpush1.msra.mxu0 0.0
  %1010 = vmatprep.subr.mxu0 0.0
  %1011 = vmatpush1.msra.mxu0 0.0
  %1012 = vmatprep.subr.mxu0 0.0
  %1013 = vmatpush1.msra.mxu0 0.0
  %1014 = vmatprep.subr.mxu0 0.0
  %1015 = vmatpush1.msra.mxu0 0.0
  %1016 = vmatprep.subr.mxu0 0.0
  %1017 = vmatpush1.msra.mxu0 0.0
  %1018 = vmatprep.subr.mxu0 0.0
  %1019 = vmatpush1.msra.mxu0 0.0
  %1020 = vmatprep.subr.mxu0 0.0
  %1021 = vmatpush1.msra.mxu0 0.0
  %1022 = vmatprep.subr.mxu0 0.0
  %1023 = vmatpush1.msra.mxu0 0.0
  %1024 = vmatprep.subr.mxu0 0.0
  %1025 = vmatpush1.msra.mxu0 0.0
  %1026 = vmatprep.subr.mxu0 0.0
  %1027 = vmatpush1.msra.mxu0 0.0
  %1028 = vmatprep.subr.mxu0 0.0
  %1029 = vmatpush1.msra.mxu0 0.0
  %1030 = vmatprep.subr.mxu0 0.0
  %1031 = vmatpush1.msra.mxu0 0.0
  %1032 = vmatprep.subr.mxu0 0.0
  %1033 = vmatpush1.msra.mxu0 0.0
  %1034 = vmatprep.subr.mxu0 0.0
  %1035 = vmatpush1.msra.mxu0 0.0
  %1036 = vmatprep.subr.mxu0 0.0
  %1037 = vmatpush1.msra.mxu0 0.0
  %1038 = vmatprep.subr.mxu0 0.0
  %1039 = vmatpush1.msra.mxu0 0.0
  %1040 = vmatprep.subr.mxu0 0.0
  %1041 = vmatpush1.msra.mxu0 0.0
  %1042 = vmatprep.subr.mxu0 0.0
  %1043 = vmatpush1.msra.mxu0 0.0
  %1044 = vmatprep.subr.mxu0 0.0
  %1045 = vmatpush1.msra.mxu0 0.0
  %1046 = vmatprep.mubr.f32.mxu0 0.0
  %1047 = vmatmul.mubr.f32.gmra.mrb[0].mxu0 %v980
  %v1048 = vpop.f32.mrb[0].mxu0
  %v1049 = vadd.f32 0.0, %v1048
  %v1050 = vpop.f32.mrb[0].mxu0
  %1051 = vdwg.mxu0
  %v1052 = vrcp.pop %v972
  %v1053 = vmul.f32 %v1049, %v1052
  %v1055 = vsel %vm395, %v1053, 0
  %1057 = vmatprep.subr.mxu0 0.0
  %1058 = vmatpush1.msra.mxu0 %v380
  %1059 = vmatprep.subr.mxu0 0.0
  %1060 = vmatpush1.msra.mxu0 0.0
  %1061 = vmatprep.subr.mxu0 0.0
  %1062 = vmatpush1.msra.mxu0 0.0
  %1063 = vmatprep.subr.mxu0 0.0
  %1064 = vmatpush1.msra.mxu0 0.0
  %1065 = vmatprep.subr.mxu0 0.0
  %1066 = vmatpush1.msra.mxu0 0.0
  %1067 = vmatprep.subr.mxu0 0.0
  %1068 = vmatpush1.msra.mxu0 0.0
  %1069 = vmatprep.subr.mxu0 0.0
  %1070 = vmatpush1.msra.mxu0 0.0
  %1071 = vmatprep.subr.mxu0 0.0
  %1072 = vmatpush1.msra.mxu0 0.0
  %1073 = vmatprep.subr.mxu0 0.0
  %1074 = vmatpush1.msra.mxu0 0.0
  %1075 = vmatprep.subr.mxu0 0.0
  %1076 = vmatpush1.msra.mxu0 0.0
  %1077 = vmatprep.subr.mxu0 0.0
  %1078 = vmatpush1.msra.mxu0 0.0
  %1079 = vmatprep.subr.mxu0 0.0
  %1080 = vmatpush1.msra.mxu0 0.0
  %1081 = vmatprep.subr.mxu0 0.0
  %1082 = vmatpush1.msra.mxu0 0.0
  %1083 = vmatprep.subr.mxu0 0.0
  %1084 = vmatpush1.msra.mxu0 0.0
  %1085 = vmatprep.subr.mxu0 0.0
  %1086 = vmatpush1.msra.mxu0 0.0
  %1087 = vmatprep.subr.mxu0 0.0
  %1088 = vmatpush1.msra.mxu0 0.0
  %1089 = vmatprep.subr.mxu0 0.0
  %1090 = vmatpush1.msra.mxu0 0.0
  %1091 = vmatprep.subr.mxu0 0.0
  %1092 = vmatpush1.msra.mxu0 0.0
  %1093 = vmatprep.subr.mxu0 0.0
  %1094 = vmatpush1.msra.mxu0 0.0
  %1095 = vmatprep.subr.mxu0 0.0
  %1096 = vmatpush1.msra.mxu0 0.0
  %1097 = vmatprep.subr.mxu0 0.0
  %1098 = vmatpush1.msra.mxu0 0.0
  %1099 = vmatprep.subr.mxu0 0.0
  %1100 = vmatpush1.msra.mxu0 0.0
  %1101 = vmatprep.subr.mxu0 0.0
  %1102 = vmatpush1.msra.mxu0 0.0
  %1103 = vmatprep.subr.mxu0 0.0
  %1104 = vmatpush1.msra.mxu0 0.0
  %1105 = vmatprep.subr.mxu0 0.0
  %1106 = vmatpush1.msra.mxu0 0.0
  %1107 = vmatprep.subr.mxu0 0.0
  %1108 = vmatpush1.msra.mxu0 0.0
  %1109 = vmatprep.subr.mxu0 0.0
  %1110 = vmatpush1.msra.mxu0 0.0
  %1111 = vmatprep.subr.mxu0 0.0
  %1112 = vmatpush1.msra.mxu0 0.0
  %1113 = vmatprep.subr.mxu0 0.0
  %1114 = vmatpush1.msra.mxu0 0.0
  %1115 = vmatprep.subr.mxu0 0.0
  %1116 = vmatpush1.msra.mxu0 0.0
  %1117 = vmatprep.subr.mxu0 0.0
  %1118 = vmatpush1.msra.mxu0 0.0
  %1119 = vmatprep.subr.mxu0 0.0
  %1120 = vmatpush1.msra.mxu0 0.0
  %1121 = vmatprep.mubr.f32.mxu0 0.0
  %1122 = vmatmul.mubr.f32.gmra.mrb[0].mxu0 %v1055
  %v1123 = vpop.f32.mrb[0].mxu0
  %v1124 = vadd.f32 0.0, %v1123
  %v1125 = vpop.f32.mrb[0].mxu0
  %1126 = vdwg.mxu0
  %v1127 = vadd.f32 %v881, %v1124
  %1128 = vrot.lane.b32.xlu0 %v153, 104
  %v1129 = vpop.permute.xlu0 %1128
  %1130 = vrot.lane.b32.xlu0 %v251, 104
  %v1131 = vpop.permute.xlu0 %1130
  %1132 = vrot.lane.b32.xlu0 %v256, 104
  %v1133 = vpop.permute.xlu0 %1132
  %v1134 = vsel %vm395, %v1129, 0
  %v1136 = vsel %vm395, %v1131, 0
  %v1138 = vsel %vm395, %v1133, 0
  %1140 = vmatprep.subr.mxu0 0.0
  %1141 = vmatpush1.xpose.msra.mxu0 %v1136
  %1142 = vmatprep.subr.mxu0 0.0
  %1143 = vmatpush1.xpose.msra.mxu0 %v1138
  %1144 = vmatprep.subr.mxu0 0.0
  %1145 = vmatpush1.xpose.msra.mxu0 0.0
  %1146 = vmatprep.subr.mxu0 0.0
  %1147 = vmatpush1.xpose.msra.mxu0 0.0
  %1148 = vmatprep.subr.mxu0 0.0
  %1149 = vmatpush1.xpose.msra.mxu0 0.0
  %1150 = vmatprep.subr.mxu0 0.0
  %1151 = vmatpush1.xpose.msra.mxu0 0.0
  %1152 = vmatprep.subr.mxu0 0.0
  %1153 = vmatpush1.xpose.msra.mxu0 0.0
  %1154 = vmatprep.subr.mxu0 0.0
  %1155 = vmatpush1.xpose.msra.mxu0 0.0
  %1156 = vmatprep.subr.mxu0 0.0
  %1157 = vmatpush1.xpose.msra.mxu0 0.0
  %1158 = vmatprep.subr.mxu0 0.0
  %1159 = vmatpush1.xpose.msra.mxu0 0.0
  %1160 = vmatprep.subr.mxu0 0.0
  %1161 = vmatpush1.xpose.msra.mxu0 0.0
  %1162 = vmatprep.subr.mxu0 0.0
  %1163 = vmatpush1.xpose.msra.mxu0 0.0
  %1164 = vmatprep.subr.mxu0 0.0
  %1165 = vmatpush1.xpose.msra.mxu0 0.0
  %1166 = vmatprep.subr.mxu0 0.0
  %1167 = vmatpush1.xpose.msra.mxu0 0.0
  %1168 = vmatprep.subr.mxu0 0.0
  %1169 = vmatpush1.xpose.msra.mxu0 0.0
  %1170 = vmatprep.subr.mxu0 0.0
  %1171 = vmatpush1.xpose.msra.mxu0 0.0
  %1172 = vmatprep.subr.mxu0 0.0
  %1173 = vmatpush1.xpose.msra.mxu0 0.0
  %1174 = vmatprep.subr.mxu0 0.0
  %1175 = vmatpush1.xpose.msra.mxu0 0.0
  %1176 = vmatprep.subr.mxu0 0.0
  %1177 = vmatpush1.xpose.msra.mxu0 0.0
  %1178 = vmatprep.subr.mxu0 0.0
  %1179 = vmatpush1.xpose.msra.mxu0 0.0
  %1180 = vmatprep.subr.mxu0 0.0
  %1181 = vmatpush1.xpose.msra.mxu0 0.0
  %1182 = vmatprep.subr.mxu0 0.0
  %1183 = vmatpush1.xpose.msra.mxu0 0.0
  %1184 = vmatprep.subr.mxu0 0.0
  %1185 = vmatpush1.xpose.msra.mxu0 0.0
  %1186 = vmatprep.subr.mxu0 0.0
  %1187 = vmatpush1.xpose.msra.mxu0 0.0
  %1188 = vmatprep.subr.mxu0 0.0
  %1189 = vmatpush1.xpose.msra.mxu0 0.0
  %1190 = vmatprep.subr.mxu0 0.0
  %1191 = vmatpush1.xpose.msra.mxu0 0.0
  %1192 = vmatprep.subr.mxu0 0.0
  %1193 = vmatpush1.xpose.msra.mxu0 0.0
  %1194 = vmatprep.subr.mxu0 0.0
  %1195 = vmatpush1.xpose.msra.mxu0 0.0
  %1196 = vmatprep.subr.mxu0 0.0
  %1197 = vmatpush1.xpose.msra.mxu0 0.0
  %1198 = vmatprep.subr.mxu0 0.0
  %1199 = vmatpush1.xpose.msra.mxu0 0.0
  %1200 = vmatprep.subr.mxu0 0.0
  %1201 = vmatpush1.xpose.msra.mxu0 0.0
  %1202 = vmatprep.subr.mxu0 0.0
  %1203 = vmatpush1.xpose.msra.mxu0 0.0
  %1204 = vmatprep.mubr.f32.mxu0 0.0
  %1205 = vmatmul.mubr.f32.gmra.mrb[0].mxu0 %v1134
  %v1206 = vpop.f32.mrb[0].mxu0
  %v1207 = vadd.f32 %v394, %v1206
  %v1208 = vpop.f32.mrb[0].mxu0
  %1209 = vdwg.mxu0
  %v1210 = vsel %vm475, %v1207, -inf
  %1211 = vmax.xlane.f32.xlu0 %v1210
  %v1212 = vpop.xlane.xlu0 %1211
  %v1213 = vsub.f32 %v1207, %v1212
  %v1214 = vmul.f32 %v1213, 1.442695
  %v1215 = vpow.pop %v1214
  %v1216 = vsel %vm475, %v1215, 0.0
  %1217 = vadd.xlane.f32.xlu0 %v1216
  %v1218 = vpop.xlane.xlu0 %1217
  %1219 = vrot.lane.b32.xlu0 %v359, 104
  %v1220 = vpop.permute.xlu0 %1219
  %1221 = vrot.lane.b32.xlu0 %v364, 104
  %v1222 = vpop.permute.xlu0 %1221
  %v1226 = vsel %vm475, %v1215, 0
  %1228 = vmatprep.subr.mxu0 0.0
  %1229 = vmatpush1.msra.mxu0 %v1220
  %1230 = vmatprep.subr.mxu0 0.0
  %1231 = vmatpush1.msra.mxu0 %v1222
  %1232 = vmatprep.subr.mxu0 0.0
  %1233 = vmatpush1.msra.mxu0 0.0
  %1234 = vmatprep.subr.mxu0 0.0
  %1235 = vmatpush1.msra.mxu0 0.0
  %1236 = vmatprep.subr.mxu0 0.0
  %1237 = vmatpush1.msra.mxu0 0.0
  %1238 = vmatprep.subr.mxu0 0.0
  %1239 = vmatpush1.msra.mxu0 0.0
  %1240 = vmatprep.subr.mxu0 0.0
  %1241 = vmatpush1.msra.mxu0 0.0
  %1242 = vmatprep.subr.mxu0 0.0
  %1243 = vmatpush1.msra.mxu0 0.0
  %1244 = vmatprep.subr.mxu0 0.0
  %1245 = vmatpush1.msra.mxu0 0.0
  %1246 = vmatprep.subr.mxu0 0.0
  %1247 = vmatpush1.msra.mxu0 0.0
  %1248 = vmatprep.subr.mxu0 0.0
  %1249 = vmatpush1.msra.mxu0 0.0
  %1250 = vmatprep.subr.mxu0 0.0
  %1251 = vmatpush1.msra.mxu0 0.0
  %1252 = vmatprep.subr.mxu0 0.0
  %1253 = vmatpush1.msra.mxu0 0.0
  %1254 = vmatprep.subr.mxu0 0.0
  %1255 = vmatpush1.msra.mxu0 0.0
  %1256 = vmatprep.subr.mxu0 0.0
  %1257 = vmatpush1.msra.mxu0 0.0
  %1258 = vmatprep.subr.mxu0 0.0
  %1259 = vmatpush1.msra.mxu0 0.0
  %1260 = vmatprep.subr.mxu0 0.0
  %1261 = vmatpush1.msra.mxu0 0.0
  %1262 = vmatprep.subr.mxu0 0.0
  %1263 = vmatpush1.msra.mxu0 0.0
  %1264 = vmatprep.subr.mxu0 0.0
  %1265 = vmatpush1.msra.mxu0 0.0
  %1266 = vmatprep.subr.mxu0 0.0
  %1267 = vmatpush1.msra.mxu0 0.0
  %1268 = vmatprep.subr.mxu0 0.0
  %1269 = vmatpush1.msra.mxu0 0.0
  %1270 = vmatprep.subr.mxu0 0.0
  %1271 = vmatpush1.msra.mxu0 0.0
  %1272 = vmatprep.subr.mxu0 0.0
  %1273 = vmatpush1.msra.mxu0 0.0
  %1274 = vmatprep.subr.mxu0 0.0
  %1275 = vmatpush1.msra.mxu0 0.0
  %1276 = vmatprep.subr.mxu0 0.0
  %1277 = vmatpush1.msra.mxu0 0.0
  %1278 = vmatprep.subr.mxu0 0.0
  %1279 = vmatpush1.msra.mxu0 0.0
  %1280 = vmatprep.subr.mxu0 0.0
  %1281 = vmatpush1.msra.mxu0 0.0
  %1282 = vmatprep.subr.mxu0 0.0
  %1283 = vmatpush1.msra.mxu0 0.0
  %1284 = vmatprep.subr.mxu0 0.0
  %1285 = vmatpush1.msra.mxu0 0.0
  %1286 = vmatprep.subr.mxu0 0.0
  %1287 = vmatpush1.msra.mxu0 0.0
  %1288 = vmatprep.subr.mxu0 0.0
  %1289 = vmatpush1.msra.mxu0 0.0
  %1290 = vmatprep.subr.mxu0 0.0
  %1291 = vmatpush1.msra.mxu0 0.0
  %1292 = vmatprep.mubr.f32.mxu0 0.0
  %1293 = vmatmul.mubr.f32.gmra.mrb[0].mxu0 %v1226
  %v1294 = vpop.f32.mrb[0].mxu0
  %v1295 = vadd.f32 0.0, %v1294
  %v1296 = vpop.f32.mrb[0].mxu0
  %1297 = vdwg.mxu0
  %v1298 = vrcp.pop %v1218
  %v1299 = vmul.f32 %v1295, %v1298
  %v1301 = vsel %vm395, %v1299, 0
  %1303 = vmatprep.subr.mxu0 0.0
  %1304 = vmatpush1.msra.mxu0 %v381
  %1305 = vmatprep.subr.mxu0 0.0
  %1306 = vmatpush1.msra.mxu0 0.0
  %1307 = vmatprep.subr.mxu0 0.0
  %1308 = vmatpush1.msra.mxu0 0.0
  %1309 = vmatprep.subr.mxu0 0.0
  %1310 = vmatpush1.msra.mxu0 0.0
  %1311 = vmatprep.subr.mxu0 0.0
  %1312 = vmatpush1.msra.mxu0 0.0
  %1313 = vmatprep.subr.mxu0 0.0
  %1314 = vmatpush1.msra.mxu0 0.0
  %1315 = vmatprep.subr.mxu0 0.0
  %1316 = vmatpush1.msra.mxu0 0.0
  %1317 = vmatprep.subr.mxu0 0.0
  %1318 = vmatpush1.msra.mxu0 0.0
  %1319 = vmatprep.subr.mxu0 0.0
  %1320 = vmatpush1.msra.mxu0 0.0
  %1321 = vmatprep.subr.mxu0 0.0
  %1322 = vmatpush1.msra.mxu0 0.0
  %1323 = vmatprep.subr.mxu0 0.0
  %1324 = vmatpush1.msra.mxu0 0.0
  %1325 = vmatprep.subr.mxu0 0.0
  %1326 = vmatpush1.msra.mxu0 0.0
  %1327 = vmatprep.subr.mxu0 0.0
  %1328 = vmatpush1.msra.mxu0 0.0
  %1329 = vmatprep.subr.mxu0 0.0
  %1330 = vmatpush1.msra.mxu0 0.0
  %1331 = vmatprep.subr.mxu0 0.0
  %1332 = vmatpush1.msra.mxu0 0.0
  %1333 = vmatprep.subr.mxu0 0.0
  %1334 = vmatpush1.msra.mxu0 0.0
  %1335 = vmatprep.subr.mxu0 0.0
  %1336 = vmatpush1.msra.mxu0 0.0
  %1337 = vmatprep.subr.mxu0 0.0
  %1338 = vmatpush1.msra.mxu0 0.0
  %1339 = vmatprep.subr.mxu0 0.0
  %1340 = vmatpush1.msra.mxu0 0.0
  %1341 = vmatprep.subr.mxu0 0.0
  %1342 = vmatpush1.msra.mxu0 0.0
  %1343 = vmatprep.subr.mxu0 0.0
  %1344 = vmatpush1.msra.mxu0 0.0
  %1345 = vmatprep.subr.mxu0 0.0
  %1346 = vmatpush1.msra.mxu0 0.0
  %1347 = vmatprep.subr.mxu0 0.0
  %1348 = vmatpush1.msra.mxu0 0.0
  %1349 = vmatprep.subr.mxu0 0.0
  %1350 = vmatpush1.msra.mxu0 0.0
  %1351 = vmatprep.subr.mxu0 0.0
  %1352 = vmatpush1.msra.mxu0 0.0
  %1353 = vmatprep.subr.mxu0 0.0
  %1354 = vmatpush1.msra.mxu0 0.0
  %1355 = vmatprep.subr.mxu0 0.0
  %1356 = vmatpush1.msra.mxu0 0.0
  %1357 = vmatprep.subr.mxu0 0.0
  %1358 = vmatpush1.msra.mxu0 0.0
  %1359 = vmatprep.subr.mxu0 0.0
  %1360 = vmatpush1.msra.mxu0 0.0
  %1361 = vmatprep.subr.mxu0 0.0
  %1362 = vmatpush1.msra.mxu0 0.0
  %1363 = vmatprep.subr.mxu0 0.0
  %1364 = vmatpush1.msra.mxu0 0.0
  %1365 = vmatprep.subr.mxu0 0.0
  %1366 = vmatpush1.msra.mxu0 0.0
  %1367 = vmatprep.mubr.f32.mxu0 0.0
  %1368 = vmatmul.mubr.f32.gmra.mrb[0].mxu0 %v1301
  %v1369 = vpop.f32.mrb[0].mxu0
  %v1370 = vadd.f32 0.0, %v1369
  %v1371 = vpop.f32.mrb[0].mxu0
  %1372 = vdwg.mxu0
  %v1373 = vadd.f32 %v1127, %v1370
  %v1374 = vadd.f32 %v50, %v1373
  %v1375 = vsel %vm79, %v1374, 0.0
  %1376 = vadd.xlane.f32.xlu0 %v1375
  %v1377 = vpop.xlane.xlu0 %1376
  %v1378 = vrcp.pop 32.0
  %v1379 = vmul.f32 %v1377, %v1378
  %v1380 = vsub.f32 %v1374, %v1379
  %v1381 = vmul.f32 %v1380, %v1380
  %v1382 = vsel %vm79, %v1381, 0.0
  %1383 = vadd.xlane.f32.xlu0 %v1382
  %v1384 = vpop.xlane.xlu0 %1383
  %v1385 = vmul.f32 %v1384, %v1378
  %v1386 = vadd.f32 %v1385, 1e-05
  %v1387 = vrsqrt.pop %v1386
  %v1388 = vmul.f32 %v1380, %v1387
  %v1390 = vlaneseq
  %v1391 = vshrl.u32 %v1390, 7
  %v1392 = vsub.s32 0, %v1391
  %v1393 = vrot.slane %v389, %v1392
  %v1395 = vmul.f32 %v1388, %v1393
  %v1397 = vlaneseq
  %v1398 = vshrl.u32 %v1397, 7
  %v1399 = vsub.s32 0, %v1398
  %v1400 = vrot.slane %v390, %v1399
  %v1402 = vadd.f32 %v1395, %v1400
  %1403 = vst.msk [vmem:[%s15] sm:$0xff] %vm79, %v1402
  %v1404 = vlaneseq
  %v1405 = vshrl.u32 %v1404, 7
  %v1406 = vsub.s32 1, %v1405
  %v1407 = vrot.slane %v377, %v1406
  %v1409 = vsel %vm395, %v158, 0
  %v1412 = vsel %vm395, %v261, 0
  %v1415 = vsel %vm395, %v266, 0
  %1417 = vmatprep.subr.mxu0 0.0
  %1418 = vmatpush1.xpose.msra.mxu0 %v1412
  %1419 = vmatprep.subr.mxu0 0.0
  %1420 = vmatpush1.xpose.msra.mxu0 %v1415
  %1421 = vmatprep.subr.mxu0 0.0
  %1422 = vmatpush1.xpose.msra.mxu0 0.0
  %1423 = vmatprep.subr.mxu0 0.0
  %1424 = vmatpush1.xpose.msra.mxu0 0.0
  %1425 = vmatprep.subr.mxu0 0.0
  %1426 = vmatpush1.xpose.msra.mxu0 0.0
  %1427 = vmatprep.subr.mxu0 0.0
  %1428 = vmatpush1.xpose.msra.mxu0 0.0
  %1429 = vmatprep.subr.mxu0 0.0
  %1430 = vmatpush1.xpose.msra.mxu0 0.0
  %1431 = vmatprep.subr.mxu0 0.0
  %1432 = vmatpush1.xpose.msra.mxu0 0.0
  %1433 = vmatprep.subr.mxu0 0.0
  %1434 = vmatpush1.xpose.msra.mxu0 0.0
  %1435 = vmatprep.subr.mxu0 0.0
  %1436 = vmatpush1.xpose.msra.mxu0 0.0
  %1437 = vmatprep.subr.mxu0 0.0
  %1438 = vmatpush1.xpose.msra.mxu0 0.0
  %1439 = vmatprep.subr.mxu0 0.0
  %1440 = vmatpush1.xpose.msra.mxu0 0.0
  %1441 = vmatprep.subr.mxu0 0.0
  %1442 = vmatpush1.xpose.msra.mxu0 0.0
  %1443 = vmatprep.subr.mxu0 0.0
  %1444 = vmatpush1.xpose.msra.mxu0 0.0
  %1445 = vmatprep.subr.mxu0 0.0
  %1446 = vmatpush1.xpose.msra.mxu0 0.0
  %1447 = vmatprep.subr.mxu0 0.0
  %1448 = vmatpush1.xpose.msra.mxu0 0.0
  %1449 = vmatprep.subr.mxu0 0.0
  %1450 = vmatpush1.xpose.msra.mxu0 0.0
  %1451 = vmatprep.subr.mxu0 0.0
  %1452 = vmatpush1.xpose.msra.mxu0 0.0
  %1453 = vmatprep.subr.mxu0 0.0
  %1454 = vmatpush1.xpose.msra.mxu0 0.0
  %1455 = vmatprep.subr.mxu0 0.0
  %1456 = vmatpush1.xpose.msra.mxu0 0.0
  %1457 = vmatprep.subr.mxu0 0.0
  %1458 = vmatpush1.xpose.msra.mxu0 0.0
  %1459 = vmatprep.subr.mxu0 0.0
  %1460 = vmatpush1.xpose.msra.mxu0 0.0
  %1461 = vmatprep.subr.mxu0 0.0
  %1462 = vmatpush1.xpose.msra.mxu0 0.0
  %1463 = vmatprep.subr.mxu0 0.0
  %1464 = vmatpush1.xpose.msra.mxu0 0.0
  %1465 = vmatprep.subr.mxu0 0.0
  %1466 = vmatpush1.xpose.msra.mxu0 0.0
  %1467 = vmatprep.subr.mxu0 0.0
  %1468 = vmatpush1.xpose.msra.mxu0 0.0
  %1469 = vmatprep.subr.mxu0 0.0
  %1470 = vmatpush1.xpose.msra.mxu0 0.0
  %1471 = vmatprep.subr.mxu0 0.0
  %1472 = vmatpush1.xpose.msra.mxu0 0.0
  %1473 = vmatprep.subr.mxu0 0.0
  %1474 = vmatpush1.xpose.msra.mxu0 0.0
  %1475 = vmatprep.subr.mxu0 0.0
  %1476 = vmatpush1.xpose.msra.mxu0 0.0
  %1477 = vmatprep.subr.mxu0 0.0
  %1478 = vmatpush1.xpose.msra.mxu0 0.0
  %1479 = vmatprep.subr.mxu0 0.0
  %1480 = vmatpush1.xpose.msra.mxu0 0.0
  %1481 = vmatprep.mubr.f32.mxu0 0.0
  %1482 = vmatmul.mubr.f32.gmra.mrb[0].mxu0 %v1409
  %v1483 = vpop.f32.mrb[0].mxu0
  %v1484 = vadd.f32 %v1407, %v1483
  %v1485 = vpop.f32.mrb[0].mxu0
  %1486 = vdwg.mxu0
  %v1487 = vsel %vm475, %v1484, -inf
  %1488 = vmax.xlane.f32.xlu0 %v1487
  %v1489 = vpop.xlane.xlu0 %1488
  %v1490 = vsub.f32 %v1484, %v1489
  %v1491 = vmul.f32 %v1490, 1.442695
  %v1492 = vpow.pop %v1491
  %v1493 = vsel %vm475, %v1492, 0.0
  %1494 = vadd.xlane.f32.xlu0 %v1493
  %v1495 = vpop.xlane.xlu0 %1494
  %v1497 = vsel %vm475, %v1492, 0
  %1499 = vmatprep.subr.mxu0 0.0
  %1500 = vmatpush1.msra.mxu0 %v369
  %1501 = vmatprep.subr.mxu0 0.0
  %1502 = vmatpush1.msra.mxu0 %v374
  %1503 = vmatprep.subr.mxu0 0.0
  %1504 = vmatpush1.msra.mxu0 0.0
  %1505 = vmatprep.subr.mxu0 0.0
  %1506 = vmatpush1.msra.mxu0 0.0
  %1507 = vmatprep.subr.mxu0 0.0
  %1508 = vmatpush1.msra.mxu0 0.0
  %1509 = vmatprep.subr.mxu0 0.0
  %1510 = vmatpush1.msra.mxu0 0.0
  %1511 = vmatprep.subr.mxu0 0.0
  %1512 = vmatpush1.msra.mxu0 0.0
  %1513 = vmatprep.subr.mxu0 0.0
  %1514 = vmatpush1.msra.mxu0 0.0
  %1515 = vmatprep.subr.mxu0 0.0
  %1516 = vmatpush1.msra.mxu0 0.0
  %1517 = vmatprep.subr.mxu0 0.0
  %1518 = vmatpush1.msra.mxu0 0.0
  %1519 = vmatprep.subr.mxu0 0.0
  %1520 = vmatpush1.msra.mxu0 0.0
  %1521 = vmatprep.subr.mxu0 0.0
  %1522 = vmatpush1.msra.mxu0 0.0
  %1523 = vmatprep.subr.mxu0 0.0
  %1524 = vmatpush1.msra.mxu0 0.0
  %1525 = vmatprep.subr.mxu0 0.0
  %1526 = vmatpush1.msra.mxu0 0.0
  %1527 = vmatprep.subr.mxu0 0.0
  %1528 = vmatpush1.msra.mxu0 0.0
  %1529 = vmatprep.subr.mxu0 0.0
  %1530 = vmatpush1.msra.mxu0 0.0
  %1531 = vmatprep.subr.mxu0 0.0
  %1532 = vmatpush1.msra.mxu0 0.0
  %1533 = vmatprep.subr.mxu0 0.0
  %1534 = vmatpush1.msra.mxu0 0.0
  %1535 = vmatprep.subr.mxu0 0.0
  %1536 = vmatpush1.msra.mxu0 0.0
  %1537 = vmatprep.subr.mxu0 0.0
  %1538 = vmatpush1.msra.mxu0 0.0
  %1539 = vmatprep.subr.mxu0 0.0
  %1540 = vmatpush1.msra.mxu0 0.0
  %1541 = vmatprep.subr.mxu0 0.0
  %1542 = vmatpush1.msra.mxu0 0.0
  %1543 = vmatprep.subr.mxu0 0.0
  %1544 = vmatpush1.msra.mxu0 0.0
  %1545 = vmatprep.subr.mxu0 0.0
  %1546 = vmatpush1.msra.mxu0 0.0
  %1547 = vmatprep.subr.mxu0 0.0
  %1548 = vmatpush1.msra.mxu0 0.0
  %1549 = vmatprep.subr.mxu0 0.0
  %1550 = vmatpush1.msra.mxu0 0.0
  %1551 = vmatprep.subr.mxu0 0.0
  %1552 = vmatpush1.msra.mxu0 0.0
  %1553 = vmatprep.subr.mxu0 0.0
  %1554 = vmatpush1.msra.mxu0 0.0
  %1555 = vmatprep.subr.mxu0 0.0
  %1556 = vmatpush1.msra.mxu0 0.0
  %1557 = vmatprep.subr.mxu0 0.0
  %1558 = vmatpush1.msra.mxu0 0.0
  %1559 = vmatprep.subr.mxu0 0.0
  %1560 = vmatpush1.msra.mxu0 0.0
  %1561 = vmatprep.subr.mxu0 0.0
  %1562 = vmatpush1.msra.mxu0 0.0
  %1563 = vmatprep.mubr.f32.mxu0 0.0
  %1564 = vmatmul.mubr.f32.gmra.mrb[0].mxu0 %v1497
  %v1565 = vpop.f32.mrb[0].mxu0
  %v1566 = vadd.f32 0.0, %v1565
  %v1567 = vpop.f32.mrb[0].mxu0
  %1568 = vdwg.mxu0
  %v1569 = vrcp.pop %v1495
  %v1570 = vmul.f32 %v1566, %v1569
  %v1572 = vsel %vm395, %v1570, 0
  %1574 = vmatprep.subr.mxu0 0.0
  %1575 = vmatpush1.msra.mxu0 %v378
  %1576 = vmatprep.subr.mxu0 0.0
  %1577 = vmatpush1.msra.mxu0 0.0
  %1578 = vmatprep.subr.mxu0 0.0
  %1579 = vmatpush1.msra.mxu0 0.0
  %1580 = vmatprep.subr.mxu0 0.0
  %1581 = vmatpush1.msra.mxu0 0.0
  %1582 = vmatprep.subr.mxu0 0.0
  %1583 = vmatpush1.msra.mxu0 0.0
  %1584 = vmatprep.subr.mxu0 0.0
  %1585 = vmatpush1.msra.mxu0 0.0
  %1586 = vmatprep.subr.mxu0 0.0
  %1587 = vmatpush1.msra.mxu0 0.0
  %1588 = vmatprep.subr.mxu0 0.0
  %1589 = vmatpush1.msra.mxu0 0.0
  %1590 = vmatprep.subr.mxu0 0.0
  %1591 = vmatpush1.msra.mxu0 0.0
  %1592 = vmatprep.subr.mxu0 0.0
  %1593 = vmatpush1.msra.mxu0 0.0
  %1594 = vmatprep.subr.mxu0 0.0
  %1595 = vmatpush1.msra.mxu0 0.0
  %1596 = vmatprep.subr.mxu0 0.0
  %1597 = vmatpush1.msra.mxu0 0.0
  %1598 = vmatprep.subr.mxu0 0.0
  %1599 = vmatpush1.msra.mxu0 0.0
  %1600 = vmatprep.subr.mxu0 0.0
  %1601 = vmatpush1.msra.mxu0 0.0
  %1602 = vmatprep.subr.mxu0 0.0
  %1603 = vmatpush1.msra.mxu0 0.0
  %1604 = vmatprep.subr.mxu0 0.0
  %1605 = vmatpush1.msra.mxu0 0.0
  %1606 = vmatprep.subr.mxu0 0.0
  %1607 = vmatpush1.msra.mxu0 0.0
  %1608 = vmatprep.subr.mxu0 0.0
  %1609 = vmatpush1.msra.mxu0 0.0
  %1610 = vmatprep.subr.mxu0 0.0
  %1611 = vmatpush1.msra.mxu0 0.0
  %1612 = vmatprep.subr.mxu0 0.0
  %1613 = vmatpush1.msra.mxu0 0.0
  %1614 = vmatprep.subr.mxu0 0.0
  %1615 = vmatpush1.msra.mxu0 0.0
  %1616 = vmatprep.subr.mxu0 0.0
  %1617 = vmatpush1.msra.mxu0 0.0
  %1618 = vmatprep.subr.mxu0 0.0
  %1619 = vmatpush1.msra.mxu0 0.0
  %1620 = vmatprep.subr.mxu0 0.0
  %1621 = vmatpush1.msra.mxu0 0.0
  %1622 = vmatprep.subr.mxu0 0.0
  %1623 = vmatpush1.msra.mxu0 0.0
  %1624 = vmatprep.subr.mxu0 0.0
  %1625 = vmatpush1.msra.mxu0 0.0
  %1626 = vmatprep.subr.mxu0 0.0
  %1627 = vmatpush1.msra.mxu0 0.0
  %1628 = vmatprep.subr.mxu0 0.0
  %1629 = vmatpush1.msra.mxu0 0.0
  %1630 = vmatprep.subr.mxu0 0.0
  %1631 = vmatpush1.msra.mxu0 0.0
  %1632 = vmatprep.subr.mxu0 0.0
  %1633 = vmatpush1.msra.mxu0 0.0
  %1634 = vmatprep.subr.mxu0 0.0
  %1635 = vmatpush1.msra.mxu0 0.0
  %1636 = vmatprep.subr.mxu0 0.0
  %1637 = vmatpush1.msra.mxu0 0.0
  %1638 = vmatprep.mubr.f32.mxu0 0.0
  %1639 = vmatmul.mubr.f32.gmra.mrb[0].mxu0 %v1572
  %v1640 = vpop.f32.mrb[0].mxu0
  %v1641 = vadd.f32 0.0, %v1640
  %v1642 = vpop.f32.mrb[0].mxu0
  %1643 = vdwg.mxu0
  %v1644 = vadd.f32 %v387, %v1641
  %1645 = vrot.lane.b32.xlu0 %v158, 120
  %v1646 = vpop.permute.xlu0 %1645
  %1647 = vrot.lane.b32.xlu0 %v261, 120
  %v1648 = vpop.permute.xlu0 %1647
  %1649 = vrot.lane.b32.xlu0 %v266, 120
  %v1650 = vpop.permute.xlu0 %1649
  %v1651 = vsel %vm395, %v1646, 0
  %v1653 = vsel %vm395, %v1648, 0
  %v1655 = vsel %vm395, %v1650, 0
  %1657 = vmatprep.subr.mxu0 0.0
  %1658 = vmatpush1.xpose.msra.mxu0 %v1653
  %1659 = vmatprep.subr.mxu0 0.0
  %1660 = vmatpush1.xpose.msra.mxu0 %v1655
  %1661 = vmatprep.subr.mxu0 0.0
  %1662 = vmatpush1.xpose.msra.mxu0 0.0
  %1663 = vmatprep.subr.mxu0 0.0
  %1664 = vmatpush1.xpose.msra.mxu0 0.0
  %1665 = vmatprep.subr.mxu0 0.0
  %1666 = vmatpush1.xpose.msra.mxu0 0.0
  %1667 = vmatprep.subr.mxu0 0.0
  %1668 = vmatpush1.xpose.msra.mxu0 0.0
  %1669 = vmatprep.subr.mxu0 0.0
  %1670 = vmatpush1.xpose.msra.mxu0 0.0
  %1671 = vmatprep.subr.mxu0 0.0
  %1672 = vmatpush1.xpose.msra.mxu0 0.0
  %1673 = vmatprep.subr.mxu0 0.0
  %1674 = vmatpush1.xpose.msra.mxu0 0.0
  %1675 = vmatprep.subr.mxu0 0.0
  %1676 = vmatpush1.xpose.msra.mxu0 0.0
  %1677 = vmatprep.subr.mxu0 0.0
  %1678 = vmatpush1.xpose.msra.mxu0 0.0
  %1679 = vmatprep.subr.mxu0 0.0
  %1680 = vmatpush1.xpose.msra.mxu0 0.0
  %1681 = vmatprep.subr.mxu0 0.0
  %1682 = vmatpush1.xpose.msra.mxu0 0.0
  %1683 = vmatprep.subr.mxu0 0.0
  %1684 = vmatpush1.xpose.msra.mxu0 0.0
  %1685 = vmatprep.subr.mxu0 0.0
  %1686 = vmatpush1.xpose.msra.mxu0 0.0
  %1687 = vmatprep.subr.mxu0 0.0
  %1688 = vmatpush1.xpose.msra.mxu0 0.0
  %1689 = vmatprep.subr.mxu0 0.0
  %1690 = vmatpush1.xpose.msra.mxu0 0.0
  %1691 = vmatprep.subr.mxu0 0.0
  %1692 = vmatpush1.xpose.msra.mxu0 0.0
  %1693 = vmatprep.subr.mxu0 0.0
  %1694 = vmatpush1.xpose.msra.mxu0 0.0
  %1695 = vmatprep.subr.mxu0 0.0
  %1696 = vmatpush1.xpose.msra.mxu0 0.0
  %1697 = vmatprep.subr.mxu0 0.0
  %1698 = vmatpush1.xpose.msra.mxu0 0.0
  %1699 = vmatprep.subr.mxu0 0.0
  %1700 = vmatpush1.xpose.msra.mxu0 0.0
  %1701 = vmatprep.subr.mxu0 0.0
  %1702 = vmatpush1.xpose.msra.mxu0 0.0
  %1703 = vmatprep.subr.mxu0 0.0
  %1704 = vmatpush1.xpose.msra.mxu0 0.0
  %1705 = vmatprep.subr.mxu0 0.0
  %1706 = vmatpush1.xpose.msra.mxu0 0.0
  %1707 = vmatprep.subr.mxu0 0.0
  %1708 = vmatpush1.xpose.msra.mxu0 0.0
  %1709 = vmatprep.subr.mxu0 0.0
  %1710 = vmatpush1.xpose.msra.mxu0 0.0
  %1711 = vmatprep.subr.mxu0 0.0
  %1712 = vmatpush1.xpose.msra.mxu0 0.0
  %1713 = vmatprep.subr.mxu0 0.0
  %1714 = vmatpush1.xpose.msra.mxu0 0.0
  %1715 = vmatprep.subr.mxu0 0.0
  %1716 = vmatpush1.xpose.msra.mxu0 0.0
  %1717 = vmatprep.subr.mxu0 0.0
  %1718 = vmatpush1.xpose.msra.mxu0 0.0
  %1719 = vmatprep.subr.mxu0 0.0
  %1720 = vmatpush1.xpose.msra.mxu0 0.0
  %1721 = vmatprep.mubr.f32.mxu0 0.0
  %1722 = vmatmul.mubr.f32.gmra.mrb[0].mxu0 %v1651
  %v1723 = vpop.f32.mrb[0].mxu0
  %v1724 = vadd.f32 %v1407, %v1723
  %v1725 = vpop.f32.mrb[0].mxu0
  %1726 = vdwg.mxu0
  %v1727 = vsel %vm475, %v1724, -inf
  %1728 = vmax.xlane.f32.xlu0 %v1727
  %v1729 = vpop.xlane.xlu0 %1728
  %v1730 = vsub.f32 %v1724, %v1729
  %v1731 = vmul.f32 %v1730, 1.442695
  %v1732 = vpow.pop %v1731
  %v1733 = vsel %vm475, %v1732, 0.0
  %1734 = vadd.xlane.f32.xlu0 %v1733
  %v1735 = vpop.xlane.xlu0 %1734
  %1738 = vrot.lane.b32.xlu0 %v369, 120
  %v1739 = vpop.permute.xlu0 %1738
  %1740 = vrot.lane.b32.xlu0 %v374, 120
  %v1741 = vpop.permute.xlu0 %1740
  %v1745 = vsel %vm475, %v1732, 0
  %1747 = vmatprep.subr.mxu0 0.0
  %1748 = vmatpush1.msra.mxu0 %v1739
  %1749 = vmatprep.subr.mxu0 0.0
  %1750 = vmatpush1.msra.mxu0 %v1741
  %1751 = vmatprep.subr.mxu0 0.0
  %1752 = vmatpush1.msra.mxu0 0.0
  %1753 = vmatprep.subr.mxu0 0.0
  %1754 = vmatpush1.msra.mxu0 0.0
  %1755 = vmatprep.subr.mxu0 0.0
  %1756 = vmatpush1.msra.mxu0 0.0
  %1757 = vmatprep.subr.mxu0 0.0
  %1758 = vmatpush1.msra.mxu0 0.0
  %1759 = vmatprep.subr.mxu0 0.0
  %1760 = vmatpush1.msra.mxu0 0.0
  %1761 = vmatprep.subr.mxu0 0.0
  %1762 = vmatpush1.msra.mxu0 0.0
  %1763 = vmatprep.subr.mxu0 0.0
  %1764 = vmatpush1.msra.mxu0 0.0
  %1765 = vmatprep.subr.mxu0 0.0
  %1766 = vmatpush1.msra.mxu0 0.0
  %1767 = vmatprep.subr.mxu0 0.0
  %1768 = vmatpush1.msra.mxu0 0.0
  %1769 = vmatprep.subr.mxu0 0.0
  %1770 = vmatpush1.msra.mxu0 0.0
  %1771 = vmatprep.subr.mxu0 0.0
  %1772 = vmatpush1.msra.mxu0 0.0
  %1773 = vmatprep.subr.mxu0 0.0
  %1774 = vmatpush1.msra.mxu0 0.0
  %1775 = vmatprep.subr.mxu0 0.0
  %1776 = vmatpush1.msra.mxu0 0.0
  %1777 = vmatprep.subr.mxu0 0.0
  %1778 = vmatpush1.msra.mxu0 0.0
  %1779 = vmatprep.subr.mxu0 0.0
  %1780 = vmatpush1.msra.mxu0 0.0
  %1781 = vmatprep.subr.mxu0 0.0
  %1782 = vmatpush1.msra.mxu0 0.0
  %1783 = vmatprep.subr.mxu0 0.0
  %1784 = vmatpush1.msra.mxu0 0.0
  %1785 = vmatprep.subr.mxu0 0.0
  %1786 = vmatpush1.msra.mxu0 0.0
  %1787 = vmatprep.subr.mxu0 0.0
  %1788 = vmatpush1.msra.mxu0 0.0
  %1789 = vmatprep.subr.mxu0 0.0
  %1790 = vmatpush1.msra.mxu0 0.0
  %1791 = vmatprep.subr.mxu0 0.0
  %1792 = vmatpush1.msra.mxu0 0.0
  %1793 = vmatprep.subr.mxu0 0.0
  %1794 = vmatpush1.msra.mxu0 0.0
  %1795 = vmatprep.subr.mxu0 0.0
  %1796 = vmatpush1.msra.mxu0 0.0
  %1797 = vmatprep.subr.mxu0 0.0
  %1798 = vmatpush1.msra.mxu0 0.0
  %1799 = vmatprep.subr.mxu0 0.0
  %1800 = vmatpush1.msra.mxu0 0.0
  %1801 = vmatprep.subr.mxu0 0.0
  %1802 = vmatpush1.msra.mxu0 0.0
  %1803 = vmatprep.subr.mxu0 0.0
  %1804 = vmatpush1.msra.mxu0 0.0
  %1805 = vmatprep.subr.mxu0 0.0
  %1806 = vmatpush1.msra.mxu0 0.0
  %1807 = vmatprep.subr.mxu0 0.0
  %1808 = vmatpush1.msra.mxu0 0.0
  %1809 = vmatprep.subr.mxu0 0.0
  %1810 = vmatpush1.msra.mxu0 0.0
  %1811 = vmatprep.mubr.f32.mxu0 0.0
  %1812 = vmatmul.mubr.f32.gmra.mrb[0].mxu0 %v1745
  %v1813 = vpop.f32.mrb[0].mxu0
  %v1814 = vadd.f32 0.0, %v1813
  %v1815 = vpop.f32.mrb[0].mxu0
  %1816 = vdwg.mxu0
  %v1817 = vrcp.pop %v1735
  %v1818 = vmul.f32 %v1814, %v1817
  %v1820 = vsel %vm395, %v1818, 0
  %1822 = vmatprep.subr.mxu0 0.0
  %1823 = vmatpush1.msra.mxu0 %v379
  %1824 = vmatprep.subr.mxu0 0.0
  %1825 = vmatpush1.msra.mxu0 0.0
  %1826 = vmatprep.subr.mxu0 0.0
  %1827 = vmatpush1.msra.mxu0 0.0
  %1828 = vmatprep.subr.mxu0 0.0
  %1829 = vmatpush1.msra.mxu0 0.0
  %1830 = vmatprep.subr.mxu0 0.0
  %1831 = vmatpush1.msra.mxu0 0.0
  %1832 = vmatprep.subr.mxu0 0.0
  %1833 = vmatpush1.msra.mxu0 0.0
  %1834 = vmatprep.subr.mxu0 0.0
  %1835 = vmatpush1.msra.mxu0 0.0
  %1836 = vmatprep.subr.mxu0 0.0
  %1837 = vmatpush1.msra.mxu0 0.0
  %1838 = vmatprep.subr.mxu0 0.0
  %1839 = vmatpush1.msra.mxu0 0.0
  %1840 = vmatprep.subr.mxu0 0.0
  %1841 = vmatpush1.msra.mxu0 0.0
  %1842 = vmatprep.subr.mxu0 0.0
  %1843 = vmatpush1.msra.mxu0 0.0
  %1844 = vmatprep.subr.mxu0 0.0
  %1845 = vmatpush1.msra.mxu0 0.0
  %1846 = vmatprep.subr.mxu0 0.0
  %1847 = vmatpush1.msra.mxu0 0.0
  %1848 = vmatprep.subr.mxu0 0.0
  %1849 = vmatpush1.msra.mxu0 0.0
  %1850 = vmatprep.subr.mxu0 0.0
  %1851 = vmatpush1.msra.mxu0 0.0
  %1852 = vmatprep.subr.mxu0 0.0
  %1853 = vmatpush1.msra.mxu0 0.0
  %1854 = vmatprep.subr.mxu0 0.0
  %1855 = vmatpush1.msra.mxu0 0.0
  %1856 = vmatprep.subr.mxu0 0.0
  %1857 = vmatpush1.msra.mxu0 0.0
  %1858 = vmatprep.subr.mxu0 0.0
  %1859 = vmatpush1.msra.mxu0 0.0
  %1860 = vmatprep.subr.mxu0 0.0
  %1861 = vmatpush1.msra.mxu0 0.0
  %1862 = vmatprep.subr.mxu0 0.0
  %1863 = vmatpush1.msra.mxu0 0.0
  %1864 = vmatprep.subr.mxu0 0.0
  %1865 = vmatpush1.msra.mxu0 0.0
  %1866 = vmatprep.subr.mxu0 0.0
  %1867 = vmatpush1.msra.mxu0 0.0
  %1868 = vmatprep.subr.mxu0 0.0
  %1869 = vmatpush1.msra.mxu0 0.0
  %1870 = vmatprep.subr.mxu0 0.0
  %1871 = vmatpush1.msra.mxu0 0.0
  %1872 = vmatprep.subr.mxu0 0.0
  %1873 = vmatpush1.msra.mxu0 0.0
  %1874 = vmatprep.subr.mxu0 0.0
  %1875 = vmatpush1.msra.mxu0 0.0
  %1876 = vmatprep.subr.mxu0 0.0
  %1877 = vmatpush1.msra.mxu0 0.0
  %1878 = vmatprep.subr.mxu0 0.0
  %1879 = vmatpush1.msra.mxu0 0.0
  %1880 = vmatprep.subr.mxu0 0.0
  %1881 = vmatpush1.msra.mxu0 0.0
  %1882 = vmatprep.subr.mxu0 0.0
  %1883 = vmatpush1.msra.mxu0 0.0
  %1884 = vmatprep.subr.mxu0 0.0
  %1885 = vmatpush1.msra.mxu0 0.0
  %1886 = vmatprep.mubr.f32.mxu0 0.0
  %1887 = vmatmul.mubr.f32.gmra.mrb[0].mxu0 %v1820
  %v1888 = vpop.f32.mrb[0].mxu0
  %v1889 = vadd.f32 0.0, %v1888
  %v1890 = vpop.f32.mrb[0].mxu0
  %1891 = vdwg.mxu0
  %v1892 = vadd.f32 %v1644, %v1889
  %1893 = vrot.lane.b32.xlu0 %v158, 112
  %v1894 = vpop.permute.xlu0 %1893
  %1895 = vrot.lane.b32.xlu0 %v261, 112
  %v1896 = vpop.permute.xlu0 %1895
  %1897 = vrot.lane.b32.xlu0 %v266, 112
  %v1898 = vpop.permute.xlu0 %1897
  %v1899 = vsel %vm395, %v1894, 0
  %v1901 = vsel %vm395, %v1896, 0
  %v1903 = vsel %vm395, %v1898, 0
  %1905 = vmatprep.subr.mxu0 0.0
  %1906 = vmatpush1.xpose.msra.mxu0 %v1901
  %1907 = vmatprep.subr.mxu0 0.0
  %1908 = vmatpush1.xpose.msra.mxu0 %v1903
  %1909 = vmatprep.subr.mxu0 0.0
  %1910 = vmatpush1.xpose.msra.mxu0 0.0
  %1911 = vmatprep.subr.mxu0 0.0
  %1912 = vmatpush1.xpose.msra.mxu0 0.0
  %1913 = vmatprep.subr.mxu0 0.0
  %1914 = vmatpush1.xpose.msra.mxu0 0.0
  %1915 = vmatprep.subr.mxu0 0.0
  %1916 = vmatpush1.xpose.msra.mxu0 0.0
  %1917 = vmatprep.subr.mxu0 0.0
  %1918 = vmatpush1.xpose.msra.mxu0 0.0
  %1919 = vmatprep.subr.mxu0 0.0
  %1920 = vmatpush1.xpose.msra.mxu0 0.0
  %1921 = vmatprep.subr.mxu0 0.0
  %1922 = vmatpush1.xpose.msra.mxu0 0.0
  %1923 = vmatprep.subr.mxu0 0.0
  %1924 = vmatpush1.xpose.msra.mxu0 0.0
  %1925 = vmatprep.subr.mxu0 0.0
  %1926 = vmatpush1.xpose.msra.mxu0 0.0
  %1927 = vmatprep.subr.mxu0 0.0
  %1928 = vmatpush1.xpose.msra.mxu0 0.0
  %1929 = vmatprep.subr.mxu0 0.0
  %1930 = vmatpush1.xpose.msra.mxu0 0.0
  %1931 = vmatprep.subr.mxu0 0.0
  %1932 = vmatpush1.xpose.msra.mxu0 0.0
  %1933 = vmatprep.subr.mxu0 0.0
  %1934 = vmatpush1.xpose.msra.mxu0 0.0
  %1935 = vmatprep.subr.mxu0 0.0
  %1936 = vmatpush1.xpose.msra.mxu0 0.0
  %1937 = vmatprep.subr.mxu0 0.0
  %1938 = vmatpush1.xpose.msra.mxu0 0.0
  %1939 = vmatprep.subr.mxu0 0.0
  %1940 = vmatpush1.xpose.msra.mxu0 0.0
  %1941 = vmatprep.subr.mxu0 0.0
  %1942 = vmatpush1.xpose.msra.mxu0 0.0
  %1943 = vmatprep.subr.mxu0 0.0
  %1944 = vmatpush1.xpose.msra.mxu0 0.0
  %1945 = vmatprep.subr.mxu0 0.0
  %1946 = vmatpush1.xpose.msra.mxu0 0.0
  %1947 = vmatprep.subr.mxu0 0.0
  %1948 = vmatpush1.xpose.msra.mxu0 0.0
  %1949 = vmatprep.subr.mxu0 0.0
  %1950 = vmatpush1.xpose.msra.mxu0 0.0
  %1951 = vmatprep.subr.mxu0 0.0
  %1952 = vmatpush1.xpose.msra.mxu0 0.0
  %1953 = vmatprep.subr.mxu0 0.0
  %1954 = vmatpush1.xpose.msra.mxu0 0.0
  %1955 = vmatprep.subr.mxu0 0.0
  %1956 = vmatpush1.xpose.msra.mxu0 0.0
  %1957 = vmatprep.subr.mxu0 0.0
  %1958 = vmatpush1.xpose.msra.mxu0 0.0
  %1959 = vmatprep.subr.mxu0 0.0
  %1960 = vmatpush1.xpose.msra.mxu0 0.0
  %1961 = vmatprep.subr.mxu0 0.0
  %1962 = vmatpush1.xpose.msra.mxu0 0.0
  %1963 = vmatprep.subr.mxu0 0.0
  %1964 = vmatpush1.xpose.msra.mxu0 0.0
  %1965 = vmatprep.subr.mxu0 0.0
  %1966 = vmatpush1.xpose.msra.mxu0 0.0
  %1967 = vmatprep.subr.mxu0 0.0
  %1968 = vmatpush1.xpose.msra.mxu0 0.0
  %1969 = vmatprep.mubr.f32.mxu0 0.0
  %1970 = vmatmul.mubr.f32.gmra.mrb[0].mxu0 %v1899
  %v1971 = vpop.f32.mrb[0].mxu0
  %v1972 = vadd.f32 %v1407, %v1971
  %v1973 = vpop.f32.mrb[0].mxu0
  %1974 = vdwg.mxu0
  %v1975 = vsel %vm475, %v1972, -inf
  %1976 = vmax.xlane.f32.xlu0 %v1975
  %v1977 = vpop.xlane.xlu0 %1976
  %v1978 = vsub.f32 %v1972, %v1977
  %v1979 = vmul.f32 %v1978, 1.442695
  %v1980 = vpow.pop %v1979
  %v1981 = vsel %vm475, %v1980, 0.0
  %1982 = vadd.xlane.f32.xlu0 %v1981
  %v1983 = vpop.xlane.xlu0 %1982
  %1984 = vrot.lane.b32.xlu0 %v369, 112
  %v1985 = vpop.permute.xlu0 %1984
  %1986 = vrot.lane.b32.xlu0 %v374, 112
  %v1987 = vpop.permute.xlu0 %1986
  %v1991 = vsel %vm475, %v1980, 0
  %1993 = vmatprep.subr.mxu0 0.0
  %1994 = vmatpush1.msra.mxu0 %v1985
  %1995 = vmatprep.subr.mxu0 0.0
  %1996 = vmatpush1.msra.mxu0 %v1987
  %1997 = vmatprep.subr.mxu0 0.0
  %1998 = vmatpush1.msra.mxu0 0.0
  %1999 = vmatprep.subr.mxu0 0.0
  %2000 = vmatpush1.msra.mxu0 0.0
  %2001 = vmatprep.subr.mxu0 0.0
  %2002 = vmatpush1.msra.mxu0 0.0
  %2003 = vmatprep.subr.mxu0 0.0
  %2004 = vmatpush1.msra.mxu0 0.0
  %2005 = vmatprep.subr.mxu0 0.0
  %2006 = vmatpush1.msra.mxu0 0.0
  %2007 = vmatprep.subr.mxu0 0.0
  %2008 = vmatpush1.msra.mxu0 0.0
  %2009 = vmatprep.subr.mxu0 0.0
  %2010 = vmatpush1.msra.mxu0 0.0
  %2011 = vmatprep.subr.mxu0 0.0
  %2012 = vmatpush1.msra.mxu0 0.0
  %2013 = vmatprep.subr.mxu0 0.0
  %2014 = vmatpush1.msra.mxu0 0.0
  %2015 = vmatprep.subr.mxu0 0.0
  %2016 = vmatpush1.msra.mxu0 0.0
  %2017 = vmatprep.subr.mxu0 0.0
  %2018 = vmatpush1.msra.mxu0 0.0
  %2019 = vmatprep.subr.mxu0 0.0
  %2020 = vmatpush1.msra.mxu0 0.0
  %2021 = vmatprep.subr.mxu0 0.0
  %2022 = vmatpush1.msra.mxu0 0.0
  %2023 = vmatprep.subr.mxu0 0.0
  %2024 = vmatpush1.msra.mxu0 0.0
  %2025 = vmatprep.subr.mxu0 0.0
  %2026 = vmatpush1.msra.mxu0 0.0
  %2027 = vmatprep.subr.mxu0 0.0
  %2028 = vmatpush1.msra.mxu0 0.0
  %2029 = vmatprep.subr.mxu0 0.0
  %2030 = vmatpush1.msra.mxu0 0.0
  %2031 = vmatprep.subr.mxu0 0.0
  %2032 = vmatpush1.msra.mxu0 0.0
  %2033 = vmatprep.subr.mxu0 0.0
  %2034 = vmatpush1.msra.mxu0 0.0
  %2035 = vmatprep.subr.mxu0 0.0
  %2036 = vmatpush1.msra.mxu0 0.0
  %2037 = vmatprep.subr.mxu0 0.0
  %2038 = vmatpush1.msra.mxu0 0.0
  %2039 = vmatprep.subr.mxu0 0.0
  %2040 = vmatpush1.msra.mxu0 0.0
  %2041 = vmatprep.subr.mxu0 0.0
  %2042 = vmatpush1.msra.mxu0 0.0
  %2043 = vmatprep.subr.mxu0 0.0
  %2044 = vmatpush1.msra.mxu0 0.0
  %2045 = vmatprep.subr.mxu0 0.0
  %2046 = vmatpush1.msra.mxu0 0.0
  %2047 = vmatprep.subr.mxu0 0.0
  %2048 = vmatpush1.msra.mxu0 0.0
  %2049 = vmatprep.subr.mxu0 0.0
  %2050 = vmatpush1.msra.mxu0 0.0
  %2051 = vmatprep.subr.mxu0 0.0
  %2052 = vmatpush1.msra.mxu0 0.0
  %2053 = vmatprep.subr.mxu0 0.0
  %2054 = vmatpush1.msra.mxu0 0.0
  %2055 = vmatprep.subr.mxu0 0.0
  %2056 = vmatpush1.msra.mxu0 0.0
  %2057 = vmatprep.mubr.f32.mxu0 0.0
  %2058 = vmatmul.mubr.f32.gmra.mrb[0].mxu0 %v1991
  %v2059 = vpop.f32.mrb[0].mxu0
  %v2060 = vadd.f32 0.0, %v2059
  %v2061 = vpop.f32.mrb[0].mxu0
  %2062 = vdwg.mxu0
  %v2063 = vrcp.pop %v1983
  %v2064 = vmul.f32 %v2060, %v2063
  %v2066 = vsel %vm395, %v2064, 0
  %2068 = vmatprep.subr.mxu0 0.0
  %2069 = vmatpush1.msra.mxu0 %v380
  %2070 = vmatprep.subr.mxu0 0.0
  %2071 = vmatpush1.msra.mxu0 0.0
  %2072 = vmatprep.subr.mxu0 0.0
  %2073 = vmatpush1.msra.mxu0 0.0
  %2074 = vmatprep.subr.mxu0 0.0
  %2075 = vmatpush1.msra.mxu0 0.0
  %2076 = vmatprep.subr.mxu0 0.0
  %2077 = vmatpush1.msra.mxu0 0.0
  %2078 = vmatprep.subr.mxu0 0.0
  %2079 = vmatpush1.msra.mxu0 0.0
  %2080 = vmatprep.subr.mxu0 0.0
  %2081 = vmatpush1.msra.mxu0 0.0
  %2082 = vmatprep.subr.mxu0 0.0
  %2083 = vmatpush1.msra.mxu0 0.0
  %2084 = vmatprep.subr.mxu0 0.0
  %2085 = vmatpush1.msra.mxu0 0.0
  %2086 = vmatprep.subr.mxu0 0.0
  %2087 = vmatpush1.msra.mxu0 0.0
  %2088 = vmatprep.subr.mxu0 0.0
  %2089 = vmatpush1.msra.mxu0 0.0
  %2090 = vmatprep.subr.mxu0 0.0
  %2091 = vmatpush1.msra.mxu0 0.0
  %2092 = vmatprep.subr.mxu0 0.0
  %2093 = vmatpush1.msra.mxu0 0.0
  %2094 = vmatprep.subr.mxu0 0.0
  %2095 = vmatpush1.msra.mxu0 0.0
  %2096 = vmatprep.subr.mxu0 0.0
  %2097 = vmatpush1.msra.mxu0 0.0
  %2098 = vmatprep.subr.mxu0 0.0
  %2099 = vmatpush1.msra.mxu0 0.0
  %2100 = vmatprep.subr.mxu0 0.0
  %2101 = vmatpush1.msra.mxu0 0.0
  %2102 = vmatprep.subr.mxu0 0.0
  %2103 = vmatpush1.msra.mxu0 0.0
  %2104 = vmatprep.subr.mxu0 0.0
  %2105 = vmatpush1.msra.mxu0 0.0
  %2106 = vmatprep.subr.mxu0 0.0
  %2107 = vmatpush1.msra.mxu0 0.0
  %2108 = vmatprep.subr.mxu0 0.0
  %2109 = vmatpush1.msra.mxu0 0.0
  %2110 = vmatprep.subr.mxu0 0.0
  %2111 = vmatpush1.msra.mxu0 0.0
  %2112 = vmatprep.subr.mxu0 0.0
  %2113 = vmatpush1.msra.mxu0 0.0
  %2114 = vmatprep.subr.mxu0 0.0
  %2115 = vmatpush1.msra.mxu0 0.0
  %2116 = vmatprep.subr.mxu0 0.0
  %2117 = vmatpush1.msra.mxu0 0.0
  %2118 = vmatprep.subr.mxu0 0.0
  %2119 = vmatpush1.msra.mxu0 0.0
  %2120 = vmatprep.subr.mxu0 0.0
  %2121 = vmatpush1.msra.mxu0 0.0
  %2122 = vmatprep.subr.mxu0 0.0
  %2123 = vmatpush1.msra.mxu0 0.0
  %2124 = vmatprep.subr.mxu0 0.0
  %2125 = vmatpush1.msra.mxu0 0.0
  %2126 = vmatprep.subr.mxu0 0.0
  %2127 = vmatpush1.msra.mxu0 0.0
  %2128 = vmatprep.subr.mxu0 0.0
  %2129 = vmatpush1.msra.mxu0 0.0
  %2130 = vmatprep.subr.mxu0 0.0
  %2131 = vmatpush1.msra.mxu0 0.0
  %2132 = vmatprep.mubr.f32.mxu0 0.0
  %2133 = vmatmul.mubr.f32.gmra.mrb[0].mxu0 %v2066
  %v2134 = vpop.f32.mrb[0].mxu0
  %v2135 = vadd.f32 0.0, %v2134
  %v2136 = vpop.f32.mrb[0].mxu0
  %2137 = vdwg.mxu0
  %v2138 = vadd.f32 %v1892, %v2135
  %2139 = vrot.lane.b32.xlu0 %v158, 104
  %v2140 = vpop.permute.xlu0 %2139
  %2141 = vrot.lane.b32.xlu0 %v261, 104
  %v2142 = vpop.permute.xlu0 %2141
  %2143 = vrot.lane.b32.xlu0 %v266, 104
  %v2144 = vpop.permute.xlu0 %2143
  %v2145 = vsel %vm395, %v2140, 0
  %v2147 = vsel %vm395, %v2142, 0
  %v2149 = vsel %vm395, %v2144, 0
  %2151 = vmatprep.subr.mxu0 0.0
  %2152 = vmatpush1.xpose.msra.mxu0 %v2147
  %2153 = vmatprep.subr.mxu0 0.0
  %2154 = vmatpush1.xpose.msra.mxu0 %v2149
  %2155 = vmatprep.subr.mxu0 0.0
  %2156 = vmatpush1.xpose.msra.mxu0 0.0
  %2157 = vmatprep.subr.mxu0 0.0
  %2158 = vmatpush1.xpose.msra.mxu0 0.0
  %2159 = vmatprep.subr.mxu0 0.0
  %2160 = vmatpush1.xpose.msra.mxu0 0.0
  %2161 = vmatprep.subr.mxu0 0.0
  %2162 = vmatpush1.xpose.msra.mxu0 0.0
  %2163 = vmatprep.subr.mxu0 0.0
  %2164 = vmatpush1.xpose.msra.mxu0 0.0
  %2165 = vmatprep.subr.mxu0 0.0
  %2166 = vmatpush1.xpose.msra.mxu0 0.0
  %2167 = vmatprep.subr.mxu0 0.0
  %2168 = vmatpush1.xpose.msra.mxu0 0.0
  %2169 = vmatprep.subr.mxu0 0.0
  %2170 = vmatpush1.xpose.msra.mxu0 0.0
  %2171 = vmatprep.subr.mxu0 0.0
  %2172 = vmatpush1.xpose.msra.mxu0 0.0
  %2173 = vmatprep.subr.mxu0 0.0
  %2174 = vmatpush1.xpose.msra.mxu0 0.0
  %2175 = vmatprep.subr.mxu0 0.0
  %2176 = vmatpush1.xpose.msra.mxu0 0.0
  %2177 = vmatprep.subr.mxu0 0.0
  %2178 = vmatpush1.xpose.msra.mxu0 0.0
  %2179 = vmatprep.subr.mxu0 0.0
  %2180 = vmatpush1.xpose.msra.mxu0 0.0
  %2181 = vmatprep.subr.mxu0 0.0
  %2182 = vmatpush1.xpose.msra.mxu0 0.0
  %2183 = vmatprep.subr.mxu0 0.0
  %2184 = vmatpush1.xpose.msra.mxu0 0.0
  %2185 = vmatprep.subr.mxu0 0.0
  %2186 = vmatpush1.xpose.msra.mxu0 0.0
  %2187 = vmatprep.subr.mxu0 0.0
  %2188 = vmatpush1.xpose.msra.mxu0 0.0
  %2189 = vmatprep.subr.mxu0 0.0
  %2190 = vmatpush1.xpose.msra.mxu0 0.0
  %2191 = vmatprep.subr.mxu0 0.0
  %2192 = vmatpush1.xpose.msra.mxu0 0.0
  %2193 = vmatprep.subr.mxu0 0.0
  %2194 = vmatpush1.xpose.msra.mxu0 0.0
  %2195 = vmatprep.subr.mxu0 0.0
  %2196 = vmatpush1.xpose.msra.mxu0 0.0
  %2197 = vmatprep.subr.mxu0 0.0
  %2198 = vmatpush1.xpose.msra.mxu0 0.0
  %2199 = vmatprep.subr.mxu0 0.0
  %2200 = vmatpush1.xpose.msra.mxu0 0.0
  %2201 = vmatprep.subr.mxu0 0.0
  %2202 = vmatpush1.xpose.msra.mxu0 0.0
  %2203 = vmatprep.subr.mxu0 0.0
  %2204 = vmatpush1.xpose.msra.mxu0 0.0
  %2205 = vmatprep.subr.mxu0 0.0
  %2206 = vmatpush1.xpose.msra.mxu0 0.0
  %2207 = vmatprep.subr.mxu0 0.0
  %2208 = vmatpush1.xpose.msra.mxu0 0.0
  %2209 = vmatprep.subr.mxu0 0.0
  %2210 = vmatpush1.xpose.msra.mxu0 0.0
  %2211 = vmatprep.subr.mxu0 0.0
  %2212 = vmatpush1.xpose.msra.mxu0 0.0
  %2213 = vmatprep.subr.mxu0 0.0
  %2214 = vmatpush1.xpose.msra.mxu0 0.0
  %2215 = vmatprep.mubr.f32.mxu0 0.0
  %2216 = vmatmul.mubr.f32.gmra.mrb[0].mxu0 %v2145
  %v2217 = vpop.f32.mrb[0].mxu0
  %v2218 = vadd.f32 %v1407, %v2217
  %v2219 = vpop.f32.mrb[0].mxu0
  %2220 = vdwg.mxu0
  %v2221 = vsel %vm475, %v2218, -inf
  %2222 = vmax.xlane.f32.xlu0 %v2221
  %v2223 = vpop.xlane.xlu0 %2222
  %v2224 = vsub.f32 %v2218, %v2223
  %v2225 = vmul.f32 %v2224, 1.442695
  %v2226 = vpow.pop %v2225
  %v2227 = vsel %vm475, %v2226, 0.0
  %2228 = vadd.xlane.f32.xlu0 %v2227
  %v2229 = vpop.xlane.xlu0 %2228
  %2230 = vrot.lane.b32.xlu0 %v369, 104
  %v2231 = vpop.permute.xlu0 %2230
  %2232 = vrot.lane.b32.xlu0 %v374, 104
  %v2233 = vpop.permute.xlu0 %2232
  %v2237 = vsel %vm475, %v2226, 0
  %2239 = vmatprep.subr.mxu0 0.0
  %2240 = vmatpush1.msra.mxu0 %v2231
  %2241 = vmatprep.subr.mxu0 0.0
  %2242 = vmatpush1.msra.mxu0 %v2233
  %2243 = vmatprep.subr.mxu0 0.0
  %2244 = vmatpush1.msra.mxu0 0.0
  %2245 = vmatprep.subr.mxu0 0.0
  %2246 = vmatpush1.msra.mxu0 0.0
  %2247 = vmatprep.subr.mxu0 0.0
  %2248 = vmatpush1.msra.mxu0 0.0
  %2249 = vmatprep.subr.mxu0 0.0
  %2250 = vmatpush1.msra.mxu0 0.0
  %2251 = vmatprep.subr.mxu0 0.0
  %2252 = vmatpush1.msra.mxu0 0.0
  %2253 = vmatprep.subr.mxu0 0.0
  %2254 = vmatpush1.msra.mxu0 0.0
  %2255 = vmatprep.subr.mxu0 0.0
  %2256 = vmatpush1.msra.mxu0 0.0
  %2257 = vmatprep.subr.mxu0 0.0
  %2258 = vmatpush1.msra.mxu0 0.0
  %2259 = vmatprep.subr.mxu0 0.0
  %2260 = vmatpush1.msra.mxu0 0.0
  %2261 = vmatprep.subr.mxu0 0.0
  %2262 = vmatpush1.msra.mxu0 0.0
  %2263 = vmatprep.subr.mxu0 0.0
  %2264 = vmatpush1.msra.mxu0 0.0
  %2265 = vmatprep.subr.mxu0 0.0
  %2266 = vmatpush1.msra.mxu0 0.0
  %2267 = vmatprep.subr.mxu0 0.0
  %2268 = vmatpush1.msra.mxu0 0.0
  %2269 = vmatprep.subr.mxu0 0.0
  %2270 = vmatpush1.msra.mxu0 0.0
  %2271 = vmatprep.subr.mxu0 0.0
  %2272 = vmatpush1.msra.mxu0 0.0
  %2273 = vmatprep.subr.mxu0 0.0
  %2274 = vmatpush1.msra.mxu0 0.0
  %2275 = vmatprep.subr.mxu0 0.0
  %2276 = vmatpush1.msra.mxu0 0.0
  %2277 = vmatprep.subr.mxu0 0.0
  %2278 = vmatpush1.msra.mxu0 0.0
  %2279 = vmatprep.subr.mxu0 0.0
  %2280 = vmatpush1.msra.mxu0 0.0
  %2281 = vmatprep.subr.mxu0 0.0
  %2282 = vmatpush1.msra.mxu0 0.0
  %2283 = vmatprep.subr.mxu0 0.0
  %2284 = vmatpush1.msra.mxu0 0.0
  %2285 = vmatprep.subr.mxu0 0.0
  %2286 = vmatpush1.msra.mxu0 0.0
  %2287 = vmatprep.subr.mxu0 0.0
  %2288 = vmatpush1.msra.mxu0 0.0
  %2289 = vmatprep.subr.mxu0 0.0
  %2290 = vmatpush1.msra.mxu0 0.0
  %2291 = vmatprep.subr.mxu0 0.0
  %2292 = vmatpush1.msra.mxu0 0.0
  %2293 = vmatprep.subr.mxu0 0.0
  %2294 = vmatpush1.msra.mxu0 0.0
  %2295 = vmatprep.subr.mxu0 0.0
  %2296 = vmatpush1.msra.mxu0 0.0
  %2297 = vmatprep.subr.mxu0 0.0
  %2298 = vmatpush1.msra.mxu0 0.0
  %2299 = vmatprep.subr.mxu0 0.0
  %2300 = vmatpush1.msra.mxu0 0.0
  %2301 = vmatprep.subr.mxu0 0.0
  %2302 = vmatpush1.msra.mxu0 0.0
  %2303 = vmatprep.mubr.f32.mxu0 0.0
  %2304 = vmatmul.mubr.f32.gmra.mrb[0].mxu0 %v2237
  %v2305 = vpop.f32.mrb[0].mxu0
  %v2306 = vadd.f32 0.0, %v2305
  %v2307 = vpop.f32.mrb[0].mxu0
  %2308 = vdwg.mxu0
  %v2309 = vrcp.pop %v2229
  %v2310 = vmul.f32 %v2306, %v2309
  %v2312 = vsel %vm395, %v2310, 0
  %2314 = vmatprep.subr.mxu0 0.0
  %2315 = vmatpush1.msra.mxu0 %v381
  %2316 = vmatprep.subr.mxu0 0.0
  %2317 = vmatpush1.msra.mxu0 0.0
  %2318 = vmatprep.subr.mxu0 0.0
  %2319 = vmatpush1.msra.mxu0 0.0
  %2320 = vmatprep.subr.mxu0 0.0
  %2321 = vmatpush1.msra.mxu0 0.0
  %2322 = vmatprep.subr.mxu0 0.0
  %2323 = vmatpush1.msra.mxu0 0.0
  %2324 = vmatprep.subr.mxu0 0.0
  %2325 = vmatpush1.msra.mxu0 0.0
  %2326 = vmatprep.subr.mxu0 0.0
  %2327 = vmatpush1.msra.mxu0 0.0
  %2328 = vmatprep.subr.mxu0 0.0
  %2329 = vmatpush1.msra.mxu0 0.0
  %2330 = vmatprep.subr.mxu0 0.0
  %2331 = vmatpush1.msra.mxu0 0.0
  %2332 = vmatprep.subr.mxu0 0.0
  %2333 = vmatpush1.msra.mxu0 0.0
  %2334 = vmatprep.subr.mxu0 0.0
  %2335 = vmatpush1.msra.mxu0 0.0
  %2336 = vmatprep.subr.mxu0 0.0
  %2337 = vmatpush1.msra.mxu0 0.0
  %2338 = vmatprep.subr.mxu0 0.0
  %2339 = vmatpush1.msra.mxu0 0.0
  %2340 = vmatprep.subr.mxu0 0.0
  %2341 = vmatpush1.msra.mxu0 0.0
  %2342 = vmatprep.subr.mxu0 0.0
  %2343 = vmatpush1.msra.mxu0 0.0
  %2344 = vmatprep.subr.mxu0 0.0
  %2345 = vmatpush1.msra.mxu0 0.0
  %2346 = vmatprep.subr.mxu0 0.0
  %2347 = vmatpush1.msra.mxu0 0.0
  %2348 = vmatprep.subr.mxu0 0.0
  %2349 = vmatpush1.msra.mxu0 0.0
  %2350 = vmatprep.subr.mxu0 0.0
  %2351 = vmatpush1.msra.mxu0 0.0
  %2352 = vmatprep.subr.mxu0 0.0
  %2353 = vmatpush1.msra.mxu0 0.0
  %2354 = vmatprep.subr.mxu0 0.0
  %2355 = vmatpush1.msra.mxu0 0.0
  %2356 = vmatprep.subr.mxu0 0.0
  %2357 = vmatpush1.msra.mxu0 0.0
  %2358 = vmatprep.subr.mxu0 0.0
  %2359 = vmatpush1.msra.mxu0 0.0
  %2360 = vmatprep.subr.mxu0 0.0
  %2361 = vmatpush1.msra.mxu0 0.0
  %2362 = vmatprep.subr.mxu0 0.0
  %2363 = vmatpush1.msra.mxu0 0.0
  %2364 = vmatprep.subr.mxu0 0.0
  %2365 = vmatpush1.msra.mxu0 0.0
  %2366 = vmatprep.subr.mxu0 0.0
  %2367 = vmatpush1.msra.mxu0 0.0
  %2368 = vmatprep.subr.mxu0 0.0
  %2369 = vmatpush1.msra.mxu0 0.0
  %2370 = vmatprep.subr.mxu0 0.0
  %2371 = vmatpush1.msra.mxu0 0.0
  %2372 = vmatprep.subr.mxu0 0.0
  %2373 = vmatpush1.msra.mxu0 0.0
  %2374 = vmatprep.subr.mxu0 0.0
  %2375 = vmatpush1.msra.mxu0 0.0
  %2376 = vmatprep.subr.mxu0 0.0
  %2377 = vmatpush1.msra.mxu0 0.0
  %2378 = vmatprep.mubr.f32.mxu0 0.0
  %2379 = vmatmul.mubr.f32.gmra.mrb[0].mxu0 %v2312
  %v2380 = vpop.f32.mrb[0].mxu0
  %v2381 = vadd.f32 0.0, %v2380
  %v2382 = vpop.f32.mrb[0].mxu0
  %2383 = vdwg.mxu0
  %v2384 = vadd.f32 %v2138, %v2381
  %v2385 = vadd.f32 %v51, %v2384
  %v2386 = vsel %vm79, %v2385, 0.0
  %2387 = vadd.xlane.f32.xlu0 %v2386
  %v2388 = vpop.xlane.xlu0 %2387
  %v2389 = vmul.f32 %v2388, %v1378
  %v2390 = vsub.f32 %v2385, %v2389
  %v2391 = vmul.f32 %v2390, %v2390
  %v2392 = vsel %vm79, %v2391, 0.0
  %2393 = vadd.xlane.f32.xlu0 %v2392
  %v2394 = vpop.xlane.xlu0 %2393
  %v2395 = vmul.f32 %v2394, %v1378
  %v2396 = vadd.f32 %v2395, 1e-05
  %v2397 = vrsqrt.pop %v2396
  %v2398 = vmul.f32 %v2390, %v2397
  %v2399 = vmul.f32 %v2398, %v1393
  %v2400 = vadd.f32 %v2399, %v1400
  %2401 = vst.msk [vmem:[%s15 + $0x8] sm:$0xff] %vm79, %v2400
  // Predicated region
  $region62: #{transformer_forward.16} parent=0 // pred_check
    _
  $region63: #{transformer_forward.16} parent=0 // pred_check_branch
    %2403 = sbr.rel (0) target = $region65
  $region64: #{transformer_forward.16} parent=0 // pred_region
    _
  $region65: #{transformer_forward.16} parent=0 // pred_fallthru
    _
  // Predicated region
  $region66: #{transformer_forward.16} parent=0 // pred_check
    _
  $region67: #{transformer_forward.16} parent=0 // pred_check_branch
    %2405 = sbr.rel (0) target = $region69
  $region68: #{transformer_forward.16} parent=0 // pred_region
    _
  $region69: #{transformer_forward.16} parent=0 // pred_fallthru
    _

// kernel: transformer_forward.21
$region0: #{transformer_forward.21}
  #allocation0 [shape = 'u32[]', space=smem, size = 0x4, offset = 0x4, fixed_abs, tag = 'smem constant byte address 0x4 - core index']
  #allocation1 [shape = 'u32[144,128]{1,0:T(1,128)}', space=vmem, size = 0x12000, scoped, tag = 'internal scratch']
  %s0 = inlined_call_operand.vmem [shape: f32[16,32], index: 0, kind: input, shape index: {}]
  %s1 = inlined_call_operand.vmem [shape: f32[1,32], index: 1, kind: input, shape index: {}]
  %s2 = inlined_call_operand.vmem [shape: f32[1,32], index: 2, kind: input, shape index: {}]
  %s3 = inlined_call_operand.hbm [shape: f32[16,32], index: 3, kind: output, shape index: {}]
  %s4 = sld [smem:[#allocation0]]
  $region22: #{transformer_forward.21} parent=0
    _
  %s6 = ssub.s32 1, %s4
  %s7 = scalar_select 0, %s6, %s4
  $region1: #{transformer_forward.21} parent=0
    #allocation2 [shape = 'u8[8192]{0}', space=vmem, size = 0x2000, scoped, tag = 'output window, operand 0, single buffered']
    #allocation3 [shape = 's32[1]{0}', space=sflag, size = 0x4, scoped, tag = 'scoped memory for transformer_forward.21']
    %8 = vsyncpa [#allocation3], 0
    // Predicated region
    $region2: #{transformer_forward.21} parent=1 // pred_check
      _
    $region3: #{transformer_forward.21} parent=1 // pred_check_branch
      %10 = sbr.rel (0) target = $region5
    $region4: #{transformer_forward.21} parent=1 // pred_region
      _
    $region5: #{transformer_forward.21} parent=1 // pred_fallthru
      _
    // Predicated region
    $region6: #{transformer_forward.21} parent=1 // pred_check
      _
    $region7: #{transformer_forward.21} parent=1 // pred_check_branch
      %12 = sbr.rel (0) target = $region9
    $region8: #{transformer_forward.21} parent=1 // pred_region
      _
    $region9: #{transformer_forward.21} parent=1 // pred_fallthru
      _
    // Predicated region
    $region10: #{transformer_forward.21} parent=1 // pred_check
      _
    $region11: #{transformer_forward.21} parent=1 // pred_check_branch
      %14 = sbr.rel (0) target = $region13
    $region12: #{transformer_forward.21} parent=1 // pred_region
      _
    $region13: #{transformer_forward.21} parent=1 // pred_fallthru
      _
    %v15 = vld [vmem:[%s0] sm:$0xff]
    %v16 = vld [vmem:[%s0 + $0x8] sm:$0xff]
    %v17 = vld [vmem:[%s1] sm:$0x1]
    %v18 = vld [vmem:[%s2] sm:$0x1]
    %vm19 = vcmask 261120
    %v20 = vsel %vm19, %v15, 0.0
    %21 = vadd.xlane.f32.xlu0 %v20
    %v22 = vpop.xlane.xlu0 %21
    %v23 = vsel %vm19, %v16, 0.0
    %24 = vadd.xlane.f32.xlu0 %v23
    %v25 = vpop.xlane.xlu0 %24
    %v26 = vrcp.pop 32.0
    %v27 = vmul.f32 %v22, %v26
    %v28 = vmul.f32 %v25, %v26
    %v29 = vsub.f32 %v15, %v27
    %v30 = vsub.f32 %v16, %v28
    %v31 = vmul.f32 %v29, %v29
    %v32 = vmul.f32 %v30, %v30
    %v33 = vsel %vm19, %v31, 0.0
    %34 = vadd.xlane.f32.xlu0 %v33
    %v35 = vpop.xlane.xlu0 %34
    %v36 = vsel %vm19, %v32, 0.0
    %37 = vadd.xlane.f32.xlu0 %v36
    %v38 = vpop.xlane.xlu0 %37
    %v39 = vmul.f32 %v35, %v26
    %v40 = vmul.f32 %v38, %v26
    %v41 = vadd.f32 %v39, 1e-05
    %v42 = vadd.f32 %v40, 1e-05
    %v43 = vrsqrt.pop %v41
    %v44 = vrsqrt.pop %v42
    %v45 = vmul.f32 %v29, %v43
    %v46 = vmul.f32 %v30, %v44
    %v48 = vlaneseq
    %v49 = vshrl.u32 %v48, 7
    %v50 = vsub.s32 0, %v49
    %v51 = vrot.slane %v17, %v50
    %v53 = vmul.f32 %v45, %v51
    %v54 = vmul.f32 %v46, %v51
    %v56 = vlaneseq
    %v57 = vshrl.u32 %v56, 7
    %v58 = vsub.s32 0, %v57
    %v59 = vrot.slane %v18, %v58
    %v61 = vadd.f32 %v53, %v59
    %v62 = vadd.f32 %v54, %v59
    %63 = vst.msk [vmem:[#allocation2] sm:$0xff] %vm19, %v61
    %64 = vst.msk [vmem:[#allocation2 + $0x8] sm:$0xff] %vm19, %v62
    // Predicated region
    $region14: #{transformer_forward.21} parent=1 // pred_check
      _
    $region15: #{transformer_forward.21} parent=1 // pred_check_branch
      %66 = sbr.rel (0) target = $region17
    $region16: #{transformer_forward.21} parent=1 // pred_region
      %s68 = ssub.s32 256, 256
      %69 = vsyncadd [#allocation3], %s68
      %s70 = sshll.u32 [#allocation2], 4
      %s71 = int_to_ptr.vmem [resolvable:$true] %s70
      %76 = dma.vmem_to_hbm [thread:$0]  %s71, 256, %s3, [#allocation3], 128, 128, 8
    $region17: #{transformer_forward.21} parent=1 // pred_fallthru
      _
    // Predicated region
    $region18: #{transformer_forward.21} parent=1 // pred_check
      _
    $region19: #{transformer_forward.21} parent=1 // pred_check_branch
      %78 = sbr.rel (0) target = $region21
    $region20: #{transformer_forward.21} parent=1 // pred_region
      %79 = dma.done [#allocation3], 256
    $region21: #{transformer_forward.21} parent=1 // pred_fallthru
      _
    %80 = vsyncpa [#allocation3], 1

</llo_original>
